<compile_context>
chip_gen: v7x
topology: tpu7x:2x2x1
jax: 0.10.0
libtpu: 0.0.40
codegen_flags: <defaults>
</compile_context>

<pallas_src>
import functools

import jax
import jax.numpy as jnp
from jax.experimental import pallas as pl
from jax.experimental.pallas import tpu as pltpu


TN = 512  # weight-streaming chunk width along the output (lane) dimension


def _round_up(n, m):
    return ((n + m - 1) // m) * m


def _mlp_kernel(x_ref,
                w1_hbm, s1_ref, b1_ref,
                w2_hbm, s2_ref, b2_ref,
                w3_hbm, s3_ref, b3_ref,
                w4_ref, s4_ref, b4_ref,
                o_ref,
                h1_ref, h2_ref, h3_ref,
                wbuf1, wbuf2, wbuf3, sems):
    """Fused 3x(streamed Linear+ReLU) + resident Linear+Softmax."""
    cdt = jnp.bfloat16

    # Prefetch chunk 0 of every streamed layer immediately: the DMA engine
    # drains them in order, so there is no bubble at layer boundaries.
    pltpu.make_async_copy(w1_hbm.at[0], wbuf1.at[0], sems.at[0, 0]).start()
    pltpu.make_async_copy(w2_hbm.at[0], wbuf2.at[0], sems.at[1, 0]).start()
    pltpu.make_async_copy(w3_hbm.at[0], wbuf3.at[0], sems.at[2, 0]).start()

    def streamed_dense(lidx, h_in, w_hbm, wbuf, s_ref, b_ref, out_ref, relu):
        """out[:, c*TN:(c+1)*TN] = act((h @ dequant(W_chunk_c)) * s + b), chunk by chunk."""
        n_chunks, _, tn = w_hbm.shape
        h_c = h_in.astype(cdt)

        def cp(c, slot):
            return pltpu.make_async_copy(w_hbm.at[c], wbuf.at[slot],
                                         sems.at[lidx, slot])

        for c in range(n_chunks):          # static unroll (2-4 chunks)
            slot = c % 2
            cp(c, slot).wait()
            if c + 1 < n_chunks:
                cp(c + 1, 1 - slot).start()   # DMA of chunk c+1 overlaps compute of c
            w_chunk = wbuf[slot].astype(cdt)  # int8 -> bf16 (exact), VPU, hidden under DMA
            acc = jnp.dot(h_c, w_chunk, preferred_element_type=jnp.float32)
            y = acc * s_ref[:, c * tn:(c + 1) * tn] + b_ref[:, c * tn:(c + 1) * tn]
            if relu:
                y = jnp.maximum(y, 0.0)
            out_ref[:, c * tn:(c + 1) * tn] = y

    streamed_dense(0, x_ref[...], w1_hbm, wbuf1, s1_ref, b1_ref, h1_ref, True)
    streamed_dense(1, h1_ref[...], w2_hbm, wbuf2, s2_ref, b2_ref, h2_ref, True)
    streamed_dense(2, h2_ref[...], w3_hbm, wbuf3, s3_ref, b3_ref, h3_ref, True)

    # Final (tiny) classifier layer, fully VMEM-resident, then softmax(dim=1).
    # Padded output columns carry bias -1e30 (f32) -> exp underflows to 0.
    logits = (jnp.dot(h3_ref[...].astype(cdt), w4_ref[...].astype(cdt),
                      preferred_element_type=jnp.float32)
              * s4_ref[...] + b4_ref[...])
    m = jnp.max(logits, axis=-1, keepdims=True)
    e = jnp.exp(logits - m)
    o_ref[...] = (e / jnp.sum(e, axis=-1, keepdims=True)).astype(o_ref.dtype)


def prepare_params(params):
    """Pad, quantize (int8 + per-output-channel f32 scale) and chunk once, outside the kernel.

    params: [(w, b)] * 4 with w stored as (in, out), f32 (same layout as W_pt.T).
    """
    (w1, b1), (w2, b2), (w3, b3), (w4, b4) = params
    k_in = w1.shape[0]
    n_out = w4.shape[1]
    kp = _round_up(k_in, 128)
    npad = _round_up(n_out, 128)

    # Pad input-feature rows of W1 with zeros (quantize to exactly 0).
    w1 = jnp.pad(w1.astype(jnp.float32), ((0, kp - k_in), (0, 0)))

    def quant(w):
        w = w.astype(jnp.float32)
        amax = jnp.max(jnp.abs(w), axis=0, keepdims=True)          # (1, N)
        scale = jnp.maximum(amax, 1e-12) / 127.0
        q = jnp.clip(jnp.round(w / scale), -127.0, 127.0).astype(jnp.int8)
        return q, scale.astype(jnp.float32)

    def chunked(q):  # (K, N) -> (N//TN, K, TN): each chunk is a contiguous HBM slab
        k, n = q.shape
        return jnp.transpose(q.reshape(k, n // TN, TN), (1, 0, 2))

    q1, s1 = quant(w1)
    q2, s2 = quant(w2)
    q3, s3 = quant(w3)
    q4, s4 = quant(w4)

    # Pad classifier output dim: zero weights, scale 1.0, bias -1e30 (stays f32!).
    q4 = jnp.pad(q4, ((0, 0), (0, npad - n_out)))
    s4 = jnp.pad(s4, ((0, 0), (0, npad - n_out)), constant_values=1.0)
    b4 = jnp.pad(b4.astype(jnp.float32), (0, npad - n_out), constant_values=-1e30)

    def brow(b):
        return b.reshape(1, -1).astype(jnp.float32)

    return (chunked(q1), s1, brow(b1),
            chunked(q2), s2, brow(b2),
            chunked(q3), s3, brow(b3),
            q4, s4, brow(b4))


@functools.partial(jax.jit, static_argnames=("output_size",))
def adversarial_forward(x, prepared, output_size):
    """Full forward pass.  `prepared` comes from prepare_params()."""
    (w1q, s1, b1, w2q, s2, b2, w3q, s3, b3, w4q, s4, b4) = prepared
    batch, k_in = x.shape
    kp = w1q.shape[1]
    npad = w4q.shape[1]
    n1 = w1q.shape[0] * w1q.shape[2]
    n2 = w2q.shape[0] * w2q.shape[2]
    n3 = w3q.shape[0] * w3q.shape[2]

    xp = jnp.pad(x.astype(jnp.float32), ((0, 0), (0, kp - k_in)))

    hbm = pl.BlockSpec(memory_space=pl.ANY)                     # streamed in-kernel
    vmem = pl.BlockSpec(memory_space=pltpu.MemorySpace.VMEM)    # small, resident
    in_specs = [vmem,                # x
                hbm, vmem, vmem,     # W1 (HBM), scale1, bias1
                hbm, vmem, vmem,     # W2
                hbm, vmem, vmem,     # W3
                vmem, vmem, vmem]    # W4 (tiny), scale4, bias4

    flops = 2 * batch * (kp * n1 + n1 * n2 + n2 * n3 + n3 * npad)
    weight_bytes = w1q.size + w2q.size + w3q.size + w4q.size    # int8: 1 byte each
    small_bytes = 4 * (s1.size + b1.size + s2.size + b2.size + s3.size + b3.size
                       + s4.size + b4.size + xp.size + batch * npad)
    cost = pl.CostEstimate(flops=int(flops),
                           transcendentals=int(batch * npad),
                           bytes_accessed=int(weight_bytes + small_bytes))

    out = pl.pallas_call(
        _mlp_kernel,
        out_shape=jax.ShapeDtypeStruct((batch, npad), jnp.float32),
        in_specs=in_specs,
        out_specs=vmem,
        scratch_shapes=[
            pltpu.VMEM((batch, n1), jnp.float32),   # h1
            pltpu.VMEM((batch, n2), jnp.float32),   # h2
            pltpu.VMEM((batch, n3), jnp.float32),   # h3
            pltpu.VMEM((2, kp, TN), jnp.int8),      # W1 double buffer
            pltpu.VMEM((2, n1, TN), jnp.int8),      # W2 double buffer
            pltpu.VMEM((2, n2, TN), jnp.int8),      # W3 double buffer
            pltpu.SemaphoreType.DMA((3, 2)),        # per-layer, per-slot DMA sems
        ],
        compiler_params=pltpu.CompilerParams(
            # Actual footprint ~5 MiB; keep well under v7x's 64 MiB physical VMEM.
            vmem_limit_bytes=24 * 1024 * 1024,
        ),
        cost_estimate=cost,
    )(xp, w1q, s1, b1, w2q, s2, b2, w3q, s3, b3, w4q, s4, b4)

    return out[:, :output_size]


def reference_forward(x, prepared, output_size):
    """Plain-JAX reference with the exact same math (quantized bf16 matmuls, f32 acc)."""
    (w1q, s1, b1, w2q, s2, b2, w3q, s3, b3, w4q, s4, b4) = prepared
    kp = w1q.shape[1]
    xp = jnp.pad(x.astype(jnp.float32), ((0, 0), (0, kp - x.shape[1])))

    def unchunk(wq):  # (nc, K, TN) -> (K, nc*TN)
        return jnp.transpose(wq, (1, 0, 2)).reshape(wq.shape[1], -1)

    def dense(h, wq, s, b, relu):
        acc = jnp.dot(h.astype(jnp.bfloat16), wq.astype(jnp.bfloat16),
                      preferred_element_type=jnp.float32)
        y = acc * s + b
        return jnp.maximum(y, 0.0) if relu else y

    h = dense(xp, unchunk(w1q), s1, b1, True)
    h = dense(h, unchunk(w2q), s2, b2, True)
    h = dense(h, unchunk(w3q), s3, b3, True)
    logits = dense(h, w4q, s4, b4, False)
    return jax.nn.softmax(logits, axis=1)[:, :output_size]


def init_params(key, input_size, output_size):
    """Deterministic init matching nn.Linear's U(-1/sqrt(in), 1/sqrt(in))."""
    dims = [(input_size, 2048), (2048, 1024), (1024, 1024), (1024, output_size)]
    params = []
    for i, (fan_in, fan_out) in enumerate(dims):
        kw, kb = jax.random.split(jax.random.fold_in(key, i))
        bound = 1.0 / jnp.sqrt(fan_in)
        w = jax.random.uniform(kw, (fan_in, fan_out), jnp.float32, -bound, bound)
        b = jax.random.uniform(kb, (fan_out,), jnp.float32, -bound, bound)
        params.append((w, b))
    return params


if __name__ == "__main__":
    key = jax.random.PRNGKey(0)
    batch = 8
    input_size = 784   # real MNIST feature size (padded to 896 inside)
    output_size = 10

    kx, kparam = jax.random.split(key)
    x = jax.random.normal(kx, (batch, input_size), jnp.float32)
    params = init_params(kparam, input_size, output_size)

    prepared = prepare_params(params)
    out = adversarial_forward(x, prepared, output_size)
    out = jax.block_until_ready(out)

    ref = reference_forward(x, prepared, output_size)

    assert out.shape == (batch, output_size)
    assert jnp.allclose(jnp.sum(out, axis=1), 1.0, atol=1e-5)
    assert jnp.allclose(out, ref, atol=1e-4, rtol=1e-3)

    print("KERNEL_OK")
</pallas_src>

<mosaic_0001>
module attributes {stable_mosaic.version = 11 : i64} {
  func.func @_mlp_kernel(%arg0: memref<8x896xf32, #tpu.memory_space<vmem>>, %arg1: memref<4x896x512xi8, #tpu.memory_space<any>>, %arg2: memref<1x2048xf32, #tpu.memory_space<vmem>>, %arg3: memref<1x2048xf32, #tpu.memory_space<vmem>>, %arg4: memref<2x2048x512xi8, #tpu.memory_space<any>>, %arg5: memref<1x1024xf32, #tpu.memory_space<vmem>>, %arg6: memref<1x1024xf32, #tpu.memory_space<vmem>>, %arg7: memref<2x1024x512xi8, #tpu.memory_space<any>>, %arg8: memref<1x1024xf32, #tpu.memory_space<vmem>>, %arg9: memref<1x1024xf32, #tpu.memory_space<vmem>>, %arg10: memref<1024x128xi8, #tpu.memory_space<vmem>>, %arg11: memref<1x128xf32, #tpu.memory_space<vmem>>, %arg12: memref<1x128xf32, #tpu.memory_space<vmem>>, %arg13: memref<8x128xf32, #tpu.memory_space<vmem>>, %arg14: memref<8x2048xf32, #tpu.memory_space<vmem>>, %arg15: memref<8x1024xf32, #tpu.memory_space<vmem>>, %arg16: memref<8x1024xf32, #tpu.memory_space<vmem>>, %arg17: memref<2x896x512xi8, #tpu.memory_space<vmem>>, %arg18: memref<2x2048x512xi8, #tpu.memory_space<vmem>>, %arg19: memref<2x1024x512xi8, #tpu.memory_space<vmem>>, %arg20: memref<3x2x!tpu.dma_semaphore, #tpu.memory_space<semaphore_mem>>) attributes {dimension_semantics = [], scalar_prefetch = 0 : i64, scratch_operands = 7 : i64, tpu.core_type = #tpu.core_type<tc>} {
    %c0_i32 = arith.constant 0 : i32
    %c0_i32_0 = arith.constant 0 : i32
    %c0_i32_1 = arith.constant 0 : i32
    %c0_i32_2 = arith.constant 0 : i32
    %c0_i32_3 = arith.constant 0 : i32
    %c0_i32_4 = arith.constant 0 : i32
    %0 = tpu.memref_slice %arg1[%c0_i32, %c0_i32_3, %c0_i32_4] : memref<4x896x512xi8, #tpu.memory_space<any>> -> memref<1x896x512xi8, #tpu.memory_space<any>>
    %1 = tpu.memref_squeeze %0 : memref<1x896x512xi8, #tpu.memory_space<any>> -> memref<896x512xi8, #tpu.memory_space<any>>
    %c0_i32_5 = arith.constant 0 : i32
    %c0_i32_6 = arith.constant 0 : i32
    %2 = tpu.memref_slice %arg17[%c0_i32_0, %c0_i32_5, %c0_i32_6] : memref<2x896x512xi8, #tpu.memory_space<vmem>> -> memref<1x896x512xi8, #tpu.memory_space<vmem>>
    %3 = tpu.memref_squeeze %2 : memref<1x896x512xi8, #tpu.memory_space<vmem>> -> memref<896x512xi8, #tpu.memory_space<vmem>>
    %4 = tpu.memref_slice %arg20[%c0_i32_1, %c0_i32_2] : memref<3x2x!tpu.dma_semaphore, #tpu.memory_space<semaphore_mem>> -> memref<1x1x!tpu.dma_semaphore, #tpu.memory_space<semaphore_mem>>
    %5 = tpu.memref_squeeze %4 : memref<1x1x!tpu.dma_semaphore, #tpu.memory_space<semaphore_mem>> -> memref<!tpu.dma_semaphore, #tpu.memory_space<semaphore_mem>>
    tpu.enqueue_dma source(%1 : memref<896x512xi8, #tpu.memory_space<any>>) target(%3 : memref<896x512xi8, #tpu.memory_space<vmem>>) target_semaphore(%5 : memref<!tpu.dma_semaphore, #tpu.memory_space<semaphore_mem>>)
    %c0_i32_7 = arith.constant 0 : i32
    %c0_i32_8 = arith.constant 0 : i32
    %c1_i32 = arith.constant 1 : i32
    %c0_i32_9 = arith.constant 0 : i32
    %c0_i32_10 = arith.constant 0 : i32
    %c0_i32_11 = arith.constant 0 : i32
    %6 = tpu.memref_slice %arg4[%c0_i32_7, %c0_i32_10, %c0_i32_11] : memref<2x2048x512xi8, #tpu.memory_space<any>> -> memref<1x2048x512xi8, #tpu.memory_space<any>>
    %7 = tpu.memref_squeeze %6 : memref<1x2048x512xi8, #tpu.memory_space<any>> -> memref<2048x512xi8, #tpu.memory_space<any>>
    %c0_i32_12 = arith.constant 0 : i32
    %c0_i32_13 = arith.constant 0 : i32
    %8 = tpu.memref_slice %arg18[%c0_i32_8, %c0_i32_12, %c0_i32_13] : memref<2x2048x512xi8, #tpu.memory_space<vmem>> -> memref<1x2048x512xi8, #tpu.memory_space<vmem>>
    %9 = tpu.memref_squeeze %8 : memref<1x2048x512xi8, #tpu.memory_space<vmem>> -> memref<2048x512xi8, #tpu.memory_space<vmem>>
    %10 = tpu.memref_slice %arg20[%c1_i32, %c0_i32_9] : memref<3x2x!tpu.dma_semaphore, #tpu.memory_space<semaphore_mem>> -> memref<1x1x!tpu.dma_semaphore, #tpu.memory_space<semaphore_mem>>
    %11 = tpu.memref_squeeze %10 : memref<1x1x!tpu.dma_semaphore, #tpu.memory_space<semaphore_mem>> -> memref<!tpu.dma_semaphore, #tpu.memory_space<semaphore_mem>>
    tpu.enqueue_dma source(%7 : memref<2048x512xi8, #tpu.memory_space<any>>) target(%9 : memref<2048x512xi8, #tpu.memory_space<vmem>>) target_semaphore(%11 : memref<!tpu.dma_semaphore, #tpu.memory_space<semaphore_mem>>)
    %c0_i32_14 = arith.constant 0 : i32
    %c0_i32_15 = arith.constant 0 : i32
    %c2_i32 = arith.constant 2 : i32
    %c0_i32_16 = arith.constant 0 : i32
    %c0_i32_17 = arith.constant 0 : i32
    %c0_i32_18 = arith.constant 0 : i32
    %12 = tpu.memref_slice %arg7[%c0_i32_14, %c0_i32_17, %c0_i32_18] : memref<2x1024x512xi8, #tpu.memory_space<any>> -> memref<1x1024x512xi8, #tpu.memory_space<any>>
    %13 = tpu.memref_squeeze %12 : memref<1x1024x512xi8, #tpu.memory_space<any>> -> memref<1024x512xi8, #tpu.memory_space<any>>
    %c0_i32_19 = arith.constant 0 : i32
    %c0_i32_20 = arith.constant 0 : i32
    %14 = tpu.memref_slice %arg19[%c0_i32_15, %c0_i32_19, %c0_i32_20] : memref<2x1024x512xi8, #tpu.memory_space<vmem>> -> memref<1x1024x512xi8, #tpu.memory_space<vmem>>
    %15 = tpu.memref_squeeze %14 : memref<1x1024x512xi8, #tpu.memory_space<vmem>> -> memref<1024x512xi8, #tpu.memory_space<vmem>>
    %16 = tpu.memref_slice %arg20[%c2_i32, %c0_i32_16] : memref<3x2x!tpu.dma_semaphore, #tpu.memory_space<semaphore_mem>> -> memref<1x1x!tpu.dma_semaphore, #tpu.memory_space<semaphore_mem>>
    %17 = tpu.memref_squeeze %16 : memref<1x1x!tpu.dma_semaphore, #tpu.memory_space<semaphore_mem>> -> memref<!tpu.dma_semaphore, #tpu.memory_space<semaphore_mem>>
    tpu.enqueue_dma source(%13 : memref<1024x512xi8, #tpu.memory_space<any>>) target(%15 : memref<1024x512xi8, #tpu.memory_space<vmem>>) target_semaphore(%17 : memref<!tpu.dma_semaphore, #tpu.memory_space<semaphore_mem>>)
    %c0 = arith.constant 0 : index
    %c0_21 = arith.constant 0 : index
    %18 = vector.load %arg0[%c0, %c0_21] : memref<8x896xf32, #tpu.memory_space<vmem>>, vector<8x896xf32>
    %19 = arith.truncf %18 : vector<8x896xf32> to vector<8x896xbf16>
    %c0_i32_22 = arith.constant 0 : i32
    %c0_i32_23 = arith.constant 0 : i32
    %c0_i32_24 = arith.constant 0 : i32
    %c0_i32_25 = arith.constant 0 : i32
    %c0_i32_26 = arith.constant 0 : i32
    %c0_i32_27 = arith.constant 0 : i32
    %20 = tpu.memref_slice %arg1[%c0_i32_22, %c0_i32_26, %c0_i32_27] : memref<4x896x512xi8, #tpu.memory_space<any>> -> memref<1x896x512xi8, #tpu.memory_space<any>>
    %21 = tpu.memref_squeeze %20 : memref<1x896x512xi8, #tpu.memory_space<any>> -> memref<896x512xi8, #tpu.memory_space<any>>
    %c0_i32_28 = arith.constant 0 : i32
    %c0_i32_29 = arith.constant 0 : i32
    %22 = tpu.memref_slice %arg17[%c0_i32_23, %c0_i32_28, %c0_i32_29] : memref<2x896x512xi8, #tpu.memory_space<vmem>> -> memref<1x896x512xi8, #tpu.memory_space<vmem>>
    %23 = tpu.memref_squeeze %22 : memref<1x896x512xi8, #tpu.memory_space<vmem>> -> memref<896x512xi8, #tpu.memory_space<vmem>>
    %24 = tpu.memref_slice %arg20[%c0_i32_24, %c0_i32_25] : memref<3x2x!tpu.dma_semaphore, #tpu.memory_space<semaphore_mem>> -> memref<1x1x!tpu.dma_semaphore, #tpu.memory_space<semaphore_mem>>
    %25 = tpu.memref_squeeze %24 : memref<1x1x!tpu.dma_semaphore, #tpu.memory_space<semaphore_mem>> -> memref<!tpu.dma_semaphore, #tpu.memory_space<semaphore_mem>>
    tpu.wait_dma2 semaphore(%25 : memref<!tpu.dma_semaphore, #tpu.memory_space<semaphore_mem>>) src(%21 : memref<896x512xi8, #tpu.memory_space<any>>) dst(%23 : memref<896x512xi8, #tpu.memory_space<vmem>>)
    %c1_i32_30 = arith.constant 1 : i32
    %c1_i32_31 = arith.constant 1 : i32
    %c0_i32_32 = arith.constant 0 : i32
    %c1_i32_33 = arith.constant 1 : i32
    %c0_i32_34 = arith.constant 0 : i32
    %c0_i32_35 = arith.constant 0 : i32
    %26 = tpu.memref_slice %arg1[%c1_i32_30, %c0_i32_34, %c0_i32_35] : memref<4x896x512xi8, #tpu.memory_space<any>> -> memref<1x896x512xi8, #tpu.memory_space<any>>
    %27 = tpu.memref_squeeze %26 : memref<1x896x512xi8, #tpu.memory_space<any>> -> memref<896x512xi8, #tpu.memory_space<any>>
    %c0_i32_36 = arith.constant 0 : i32
    %c0_i32_37 = arith.constant 0 : i32
    %28 = tpu.memref_slice %arg17[%c1_i32_31, %c0_i32_36, %c0_i32_37] : memref<2x896x512xi8, #tpu.memory_space<vmem>> -> memref<1x896x512xi8, #tpu.memory_space<vmem>>
    %29 = tpu.memref_squeeze %28 : memref<1x896x512xi8, #tpu.memory_space<vmem>> -> memref<896x512xi8, #tpu.memory_space<vmem>>
    %30 = tpu.memref_slice %arg20[%c0_i32_32, %c1_i32_33] : memref<3x2x!tpu.dma_semaphore, #tpu.memory_space<semaphore_mem>> -> memref<1x1x!tpu.dma_semaphore, #tpu.memory_space<semaphore_mem>>
    %31 = tpu.memref_squeeze %30 : memref<1x1x!tpu.dma_semaphore, #tpu.memory_space<semaphore_mem>> -> memref<!tpu.dma_semaphore, #tpu.memory_space<semaphore_mem>>
    tpu.enqueue_dma source(%27 : memref<896x512xi8, #tpu.memory_space<any>>) target(%29 : memref<896x512xi8, #tpu.memory_space<vmem>>) target_semaphore(%31 : memref<!tpu.dma_semaphore, #tpu.memory_space<semaphore_mem>>)
    %c0_38 = arith.constant 0 : index
    %c0_39 = arith.constant 0 : index
    %c0_40 = arith.constant 0 : index
    %32 = vector.load %arg17[%c0_38, %c0_39, %c0_40] : memref<2x896x512xi8, #tpu.memory_space<vmem>>, vector<1x896x512xi8>
    %33 = vector.shape_cast %32 : vector<1x896x512xi8> to vector<896x512xi8>
    %34 = arith.sitofp %33 : vector<896x512xi8> to vector<896x512xbf16>
    %cst = arith.constant dense<0.000000e+00> : vector<8x512xf32>
    %35 = tpu.matmul %19, %34, %cst {dimension_numbers = #tpu.dot_dimension_numbers<[1], [0], [0], [1], [0, 0, 1, 1], [], []>} : vector<8x896xbf16>, vector<896x512xbf16>, vector<8x512xf32> -> vector<8x512xf32>
    %c0_41 = arith.constant 0 : index
    %c0_42 = arith.constant 0 : index
    %36 = vector.load %arg2[%c0_41, %c0_42] : memref<1x2048xf32, #tpu.memory_space<vmem>>, vector<1x512xf32>
    %37 = vector.broadcast %36 : vector<1x512xf32> to vector<8x512xf32>
    %38 = arith.mulf %35, %37 : vector<8x512xf32>
    %c0_43 = arith.constant 0 : index
    %c0_44 = arith.constant 0 : index
    %39 = vector.load %arg3[%c0_43, %c0_44] : memref<1x2048xf32, #tpu.memory_space<vmem>>, vector<1x512xf32>
    %40 = vector.broadcast %39 : vector<1x512xf32> to vector<8x512xf32>
    %41 = arith.addf %38, %40 : vector<8x512xf32>
    %cst_45 = arith.constant 0.000000e+00 : f32
    %42 = vector.broadcast %cst_45 : f32 to vector<8x512xf32>
    %43 = arith.maximumf %41, %42 : vector<8x512xf32>
    %c0_46 = arith.constant 0 : index
    %c0_47 = arith.constant 0 : index
    %44 = vector.load %arg14[%c0_46, %c0_47] : memref<8x2048xf32, #tpu.memory_space<vmem>>, vector<8x512xf32>
    tpu.vector_store %arg14[%c0_46, %c0_47], %43 {strides = array<i32>} : memref<8x2048xf32, #tpu.memory_space<vmem>>, vector<8x512xf32>,
    %c1_i32_48 = arith.constant 1 : i32
    %c1_i32_49 = arith.constant 1 : i32
    %c0_i32_50 = arith.constant 0 : i32
    %c1_i32_51 = arith.constant 1 : i32
    %c0_i32_52 = arith.constant 0 : i32
    %c0_i32_53 = arith.constant 0 : i32
    %45 = tpu.memref_slice %arg1[%c1_i32_48, %c0_i32_52, %c0_i32_53] : memref<4x896x512xi8, #tpu.memory_space<any>> -> memref<1x896x512xi8, #tpu.memory_space<any>>
    %46 = tpu.memref_squeeze %45 : memref<1x896x512xi8, #tpu.memory_space<any>> -> memref<896x512xi8, #tpu.memory_space<any>>
    %c0_i32_54 = arith.constant 0 : i32
    %c0_i32_55 = arith.constant 0 : i32
    %47 = tpu.memref_slice %arg17[%c1_i32_49, %c0_i32_54, %c0_i32_55] : memref<2x896x512xi8, #tpu.memory_space<vmem>> -> memref<1x896x512xi8, #tpu.memory_space<vmem>>
    %48 = tpu.memref_squeeze %47 : memref<1x896x512xi8, #tpu.memory_space<vmem>> -> memref<896x512xi8, #tpu.memory_space<vmem>>
    %49 = tpu.memref_slice %arg20[%c0_i32_50, %c1_i32_51] : memref<3x2x!tpu.dma_semaphore, #tpu.memory_space<semaphore_mem>> -> memref<1x1x!tpu.dma_semaphore, #tpu.memory_space<semaphore_mem>>
    %50 = tpu.memref_squeeze %49 : memref<1x1x!tpu.dma_semaphore, #tpu.memory_space<semaphore_mem>> -> memref<!tpu.dma_semaphore, #tpu.memory_space<semaphore_mem>>
    tpu.wait_dma2 semaphore(%50 : memref<!tpu.dma_semaphore, #tpu.memory_space<semaphore_mem>>) src(%46 : memref<896x512xi8, #tpu.memory_space<any>>) dst(%48 : memref<896x512xi8, #tpu.memory_space<vmem>>)
    %c2_i32_56 = arith.constant 2 : i32
    %c0_i32_57 = arith.constant 0 : i32
    %c0_i32_58 = arith.constant 0 : i32
    %c0_i32_59 = arith.constant 0 : i32
    %c0_i32_60 = arith.constant 0 : i32
    %c0_i32_61 = arith.constant 0 : i32
    %51 = tpu.memref_slice %arg1[%c2_i32_56, %c0_i32_60, %c0_i32_61] : memref<4x896x512xi8, #tpu.memory_space<any>> -> memref<1x896x512xi8, #tpu.memory_space<any>>
    %52 = tpu.memref_squeeze %51 : memref<1x896x512xi8, #tpu.memory_space<any>> -> memref<896x512xi8, #tpu.memory_space<any>>
    %c0_i32_62 = arith.constant 0 : i32
    %c0_i32_63 = arith.constant 0 : i32
    %53 = tpu.memref_slice %arg17[%c0_i32_57, %c0_i32_62, %c0_i32_63] : memref<2x896x512xi8, #tpu.memory_space<vmem>> -> memref<1x896x512xi8, #tpu.memory_space<vmem>>
    %54 = tpu.memref_squeeze %53 : memref<1x896x512xi8, #tpu.memory_space<vmem>> -> memref<896x512xi8, #tpu.memory_space<vmem>>
    %55 = tpu.memref_slice %arg20[%c0_i32_58, %c0_i32_59] : memref<3x2x!tpu.dma_semaphore, #tpu.memory_space<semaphore_mem>> -> memref<1x1x!tpu.dma_semaphore, #tpu.memory_space<semaphore_mem>>
    %56 = tpu.memref_squeeze %55 : memref<1x1x!tpu.dma_semaphore, #tpu.memory_space<semaphore_mem>> -> memref<!tpu.dma_semaphore, #tpu.memory_space<semaphore_mem>>
    tpu.enqueue_dma source(%52 : memref<896x512xi8, #tpu.memory_space<any>>) target(%54 : memref<896x512xi8, #tpu.memory_space<vmem>>) target_semaphore(%56 : memref<!tpu.dma_semaphore, #tpu.memory_space<semaphore_mem>>)
    %c1 = arith.constant 1 : index
    %c0_64 = arith.constant 0 : index
    %c0_65 = arith.constant 0 : index
    %57 = vector.load %arg17[%c1, %c0_64, %c0_65] : memref<2x896x512xi8, #tpu.memory_space<vmem>>, vector<1x896x512xi8>
    %58 = vector.shape_cast %57 : vector<1x896x512xi8> to vector<896x512xi8>
    %59 = arith.sitofp %58 : vector<896x512xi8> to vector<896x512xbf16>
    %cst_66 = arith.constant dense<0.000000e+00> : vector<8x512xf32>
    %60 = tpu.matmul %19, %59, %cst_66 {dimension_numbers = #tpu.dot_dimension_numbers<[1], [0], [0], [1], [0, 0, 1, 1], [], []>} : vector<8x896xbf16>, vector<896x512xbf16>, vector<8x512xf32> -> vector<8x512xf32>
    %c0_67 = arith.constant 0 : index
    %c512 = arith.constant 512 : index
    %61 = vector.load %arg2[%c0_67, %c512] : memref<1x2048xf32, #tpu.memory_space<vmem>>, vector<1x512xf32>
    %62 = vector.broadcast %61 : vector<1x512xf32> to vector<8x512xf32>
    %63 = arith.mulf %60, %62 : vector<8x512xf32>
    %c0_68 = arith.constant 0 : index
    %c512_69 = arith.constant 512 : index
    %64 = vector.load %arg3[%c0_68, %c512_69] : memref<1x2048xf32, #tpu.memory_space<vmem>>, vector<1x512xf32>
    %65 = vector.broadcast %64 : vector<1x512xf32> to vector<8x512xf32>
    %66 = arith.addf %63, %65 : vector<8x512xf32>
    %cst_70 = arith.constant 0.000000e+00 : f32
    %67 = vector.broadcast %cst_70 : f32 to vector<8x512xf32>
    %68 = arith.maximumf %66, %67 : vector<8x512xf32>
    %c0_71 = arith.constant 0 : index
    %c512_72 = arith.constant 512 : index
    %69 = vector.load %arg14[%c0_71, %c512_72] : memref<8x2048xf32, #tpu.memory_space<vmem>>, vector<8x512xf32>
    tpu.vector_store %arg14[%c0_71, %c512_72], %68 {strides = array<i32>} : memref<8x2048xf32, #tpu.memory_space<vmem>>, vector<8x512xf32>,
    %c2_i32_73 = arith.constant 2 : i32
    %c0_i32_74 = arith.constant 0 : i32
    %c0_i32_75 = arith.constant 0 : i32
    %c0_i32_76 = arith.constant 0 : i32
    %c0_i32_77 = arith.constant 0 : i32
    %c0_i32_78 = arith.constant 0 : i32
    %70 = tpu.memref_slice %arg1[%c2_i32_73, %c0_i32_77, %c0_i32_78] : memref<4x896x512xi8, #tpu.memory_space<any>> -> memref<1x896x512xi8, #tpu.memory_space<any>>
    %71 = tpu.memref_squeeze %70 : memref<1x896x512xi8, #tpu.memory_space<any>> -> memref<896x512xi8, #tpu.memory_space<any>>
    %c0_i32_79 = arith.constant 0 : i32
    %c0_i32_80 = arith.constant 0 : i32
    %72 = tpu.memref_slice %arg17[%c0_i32_74, %c0_i32_79, %c0_i32_80] : memref<2x896x512xi8, #tpu.memory_space<vmem>> -> memref<1x896x512xi8, #tpu.memory_space<vmem>>
    %73 = tpu.memref_squeeze %72 : memref<1x896x512xi8, #tpu.memory_space<vmem>> -> memref<896x512xi8, #tpu.memory_space<vmem>>
    %74 = tpu.memref_slice %arg20[%c0_i32_75, %c0_i32_76] : memref<3x2x!tpu.dma_semaphore, #tpu.memory_space<semaphore_mem>> -> memref<1x1x!tpu.dma_semaphore, #tpu.memory_space<semaphore_mem>>
    %75 = tpu.memref_squeeze %74 : memref<1x1x!tpu.dma_semaphore, #tpu.memory_space<semaphore_mem>> -> memref<!tpu.dma_semaphore, #tpu.memory_space<semaphore_mem>>
    tpu.wait_dma2 semaphore(%75 : memref<!tpu.dma_semaphore, #tpu.memory_space<semaphore_mem>>) src(%71 : memref<896x512xi8, #tpu.memory_space<any>>) dst(%73 : memref<896x512xi8, #tpu.memory_space<vmem>>)
    %c3_i32 = arith.constant 3 : i32
    %c1_i32_81 = arith.constant 1 : i32
    %c0_i32_82 = arith.constant 0 : i32
    %c1_i32_83 = arith.constant 1 : i32
    %c0_i32_84 = arith.constant 0 : i32
    %c0_i32_85 = arith.constant 0 : i32
    %76 = tpu.memref_slice %arg1[%c3_i32, %c0_i32_84, %c0_i32_85] : memref<4x896x512xi8, #tpu.memory_space<any>> -> memref<1x896x512xi8, #tpu.memory_space<any>>
    %77 = tpu.memref_squeeze %76 : memref<1x896x512xi8, #tpu.memory_space<any>> -> memref<896x512xi8, #tpu.memory_space<any>>
    %c0_i32_86 = arith.constant 0 : i32
    %c0_i32_87 = arith.constant 0 : i32
    %78 = tpu.memref_slice %arg17[%c1_i32_81, %c0_i32_86, %c0_i32_87] : memref<2x896x512xi8, #tpu.memory_space<vmem>> -> memref<1x896x512xi8, #tpu.memory_space<vmem>>
    %79 = tpu.memref_squeeze %78 : memref<1x896x512xi8, #tpu.memory_space<vmem>> -> memref<896x512xi8, #tpu.memory_space<vmem>>
    %80 = tpu.memref_slice %arg20[%c0_i32_82, %c1_i32_83] : memref<3x2x!tpu.dma_semaphore, #tpu.memory_space<semaphore_mem>> -> memref<1x1x!tpu.dma_semaphore, #tpu.memory_space<semaphore_mem>>
    %81 = tpu.memref_squeeze %80 : memref<1x1x!tpu.dma_semaphore, #tpu.memory_space<semaphore_mem>> -> memref<!tpu.dma_semaphore, #tpu.memory_space<semaphore_mem>>
    tpu.enqueue_dma source(%77 : memref<896x512xi8, #tpu.memory_space<any>>) target(%79 : memref<896x512xi8, #tpu.memory_space<vmem>>) target_semaphore(%81 : memref<!tpu.dma_semaphore, #tpu.memory_space<semaphore_mem>>)
    %c0_88 = arith.constant 0 : index
    %c0_89 = arith.constant 0 : index
    %c0_90 = arith.constant 0 : index
    %82 = vector.load %arg17[%c0_88, %c0_89, %c0_90] : memref<2x896x512xi8, #tpu.memory_space<vmem>>, vector<1x896x512xi8>
    %83 = vector.shape_cast %82 : vector<1x896x512xi8> to vector<896x512xi8>
    %84 = arith.sitofp %83 : vector<896x512xi8> to vector<896x512xbf16>
    %cst_91 = arith.constant dense<0.000000e+00> : vector<8x512xf32>
    %85 = tpu.matmul %19, %84, %cst_91 {dimension_numbers = #tpu.dot_dimension_numbers<[1], [0], [0], [1], [0, 0, 1, 1], [], []>} : vector<8x896xbf16>, vector<896x512xbf16>, vector<8x512xf32> -> vector<8x512xf32>
    %c0_92 = arith.constant 0 : index
    %c1024 = arith.constant 1024 : index
    %86 = vector.load %arg2[%c0_92, %c1024] : memref<1x2048xf32, #tpu.memory_space<vmem>>, vector<1x512xf32>
    %87 = vector.broadcast %86 : vector<1x512xf32> to vector<8x512xf32>
    %88 = arith.mulf %85, %87 : vector<8x512xf32>
    %c0_93 = arith.constant 0 : index
    %c1024_94 = arith.constant 1024 : index
    %89 = vector.load %arg3[%c0_93, %c1024_94] : memref<1x2048xf32, #tpu.memory_space<vmem>>, vector<1x512xf32>
    %90 = vector.broadcast %89 : vector<1x512xf32> to vector<8x512xf32>
    %91 = arith.addf %88, %90 : vector<8x512xf32>
    %cst_95 = arith.constant 0.000000e+00 : f32
    %92 = vector.broadcast %cst_95 : f32 to vector<8x512xf32>
    %93 = arith.maximumf %91, %92 : vector<8x512xf32>
    %c0_96 = arith.constant 0 : index
    %c1024_97 = arith.constant 1024 : index
    %94 = vector.load %arg14[%c0_96, %c1024_97] : memref<8x2048xf32, #tpu.memory_space<vmem>>, vector<8x512xf32>
    tpu.vector_store %arg14[%c0_96, %c1024_97], %93 {strides = array<i32>} : memref<8x2048xf32, #tpu.memory_space<vmem>>, vector<8x512xf32>,
    %c3_i32_98 = arith.constant 3 : i32
    %c1_i32_99 = arith.constant 1 : i32
    %c0_i32_100 = arith.constant 0 : i32
    %c1_i32_101 = arith.constant 1 : i32
    %c0_i32_102 = arith.constant 0 : i32
    %c0_i32_103 = arith.constant 0 : i32
    %95 = tpu.memref_slice %arg1[%c3_i32_98, %c0_i32_102, %c0_i32_103] : memref<4x896x512xi8, #tpu.memory_space<any>> -> memref<1x896x512xi8, #tpu.memory_space<any>>
    %96 = tpu.memref_squeeze %95 : memref<1x896x512xi8, #tpu.memory_space<any>> -> memref<896x512xi8, #tpu.memory_space<any>>
    %c0_i32_104 = arith.constant 0 : i32
    %c0_i32_105 = arith.constant 0 : i32
    %97 = tpu.memref_slice %arg17[%c1_i32_99, %c0_i32_104, %c0_i32_105] : memref<2x896x512xi8, #tpu.memory_space<vmem>> -> memref<1x896x512xi8, #tpu.memory_space<vmem>>
    %98 = tpu.memref_squeeze %97 : memref<1x896x512xi8, #tpu.memory_space<vmem>> -> memref<896x512xi8, #tpu.memory_space<vmem>>
    %99 = tpu.memref_slice %arg20[%c0_i32_100, %c1_i32_101] : memref<3x2x!tpu.dma_semaphore, #tpu.memory_space<semaphore_mem>> -> memref<1x1x!tpu.dma_semaphore, #tpu.memory_space<semaphore_mem>>
    %100 = tpu.memref_squeeze %99 : memref<1x1x!tpu.dma_semaphore, #tpu.memory_space<semaphore_mem>> -> memref<!tpu.dma_semaphore, #tpu.memory_space<semaphore_mem>>
    tpu.wait_dma2 semaphore(%100 : memref<!tpu.dma_semaphore, #tpu.memory_space<semaphore_mem>>) src(%96 : memref<896x512xi8, #tpu.memory_space<any>>) dst(%98 : memref<896x512xi8, #tpu.memory_space<vmem>>)
    %c1_106 = arith.constant 1 : index
    %c0_107 = arith.constant 0 : index
    %c0_108 = arith.constant 0 : index
    %101 = vector.load %arg17[%c1_106, %c0_107, %c0_108] : memref<2x896x512xi8, #tpu.memory_space<vmem>>, vector<1x896x512xi8>
    %102 = vector.shape_cast %101 : vector<1x896x512xi8> to vector<896x512xi8>
    %103 = arith.sitofp %102 : vector<896x512xi8> to vector<896x512xbf16>
    %cst_109 = arith.constant dense<0.000000e+00> : vector<8x512xf32>
    %104 = tpu.matmul %19, %103, %cst_109 {dimension_numbers = #tpu.dot_dimension_numbers<[1], [0], [0], [1], [0, 0, 1, 1], [], []>} : vector<8x896xbf16>, vector<896x512xbf16>, vector<8x512xf32> -> vector<8x512xf32>
    %c0_110 = arith.constant 0 : index
    %c1536 = arith.constant 1536 : index
    %105 = vector.load %arg2[%c0_110, %c1536] : memref<1x2048xf32, #tpu.memory_space<vmem>>, vector<1x512xf32>
    %106 = vector.broadcast %105 : vector<1x512xf32> to vector<8x512xf32>
    %107 = arith.mulf %104, %106 : vector<8x512xf32>
    %c0_111 = arith.constant 0 : index
    %c1536_112 = arith.constant 1536 : index
    %108 = vector.load %arg3[%c0_111, %c1536_112] : memref<1x2048xf32, #tpu.memory_space<vmem>>, vector<1x512xf32>
    %109 = vector.broadcast %108 : vector<1x512xf32> to vector<8x512xf32>
    %110 = arith.addf %107, %109 : vector<8x512xf32>
    %cst_113 = arith.constant 0.000000e+00 : f32
    %111 = vector.broadcast %cst_113 : f32 to vector<8x512xf32>
    %112 = arith.maximumf %110, %111 : vector<8x512xf32>
    %c0_114 = arith.constant 0 : index
    %c1536_115 = arith.constant 1536 : index
    %113 = vector.load %arg14[%c0_114, %c1536_115] : memref<8x2048xf32, #tpu.memory_space<vmem>>, vector<8x512xf32>
    tpu.vector_store %arg14[%c0_114, %c1536_115], %112 {strides = array<i32>} : memref<8x2048xf32, #tpu.memory_space<vmem>>, vector<8x512xf32>,
    %c0_116 = arith.constant 0 : index
    %c0_117 = arith.constant 0 : index
    %114 = vector.load %arg14[%c0_116, %c0_117] : memref<8x2048xf32, #tpu.memory_space<vmem>>, vector<8x2048xf32>
    %115 = arith.truncf %114 : vector<8x2048xf32> to vector<8x2048xbf16>
    %c0_i32_118 = arith.constant 0 : i32
    %c0_i32_119 = arith.constant 0 : i32
    %c1_i32_120 = arith.constant 1 : i32
    %c0_i32_121 = arith.constant 0 : i32
    %c0_i32_122 = arith.constant 0 : i32
    %c0_i32_123 = arith.constant 0 : i32
    %116 = tpu.memref_slice %arg4[%c0_i32_118, %c0_i32_122, %c0_i32_123] : memref<2x2048x512xi8, #tpu.memory_space<any>> -> memref<1x2048x512xi8, #tpu.memory_space<any>>
    %117 = tpu.memref_squeeze %116 : memref<1x2048x512xi8, #tpu.memory_space<any>> -> memref<2048x512xi8, #tpu.memory_space<any>>
    %c0_i32_124 = arith.constant 0 : i32
    %c0_i32_125 = arith.constant 0 : i32
    %118 = tpu.memref_slice %arg18[%c0_i32_119, %c0_i32_124, %c0_i32_125] : memref<2x2048x512xi8, #tpu.memory_space<vmem>> -> memref<1x2048x512xi8, #tpu.memory_space<vmem>>
    %119 = tpu.memref_squeeze %118 : memref<1x2048x512xi8, #tpu.memory_space<vmem>> -> memref<2048x512xi8, #tpu.memory_space<vmem>>
    %120 = tpu.memref_slice %arg20[%c1_i32_120, %c0_i32_121] : memref<3x2x!tpu.dma_semaphore, #tpu.memory_space<semaphore_mem>> -> memref<1x1x!tpu.dma_semaphore, #tpu.memory_space<semaphore_mem>>
    %121 = tpu.memref_squeeze %120 : memref<1x1x!tpu.dma_semaphore, #tpu.memory_space<semaphore_mem>> -> memref<!tpu.dma_semaphore, #tpu.memory_space<semaphore_mem>>
    tpu.wait_dma2 semaphore(%121 : memref<!tpu.dma_semaphore, #tpu.memory_space<semaphore_mem>>) src(%117 : memref<2048x512xi8, #tpu.memory_space<any>>) dst(%119 : memref<2048x512xi8, #tpu.memory_space<vmem>>)
    %c1_i32_126 = arith.constant 1 : i32
    %c1_i32_127 = arith.constant 1 : i32
    %c1_i32_128 = arith.constant 1 : i32
    %c1_i32_129 = arith.constant 1 : i32
    %c0_i32_130 = arith.constant 0 : i32
    %c0_i32_131 = arith.constant 0 : i32
    %122 = tpu.memref_slice %arg4[%c1_i32_126, %c0_i32_130, %c0_i32_131] : memref<2x2048x512xi8, #tpu.memory_space<any>> -> memref<1x2048x512xi8, #tpu.memory_space<any>>
    %123 = tpu.memref_squeeze %122 : memref<1x2048x512xi8, #tpu.memory_space<any>> -> memref<2048x512xi8, #tpu.memory_space<any>>
    %c0_i32_132 = arith.constant 0 : i32
    %c0_i32_133 = arith.constant 0 : i32
    %124 = tpu.memref_slice %arg18[%c1_i32_127, %c0_i32_132, %c0_i32_133] : memref<2x2048x512xi8, #tpu.memory_space<vmem>> -> memref<1x2048x512xi8, #tpu.memory_space<vmem>>
    %125 = tpu.memref_squeeze %124 : memref<1x2048x512xi8, #tpu.memory_space<vmem>> -> memref<2048x512xi8, #tpu.memory_space<vmem>>
    %126 = tpu.memref_slice %arg20[%c1_i32_128, %c1_i32_129] : memref<3x2x!tpu.dma_semaphore, #tpu.memory_space<semaphore_mem>> -> memref<1x1x!tpu.dma_semaphore, #tpu.memory_space<semaphore_mem>>
    %127 = tpu.memref_squeeze %126 : memref<1x1x!tpu.dma_semaphore, #tpu.memory_space<semaphore_mem>> -> memref<!tpu.dma_semaphore, #tpu.memory_space<semaphore_mem>>
    tpu.enqueue_dma source(%123 : memref<2048x512xi8, #tpu.memory_space<any>>) target(%125 : memref<2048x512xi8, #tpu.memory_space<vmem>>) target_semaphore(%127 : memref<!tpu.dma_semaphore, #tpu.memory_space<semaphore_mem>>)
    %c0_134 = arith.constant 0 : index
    %c0_135 = arith.constant 0 : index
    %c0_136 = arith.constant 0 : index
    %128 = vector.load %arg18[%c0_134, %c0_135, %c0_136] : memref<2x2048x512xi8, #tpu.memory_space<vmem>>, vector<1x2048x512xi8>
    %129 = vector.shape_cast %128 : vector<1x2048x512xi8> to vector<2048x512xi8>
    %130 = arith.sitofp %129 : vector<2048x512xi8> to vector<2048x512xbf16>
    %cst_137 = arith.constant dense<0.000000e+00> : vector<8x512xf32>
    %131 = tpu.matmul %115, %130, %cst_137 {dimension_numbers = #tpu.dot_dimension_numbers<[1], [0], [0], [1], [0, 0, 1, 1], [], []>} : vector<8x2048xbf16>, vector<2048x512xbf16>, vector<8x512xf32> -> vector<8x512xf32>
    %c0_138 = arith.constant 0 : index
    %c0_139 = arith.constant 0 : index
    %132 = vector.load %arg5[%c0_138, %c0_139] : memref<1x1024xf32, #tpu.memory_space<vmem>>, vector<1x512xf32>
    %133 = vector.broadcast %132 : vector<1x512xf32> to vector<8x512xf32>
    %134 = arith.mulf %131, %133 : vector<8x512xf32>
    %c0_140 = arith.constant 0 : index
    %c0_141 = arith.constant 0 : index
    %135 = vector.load %arg6[%c0_140, %c0_141] : memref<1x1024xf32, #tpu.memory_space<vmem>>, vector<1x512xf32>
    %136 = vector.broadcast %135 : vector<1x512xf32> to vector<8x512xf32>
    %137 = arith.addf %134, %136 : vector<8x512xf32>
    %cst_142 = arith.constant 0.000000e+00 : f32
    %138 = vector.broadcast %cst_142 : f32 to vector<8x512xf32>
    %139 = arith.maximumf %137, %138 : vector<8x512xf32>
    %c0_143 = arith.constant 0 : index
    %c0_144 = arith.constant 0 : index
    %140 = vector.load %arg15[%c0_143, %c0_144] : memref<8x1024xf32, #tpu.memory_space<vmem>>, vector<8x512xf32>
    tpu.vector_store %arg15[%c0_143, %c0_144], %139 {strides = array<i32>} : memref<8x1024xf32, #tpu.memory_space<vmem>>, vector<8x512xf32>,
    %c1_i32_145 = arith.constant 1 : i32
    %c1_i32_146 = arith.constant 1 : i32
    %c1_i32_147 = arith.constant 1 : i32
    %c1_i32_148 = arith.constant 1 : i32
    %c0_i32_149 = arith.constant 0 : i32
    %c0_i32_150 = arith.constant 0 : i32
    %141 = tpu.memref_slice %arg4[%c1_i32_145, %c0_i32_149, %c0_i32_150] : memref<2x2048x512xi8, #tpu.memory_space<any>> -> memref<1x2048x512xi8, #tpu.memory_space<any>>
    %142 = tpu.memref_squeeze %141 : memref<1x2048x512xi8, #tpu.memory_space<any>> -> memref<2048x512xi8, #tpu.memory_space<any>>
    %c0_i32_151 = arith.constant 0 : i32
    %c0_i32_152 = arith.constant 0 : i32
    %143 = tpu.memref_slice %arg18[%c1_i32_146, %c0_i32_151, %c0_i32_152] : memref<2x2048x512xi8, #tpu.memory_space<vmem>> -> memref<1x2048x512xi8, #tpu.memory_space<vmem>>
    %144 = tpu.memref_squeeze %143 : memref<1x2048x512xi8, #tpu.memory_space<vmem>> -> memref<2048x512xi8, #tpu.memory_space<vmem>>
    %145 = tpu.memref_slice %arg20[%c1_i32_147, %c1_i32_148] : memref<3x2x!tpu.dma_semaphore, #tpu.memory_space<semaphore_mem>> -> memref<1x1x!tpu.dma_semaphore, #tpu.memory_space<semaphore_mem>>
    %146 = tpu.memref_squeeze %145 : memref<1x1x!tpu.dma_semaphore, #tpu.memory_space<semaphore_mem>> -> memref<!tpu.dma_semaphore, #tpu.memory_space<semaphore_mem>>
    tpu.wait_dma2 semaphore(%146 : memref<!tpu.dma_semaphore, #tpu.memory_space<semaphore_mem>>) src(%142 : memref<2048x512xi8, #tpu.memory_space<any>>) dst(%144 : memref<2048x512xi8, #tpu.memory_space<vmem>>)
    %c1_153 = arith.constant 1 : index
    %c0_154 = arith.constant 0 : index
    %c0_155 = arith.constant 0 : index
    %147 = vector.load %arg18[%c1_153, %c0_154, %c0_155] : memref<2x2048x512xi8, #tpu.memory_space<vmem>>, vector<1x2048x512xi8>
    %148 = vector.shape_cast %147 : vector<1x2048x512xi8> to vector<2048x512xi8>
    %149 = arith.sitofp %148 : vector<2048x512xi8> to vector<2048x512xbf16>
    %cst_156 = arith.constant dense<0.000000e+00> : vector<8x512xf32>
    %150 = tpu.matmul %115, %149, %cst_156 {dimension_numbers = #tpu.dot_dimension_numbers<[1], [0], [0], [1], [0, 0, 1, 1], [], []>} : vector<8x2048xbf16>, vector<2048x512xbf16>, vector<8x512xf32> -> vector<8x512xf32>
    %c0_157 = arith.constant 0 : index
    %c512_158 = arith.constant 512 : index
    %151 = vector.load %arg5[%c0_157, %c512_158] : memref<1x1024xf32, #tpu.memory_space<vmem>>, vector<1x512xf32>
    %152 = vector.broadcast %151 : vector<1x512xf32> to vector<8x512xf32>
    %153 = arith.mulf %150, %152 : vector<8x512xf32>
    %c0_159 = arith.constant 0 : index
    %c512_160 = arith.constant 512 : index
    %154 = vector.load %arg6[%c0_159, %c512_160] : memref<1x1024xf32, #tpu.memory_space<vmem>>, vector<1x512xf32>
    %155 = vector.broadcast %154 : vector<1x512xf32> to vector<8x512xf32>
    %156 = arith.addf %153, %155 : vector<8x512xf32>
    %cst_161 = arith.constant 0.000000e+00 : f32
    %157 = vector.broadcast %cst_161 : f32 to vector<8x512xf32>
    %158 = arith.maximumf %156, %157 : vector<8x512xf32>
    %c0_162 = arith.constant 0 : index
    %c512_163 = arith.constant 512 : index
    %159 = vector.load %arg15[%c0_162, %c512_163] : memref<8x1024xf32, #tpu.memory_space<vmem>>, vector<8x512xf32>
    tpu.vector_store %arg15[%c0_162, %c512_163], %158 {strides = array<i32>} : memref<8x1024xf32, #tpu.memory_space<vmem>>, vector<8x512xf32>,
    %c0_164 = arith.constant 0 : index
    %c0_165 = arith.constant 0 : index
    %160 = vector.load %arg15[%c0_164, %c0_165] : memref<8x1024xf32, #tpu.memory_space<vmem>>, vector<8x1024xf32>
    %161 = arith.truncf %160 : vector<8x1024xf32> to vector<8x1024xbf16>
    %c0_i32_166 = arith.constant 0 : i32
    %c0_i32_167 = arith.constant 0 : i32
    %c2_i32_168 = arith.constant 2 : i32
    %c0_i32_169 = arith.constant 0 : i32
    %c0_i32_170 = arith.constant 0 : i32
    %c0_i32_171 = arith.constant 0 : i32
    %162 = tpu.memref_slice %arg7[%c0_i32_166, %c0_i32_170, %c0_i32_171] : memref<2x1024x512xi8, #tpu.memory_space<any>> -> memref<1x1024x512xi8, #tpu.memory_space<any>>
    %163 = tpu.memref_squeeze %162 : memref<1x1024x512xi8, #tpu.memory_space<any>> -> memref<1024x512xi8, #tpu.memory_space<any>>
    %c0_i32_172 = arith.constant 0 : i32
    %c0_i32_173 = arith.constant 0 : i32
    %164 = tpu.memref_slice %arg19[%c0_i32_167, %c0_i32_172, %c0_i32_173] : memref<2x1024x512xi8, #tpu.memory_space<vmem>> -> memref<1x1024x512xi8, #tpu.memory_space<vmem>>
    %165 = tpu.memref_squeeze %164 : memref<1x1024x512xi8, #tpu.memory_space<vmem>> -> memref<1024x512xi8, #tpu.memory_space<vmem>>
    %166 = tpu.memref_slice %arg20[%c2_i32_168, %c0_i32_169] : memref<3x2x!tpu.dma_semaphore, #tpu.memory_space<semaphore_mem>> -> memref<1x1x!tpu.dma_semaphore, #tpu.memory_space<semaphore_mem>>
    %167 = tpu.memref_squeeze %166 : memref<1x1x!tpu.dma_semaphore, #tpu.memory_space<semaphore_mem>> -> memref<!tpu.dma_semaphore, #tpu.memory_space<semaphore_mem>>
    tpu.wait_dma2 semaphore(%167 : memref<!tpu.dma_semaphore, #tpu.memory_space<semaphore_mem>>) src(%163 : memref<1024x512xi8, #tpu.memory_space<any>>) dst(%165 : memref<1024x512xi8, #tpu.memory_space<vmem>>)
    %c1_i32_174 = arith.constant 1 : i32
    %c1_i32_175 = arith.constant 1 : i32
    %c2_i32_176 = arith.constant 2 : i32
    %c1_i32_177 = arith.constant 1 : i32
    %c0_i32_178 = arith.constant 0 : i32
    %c0_i32_179 = arith.constant 0 : i32
    %168 = tpu.memref_slice %arg7[%c1_i32_174, %c0_i32_178, %c0_i32_179] : memref<2x1024x512xi8, #tpu.memory_space<any>> -> memref<1x1024x512xi8, #tpu.memory_space<any>>
    %169 = tpu.memref_squeeze %168 : memref<1x1024x512xi8, #tpu.memory_space<any>> -> memref<1024x512xi8, #tpu.memory_space<any>>
    %c0_i32_180 = arith.constant 0 : i32
    %c0_i32_181 = arith.constant 0 : i32
    %170 = tpu.memref_slice %arg19[%c1_i32_175, %c0_i32_180, %c0_i32_181] : memref<2x1024x512xi8, #tpu.memory_space<vmem>> -> memref<1x1024x512xi8, #tpu.memory_space<vmem>>
    %171 = tpu.memref_squeeze %170 : memref<1x1024x512xi8, #tpu.memory_space<vmem>> -> memref<1024x512xi8, #tpu.memory_space<vmem>>
    %172 = tpu.memref_slice %arg20[%c2_i32_176, %c1_i32_177] : memref<3x2x!tpu.dma_semaphore, #tpu.memory_space<semaphore_mem>> -> memref<1x1x!tpu.dma_semaphore, #tpu.memory_space<semaphore_mem>>
    %173 = tpu.memref_squeeze %172 : memref<1x1x!tpu.dma_semaphore, #tpu.memory_space<semaphore_mem>> -> memref<!tpu.dma_semaphore, #tpu.memory_space<semaphore_mem>>
    tpu.enqueue_dma source(%169 : memref<1024x512xi8, #tpu.memory_space<any>>) target(%171 : memref<1024x512xi8, #tpu.memory_space<vmem>>) target_semaphore(%173 : memref<!tpu.dma_semaphore, #tpu.memory_space<semaphore_mem>>)
    %c0_182 = arith.constant 0 : index
    %c0_183 = arith.constant 0 : index
    %c0_184 = arith.constant 0 : index
    %174 = vector.load %arg19[%c0_182, %c0_183, %c0_184] : memref<2x1024x512xi8, #tpu.memory_space<vmem>>, vector<1x1024x512xi8>
    %175 = vector.shape_cast %174 : vector<1x1024x512xi8> to vector<1024x512xi8>
    %176 = arith.sitofp %175 : vector<1024x512xi8> to vector<1024x512xbf16>
    %cst_185 = arith.constant dense<0.000000e+00> : vector<8x512xf32>
    %177 = tpu.matmul %161, %176, %cst_185 {dimension_numbers = #tpu.dot_dimension_numbers<[1], [0], [0], [1], [0, 0, 1, 1], [], []>} : vector<8x1024xbf16>, vector<1024x512xbf16>, vector<8x512xf32> -> vector<8x512xf32>
    %c0_186 = arith.constant 0 : index
    %c0_187 = arith.constant 0 : index
    %178 = vector.load %arg8[%c0_186, %c0_187] : memref<1x1024xf32, #tpu.memory_space<vmem>>, vector<1x512xf32>
    %179 = vector.broadcast %178 : vector<1x512xf32> to vector<8x512xf32>
    %180 = arith.mulf %177, %179 : vector<8x512xf32>
    %c0_188 = arith.constant 0 : index
    %c0_189 = arith.constant 0 : index
    %181 = vector.load %arg9[%c0_188, %c0_189] : memref<1x1024xf32, #tpu.memory_space<vmem>>, vector<1x512xf32>
    %182 = vector.broadcast %181 : vector<1x512xf32> to vector<8x512xf32>
    %183 = arith.addf %180, %182 : vector<8x512xf32>
    %cst_190 = arith.constant 0.000000e+00 : f32
    %184 = vector.broadcast %cst_190 : f32 to vector<8x512xf32>
    %185 = arith.maximumf %183, %184 : vector<8x512xf32>
    %c0_191 = arith.constant 0 : index
    %c0_192 = arith.constant 0 : index
    %186 = vector.load %arg16[%c0_191, %c0_192] : memref<8x1024xf32, #tpu.memory_space<vmem>>, vector<8x512xf32>
    tpu.vector_store %arg16[%c0_191, %c0_192], %185 {strides = array<i32>} : memref<8x1024xf32, #tpu.memory_space<vmem>>, vector<8x512xf32>,
    %c1_i32_193 = arith.constant 1 : i32
    %c1_i32_194 = arith.constant 1 : i32
    %c2_i32_195 = arith.constant 2 : i32
    %c1_i32_196 = arith.constant 1 : i32
    %c0_i32_197 = arith.constant 0 : i32
    %c0_i32_198 = arith.constant 0 : i32
    %187 = tpu.memref_slice %arg7[%c1_i32_193, %c0_i32_197, %c0_i32_198] : memref<2x1024x512xi8, #tpu.memory_space<any>> -> memref<1x1024x512xi8, #tpu.memory_space<any>>
    %188 = tpu.memref_squeeze %187 : memref<1x1024x512xi8, #tpu.memory_space<any>> -> memref<1024x512xi8, #tpu.memory_space<any>>
    %c0_i32_199 = arith.constant 0 : i32
    %c0_i32_200 = arith.constant 0 : i32
    %189 = tpu.memref_slice %arg19[%c1_i32_194, %c0_i32_199, %c0_i32_200] : memref<2x1024x512xi8, #tpu.memory_space<vmem>> -> memref<1x1024x512xi8, #tpu.memory_space<vmem>>
    %190 = tpu.memref_squeeze %189 : memref<1x1024x512xi8, #tpu.memory_space<vmem>> -> memref<1024x512xi8, #tpu.memory_space<vmem>>
    %191 = tpu.memref_slice %arg20[%c2_i32_195, %c1_i32_196] : memref<3x2x!tpu.dma_semaphore, #tpu.memory_space<semaphore_mem>> -> memref<1x1x!tpu.dma_semaphore, #tpu.memory_space<semaphore_mem>>
    %192 = tpu.memref_squeeze %191 : memref<1x1x!tpu.dma_semaphore, #tpu.memory_space<semaphore_mem>> -> memref<!tpu.dma_semaphore, #tpu.memory_space<semaphore_mem>>
    tpu.wait_dma2 semaphore(%192 : memref<!tpu.dma_semaphore, #tpu.memory_space<semaphore_mem>>) src(%188 : memref<1024x512xi8, #tpu.memory_space<any>>) dst(%190 : memref<1024x512xi8, #tpu.memory_space<vmem>>)
    %c1_201 = arith.constant 1 : index
    %c0_202 = arith.constant 0 : index
    %c0_203 = arith.constant 0 : index
    %193 = vector.load %arg19[%c1_201, %c0_202, %c0_203] : memref<2x1024x512xi8, #tpu.memory_space<vmem>>, vector<1x1024x512xi8>
    %194 = vector.shape_cast %193 : vector<1x1024x512xi8> to vector<1024x512xi8>
    %195 = arith.sitofp %194 : vector<1024x512xi8> to vector<1024x512xbf16>
    %cst_204 = arith.constant dense<0.000000e+00> : vector<8x512xf32>
    %196 = tpu.matmul %161, %195, %cst_204 {dimension_numbers = #tpu.dot_dimension_numbers<[1], [0], [0], [1], [0, 0, 1, 1], [], []>} : vector<8x1024xbf16>, vector<1024x512xbf16>, vector<8x512xf32> -> vector<8x512xf32>
    %c0_205 = arith.constant 0 : index
    %c512_206 = arith.constant 512 : index
    %197 = vector.load %arg8[%c0_205, %c512_206] : memref<1x1024xf32, #tpu.memory_space<vmem>>, vector<1x512xf32>
    %198 = vector.broadcast %197 : vector<1x512xf32> to vector<8x512xf32>
    %199 = arith.mulf %196, %198 : vector<8x512xf32>
    %c0_207 = arith.constant 0 : index
    %c512_208 = arith.constant 512 : index
    %200 = vector.load %arg9[%c0_207, %c512_208] : memref<1x1024xf32, #tpu.memory_space<vmem>>, vector<1x512xf32>
    %201 = vector.broadcast %200 : vector<1x512xf32> to vector<8x512xf32>
    %202 = arith.addf %199, %201 : vector<8x512xf32>
    %cst_209 = arith.constant 0.000000e+00 : f32
    %203 = vector.broadcast %cst_209 : f32 to vector<8x512xf32>
    %204 = arith.maximumf %202, %203 : vector<8x512xf32>
    %c0_210 = arith.constant 0 : index
    %c512_211 = arith.constant 512 : index
    %205 = vector.load %arg16[%c0_210, %c512_211] : memref<8x1024xf32, #tpu.memory_space<vmem>>, vector<8x512xf32>
    tpu.vector_store %arg16[%c0_210, %c512_211], %204 {strides = array<i32>} : memref<8x1024xf32, #tpu.memory_space<vmem>>, vector<8x512xf32>,
    %c0_212 = arith.constant 0 : index
    %c0_213 = arith.constant 0 : index
    %206 = vector.load %arg16[%c0_212, %c0_213] : memref<8x1024xf32, #tpu.memory_space<vmem>>, vector<8x1024xf32>
    %207 = arith.truncf %206 : vector<8x1024xf32> to vector<8x1024xbf16>
    %c0_214 = arith.constant 0 : index
    %c0_215 = arith.constant 0 : index
    %208 = vector.load %arg10[%c0_214, %c0_215] : memref<1024x128xi8, #tpu.memory_space<vmem>>, vector<1024x128xi8>
    %209 = arith.sitofp %208 : vector<1024x128xi8> to vector<1024x128xbf16>
    %cst_216 = arith.constant dense<0.000000e+00> : vector<8x128xf32>
    %210 = tpu.matmul %207, %209, %cst_216 {dimension_numbers = #tpu.dot_dimension_numbers<[1], [0], [0], [1], [0, 0, 1, 1], [], []>} : vector<8x1024xbf16>, vector<1024x128xbf16>, vector<8x128xf32> -> vector<8x128xf32>
    %c0_217 = arith.constant 0 : index
    %c0_218 = arith.constant 0 : index
    %211 = vector.load %arg11[%c0_217, %c0_218] : memref<1x128xf32, #tpu.memory_space<vmem>>, vector<1x128xf32>
    %212 = vector.broadcast %211 : vector<1x128xf32> to vector<8x128xf32>
    %213 = arith.mulf %210, %212 : vector<8x128xf32>
    %c0_219 = arith.constant 0 : index
    %c0_220 = arith.constant 0 : index
    %214 = vector.load %arg12[%c0_219, %c0_220] : memref<1x128xf32, #tpu.memory_space<vmem>>, vector<1x128xf32>
    %215 = vector.broadcast %214 : vector<1x128xf32> to vector<8x128xf32>
    %216 = arith.addf %213, %215 : vector<8x128xf32>
    %cst_221 = arith.constant dense<0xFF800000> : vector<8xf32>
    %217 = vector.multi_reduction <maximumf>, %216, %cst_221 [1] : vector<8x128xf32> to vector<8xf32>
    %218 = vector.shape_cast %217 : vector<8xf32> to vector<8x1xf32>
    %219 = vector.broadcast %218 : vector<8x1xf32> to vector<8x128xf32>
    %220 = arith.subf %216, %219 : vector<8x128xf32>
    %221 = math.exp %220 : vector<8x128xf32>
    %cst_222 = arith.constant dense<0.000000e+00> : vector<8xf32>
    %222 = vector.multi_reduction <add>, %221, %cst_222 [1] : vector<8x128xf32> to vector<8xf32>
    %223 = vector.shape_cast %222 : vector<8xf32> to vector<8x1xf32>
    %224 = vector.broadcast %223 : vector<8x1xf32> to vector<8x128xf32>
    %225 = arith.divf %221, %224 : vector<8x128xf32>
    %c0_223 = arith.constant 0 : index
    %c0_224 = arith.constant 0 : index
    %226 = vector.load %arg13[%c0_223, %c0_224] : memref<8x128xf32, #tpu.memory_space<vmem>>, vector<8x128xf32>
    tpu.vector_store %arg13[%c0_223, %c0_224], %225 {strides = array<i32>} : memref<8x128xf32, #tpu.memory_space<vmem>>, vector<8x128xf32>,
    return
  }
}

</mosaic_0001>

<llo_original>
// kernel: adversarial_forward.1
$region0: #{adversarial_forward.1}
  #allocation0 [shape = 'u32[]', space=smem, size = 0x4, offset = 0x4, fixed_abs, tag = 'smem constant byte address 0x4 - core index']
  #allocation1 [shape = 'u32[144,128]{1,0:T(1,128)}', space=vmem, size = 0x12000, scoped, tag = 'internal scratch']
  #allocation2 [shape = 'f32[8,2048]{1,0:T(8,128)}', space=vmem, size = 0x10000, scoped, tag = 'scratch operand']
  #allocation3 [shape = 'f32[8,1024]{1,0:T(8,128)}', space=vmem, size = 0x8000, scoped, tag = 'scratch operand']
  #allocation4 [shape = 'f32[8,1024]{1,0:T(8,128)}', space=vmem, size = 0x8000, scoped, tag = 'scratch operand']
  #allocation5 [shape = 's8[2,896,512]{2,1,0:T(32,128)(4,1)}', space=vmem, size = 0xe0000, scoped, tag = 'scratch operand']
  #allocation6 [shape = 's8[2,2048,512]{2,1,0:T(32,128)(4,1)}', space=vmem, size = 0x200000, scoped, tag = 'scratch operand']
  #allocation7 [shape = 's8[2,1024,512]{2,1,0:T(32,128)(4,1)}', space=vmem, size = 0x100000, scoped, tag = 'scratch operand']
  #allocation8 [shape = 's32[6]{0}', space=sflag, size = 0x18, scoped, tag = 'scratch operand']
  #allocation25 [shape = 's32[]', space=sflag, size = 0x4, offset = 0, fixed_abs, tag = 'sflag constant byte address 0x0 - dummy sync flag']
  #allocation26 [shape = 's32[]', space=sflag, size = 0x4, offset = 0, fixed_abs, tag = 'sflag constant byte address 0x0 - dummy sync flag']
  #allocation27 [shape = 'u32[]', space=smem, size = 0x4, offset = 0x44, fixed_abs, tag = 'smem constant byte address 0x44 - assertion arg 0']
  #allocation28 [shape = 'u32[]', space=smem, size = 0x4, offset = 0x48, fixed_abs, tag = 'smem constant byte address 0x48 - assertion arg 1']
  #allocation29 [shape = 's32[]', space=sflag, size = 0x4, offset = 0, fixed_abs, tag = 'sflag constant byte address 0x0 - dummy sync flag']
  #allocation30 [shape = 's32[]', space=sflag, size = 0x4, offset = 0, fixed_abs, tag = 'sflag constant byte address 0x0 - dummy sync flag']
  #allocation31 [shape = 's32[]', space=sflag, size = 0x4, offset = 0, fixed_abs, tag = 'sflag constant byte address 0x0 - dummy sync flag']
  #allocation32 [shape = 's32[]', space=sflag, size = 0x4, offset = 0, fixed_abs, tag = 'sflag constant byte address 0x0 - dummy sync flag']
  #allocation33 [shape = 's32[]', space=sflag, size = 0x4, offset = 0, fixed_abs, tag = 'sflag constant byte address 0x0 - dummy sync flag']
  #allocation34 [shape = 's32[]', space=sflag, size = 0x4, offset = 0, fixed_abs, tag = 'sflag constant byte address 0x0 - dummy sync flag']
  #allocation35 [shape = 's32[]', space=sflag, size = 0x4, offset = 0, fixed_abs, tag = 'sflag constant byte address 0x0 - dummy sync flag']
  #allocation36 [shape = 's32[]', space=sflag, size = 0x4, offset = 0, fixed_abs, tag = 'sflag constant byte address 0x0 - dummy sync flag']
  #allocation37 [shape = 's32[]', space=sflag, size = 0x4, offset = 0, fixed_abs, tag = 'sflag constant byte address 0x0 - dummy sync flag']
  #allocation38 [shape = 's32[]', space=sflag, size = 0x4, offset = 0, fixed_abs, tag = 'sflag constant byte address 0x0 - dummy sync flag']
  #allocation39 [shape = 's32[]', space=sflag, size = 0x4, offset = 0, fixed_abs, tag = 'sflag constant byte address 0x0 - dummy sync flag']
  #allocation40 [shape = 's32[]', space=sflag, size = 0x4, offset = 0, fixed_abs, tag = 'sflag constant byte address 0x0 - dummy sync flag']
  #allocation41 [shape = 's32[]', space=sflag, size = 0x4, offset = 0, fixed_abs, tag = 'sflag constant byte address 0x0 - dummy sync flag']
  #allocation42 [shape = 's32[]', space=sflag, size = 0x4, offset = 0, fixed_abs, tag = 'sflag constant byte address 0x0 - dummy sync flag']
  %s0 = inlined_call_operand.vmem [shape: f32[8,896], index: 0, kind: input, shape index: {}]
  %s1 = inlined_call_operand.hbm [shape: s8[4,896,512], index: 1, kind: input, shape index: {}]
  %s2 = inlined_call_operand.hbm [shape: f32[1,2048], index: 2, kind: input, shape index: {}]
  %s3 = inlined_call_operand.hbm [shape: f32[1,2048], index: 3, kind: input, shape index: {}]
  %s4 = inlined_call_operand.hbm [shape: s8[2,2048,512], index: 4, kind: input, shape index: {}]
  %s5 = inlined_call_operand.hbm [shape: f32[1,1024], index: 5, kind: input, shape index: {}]
  %s6 = inlined_call_operand.hbm [shape: f32[1,1024], index: 6, kind: input, shape index: {}]
  %s7 = inlined_call_operand.hbm [shape: s8[2,1024,512], index: 7, kind: input, shape index: {}]
  %s8 = inlined_call_operand.hbm [shape: f32[1,1024], index: 8, kind: input, shape index: {}]
  %s9 = inlined_call_operand.hbm [shape: f32[1,1024], index: 9, kind: input, shape index: {}]
  %s10 = inlined_call_operand.hbm [shape: s8[1024,128], index: 10, kind: input, shape index: {}]
  %s11 = inlined_call_operand.hbm [shape: f32[1,128], index: 11, kind: input, shape index: {}]
  %s12 = inlined_call_operand.hbm [shape: f32[1,128], index: 12, kind: input, shape index: {}]
  %s13 = inlined_call_operand.hbm [shape: f32[8,128], index: 13, kind: output, shape index: {}]
  %s14 = sld [smem:[#allocation0]]
  $region118: #{adversarial_forward.1} parent=0
    _
  %s16 = ssub.s32 1, %s14
  %s17 = scalar_select 0, %s16, %s14
  $region1: #{adversarial_forward.1} parent=0
    #allocation9 [shape = 'u8[8192]{0}', space=vmem, size = 0x2000, scoped, tag = 'input window, operand 2, single buffered']
    #allocation10 [shape = 's32[1]{0}', space=sflag, size = 0x4, scoped, tag = 'scoped memory for adversarial_forward.1']
    #allocation11 [shape = 's32[1]{0}', space=sflag, size = 0x4, scoped, tag = 'scoped memory for adversarial_forward.1']
    #allocation12 [shape = 'u8[8192]{0}', space=vmem, size = 0x2000, scoped, tag = 'input window, operand 3, single buffered']
    #allocation13 [shape = 's32[1]{0}', space=sflag, size = 0x4, scoped, tag = 'scoped memory for adversarial_forward.1']
    #allocation14 [shape = 'u8[4096]{0}', space=vmem, size = 0x1000, scoped, tag = 'input window, operand 5, single buffered']
    #allocation15 [shape = 'u8[4096]{0}', space=vmem, size = 0x1000, scoped, tag = 'input window, operand 6, single buffered']
    #allocation16 [shape = 's32[1]{0}', space=sflag, size = 0x4, scoped, tag = 'scoped memory for adversarial_forward.1']
    #allocation17 [shape = 'u8[4096]{0}', space=vmem, size = 0x1000, scoped, tag = 'input window, operand 8, single buffered']
    #allocation18 [shape = 'u8[4096]{0}', space=vmem, size = 0x1000, scoped, tag = 'input window, operand 9, single buffered']
    #allocation19 [shape = 's32[1]{0}', space=sflag, size = 0x4, scoped, tag = 'scoped memory for adversarial_forward.1']
    #allocation20 [shape = 'u8[131072]{0}', space=vmem, size = 0x20000, scoped, tag = 'input window, operand 10, single buffered']
    #allocation21 [shape = 'u8[512]{0}', space=vmem, size = 0x400, scoped, tag = 'input window, operand 11, single buffered']
    #allocation22 [shape = 's32[1]{0}', space=sflag, size = 0x4, scoped, tag = 'scoped memory for adversarial_forward.1']
    #allocation23 [shape = 'u8[512]{0}', space=vmem, size = 0x400, scoped, tag = 'input window, operand 12, single buffered']
    #allocation24 [shape = 'u8[4096]{0}', space=vmem, size = 0x1000, scoped, tag = 'output window, operand 0, single buffered']
    %18 = vsyncpa [#allocation10], 0
    %19 = vsyncpa [#allocation13], 0
    %20 = vsyncpa [#allocation16], 0
    %21 = vsyncpa [#allocation19], 0
    %22 = vsyncpa [#allocation22], 0
    %23 = vsyncpa [#allocation11], 0
    // Predicated region
    $region2: #{adversarial_forward.1} parent=1 // pred_check
      _
    $region3: #{adversarial_forward.1} parent=1 // pred_check_branch
      %25 = sbr.rel (0) target = $region5
    $region4: #{adversarial_forward.1} parent=1 // pred_region
      _
    $region5: #{adversarial_forward.1} parent=1 // pred_fallthru
      _
    // Predicated region
    $region6: #{adversarial_forward.1} parent=1 // pred_check
      _
    $region7: #{adversarial_forward.1} parent=1 // pred_check_branch
      %27 = sbr.rel (0) target = $region9
    $region8: #{adversarial_forward.1} parent=1 // pred_region
      %s29 = ssub.s32 256, 256
      %30 = vsyncadd [#allocation10], %s29
      %s32 = sshll.u32 [#allocation9], 4
      %s33 = int_to_ptr.vmem [resolvable:$true] %s32
      %35 = dma.hbm_to_vmem [thread:$0]  %s2, 256, %s33, [#allocation10]
    $region9: #{adversarial_forward.1} parent=1 // pred_fallthru
      _
    // Predicated region
    $region10: #{adversarial_forward.1} parent=1 // pred_check
      _
    $region11: #{adversarial_forward.1} parent=1 // pred_check_branch
      %37 = sbr.rel (0) target = $region13
    $region12: #{adversarial_forward.1} parent=1 // pred_region
      %s39 = ssub.s32 256, 256
      %40 = vsyncadd [#allocation13], %s39
      %s42 = sshll.u32 [#allocation12], 4
      %s43 = int_to_ptr.vmem [resolvable:$true] %s42
      %45 = dma.hbm_to_vmem [thread:$0]  %s3, 256, %s43, [#allocation13]
    $region13: #{adversarial_forward.1} parent=1 // pred_fallthru
      _
    // Predicated region
    $region14: #{adversarial_forward.1} parent=1 // pred_check
      _
    $region15: #{adversarial_forward.1} parent=1 // pred_check_branch
      %47 = sbr.rel (0) target = $region17
    $region16: #{adversarial_forward.1} parent=1 // pred_region
      %s49 = ssub.s32 128, 128
      %50 = vsyncadd [#allocation13], %s49
      %s52 = sshll.u32 [#allocation14], 4
      %s53 = int_to_ptr.vmem [resolvable:$true] %s52
      %55 = dma.hbm_to_vmem [thread:$0]  %s5, 128, %s53, [#allocation13]
    $region17: #{adversarial_forward.1} parent=1 // pred_fallthru
      _
    // Predicated region
    $region18: #{adversarial_forward.1} parent=1 // pred_check
      _
    $region19: #{adversarial_forward.1} parent=1 // pred_check_branch
      %57 = sbr.rel (0) target = $region21
    $region20: #{adversarial_forward.1} parent=1 // pred_region
      %s59 = ssub.s32 128, 128
      %60 = vsyncadd [#allocation16], %s59
      %s62 = sshll.u32 [#allocation15], 4
      %s63 = int_to_ptr.vmem [resolvable:$true] %s62
      %65 = dma.hbm_to_vmem [thread:$0]  %s6, 128, %s63, [#allocation16]
    $region21: #{adversarial_forward.1} parent=1 // pred_fallthru
      _
    // Predicated region
    $region22: #{adversarial_forward.1} parent=1 // pred_check
      _
    $region23: #{adversarial_forward.1} parent=1 // pred_check_branch
      %67 = sbr.rel (0) target = $region25
    $region24: #{adversarial_forward.1} parent=1 // pred_region
      %s69 = ssub.s32 128, 128
      %70 = vsyncadd [#allocation16], %s69
      %s72 = sshll.u32 [#allocation17], 4
      %s73 = int_to_ptr.vmem [resolvable:$true] %s72
      %75 = dma.hbm_to_vmem [thread:$0]  %s8, 128, %s73, [#allocation16]
    $region25: #{adversarial_forward.1} parent=1 // pred_fallthru
      _
    // Predicated region
    $region26: #{adversarial_forward.1} parent=1 // pred_check
      _
    $region27: #{adversarial_forward.1} parent=1 // pred_check_branch
      %77 = sbr.rel (0) target = $region29
    $region28: #{adversarial_forward.1} parent=1 // pred_region
      %s79 = ssub.s32 128, 128
      %80 = vsyncadd [#allocation19], %s79
      %s82 = sshll.u32 [#allocation18], 4
      %s83 = int_to_ptr.vmem [resolvable:$true] %s82
      %85 = dma.hbm_to_vmem [thread:$0]  %s9, 128, %s83, [#allocation19]
    $region29: #{adversarial_forward.1} parent=1 // pred_fallthru
      _
    // Predicated region
    $region30: #{adversarial_forward.1} parent=1 // pred_check
      _
    $region31: #{adversarial_forward.1} parent=1 // pred_check_branch
      %87 = sbr.rel (0) target = $region33
    $region32: #{adversarial_forward.1} parent=1 // pred_region
      %s89 = ssub.s32 4096, 4096
      %90 = vsyncadd [#allocation19], %s89
      %s91 = sshll.u32 [#allocation20], 4
      %s92 = int_to_ptr.vmem [resolvable:$true] %s91
      %97 = dma.hbm_to_vmem [thread:$0]  %s10, 4096, %s92, [#allocation19], 128, 128, 8
    $region33: #{adversarial_forward.1} parent=1 // pred_fallthru
      _
    // Predicated region
    $region34: #{adversarial_forward.1} parent=1 // pred_check
      _
    $region35: #{adversarial_forward.1} parent=1 // pred_check_branch
      %99 = sbr.rel (0) target = $region37
    $region36: #{adversarial_forward.1} parent=1 // pred_region
      %s101 = ssub.s32 16, 16
      %102 = vsyncadd [#allocation22], %s101
      %s104 = sshll.u32 [#allocation21], 4
      %s105 = int_to_ptr.vmem [resolvable:$true] %s104
      %107 = dma.hbm_to_vmem [thread:$0]  %s11, 16, %s105, [#allocation22]
    $region37: #{adversarial_forward.1} parent=1 // pred_fallthru
      _
    // Predicated region
    $region38: #{adversarial_forward.1} parent=1 // pred_check
      _
    $region39: #{adversarial_forward.1} parent=1 // pred_check_branch
      %109 = sbr.rel (0) target = $region41
    $region40: #{adversarial_forward.1} parent=1 // pred_region
      %s111 = ssub.s32 16, 16
      %112 = vsyncadd [#allocation22], %s111
      %s114 = sshll.u32 [#allocation23], 4
      %s115 = int_to_ptr.vmem [resolvable:$true] %s114
      %117 = dma.hbm_to_vmem [thread:$0]  %s12, 16, %s115, [#allocation22]
    $region41: #{adversarial_forward.1} parent=1 // pred_fallthru
      _
    // Predicated region
    $region42: #{adversarial_forward.1} parent=1 // pred_check
      _
    $region43: #{adversarial_forward.1} parent=1 // pred_check_branch
      %119 = sbr.rel (0) target = $region45
    $region44: #{adversarial_forward.1} parent=1 // pred_region
      %120 = dma.done [#allocation10], 256
    $region45: #{adversarial_forward.1} parent=1 // pred_fallthru
      _
    // Predicated region
    $region46: #{adversarial_forward.1} parent=1 // pred_check
      _
    $region47: #{adversarial_forward.1} parent=1 // pred_check_branch
      %122 = sbr.rel (0) target = $region49
    $region48: #{adversarial_forward.1} parent=1 // pred_region
      %123 = dma.done [#allocation13], 256
    $region49: #{adversarial_forward.1} parent=1 // pred_fallthru
      _
    // Predicated region
    $region50: #{adversarial_forward.1} parent=1 // pred_check
      _
    $region51: #{adversarial_forward.1} parent=1 // pred_check_branch
      %125 = sbr.rel (0) target = $region53
    $region52: #{adversarial_forward.1} parent=1 // pred_region
      %126 = dma.done [#allocation13], 128
    $region53: #{adversarial_forward.1} parent=1 // pred_fallthru
      _
    // Predicated region
    $region54: #{adversarial_forward.1} parent=1 // pred_check
      _
    $region55: #{adversarial_forward.1} parent=1 // pred_check_branch
      %128 = sbr.rel (0) target = $region57
    $region56: #{adversarial_forward.1} parent=1 // pred_region
      %129 = dma.done [#allocation16], 128
    $region57: #{adversarial_forward.1} parent=1 // pred_fallthru
      _
    // Predicated region
    $region58: #{adversarial_forward.1} parent=1 // pred_check
      _
    $region59: #{adversarial_forward.1} parent=1 // pred_check_branch
      %131 = sbr.rel (0) target = $region61
    $region60: #{adversarial_forward.1} parent=1 // pred_region
      %132 = dma.done [#allocation16], 128
    $region61: #{adversarial_forward.1} parent=1 // pred_fallthru
      _
    // Predicated region
    $region62: #{adversarial_forward.1} parent=1 // pred_check
      _
    $region63: #{adversarial_forward.1} parent=1 // pred_check_branch
      %134 = sbr.rel (0) target = $region65
    $region64: #{adversarial_forward.1} parent=1 // pred_region
      %135 = dma.done [#allocation19], 128
    $region65: #{adversarial_forward.1} parent=1 // pred_fallthru
      _
    // Predicated region
    $region66: #{adversarial_forward.1} parent=1 // pred_check
      _
    $region67: #{adversarial_forward.1} parent=1 // pred_check_branch
      %137 = sbr.rel (0) target = $region69
    $region68: #{adversarial_forward.1} parent=1 // pred_region
      %138 = dma.done [#allocation19], 4096
    $region69: #{adversarial_forward.1} parent=1 // pred_fallthru
      _
    // Predicated region
    $region70: #{adversarial_forward.1} parent=1 // pred_check
      _
    $region71: #{adversarial_forward.1} parent=1 // pred_check_branch
      %140 = sbr.rel (0) target = $region73
    $region72: #{adversarial_forward.1} parent=1 // pred_region
      %141 = dma.done [#allocation22], 16
    $region73: #{adversarial_forward.1} parent=1 // pred_fallthru
      _
    // Predicated region
    $region74: #{adversarial_forward.1} parent=1 // pred_check
      _
    $region75: #{adversarial_forward.1} parent=1 // pred_check_branch
      %143 = sbr.rel (0) target = $region77
    $region76: #{adversarial_forward.1} parent=1 // pred_region
      %144 = dma.done [#allocation22], 16
    $region77: #{adversarial_forward.1} parent=1 // pred_fallthru
      _
    // Predicated region
    $region78: #{adversarial_forward.1} parent=1 // pred_check
      _
    $region79: #{adversarial_forward.1} parent=1 // pred_check_branch
      %147 = sbr.rel target = $region81
    $region80: #{adversarial_forward.1} parent=1 // pred_region
      %148 = sst [smem:[#allocation27]] [#allocation26]
      %149 = sst [smem:[#allocation28]] [#allocation25]
    $region81: #{adversarial_forward.1} parent=1 // pred_fallthru
      _
    %151 = shalt.err (0)
    %s153 = sshll.u32 [#allocation5], 4
    %s154 = int_to_ptr.vmem [resolvable:$true] %s153
    %156 = dma.hbm_to_vmem [thread:$0]  %s1, 14336, %s154, [#allocation8]
    %s157 = scalar_lea.sflag [#allocation8], 2
    // Predicated region
    $region82: #{adversarial_forward.1} parent=1 // pred_check
      _
    $region83: #{adversarial_forward.1} parent=1 // pred_check_branch
      %159 = sbr.rel target = $region85
    $region84: #{adversarial_forward.1} parent=1 // pred_region
      %160 = sst [smem:[#allocation27]] [#allocation30]
      %161 = sst [smem:[#allocation28]] [#allocation29]
    $region85: #{adversarial_forward.1} parent=1 // pred_fallthru
      _
    %163 = shalt.err (0)
    %s165 = sshll.u32 [#allocation6], 4
    %s166 = int_to_ptr.vmem [resolvable:$true] %s165
    %168 = dma.hbm_to_vmem [thread:$0]  %s4, 32768, %s166, %s157
    %s169 = scalar_lea.sflag [#allocation8], 4
    // Predicated region
    $region86: #{adversarial_forward.1} parent=1 // pred_check
      _
    $region87: #{adversarial_forward.1} parent=1 // pred_check_branch
      %171 = sbr.rel target = $region89
    $region88: #{adversarial_forward.1} parent=1 // pred_region
      %172 = sst [smem:[#allocation27]] [#allocation32]
      %173 = sst [smem:[#allocation28]] [#allocation31]
    $region89: #{adversarial_forward.1} parent=1 // pred_fallthru
      _
    %175 = shalt.err (0)
    %s177 = sshll.u32 [#allocation7], 4
    %s178 = int_to_ptr.vmem [resolvable:$true] %s177
    %180 = dma.hbm_to_vmem [thread:$0]  %s7, 16384, %s178, %s169
    %v181 = vld [vmem:[%s0] sm:$0xff]
    %v182 = vld [vmem:[%s0 + $0x8] sm:$0xff]
    %v183 = vld [vmem:[%s0 + $0x10] sm:$0xff]
    %v184 = vld [vmem:[%s0 + $0x18] sm:$0xff]
    %v185 = vld [vmem:[%s0 + $0x20] sm:$0xff]
    %v186 = vld [vmem:[%s0 + $0x28] sm:$0xff]
    %v187 = vld [vmem:[%s0 + $0x30] sm:$0xff]
    %v188 = vpack.c.bf16 %v181, %v181
    %v189 = vpack.c.bf16 %v182, %v182
    %v190 = vpack.c.bf16 %v183, %v183
    %v191 = vpack.c.bf16 %v184, %v184
    %v192 = vpack.c.bf16 %v185, %v185
    %v193 = vpack.c.bf16 %v186, %v186
    %v194 = vpack.c.bf16 %v187, %v187
    %s195 = smul.u32 2, 112
    %s196 = smul.u32 %s195, 4
    %s197 = sshll.u32 %s196, 4
    %198 = dma.done [#allocation8], %s197
    %s199 = scalar_lea.hbm %s1, 14336
    %s200 = scalar_lea.vmem [#allocation5], 896
    %s201 = scalar_lea.sflag [#allocation8], 1
    // Predicated region
    $region90: #{adversarial_forward.1} parent=1 // pred_check
      _
    $region91: #{adversarial_forward.1} parent=1 // pred_check_branch
      %203 = sbr.rel target = $region93
    $region92: #{adversarial_forward.1} parent=1 // pred_region
      %204 = sst [smem:[#allocation27]] [#allocation34]
      %205 = sst [smem:[#allocation28]] [#allocation33]
    $region93: #{adversarial_forward.1} parent=1 // pred_fallthru
      _
    %207 = shalt.err (0)
    %s209 = sshll.u32 %s200, 4
    %s210 = int_to_ptr.vmem [resolvable:$true] %s209
    %212 = dma.hbm_to_vmem [thread:$0]  %s199, 14336, %s210, %s201
    %v213 = vld [vmem:[#allocation5] sm:$0xff]
    %v214 = vld [vmem:[#allocation5 + $0x8] sm:$0xff]
    %v215 = vld [vmem:[#allocation5 + $0x10] sm:$0xff]
    %v216 = vld [vmem:[#allocation5 + $0x18] sm:$0xff]
    %v217 = vld [vmem:[#allocation5 + $0x20] sm:$0xff]
    %v218 = vld [vmem:[#allocation5 + $0x28] sm:$0xff]
    %v219 = vld [vmem:[#allocation5 + $0x30] sm:$0xff]
    %v220 = vld [vmem:[#allocation5 + $0x38] sm:$0xff]
    %v221 = vld [vmem:[#allocation5 + $0x40] sm:$0xff]
    %v222 = vld [vmem:[#allocation5 + $0x48] sm:$0xff]
    %v223 = vld [vmem:[#allocation5 + $0x50] sm:$0xff]
    %v224 = vld [vmem:[#allocation5 + $0x58] sm:$0xff]
    %v225 = vld [vmem:[#allocation5 + $0x60] sm:$0xff]
    %v226 = vld [vmem:[#allocation5 + $0x68] sm:$0xff]
    %v227 = vld [vmem:[#allocation5 + $0x70] sm:$0xff]
    %v228 = vld [vmem:[#allocation5 + $0x78] sm:$0xff]
    %v229 = vld [vmem:[#allocation5 + $0x80] sm:$0xff]
    %v230 = vld [vmem:[#allocation5 + $0x88] sm:$0xff]
    %v231 = vld [vmem:[#allocation5 + $0x90] sm:$0xff]
    %v232 = vld [vmem:[#allocation5 + $0x98] sm:$0xff]
    %v233 = vld [vmem:[#allocation5 + $0xa0] sm:$0xff]
    %v234 = vld [vmem:[#allocation5 + $0xa8] sm:$0xff]
    %v235 = vld [vmem:[#allocation5 + $0xb0] sm:$0xff]
    %v236 = vld [vmem:[#allocation5 + $0xb8] sm:$0xff]
    %v237 = vld [vmem:[#allocation5 + $0xc0] sm:$0xff]
    %v238 = vld [vmem:[#allocation5 + $0xc8] sm:$0xff]
    %v239 = vld [vmem:[#allocation5 + $0xd0] sm:$0xff]
    %v240 = vld [vmem:[#allocation5 + $0xd8] sm:$0xff]
    %v241 = vld [vmem:[#allocation5 + $0xe0] sm:$0xff]
    %v242 = vld [vmem:[#allocation5 + $0xe8] sm:$0xff]
    %v243 = vld [vmem:[#allocation5 + $0xf0] sm:$0xff]
    %v244 = vld [vmem:[#allocation5 + $0xf8] sm:$0xff]
    %v245 = vld [vmem:[#allocation5 + $0x100] sm:$0xff]
    %v246 = vld [vmem:[#allocation5 + $0x108] sm:$0xff]
    %v247 = vld [vmem:[#allocation5 + $0x110] sm:$0xff]
    %v248 = vld [vmem:[#allocation5 + $0x118] sm:$0xff]
    %v249 = vld [vmem:[#allocation5 + $0x120] sm:$0xff]
    %v250 = vld [vmem:[#allocation5 + $0x128] sm:$0xff]
    %v251 = vld [vmem:[#allocation5 + $0x130] sm:$0xff]
    %v252 = vld [vmem:[#allocation5 + $0x138] sm:$0xff]
    %v253 = vld [vmem:[#allocation5 + $0x140] sm:$0xff]
    %v254 = vld [vmem:[#allocation5 + $0x148] sm:$0xff]
    %v255 = vld [vmem:[#allocation5 + $0x150] sm:$0xff]
    %v256 = vld [vmem:[#allocation5 + $0x158] sm:$0xff]
    %v257 = vld [vmem:[#allocation5 + $0x160] sm:$0xff]
    %v258 = vld [vmem:[#allocation5 + $0x168] sm:$0xff]
    %v259 = vld [vmem:[#allocation5 + $0x170] sm:$0xff]
    %v260 = vld [vmem:[#allocation5 + $0x178] sm:$0xff]
    %v261 = vld [vmem:[#allocation5 + $0x180] sm:$0xff]
    %v262 = vld [vmem:[#allocation5 + $0x188] sm:$0xff]
    %v263 = vld [vmem:[#allocation5 + $0x190] sm:$0xff]
    %v264 = vld [vmem:[#allocation5 + $0x198] sm:$0xff]
    %v265 = vld [vmem:[#allocation5 + $0x1a0] sm:$0xff]
    %v266 = vld [vmem:[#allocation5 + $0x1a8] sm:$0xff]
    %v267 = vld [vmem:[#allocation5 + $0x1b0] sm:$0xff]
    %v268 = vld [vmem:[#allocation5 + $0x1b8] sm:$0xff]
    %v269 = vld [vmem:[#allocation5 + $0x1c0] sm:$0xff]
    %v270 = vld [vmem:[#allocation5 + $0x1c8] sm:$0xff]
    %v271 = vld [vmem:[#allocation5 + $0x1d0] sm:$0xff]
    %v272 = vld [vmem:[#allocation5 + $0x1d8] sm:$0xff]
    %v273 = vld [vmem:[#allocation5 + $0x1e0] sm:$0xff]
    %v274 = vld [vmem:[#allocation5 + $0x1e8] sm:$0xff]
    %v275 = vld [vmem:[#allocation5 + $0x1f0] sm:$0xff]
    %v276 = vld [vmem:[#allocation5 + $0x1f8] sm:$0xff]
    %v277 = vld [vmem:[#allocation5 + $0x200] sm:$0xff]
    %v278 = vld [vmem:[#allocation5 + $0x208] sm:$0xff]
    %v279 = vld [vmem:[#allocation5 + $0x210] sm:$0xff]
    %v280 = vld [vmem:[#allocation5 + $0x218] sm:$0xff]
    %v281 = vld [vmem:[#allocation5 + $0x220] sm:$0xff]
    %v282 = vld [vmem:[#allocation5 + $0x228] sm:$0xff]
    %v283 = vld [vmem:[#allocation5 + $0x230] sm:$0xff]
    %v284 = vld [vmem:[#allocation5 + $0x238] sm:$0xff]
    %v285 = vld [vmem:[#allocation5 + $0x240] sm:$0xff]
    %v286 = vld [vmem:[#allocation5 + $0x248] sm:$0xff]
    %v287 = vld [vmem:[#allocation5 + $0x250] sm:$0xff]
    %v288 = vld [vmem:[#allocation5 + $0x258] sm:$0xff]
    %v289 = vld [vmem:[#allocation5 + $0x260] sm:$0xff]
    %v290 = vld [vmem:[#allocation5 + $0x268] sm:$0xff]
    %v291 = vld [vmem:[#allocation5 + $0x270] sm:$0xff]
    %v292 = vld [vmem:[#allocation5 + $0x278] sm:$0xff]
    %v293 = vld [vmem:[#allocation5 + $0x280] sm:$0xff]
    %v294 = vld [vmem:[#allocation5 + $0x288] sm:$0xff]
    %v295 = vld [vmem:[#allocation5 + $0x290] sm:$0xff]
    %v296 = vld [vmem:[#allocation5 + $0x298] sm:$0xff]
    %v297 = vld [vmem:[#allocation5 + $0x2a0] sm:$0xff]
    %v298 = vld [vmem:[#allocation5 + $0x2a8] sm:$0xff]
    %v299 = vld [vmem:[#allocation5 + $0x2b0] sm:$0xff]
    %v300 = vld [vmem:[#allocation5 + $0x2b8] sm:$0xff]
    %v301 = vld [vmem:[#allocation5 + $0x2c0] sm:$0xff]
    %v302 = vld [vmem:[#allocation5 + $0x2c8] sm:$0xff]
    %v303 = vld [vmem:[#allocation5 + $0x2d0] sm:$0xff]
    %v304 = vld [vmem:[#allocation5 + $0x2d8] sm:$0xff]
    %v305 = vld [vmem:[#allocation5 + $0x2e0] sm:$0xff]
    %v306 = vld [vmem:[#allocation5 + $0x2e8] sm:$0xff]
    %v307 = vld [vmem:[#allocation5 + $0x2f0] sm:$0xff]
    %v308 = vld [vmem:[#allocation5 + $0x2f8] sm:$0xff]
    %v309 = vld [vmem:[#allocation5 + $0x300] sm:$0xff]
    %v310 = vld [vmem:[#allocation5 + $0x308] sm:$0xff]
    %v311 = vld [vmem:[#allocation5 + $0x310] sm:$0xff]
    %v312 = vld [vmem:[#allocation5 + $0x318] sm:$0xff]
    %v313 = vld [vmem:[#allocation5 + $0x320] sm:$0xff]
    %v314 = vld [vmem:[#allocation5 + $0x328] sm:$0xff]
    %v315 = vld [vmem:[#allocation5 + $0x330] sm:$0xff]
    %v316 = vld [vmem:[#allocation5 + $0x338] sm:$0xff]
    %v317 = vld [vmem:[#allocation5 + $0x340] sm:$0xff]
    %v318 = vld [vmem:[#allocation5 + $0x348] sm:$0xff]
    %v319 = vld [vmem:[#allocation5 + $0x350] sm:$0xff]
    %v320 = vld [vmem:[#allocation5 + $0x358] sm:$0xff]
    %v321 = vld [vmem:[#allocation5 + $0x360] sm:$0xff]
    %v322 = vld [vmem:[#allocation5 + $0x368] sm:$0xff]
    %v323 = vld [vmem:[#allocation5 + $0x370] sm:$0xff]
    %v324 = vld [vmem:[#allocation5 + $0x378] sm:$0xff]
    %v325 = vunpack.c.l.s8.bf16 %v213
    %v326 = vunpack.c.l.s8.bf16 %v214
    %v327 = vunpack.c.l.s8.bf16 %v215
    %v328 = vunpack.c.l.s8.bf16 %v216
    %v329 = vunpack.c.h.s8.bf16 %v213
    %v330 = vunpack.c.h.s8.bf16 %v214
    %v331 = vunpack.c.h.s8.bf16 %v215
    %v332 = vunpack.c.h.s8.bf16 %v216
    %v333 = vunpack.c.l.s8.bf16 %v217
    %v334 = vunpack.c.l.s8.bf16 %v218
    %v335 = vunpack.c.l.s8.bf16 %v219
    %v336 = vunpack.c.l.s8.bf16 %v220
    %v337 = vunpack.c.h.s8.bf16 %v217
    %v338 = vunpack.c.h.s8.bf16 %v218
    %v339 = vunpack.c.h.s8.bf16 %v219
    %v340 = vunpack.c.h.s8.bf16 %v220
    %v341 = vunpack.c.l.s8.bf16 %v221
    %v342 = vunpack.c.l.s8.bf16 %v222
    %v343 = vunpack.c.l.s8.bf16 %v223
    %v344 = vunpack.c.l.s8.bf16 %v224
    %v345 = vunpack.c.h.s8.bf16 %v221
    %v346 = vunpack.c.h.s8.bf16 %v222
    %v347 = vunpack.c.h.s8.bf16 %v223
    %v348 = vunpack.c.h.s8.bf16 %v224
    %v349 = vunpack.c.l.s8.bf16 %v225
    %v350 = vunpack.c.l.s8.bf16 %v226
    %v351 = vunpack.c.l.s8.bf16 %v227
    %v352 = vunpack.c.l.s8.bf16 %v228
    %v353 = vunpack.c.h.s8.bf16 %v225
    %v354 = vunpack.c.h.s8.bf16 %v226
    %v355 = vunpack.c.h.s8.bf16 %v227
    %v356 = vunpack.c.h.s8.bf16 %v228
    %v357 = vunpack.c.l.s8.bf16 %v229
    %v358 = vunpack.c.l.s8.bf16 %v230
    %v359 = vunpack.c.l.s8.bf16 %v231
    %v360 = vunpack.c.l.s8.bf16 %v232
    %v361 = vunpack.c.h.s8.bf16 %v229
    %v362 = vunpack.c.h.s8.bf16 %v230
    %v363 = vunpack.c.h.s8.bf16 %v231
    %v364 = vunpack.c.h.s8.bf16 %v232
    %v365 = vunpack.c.l.s8.bf16 %v233
    %v366 = vunpack.c.l.s8.bf16 %v234
    %v367 = vunpack.c.l.s8.bf16 %v235
    %v368 = vunpack.c.l.s8.bf16 %v236
    %v369 = vunpack.c.h.s8.bf16 %v233
    %v370 = vunpack.c.h.s8.bf16 %v234
    %v371 = vunpack.c.h.s8.bf16 %v235
    %v372 = vunpack.c.h.s8.bf16 %v236
    %v373 = vunpack.c.l.s8.bf16 %v237
    %v374 = vunpack.c.l.s8.bf16 %v238
    %v375 = vunpack.c.l.s8.bf16 %v239
    %v376 = vunpack.c.l.s8.bf16 %v240
    %v377 = vunpack.c.h.s8.bf16 %v237
    %v378 = vunpack.c.h.s8.bf16 %v238
    %v379 = vunpack.c.h.s8.bf16 %v239
    %v380 = vunpack.c.h.s8.bf16 %v240
    %v381 = vunpack.c.l.s8.bf16 %v241
    %v382 = vunpack.c.l.s8.bf16 %v242
    %v383 = vunpack.c.l.s8.bf16 %v243
    %v384 = vunpack.c.l.s8.bf16 %v244
    %v385 = vunpack.c.h.s8.bf16 %v241
    %v386 = vunpack.c.h.s8.bf16 %v242
    %v387 = vunpack.c.h.s8.bf16 %v243
    %v388 = vunpack.c.h.s8.bf16 %v244
    %v389 = vunpack.c.l.s8.bf16 %v245
    %v390 = vunpack.c.l.s8.bf16 %v246
    %v391 = vunpack.c.l.s8.bf16 %v247
    %v392 = vunpack.c.l.s8.bf16 %v248
    %v393 = vunpack.c.h.s8.bf16 %v245
    %v394 = vunpack.c.h.s8.bf16 %v246
    %v395 = vunpack.c.h.s8.bf16 %v247
    %v396 = vunpack.c.h.s8.bf16 %v248
    %v397 = vunpack.c.l.s8.bf16 %v249
    %v398 = vunpack.c.l.s8.bf16 %v250
    %v399 = vunpack.c.l.s8.bf16 %v251
    %v400 = vunpack.c.l.s8.bf16 %v252
    %v401 = vunpack.c.h.s8.bf16 %v249
    %v402 = vunpack.c.h.s8.bf16 %v250
    %v403 = vunpack.c.h.s8.bf16 %v251
    %v404 = vunpack.c.h.s8.bf16 %v252
    %v405 = vunpack.c.l.s8.bf16 %v253
    %v406 = vunpack.c.l.s8.bf16 %v254
    %v407 = vunpack.c.l.s8.bf16 %v255
    %v408 = vunpack.c.l.s8.bf16 %v256
    %v409 = vunpack.c.h.s8.bf16 %v253
    %v410 = vunpack.c.h.s8.bf16 %v254
    %v411 = vunpack.c.h.s8.bf16 %v255
    %v412 = vunpack.c.h.s8.bf16 %v256
    %v413 = vunpack.c.l.s8.bf16 %v257
    %v414 = vunpack.c.l.s8.bf16 %v258
    %v415 = vunpack.c.l.s8.bf16 %v259
    %v416 = vunpack.c.l.s8.bf16 %v260
    %v417 = vunpack.c.h.s8.bf16 %v257
    %v418 = vunpack.c.h.s8.bf16 %v258
    %v419 = vunpack.c.h.s8.bf16 %v259
    %v420 = vunpack.c.h.s8.bf16 %v260
    %v421 = vunpack.c.l.s8.bf16 %v261
    %v422 = vunpack.c.l.s8.bf16 %v262
    %v423 = vunpack.c.l.s8.bf16 %v263
    %v424 = vunpack.c.l.s8.bf16 %v264
    %v425 = vunpack.c.h.s8.bf16 %v261
    %v426 = vunpack.c.h.s8.bf16 %v262
    %v427 = vunpack.c.h.s8.bf16 %v263
    %v428 = vunpack.c.h.s8.bf16 %v264
    %v429 = vunpack.c.l.s8.bf16 %v265
    %v430 = vunpack.c.l.s8.bf16 %v266
    %v431 = vunpack.c.l.s8.bf16 %v267
    %v432 = vunpack.c.l.s8.bf16 %v268
    %v433 = vunpack.c.h.s8.bf16 %v265
    %v434 = vunpack.c.h.s8.bf16 %v266
    %v435 = vunpack.c.h.s8.bf16 %v267
    %v436 = vunpack.c.h.s8.bf16 %v268
    %v437 = vunpack.c.l.s8.bf16 %v269
    %v438 = vunpack.c.l.s8.bf16 %v270
    %v439 = vunpack.c.l.s8.bf16 %v271
    %v440 = vunpack.c.l.s8.bf16 %v272
    %v441 = vunpack.c.h.s8.bf16 %v269
    %v442 = vunpack.c.h.s8.bf16 %v270
    %v443 = vunpack.c.h.s8.bf16 %v271
    %v444 = vunpack.c.h.s8.bf16 %v272
    %v445 = vunpack.c.l.s8.bf16 %v273
    %v446 = vunpack.c.l.s8.bf16 %v274
    %v447 = vunpack.c.l.s8.bf16 %v275
    %v448 = vunpack.c.l.s8.bf16 %v276
    %v449 = vunpack.c.h.s8.bf16 %v273
    %v450 = vunpack.c.h.s8.bf16 %v274
    %v451 = vunpack.c.h.s8.bf16 %v275
    %v452 = vunpack.c.h.s8.bf16 %v276
    %v453 = vunpack.c.l.s8.bf16 %v277
    %v454 = vunpack.c.l.s8.bf16 %v278
    %v455 = vunpack.c.l.s8.bf16 %v279
    %v456 = vunpack.c.l.s8.bf16 %v280
    %v457 = vunpack.c.h.s8.bf16 %v277
    %v458 = vunpack.c.h.s8.bf16 %v278
    %v459 = vunpack.c.h.s8.bf16 %v279
    %v460 = vunpack.c.h.s8.bf16 %v280
    %v461 = vunpack.c.l.s8.bf16 %v281
    %v462 = vunpack.c.l.s8.bf16 %v282
    %v463 = vunpack.c.l.s8.bf16 %v283
    %v464 = vunpack.c.l.s8.bf16 %v284
    %v465 = vunpack.c.h.s8.bf16 %v281
    %v466 = vunpack.c.h.s8.bf16 %v282
    %v467 = vunpack.c.h.s8.bf16 %v283
    %v468 = vunpack.c.h.s8.bf16 %v284
    %v469 = vunpack.c.l.s8.bf16 %v285
    %v470 = vunpack.c.l.s8.bf16 %v286
    %v471 = vunpack.c.l.s8.bf16 %v287
    %v472 = vunpack.c.l.s8.bf16 %v288
    %v473 = vunpack.c.h.s8.bf16 %v285
    %v474 = vunpack.c.h.s8.bf16 %v286
    %v475 = vunpack.c.h.s8.bf16 %v287
    %v476 = vunpack.c.h.s8.bf16 %v288
    %v477 = vunpack.c.l.s8.bf16 %v289
    %v478 = vunpack.c.l.s8.bf16 %v290
    %v479 = vunpack.c.l.s8.bf16 %v291
    %v480 = vunpack.c.l.s8.bf16 %v292
    %v481 = vunpack.c.h.s8.bf16 %v289
    %v482 = vunpack.c.h.s8.bf16 %v290
    %v483 = vunpack.c.h.s8.bf16 %v291
    %v484 = vunpack.c.h.s8.bf16 %v292
    %v485 = vunpack.c.l.s8.bf16 %v293
    %v486 = vunpack.c.l.s8.bf16 %v294
    %v487 = vunpack.c.l.s8.bf16 %v295
    %v488 = vunpack.c.l.s8.bf16 %v296
    %v489 = vunpack.c.h.s8.bf16 %v293
    %v490 = vunpack.c.h.s8.bf16 %v294
    %v491 = vunpack.c.h.s8.bf16 %v295
    %v492 = vunpack.c.h.s8.bf16 %v296
    %v493 = vunpack.c.l.s8.bf16 %v297
    %v494 = vunpack.c.l.s8.bf16 %v298
    %v495 = vunpack.c.l.s8.bf16 %v299
    %v496 = vunpack.c.l.s8.bf16 %v300
    %v497 = vunpack.c.h.s8.bf16 %v297
    %v498 = vunpack.c.h.s8.bf16 %v298
    %v499 = vunpack.c.h.s8.bf16 %v299
    %v500 = vunpack.c.h.s8.bf16 %v300
    %v501 = vunpack.c.l.s8.bf16 %v301
    %v502 = vunpack.c.l.s8.bf16 %v302
    %v503 = vunpack.c.l.s8.bf16 %v303
    %v504 = vunpack.c.l.s8.bf16 %v304
    %v505 = vunpack.c.h.s8.bf16 %v301
    %v506 = vunpack.c.h.s8.bf16 %v302
    %v507 = vunpack.c.h.s8.bf16 %v303
    %v508 = vunpack.c.h.s8.bf16 %v304
    %v509 = vunpack.c.l.s8.bf16 %v305
    %v510 = vunpack.c.l.s8.bf16 %v306
    %v511 = vunpack.c.l.s8.bf16 %v307
    %v512 = vunpack.c.l.s8.bf16 %v308
    %v513 = vunpack.c.h.s8.bf16 %v305
    %v514 = vunpack.c.h.s8.bf16 %v306
    %v515 = vunpack.c.h.s8.bf16 %v307
    %v516 = vunpack.c.h.s8.bf16 %v308
    %v517 = vunpack.c.l.s8.bf16 %v309
    %v518 = vunpack.c.l.s8.bf16 %v310
    %v519 = vunpack.c.l.s8.bf16 %v311
    %v520 = vunpack.c.l.s8.bf16 %v312
    %v521 = vunpack.c.h.s8.bf16 %v309
    %v522 = vunpack.c.h.s8.bf16 %v310
    %v523 = vunpack.c.h.s8.bf16 %v311
    %v524 = vunpack.c.h.s8.bf16 %v312
    %v525 = vunpack.c.l.s8.bf16 %v313
    %v526 = vunpack.c.l.s8.bf16 %v314
    %v527 = vunpack.c.l.s8.bf16 %v315
    %v528 = vunpack.c.l.s8.bf16 %v316
    %v529 = vunpack.c.h.s8.bf16 %v313
    %v530 = vunpack.c.h.s8.bf16 %v314
    %v531 = vunpack.c.h.s8.bf16 %v315
    %v532 = vunpack.c.h.s8.bf16 %v316
    %v533 = vunpack.c.l.s8.bf16 %v317
    %v534 = vunpack.c.l.s8.bf16 %v318
    %v535 = vunpack.c.l.s8.bf16 %v319
    %v536 = vunpack.c.l.s8.bf16 %v320
    %v537 = vunpack.c.h.s8.bf16 %v317
    %v538 = vunpack.c.h.s8.bf16 %v318
    %v539 = vunpack.c.h.s8.bf16 %v319
    %v540 = vunpack.c.h.s8.bf16 %v320
    %v541 = vunpack.c.l.s8.bf16 %v321
    %v542 = vunpack.c.l.s8.bf16 %v322
    %v543 = vunpack.c.l.s8.bf16 %v323
    %v544 = vunpack.c.l.s8.bf16 %v324
    %v545 = vunpack.c.h.s8.bf16 %v321
    %v546 = vunpack.c.h.s8.bf16 %v322
    %v547 = vunpack.c.h.s8.bf16 %v323
    %v548 = vunpack.c.h.s8.bf16 %v324
    %549 = vmatprep.subr.bf16.mxu0 %v326
    %550 = vmatpush1.bf16.msra.mxu0 %v325
    %551 = vmatprep.subr.bf16.mxu0 %v330
    %552 = vmatpush1.bf16.msra.mxu0 %v329
    %553 = vmatprep.subr.bf16.mxu0 %v334
    %554 = vmatpush1.bf16.msra.mxu0 %v333
    %555 = vmatprep.subr.bf16.mxu0 %v338
    %556 = vmatpush1.bf16.msra.mxu0 %v337
    %557 = vmatprep.subr.bf16.mxu0 %v342
    %558 = vmatpush1.bf16.msra.mxu0 %v341
    %559 = vmatprep.subr.bf16.mxu0 %v346
    %560 = vmatpush1.bf16.msra.mxu0 %v345
    %561 = vmatprep.subr.bf16.mxu0 %v350
    %562 = vmatpush1.bf16.msra.mxu0 %v349
    %563 = vmatprep.subr.bf16.mxu0 %v354
    %564 = vmatpush1.bf16.msra.mxu0 %v353
    %565 = vmatprep.subr.bf16.mxu0 %v358
    %566 = vmatpush1.bf16.msra.mxu0 %v357
    %567 = vmatprep.subr.bf16.mxu0 %v362
    %568 = vmatpush1.bf16.msra.mxu0 %v361
    %569 = vmatprep.subr.bf16.mxu0 %v366
    %570 = vmatpush1.bf16.msra.mxu0 %v365
    %571 = vmatprep.subr.bf16.mxu0 %v370
    %572 = vmatpush1.bf16.msra.mxu0 %v369
    %573 = vmatprep.subr.bf16.mxu0 %v374
    %574 = vmatpush1.bf16.msra.mxu0 %v373
    %575 = vmatprep.subr.bf16.mxu0 %v378
    %576 = vmatpush1.bf16.msra.mxu0 %v377
    %577 = vmatprep.subr.bf16.mxu0 %v382
    %578 = vmatpush1.bf16.msra.mxu0 %v381
    %579 = vmatprep.subr.bf16.mxu0 %v386
    %580 = vmatpush1.bf16.msra.mxu0 %v385
    %581 = vmatprep.mubr.bf16.mxu0 %v189
    %582 = vmatmul.mubr.bf16.gmra.mrb[0].mxu0 %v188
    %v583 = vpop.f32.mrb[0].mxu0
    %v584 = vadd.f32 0.0, %v583
    %v585 = vpop.f32.mrb[0].mxu0
    %v586 = vadd.f32 0.0, %v585
    %v587 = vpop.f32.mrb[0].mxu0
    %v588 = vpop.f32.mrb[0].mxu0
    %589 = vdwg.mxu0
    %590 = vmatprep.subr.bf16.mxu0 %v390
    %591 = vmatpush1.bf16.msra.mxu0 %v389
    %592 = vmatprep.subr.bf16.mxu0 %v394
    %593 = vmatpush1.bf16.msra.mxu0 %v393
    %594 = vmatprep.subr.bf16.mxu0 %v398
    %595 = vmatpush1.bf16.msra.mxu0 %v397
    %596 = vmatprep.subr.bf16.mxu0 %v402
    %597 = vmatpush1.bf16.msra.mxu0 %v401
    %598 = vmatprep.subr.bf16.mxu0 %v406
    %599 = vmatpush1.bf16.msra.mxu0 %v405
    %600 = vmatprep.subr.bf16.mxu0 %v410
    %601 = vmatpush1.bf16.msra.mxu0 %v409
    %602 = vmatprep.subr.bf16.mxu0 %v414
    %603 = vmatpush1.bf16.msra.mxu0 %v413
    %604 = vmatprep.subr.bf16.mxu0 %v418
    %605 = vmatpush1.bf16.msra.mxu0 %v417
    %606 = vmatprep.subr.bf16.mxu0 %v422
    %607 = vmatpush1.bf16.msra.mxu0 %v421
    %608 = vmatprep.subr.bf16.mxu0 %v426
    %609 = vmatpush1.bf16.msra.mxu0 %v425
    %610 = vmatprep.subr.bf16.mxu0 %v430
    %611 = vmatpush1.bf16.msra.mxu0 %v429
    %612 = vmatprep.subr.bf16.mxu0 %v434
    %613 = vmatpush1.bf16.msra.mxu0 %v433
    %614 = vmatprep.subr.bf16.mxu0 %v438
    %615 = vmatpush1.bf16.msra.mxu0 %v437
    %616 = vmatprep.subr.bf16.mxu0 %v442
    %617 = vmatpush1.bf16.msra.mxu0 %v441
    %618 = vmatprep.subr.bf16.mxu0 %v446
    %619 = vmatpush1.bf16.msra.mxu0 %v445
    %620 = vmatprep.subr.bf16.mxu0 %v450
    %621 = vmatpush1.bf16.msra.mxu0 %v449
    %622 = vmatprep.mubr.bf16.mxu0 %v191
    %623 = vmatmul.mubr.bf16.gmra.mrb[0].mxu0 %v190
    %v624 = vpop.f32.mrb[0].mxu0
    %v625 = vadd.f32 %v584, %v624
    %v626 = vpop.f32.mrb[0].mxu0
    %v627 = vadd.f32 %v586, %v626
    %v628 = vpop.f32.mrb[0].mxu0
    %v629 = vpop.f32.mrb[0].mxu0
    %630 = vdwg.mxu0
    %631 = vmatprep.subr.bf16.mxu0 %v454
    %632 = vmatpush1.bf16.msra.mxu0 %v453
    %633 = vmatprep.subr.bf16.mxu0 %v458
    %634 = vmatpush1.bf16.msra.mxu0 %v457
    %635 = vmatprep.subr.bf16.mxu0 %v462
    %636 = vmatpush1.bf16.msra.mxu0 %v461
    %637 = vmatprep.subr.bf16.mxu0 %v466
    %638 = vmatpush1.bf16.msra.mxu0 %v465
    %639 = vmatprep.subr.bf16.mxu0 %v470
    %640 = vmatpush1.bf16.msra.mxu0 %v469
    %641 = vmatprep.subr.bf16.mxu0 %v474
    %642 = vmatpush1.bf16.msra.mxu0 %v473
    %643 = vmatprep.subr.bf16.mxu0 %v478
    %644 = vmatpush1.bf16.msra.mxu0 %v477
    %645 = vmatprep.subr.bf16.mxu0 %v482
    %646 = vmatpush1.bf16.msra.mxu0 %v481
    %647 = vmatprep.subr.bf16.mxu0 %v486
    %648 = vmatpush1.bf16.msra.mxu0 %v485
    %649 = vmatprep.subr.bf16.mxu0 %v490
    %650 = vmatpush1.bf16.msra.mxu0 %v489
    %651 = vmatprep.subr.bf16.mxu0 %v494
    %652 = vmatpush1.bf16.msra.mxu0 %v493
    %653 = vmatprep.subr.bf16.mxu0 %v498
    %654 = vmatpush1.bf16.msra.mxu0 %v497
    %655 = vmatprep.subr.bf16.mxu0 %v502
    %656 = vmatpush1.bf16.msra.mxu0 %v501
    %657 = vmatprep.subr.bf16.mxu0 %v506
    %658 = vmatpush1.bf16.msra.mxu0 %v505
    %659 = vmatprep.subr.bf16.mxu0 %v510
    %660 = vmatpush1.bf16.msra.mxu0 %v509
    %661 = vmatprep.subr.bf16.mxu0 %v514
    %662 = vmatpush1.bf16.msra.mxu0 %v513
    %663 = vmatprep.mubr.bf16.mxu0 %v193
    %664 = vmatmul.mubr.bf16.gmra.mrb[0].mxu0 %v192
    %v665 = vpop.f32.mrb[0].mxu0
    %v666 = vadd.f32 %v625, %v665
    %v667 = vpop.f32.mrb[0].mxu0
    %v668 = vadd.f32 %v627, %v667
    %v669 = vpop.f32.mrb[0].mxu0
    %v670 = vpop.f32.mrb[0].mxu0
    %671 = vdwg.mxu0
    %672 = vmatprep.subr.bf16.mxu0 %v518
    %673 = vmatpush1.bf16.msra.mxu0 %v517
    %674 = vmatprep.subr.bf16.mxu0 %v522
    %675 = vmatpush1.bf16.msra.mxu0 %v521
    %676 = vmatprep.subr.bf16.mxu0 %v526
    %677 = vmatpush1.bf16.msra.mxu0 %v525
    %678 = vmatprep.subr.bf16.mxu0 %v530
    %679 = vmatpush1.bf16.msra.mxu0 %v529
    %680 = vmatprep.subr.bf16.mxu0 %v534
    %681 = vmatpush1.bf16.msra.mxu0 %v533
    %682 = vmatprep.subr.bf16.mxu0 %v538
    %683 = vmatpush1.bf16.msra.mxu0 %v537
    %684 = vmatprep.subr.bf16.mxu0 %v542
    %685 = vmatpush1.bf16.msra.mxu0 %v541
    %686 = vmatprep.subr.bf16.mxu0 %v546
    %687 = vmatpush1.bf16.msra.mxu0 %v545
    %688 = vmatprep.subr.bf16.mxu0 0
    %689 = vmatpush1.bf16.msra.mxu0 0
    %690 = vmatprep.subr.bf16.mxu0 0
    %691 = vmatpush1.bf16.msra.mxu0 0
    %692 = vmatprep.subr.bf16.mxu0 0
    %693 = vmatpush1.bf16.msra.mxu0 0
    %694 = vmatprep.subr.bf16.mxu0 0
    %695 = vmatpush1.bf16.msra.mxu0 0
    %696 = vmatprep.subr.bf16.mxu0 0
    %697 = vmatpush1.bf16.msra.mxu0 0
    %698 = vmatprep.subr.bf16.mxu0 0
    %699 = vmatpush1.bf16.msra.mxu0 0
    %700 = vmatprep.subr.bf16.mxu0 0
    %701 = vmatpush1.bf16.msra.mxu0 0
    %702 = vmatprep.subr.bf16.mxu0 0
    %703 = vmatpush1.bf16.msra.mxu0 0
    %704 = vmatprep.mubr.bf16.mxu0 0
    %705 = vmatmul.mubr.bf16.gmra.mrb[0].mxu0 %v194
    %v706 = vpop.f32.mrb[0].mxu0
    %v707 = vadd.f32 %v666, %v706
    %v708 = vpop.f32.mrb[0].mxu0
    %v709 = vadd.f32 %v668, %v708
    %v710 = vpop.f32.mrb[0].mxu0
    %v711 = vpop.f32.mrb[0].mxu0
    %712 = vdwg.mxu0
    %713 = vmatprep.subr.bf16.mxu0 %v328
    %714 = vmatpush1.bf16.msra.mxu0 %v327
    %715 = vmatprep.subr.bf16.mxu0 %v332
    %716 = vmatpush1.bf16.msra.mxu0 %v331
    %717 = vmatprep.subr.bf16.mxu0 %v336
    %718 = vmatpush1.bf16.msra.mxu0 %v335
    %719 = vmatprep.subr.bf16.mxu0 %v340
    %720 = vmatpush1.bf16.msra.mxu0 %v339
    %721 = vmatprep.subr.bf16.mxu0 %v344
    %722 = vmatpush1.bf16.msra.mxu0 %v343
    %723 = vmatprep.subr.bf16.mxu0 %v348
    %724 = vmatpush1.bf16.msra.mxu0 %v347
    %725 = vmatprep.subr.bf16.mxu0 %v352
    %726 = vmatpush1.bf16.msra.mxu0 %v351
    %727 = vmatprep.subr.bf16.mxu0 %v356
    %728 = vmatpush1.bf16.msra.mxu0 %v355
    %729 = vmatprep.subr.bf16.mxu0 %v360
    %730 = vmatpush1.bf16.msra.mxu0 %v359
    %731 = vmatprep.subr.bf16.mxu0 %v364
    %732 = vmatpush1.bf16.msra.mxu0 %v363
    %733 = vmatprep.subr.bf16.mxu0 %v368
    %734 = vmatpush1.bf16.msra.mxu0 %v367
    %735 = vmatprep.subr.bf16.mxu0 %v372
    %736 = vmatpush1.bf16.msra.mxu0 %v371
    %737 = vmatprep.subr.bf16.mxu0 %v376
    %738 = vmatpush1.bf16.msra.mxu0 %v375
    %739 = vmatprep.subr.bf16.mxu0 %v380
    %740 = vmatpush1.bf16.msra.mxu0 %v379
    %741 = vmatprep.subr.bf16.mxu0 %v384
    %742 = vmatpush1.bf16.msra.mxu0 %v383
    %743 = vmatprep.subr.bf16.mxu0 %v388
    %744 = vmatpush1.bf16.msra.mxu0 %v387
    %745 = vmatprep.mubr.bf16.mxu0 %v189
    %746 = vmatmul.mubr.bf16.gmra.mrb[0].mxu0 %v188
    %v747 = vpop.f32.mrb[0].mxu0
    %v748 = vadd.f32 0.0, %v747
    %v749 = vpop.f32.mrb[0].mxu0
    %v750 = vadd.f32 0.0, %v749
    %v751 = vpop.f32.mrb[0].mxu0
    %v752 = vpop.f32.mrb[0].mxu0
    %753 = vdwg.mxu0
    %754 = vmatprep.subr.bf16.mxu0 %v392
    %755 = vmatpush1.bf16.msra.mxu0 %v391
    %756 = vmatprep.subr.bf16.mxu0 %v396
    %757 = vmatpush1.bf16.msra.mxu0 %v395
    %758 = vmatprep.subr.bf16.mxu0 %v400
    %759 = vmatpush1.bf16.msra.mxu0 %v399
    %760 = vmatprep.subr.bf16.mxu0 %v404
    %761 = vmatpush1.bf16.msra.mxu0 %v403
    %762 = vmatprep.subr.bf16.mxu0 %v408
    %763 = vmatpush1.bf16.msra.mxu0 %v407
    %764 = vmatprep.subr.bf16.mxu0 %v412
    %765 = vmatpush1.bf16.msra.mxu0 %v411
    %766 = vmatprep.subr.bf16.mxu0 %v416
    %767 = vmatpush1.bf16.msra.mxu0 %v415
    %768 = vmatprep.subr.bf16.mxu0 %v420
    %769 = vmatpush1.bf16.msra.mxu0 %v419
    %770 = vmatprep.subr.bf16.mxu0 %v424
    %771 = vmatpush1.bf16.msra.mxu0 %v423
    %772 = vmatprep.subr.bf16.mxu0 %v428
    %773 = vmatpush1.bf16.msra.mxu0 %v427
    %774 = vmatprep.subr.bf16.mxu0 %v432
    %775 = vmatpush1.bf16.msra.mxu0 %v431
    %776 = vmatprep.subr.bf16.mxu0 %v436
    %777 = vmatpush1.bf16.msra.mxu0 %v435
    %778 = vmatprep.subr.bf16.mxu0 %v440
    %779 = vmatpush1.bf16.msra.mxu0 %v439
    %780 = vmatprep.subr.bf16.mxu0 %v444
    %781 = vmatpush1.bf16.msra.mxu0 %v443
    %782 = vmatprep.subr.bf16.mxu0 %v448
    %783 = vmatpush1.bf16.msra.mxu0 %v447
    %784 = vmatprep.subr.bf16.mxu0 %v452
    %785 = vmatpush1.bf16.msra.mxu0 %v451
    %786 = vmatprep.mubr.bf16.mxu0 %v191
    %787 = vmatmul.mubr.bf16.gmra.mrb[0].mxu0 %v190
    %v788 = vpop.f32.mrb[0].mxu0
    %v789 = vadd.f32 %v748, %v788
    %v790 = vpop.f32.mrb[0].mxu0
    %v791 = vadd.f32 %v750, %v790
    %v792 = vpop.f32.mrb[0].mxu0
    %v793 = vpop.f32.mrb[0].mxu0
    %794 = vdwg.mxu0
    %795 = vmatprep.subr.bf16.mxu0 %v456
    %796 = vmatpush1.bf16.msra.mxu0 %v455
    %797 = vmatprep.subr.bf16.mxu0 %v460
    %798 = vmatpush1.bf16.msra.mxu0 %v459
    %799 = vmatprep.subr.bf16.mxu0 %v464
    %800 = vmatpush1.bf16.msra.mxu0 %v463
    %801 = vmatprep.subr.bf16.mxu0 %v468
    %802 = vmatpush1.bf16.msra.mxu0 %v467
    %803 = vmatprep.subr.bf16.mxu0 %v472
    %804 = vmatpush1.bf16.msra.mxu0 %v471
    %805 = vmatprep.subr.bf16.mxu0 %v476
    %806 = vmatpush1.bf16.msra.mxu0 %v475
    %807 = vmatprep.subr.bf16.mxu0 %v480
    %808 = vmatpush1.bf16.msra.mxu0 %v479
    %809 = vmatprep.subr.bf16.mxu0 %v484
    %810 = vmatpush1.bf16.msra.mxu0 %v483
    %811 = vmatprep.subr.bf16.mxu0 %v488
    %812 = vmatpush1.bf16.msra.mxu0 %v487
    %813 = vmatprep.subr.bf16.mxu0 %v492
    %814 = vmatpush1.bf16.msra.mxu0 %v491
    %815 = vmatprep.subr.bf16.mxu0 %v496
    %816 = vmatpush1.bf16.msra.mxu0 %v495
    %817 = vmatprep.subr.bf16.mxu0 %v500
    %818 = vmatpush1.bf16.msra.mxu0 %v499
    %819 = vmatprep.subr.bf16.mxu0 %v504
    %820 = vmatpush1.bf16.msra.mxu0 %v503
    %821 = vmatprep.subr.bf16.mxu0 %v508
    %822 = vmatpush1.bf16.msra.mxu0 %v507
    %823 = vmatprep.subr.bf16.mxu0 %v512
    %824 = vmatpush1.bf16.msra.mxu0 %v511
    %825 = vmatprep.subr.bf16.mxu0 %v516
    %826 = vmatpush1.bf16.msra.mxu0 %v515
    %827 = vmatprep.mubr.bf16.mxu0 %v193
    %828 = vmatmul.mubr.bf16.gmra.mrb[0].mxu0 %v192
    %v829 = vpop.f32.mrb[0].mxu0
    %v830 = vadd.f32 %v789, %v829
    %v831 = vpop.f32.mrb[0].mxu0
    %v832 = vadd.f32 %v791, %v831
    %v833 = vpop.f32.mrb[0].mxu0
    %v834 = vpop.f32.mrb[0].mxu0
    %835 = vdwg.mxu0
    %836 = vmatprep.subr.bf16.mxu0 %v520
    %837 = vmatpush1.bf16.msra.mxu0 %v519
    %838 = vmatprep.subr.bf16.mxu0 %v524
    %839 = vmatpush1.bf16.msra.mxu0 %v523
    %840 = vmatprep.subr.bf16.mxu0 %v528
    %841 = vmatpush1.bf16.msra.mxu0 %v527
    %842 = vmatprep.subr.bf16.mxu0 %v532
    %843 = vmatpush1.bf16.msra.mxu0 %v531
    %844 = vmatprep.subr.bf16.mxu0 %v536
    %845 = vmatpush1.bf16.msra.mxu0 %v535
    %846 = vmatprep.subr.bf16.mxu0 %v540
    %847 = vmatpush1.bf16.msra.mxu0 %v539
    %848 = vmatprep.subr.bf16.mxu0 %v544
    %849 = vmatpush1.bf16.msra.mxu0 %v543
    %850 = vmatprep.subr.bf16.mxu0 %v548
    %851 = vmatpush1.bf16.msra.mxu0 %v547
    %852 = vmatprep.subr.bf16.mxu0 0
    %853 = vmatpush1.bf16.msra.mxu0 0
    %854 = vmatprep.subr.bf16.mxu0 0
    %855 = vmatpush1.bf16.msra.mxu0 0
    %856 = vmatprep.subr.bf16.mxu0 0
    %857 = vmatpush1.bf16.msra.mxu0 0
    %858 = vmatprep.subr.bf16.mxu0 0
    %859 = vmatpush1.bf16.msra.mxu0 0
    %860 = vmatprep.subr.bf16.mxu0 0
    %861 = vmatpush1.bf16.msra.mxu0 0
    %862 = vmatprep.subr.bf16.mxu0 0
    %863 = vmatpush1.bf16.msra.mxu0 0
    %864 = vmatprep.subr.bf16.mxu0 0
    %865 = vmatpush1.bf16.msra.mxu0 0
    %866 = vmatprep.subr.bf16.mxu0 0
    %867 = vmatpush1.bf16.msra.mxu0 0
    %868 = vmatprep.mubr.bf16.mxu0 0
    %869 = vmatmul.mubr.bf16.gmra.mrb[0].mxu0 %v194
    %v870 = vpop.f32.mrb[0].mxu0
    %v871 = vadd.f32 %v830, %v870
    %v872 = vpop.f32.mrb[0].mxu0
    %v873 = vadd.f32 %v832, %v872
    %v874 = vpop.f32.mrb[0].mxu0
    %v875 = vpop.f32.mrb[0].mxu0
    %876 = vdwg.mxu0
    %v877 = vld [vmem:[#allocation9] sm:$0xf]
    %v879 = vlaneseq
    %v880 = vshrl.u32 %v879, 7
    %v881 = vsub.s32 0, %v880
    %v882 = vrot.slane %v877, %v881
    %v883 = vlaneseq
    %v884 = vshrl.u32 %v883, 7
    %v885 = vsub.s32 1, %v884
    %v886 = vrot.slane %v877, %v885
    %v887 = vlaneseq
    %v888 = vshrl.u32 %v887, 7
    %v889 = vsub.s32 2, %v888
    %v890 = vrot.slane %v877, %v889
    %v891 = vlaneseq
    %v892 = vshrl.u32 %v891, 7
    %v893 = vsub.s32 3, %v892
    %v894 = vrot.slane %v877, %v893
    %v899 = vmul.f32 %v707, %v882
    %v900 = vmul.f32 %v709, %v886
    %v901 = vmul.f32 %v871, %v890
    %v902 = vmul.f32 %v873, %v894
    %v903 = vld [vmem:[#allocation12] sm:$0xf]
    %v905 = vlaneseq
    %v906 = vshrl.u32 %v905, 7
    %v907 = vsub.s32 0, %v906
    %v908 = vrot.slane %v903, %v907
    %v909 = vlaneseq
    %v910 = vshrl.u32 %v909, 7
    %v911 = vsub.s32 1, %v910
    %v912 = vrot.slane %v903, %v911
    %v913 = vlaneseq
    %v914 = vshrl.u32 %v913, 7
    %v915 = vsub.s32 2, %v914
    %v916 = vrot.slane %v903, %v915
    %v917 = vlaneseq
    %v918 = vshrl.u32 %v917, 7
    %v919 = vsub.s32 3, %v918
    %v920 = vrot.slane %v903, %v919
    %v925 = vadd.f32 %v899, %v908
    %v926 = vadd.f32 %v900, %v912
    %v927 = vadd.f32 %v901, %v916
    %v928 = vadd.f32 %v902, %v920
    %v929 = vmax.f32 %v925, 0.0
    %v930 = vmax.f32 %v926, 0.0
    %v931 = vmax.f32 %v927, 0.0
    %v932 = vmax.f32 %v928, 0.0
    %933 = vst [vmem:[#allocation2] sm:$0xff] %v929
    %934 = vst [vmem:[#allocation2 + $0x8] sm:$0xff] %v930
    %935 = vst [vmem:[#allocation2 + $0x10] sm:$0xff] %v931
    %936 = vst [vmem:[#allocation2 + $0x18] sm:$0xff] %v932
    %s937 = sshll.u32 %s196, 4
    %938 = dma.done %s201, %s937
    %s939 = scalar_lea.hbm %s1, 28672
    // Predicated region
    $region94: #{adversarial_forward.1} parent=1 // pred_check
      _
    $region95: #{adversarial_forward.1} parent=1 // pred_check_branch
      %941 = sbr.rel target = $region97
    $region96: #{adversarial_forward.1} parent=1 // pred_region
      %942 = sst [smem:[#allocation27]] [#allocation36]
      %943 = sst [smem:[#allocation28]] [#allocation35]
    $region97: #{adversarial_forward.1} parent=1 // pred_fallthru
      _
    %945 = shalt.err (0)
    %s947 = sshll.u32 [#allocation5], 4
    %s948 = int_to_ptr.vmem [resolvable:$true] %s947
    %950 = dma.hbm_to_vmem [thread:$0]  %s939, 14336, %s948, [#allocation8]
    %v951 = vld [vmem:[%s200] sm:$0xff]
    %v952 = vld [vmem:[%s200 + $0x8] sm:$0xff]
    %v953 = vld [vmem:[%s200 + $0x10] sm:$0xff]
    %v954 = vld [vmem:[%s200 + $0x18] sm:$0xff]
    %v955 = vld [vmem:[%s200 + $0x20] sm:$0xff]
    %v956 = vld [vmem:[%s200 + $0x28] sm:$0xff]
    %v957 = vld [vmem:[%s200 + $0x30] sm:$0xff]
    %v958 = vld [vmem:[%s200 + $0x38] sm:$0xff]
    %v959 = vld [vmem:[%s200 + $0x40] sm:$0xff]
    %v960 = vld [vmem:[%s200 + $0x48] sm:$0xff]
    %v961 = vld [vmem:[%s200 + $0x50] sm:$0xff]
    %v962 = vld [vmem:[%s200 + $0x58] sm:$0xff]
    %v963 = vld [vmem:[%s200 + $0x60] sm:$0xff]
    %v964 = vld [vmem:[%s200 + $0x68] sm:$0xff]
    %v965 = vld [vmem:[%s200 + $0x70] sm:$0xff]
    %v966 = vld [vmem:[%s200 + $0x78] sm:$0xff]
    %v967 = vld [vmem:[%s200 + $0x80] sm:$0xff]
    %v968 = vld [vmem:[%s200 + $0x88] sm:$0xff]
    %v969 = vld [vmem:[%s200 + $0x90] sm:$0xff]
    %v970 = vld [vmem:[%s200 + $0x98] sm:$0xff]
    %v971 = vld [vmem:[%s200 + $0xa0] sm:$0xff]
    %v972 = vld [vmem:[%s200 + $0xa8] sm:$0xff]
    %v973 = vld [vmem:[%s200 + $0xb0] sm:$0xff]
    %v974 = vld [vmem:[%s200 + $0xb8] sm:$0xff]
    %v975 = vld [vmem:[%s200 + $0xc0] sm:$0xff]
    %v976 = vld [vmem:[%s200 + $0xc8] sm:$0xff]
    %v977 = vld [vmem:[%s200 + $0xd0] sm:$0xff]
    %v978 = vld [vmem:[%s200 + $0xd8] sm:$0xff]
    %v979 = vld [vmem:[%s200 + $0xe0] sm:$0xff]
    %v980 = vld [vmem:[%s200 + $0xe8] sm:$0xff]
    %v981 = vld [vmem:[%s200 + $0xf0] sm:$0xff]
    %v982 = vld [vmem:[%s200 + $0xf8] sm:$0xff]
    %v983 = vld [vmem:[%s200 + $0x100] sm:$0xff]
    %v984 = vld [vmem:[%s200 + $0x108] sm:$0xff]
    %v985 = vld [vmem:[%s200 + $0x110] sm:$0xff]
    %v986 = vld [vmem:[%s200 + $0x118] sm:$0xff]
    %v987 = vld [vmem:[%s200 + $0x120] sm:$0xff]
    %v988 = vld [vmem:[%s200 + $0x128] sm:$0xff]
    %v989 = vld [vmem:[%s200 + $0x130] sm:$0xff]
    %v990 = vld [vmem:[%s200 + $0x138] sm:$0xff]
    %v991 = vld [vmem:[%s200 + $0x140] sm:$0xff]
    %v992 = vld [vmem:[%s200 + $0x148] sm:$0xff]
    %v993 = vld [vmem:[%s200 + $0x150] sm:$0xff]
    %v994 = vld [vmem:[%s200 + $0x158] sm:$0xff]
    %v995 = vld [vmem:[%s200 + $0x160] sm:$0xff]
    %v996 = vld [vmem:[%s200 + $0x168] sm:$0xff]
    %v997 = vld [vmem:[%s200 + $0x170] sm:$0xff]
    %v998 = vld [vmem:[%s200 + $0x178] sm:$0xff]
    %v999 = vld [vmem:[%s200 + $0x180] sm:$0xff]
    %v1000 = vld [vmem:[%s200 + $0x188] sm:$0xff]
    %v1001 = vld [vmem:[%s200 + $0x190] sm:$0xff]
    %v1002 = vld [vmem:[%s200 + $0x198] sm:$0xff]
    %v1003 = vld [vmem:[%s200 + $0x1a0] sm:$0xff]
    %v1004 = vld [vmem:[%s200 + $0x1a8] sm:$0xff]
    %v1005 = vld [vmem:[%s200 + $0x1b0] sm:$0xff]
    %v1006 = vld [vmem:[%s200 + $0x1b8] sm:$0xff]
    %v1007 = vld [vmem:[%s200 + $0x1c0] sm:$0xff]
    %v1008 = vld [vmem:[%s200 + $0x1c8] sm:$0xff]
    %v1009 = vld [vmem:[%s200 + $0x1d0] sm:$0xff]
    %v1010 = vld [vmem:[%s200 + $0x1d8] sm:$0xff]
    %v1011 = vld [vmem:[%s200 + $0x1e0] sm:$0xff]
    %v1012 = vld [vmem:[%s200 + $0x1e8] sm:$0xff]
    %v1013 = vld [vmem:[%s200 + $0x1f0] sm:$0xff]
    %v1014 = vld [vmem:[%s200 + $0x1f8] sm:$0xff]
    %v1015 = vld [vmem:[%s200 + $0x200] sm:$0xff]
    %v1016 = vld [vmem:[%s200 + $0x208] sm:$0xff]
    %v1017 = vld [vmem:[%s200 + $0x210] sm:$0xff]
    %v1018 = vld [vmem:[%s200 + $0x218] sm:$0xff]
    %v1019 = vld [vmem:[%s200 + $0x220] sm:$0xff]
    %v1020 = vld [vmem:[%s200 + $0x228] sm:$0xff]
    %v1021 = vld [vmem:[%s200 + $0x230] sm:$0xff]
    %v1022 = vld [vmem:[%s200 + $0x238] sm:$0xff]
    %v1023 = vld [vmem:[%s200 + $0x240] sm:$0xff]
    %v1024 = vld [vmem:[%s200 + $0x248] sm:$0xff]
    %v1025 = vld [vmem:[%s200 + $0x250] sm:$0xff]
    %v1026 = vld [vmem:[%s200 + $0x258] sm:$0xff]
    %v1027 = vld [vmem:[%s200 + $0x260] sm:$0xff]
    %v1028 = vld [vmem:[%s200 + $0x268] sm:$0xff]
    %v1029 = vld [vmem:[%s200 + $0x270] sm:$0xff]
    %v1030 = vld [vmem:[%s200 + $0x278] sm:$0xff]
    %v1031 = vld [vmem:[%s200 + $0x280] sm:$0xff]
    %v1032 = vld [vmem:[%s200 + $0x288] sm:$0xff]
    %v1033 = vld [vmem:[%s200 + $0x290] sm:$0xff]
    %v1034 = vld [vmem:[%s200 + $0x298] sm:$0xff]
    %v1035 = vld [vmem:[%s200 + $0x2a0] sm:$0xff]
    %v1036 = vld [vmem:[%s200 + $0x2a8] sm:$0xff]
    %v1037 = vld [vmem:[%s200 + $0x2b0] sm:$0xff]
    %v1038 = vld [vmem:[%s200 + $0x2b8] sm:$0xff]
    %v1039 = vld [vmem:[%s200 + $0x2c0] sm:$0xff]
    %v1040 = vld [vmem:[%s200 + $0x2c8] sm:$0xff]
    %v1041 = vld [vmem:[%s200 + $0x2d0] sm:$0xff]
    %v1042 = vld [vmem:[%s200 + $0x2d8] sm:$0xff]
    %v1043 = vld [vmem:[%s200 + $0x2e0] sm:$0xff]
    %v1044 = vld [vmem:[%s200 + $0x2e8] sm:$0xff]
    %v1045 = vld [vmem:[%s200 + $0x2f0] sm:$0xff]
    %v1046 = vld [vmem:[%s200 + $0x2f8] sm:$0xff]
    %v1047 = vld [vmem:[%s200 + $0x300] sm:$0xff]
    %v1048 = vld [vmem:[%s200 + $0x308] sm:$0xff]
    %v1049 = vld [vmem:[%s200 + $0x310] sm:$0xff]
    %v1050 = vld [vmem:[%s200 + $0x318] sm:$0xff]
    %v1051 = vld [vmem:[%s200 + $0x320] sm:$0xff]
    %v1052 = vld [vmem:[%s200 + $0x328] sm:$0xff]
    %v1053 = vld [vmem:[%s200 + $0x330] sm:$0xff]
    %v1054 = vld [vmem:[%s200 + $0x338] sm:$0xff]
    %v1055 = vld [vmem:[%s200 + $0x340] sm:$0xff]
    %v1056 = vld [vmem:[%s200 + $0x348] sm:$0xff]
    %v1057 = vld [vmem:[%s200 + $0x350] sm:$0xff]
    %v1058 = vld [vmem:[%s200 + $0x358] sm:$0xff]
    %v1059 = vld [vmem:[%s200 + $0x360] sm:$0xff]
    %v1060 = vld [vmem:[%s200 + $0x368] sm:$0xff]
    %v1061 = vld [vmem:[%s200 + $0x370] sm:$0xff]
    %v1062 = vld [vmem:[%s200 + $0x378] sm:$0xff]
    %v1063 = vunpack.c.l.s8.bf16 %v951
    %v1064 = vunpack.c.l.s8.bf16 %v952
    %v1065 = vunpack.c.l.s8.bf16 %v953
    %v1066 = vunpack.c.l.s8.bf16 %v954
    %v1067 = vunpack.c.h.s8.bf16 %v951
    %v1068 = vunpack.c.h.s8.bf16 %v952
    %v1069 = vunpack.c.h.s8.bf16 %v953
    %v1070 = vunpack.c.h.s8.bf16 %v954
    %v1071 = vunpack.c.l.s8.bf16 %v955
    %v1072 = vunpack.c.l.s8.bf16 %v956
    %v1073 = vunpack.c.l.s8.bf16 %v957
    %v1074 = vunpack.c.l.s8.bf16 %v958
    %v1075 = vunpack.c.h.s8.bf16 %v955
    %v1076 = vunpack.c.h.s8.bf16 %v956
    %v1077 = vunpack.c.h.s8.bf16 %v957
    %v1078 = vunpack.c.h.s8.bf16 %v958
    %v1079 = vunpack.c.l.s8.bf16 %v959
    %v1080 = vunpack.c.l.s8.bf16 %v960
    %v1081 = vunpack.c.l.s8.bf16 %v961
    %v1082 = vunpack.c.l.s8.bf16 %v962
    %v1083 = vunpack.c.h.s8.bf16 %v959
    %v1084 = vunpack.c.h.s8.bf16 %v960
    %v1085 = vunpack.c.h.s8.bf16 %v961
    %v1086 = vunpack.c.h.s8.bf16 %v962
    %v1087 = vunpack.c.l.s8.bf16 %v963
    %v1088 = vunpack.c.l.s8.bf16 %v964
    %v1089 = vunpack.c.l.s8.bf16 %v965
    %v1090 = vunpack.c.l.s8.bf16 %v966
    %v1091 = vunpack.c.h.s8.bf16 %v963
    %v1092 = vunpack.c.h.s8.bf16 %v964
    %v1093 = vunpack.c.h.s8.bf16 %v965
    %v1094 = vunpack.c.h.s8.bf16 %v966
    %v1095 = vunpack.c.l.s8.bf16 %v967
    %v1096 = vunpack.c.l.s8.bf16 %v968
    %v1097 = vunpack.c.l.s8.bf16 %v969
    %v1098 = vunpack.c.l.s8.bf16 %v970
    %v1099 = vunpack.c.h.s8.bf16 %v967
    %v1100 = vunpack.c.h.s8.bf16 %v968
    %v1101 = vunpack.c.h.s8.bf16 %v969
    %v1102 = vunpack.c.h.s8.bf16 %v970
    %v1103 = vunpack.c.l.s8.bf16 %v971
    %v1104 = vunpack.c.l.s8.bf16 %v972
    %v1105 = vunpack.c.l.s8.bf16 %v973
    %v1106 = vunpack.c.l.s8.bf16 %v974
    %v1107 = vunpack.c.h.s8.bf16 %v971
    %v1108 = vunpack.c.h.s8.bf16 %v972
    %v1109 = vunpack.c.h.s8.bf16 %v973
    %v1110 = vunpack.c.h.s8.bf16 %v974
    %v1111 = vunpack.c.l.s8.bf16 %v975
    %v1112 = vunpack.c.l.s8.bf16 %v976
    %v1113 = vunpack.c.l.s8.bf16 %v977
    %v1114 = vunpack.c.l.s8.bf16 %v978
    %v1115 = vunpack.c.h.s8.bf16 %v975
    %v1116 = vunpack.c.h.s8.bf16 %v976
    %v1117 = vunpack.c.h.s8.bf16 %v977
    %v1118 = vunpack.c.h.s8.bf16 %v978
    %v1119 = vunpack.c.l.s8.bf16 %v979
    %v1120 = vunpack.c.l.s8.bf16 %v980
    %v1121 = vunpack.c.l.s8.bf16 %v981
    %v1122 = vunpack.c.l.s8.bf16 %v982
    %v1123 = vunpack.c.h.s8.bf16 %v979
    %v1124 = vunpack.c.h.s8.bf16 %v980
    %v1125 = vunpack.c.h.s8.bf16 %v981
    %v1126 = vunpack.c.h.s8.bf16 %v982
    %v1127 = vunpack.c.l.s8.bf16 %v983
    %v1128 = vunpack.c.l.s8.bf16 %v984
    %v1129 = vunpack.c.l.s8.bf16 %v985
    %v1130 = vunpack.c.l.s8.bf16 %v986
    %v1131 = vunpack.c.h.s8.bf16 %v983
    %v1132 = vunpack.c.h.s8.bf16 %v984
    %v1133 = vunpack.c.h.s8.bf16 %v985
    %v1134 = vunpack.c.h.s8.bf16 %v986
    %v1135 = vunpack.c.l.s8.bf16 %v987
    %v1136 = vunpack.c.l.s8.bf16 %v988
    %v1137 = vunpack.c.l.s8.bf16 %v989
    %v1138 = vunpack.c.l.s8.bf16 %v990
    %v1139 = vunpack.c.h.s8.bf16 %v987
    %v1140 = vunpack.c.h.s8.bf16 %v988
    %v1141 = vunpack.c.h.s8.bf16 %v989
    %v1142 = vunpack.c.h.s8.bf16 %v990
    %v1143 = vunpack.c.l.s8.bf16 %v991
    %v1144 = vunpack.c.l.s8.bf16 %v992
    %v1145 = vunpack.c.l.s8.bf16 %v993
    %v1146 = vunpack.c.l.s8.bf16 %v994
    %v1147 = vunpack.c.h.s8.bf16 %v991
    %v1148 = vunpack.c.h.s8.bf16 %v992
    %v1149 = vunpack.c.h.s8.bf16 %v993
    %v1150 = vunpack.c.h.s8.bf16 %v994
    %v1151 = vunpack.c.l.s8.bf16 %v995
    %v1152 = vunpack.c.l.s8.bf16 %v996
    %v1153 = vunpack.c.l.s8.bf16 %v997
    %v1154 = vunpack.c.l.s8.bf16 %v998
    %v1155 = vunpack.c.h.s8.bf16 %v995
    %v1156 = vunpack.c.h.s8.bf16 %v996
    %v1157 = vunpack.c.h.s8.bf16 %v997
    %v1158 = vunpack.c.h.s8.bf16 %v998
    %v1159 = vunpack.c.l.s8.bf16 %v999
    %v1160 = vunpack.c.l.s8.bf16 %v1000
    %v1161 = vunpack.c.l.s8.bf16 %v1001
    %v1162 = vunpack.c.l.s8.bf16 %v1002
    %v1163 = vunpack.c.h.s8.bf16 %v999
    %v1164 = vunpack.c.h.s8.bf16 %v1000
    %v1165 = vunpack.c.h.s8.bf16 %v1001
    %v1166 = vunpack.c.h.s8.bf16 %v1002
    %v1167 = vunpack.c.l.s8.bf16 %v1003
    %v1168 = vunpack.c.l.s8.bf16 %v1004
    %v1169 = vunpack.c.l.s8.bf16 %v1005
    %v1170 = vunpack.c.l.s8.bf16 %v1006
    %v1171 = vunpack.c.h.s8.bf16 %v1003
    %v1172 = vunpack.c.h.s8.bf16 %v1004
    %v1173 = vunpack.c.h.s8.bf16 %v1005
    %v1174 = vunpack.c.h.s8.bf16 %v1006
    %v1175 = vunpack.c.l.s8.bf16 %v1007
    %v1176 = vunpack.c.l.s8.bf16 %v1008
    %v1177 = vunpack.c.l.s8.bf16 %v1009
    %v1178 = vunpack.c.l.s8.bf16 %v1010
    %v1179 = vunpack.c.h.s8.bf16 %v1007
    %v1180 = vunpack.c.h.s8.bf16 %v1008
    %v1181 = vunpack.c.h.s8.bf16 %v1009
    %v1182 = vunpack.c.h.s8.bf16 %v1010
    %v1183 = vunpack.c.l.s8.bf16 %v1011
    %v1184 = vunpack.c.l.s8.bf16 %v1012
    %v1185 = vunpack.c.l.s8.bf16 %v1013
    %v1186 = vunpack.c.l.s8.bf16 %v1014
    %v1187 = vunpack.c.h.s8.bf16 %v1011
    %v1188 = vunpack.c.h.s8.bf16 %v1012
    %v1189 = vunpack.c.h.s8.bf16 %v1013
    %v1190 = vunpack.c.h.s8.bf16 %v1014
    %v1191 = vunpack.c.l.s8.bf16 %v1015
    %v1192 = vunpack.c.l.s8.bf16 %v1016
    %v1193 = vunpack.c.l.s8.bf16 %v1017
    %v1194 = vunpack.c.l.s8.bf16 %v1018
    %v1195 = vunpack.c.h.s8.bf16 %v1015
    %v1196 = vunpack.c.h.s8.bf16 %v1016
    %v1197 = vunpack.c.h.s8.bf16 %v1017
    %v1198 = vunpack.c.h.s8.bf16 %v1018
    %v1199 = vunpack.c.l.s8.bf16 %v1019
    %v1200 = vunpack.c.l.s8.bf16 %v1020
    %v1201 = vunpack.c.l.s8.bf16 %v1021
    %v1202 = vunpack.c.l.s8.bf16 %v1022
    %v1203 = vunpack.c.h.s8.bf16 %v1019
    %v1204 = vunpack.c.h.s8.bf16 %v1020
    %v1205 = vunpack.c.h.s8.bf16 %v1021
    %v1206 = vunpack.c.h.s8.bf16 %v1022
    %v1207 = vunpack.c.l.s8.bf16 %v1023
    %v1208 = vunpack.c.l.s8.bf16 %v1024
    %v1209 = vunpack.c.l.s8.bf16 %v1025
    %v1210 = vunpack.c.l.s8.bf16 %v1026
    %v1211 = vunpack.c.h.s8.bf16 %v1023
    %v1212 = vunpack.c.h.s8.bf16 %v1024
    %v1213 = vunpack.c.h.s8.bf16 %v1025
    %v1214 = vunpack.c.h.s8.bf16 %v1026
    %v1215 = vunpack.c.l.s8.bf16 %v1027
    %v1216 = vunpack.c.l.s8.bf16 %v1028
    %v1217 = vunpack.c.l.s8.bf16 %v1029
    %v1218 = vunpack.c.l.s8.bf16 %v1030
    %v1219 = vunpack.c.h.s8.bf16 %v1027
    %v1220 = vunpack.c.h.s8.bf16 %v1028
    %v1221 = vunpack.c.h.s8.bf16 %v1029
    %v1222 = vunpack.c.h.s8.bf16 %v1030
    %v1223 = vunpack.c.l.s8.bf16 %v1031
    %v1224 = vunpack.c.l.s8.bf16 %v1032
    %v1225 = vunpack.c.l.s8.bf16 %v1033
    %v1226 = vunpack.c.l.s8.bf16 %v1034
    %v1227 = vunpack.c.h.s8.bf16 %v1031
    %v1228 = vunpack.c.h.s8.bf16 %v1032
    %v1229 = vunpack.c.h.s8.bf16 %v1033
    %v1230 = vunpack.c.h.s8.bf16 %v1034
    %v1231 = vunpack.c.l.s8.bf16 %v1035
    %v1232 = vunpack.c.l.s8.bf16 %v1036
    %v1233 = vunpack.c.l.s8.bf16 %v1037
    %v1234 = vunpack.c.l.s8.bf16 %v1038
    %v1235 = vunpack.c.h.s8.bf16 %v1035
    %v1236 = vunpack.c.h.s8.bf16 %v1036
    %v1237 = vunpack.c.h.s8.bf16 %v1037
    %v1238 = vunpack.c.h.s8.bf16 %v1038
    %v1239 = vunpack.c.l.s8.bf16 %v1039
    %v1240 = vunpack.c.l.s8.bf16 %v1040
    %v1241 = vunpack.c.l.s8.bf16 %v1041
    %v1242 = vunpack.c.l.s8.bf16 %v1042
    %v1243 = vunpack.c.h.s8.bf16 %v1039
    %v1244 = vunpack.c.h.s8.bf16 %v1040
    %v1245 = vunpack.c.h.s8.bf16 %v1041
    %v1246 = vunpack.c.h.s8.bf16 %v1042
    %v1247 = vunpack.c.l.s8.bf16 %v1043
    %v1248 = vunpack.c.l.s8.bf16 %v1044
    %v1249 = vunpack.c.l.s8.bf16 %v1045
    %v1250 = vunpack.c.l.s8.bf16 %v1046
    %v1251 = vunpack.c.h.s8.bf16 %v1043
    %v1252 = vunpack.c.h.s8.bf16 %v1044
    %v1253 = vunpack.c.h.s8.bf16 %v1045
    %v1254 = vunpack.c.h.s8.bf16 %v1046
    %v1255 = vunpack.c.l.s8.bf16 %v1047
    %v1256 = vunpack.c.l.s8.bf16 %v1048
    %v1257 = vunpack.c.l.s8.bf16 %v1049
    %v1258 = vunpack.c.l.s8.bf16 %v1050
    %v1259 = vunpack.c.h.s8.bf16 %v1047
    %v1260 = vunpack.c.h.s8.bf16 %v1048
    %v1261 = vunpack.c.h.s8.bf16 %v1049
    %v1262 = vunpack.c.h.s8.bf16 %v1050
    %v1263 = vunpack.c.l.s8.bf16 %v1051
    %v1264 = vunpack.c.l.s8.bf16 %v1052
    %v1265 = vunpack.c.l.s8.bf16 %v1053
    %v1266 = vunpack.c.l.s8.bf16 %v1054
    %v1267 = vunpack.c.h.s8.bf16 %v1051
    %v1268 = vunpack.c.h.s8.bf16 %v1052
    %v1269 = vunpack.c.h.s8.bf16 %v1053
    %v1270 = vunpack.c.h.s8.bf16 %v1054
    %v1271 = vunpack.c.l.s8.bf16 %v1055
    %v1272 = vunpack.c.l.s8.bf16 %v1056
    %v1273 = vunpack.c.l.s8.bf16 %v1057
    %v1274 = vunpack.c.l.s8.bf16 %v1058
    %v1275 = vunpack.c.h.s8.bf16 %v1055
    %v1276 = vunpack.c.h.s8.bf16 %v1056
    %v1277 = vunpack.c.h.s8.bf16 %v1057
    %v1278 = vunpack.c.h.s8.bf16 %v1058
    %v1279 = vunpack.c.l.s8.bf16 %v1059
    %v1280 = vunpack.c.l.s8.bf16 %v1060
    %v1281 = vunpack.c.l.s8.bf16 %v1061
    %v1282 = vunpack.c.l.s8.bf16 %v1062
    %v1283 = vunpack.c.h.s8.bf16 %v1059
    %v1284 = vunpack.c.h.s8.bf16 %v1060
    %v1285 = vunpack.c.h.s8.bf16 %v1061
    %v1286 = vunpack.c.h.s8.bf16 %v1062
    %1287 = vmatprep.subr.bf16.mxu0 %v1064
    %1288 = vmatpush1.bf16.msra.mxu0 %v1063
    %1289 = vmatprep.subr.bf16.mxu0 %v1068
    %1290 = vmatpush1.bf16.msra.mxu0 %v1067
    %1291 = vmatprep.subr.bf16.mxu0 %v1072
    %1292 = vmatpush1.bf16.msra.mxu0 %v1071
    %1293 = vmatprep.subr.bf16.mxu0 %v1076
    %1294 = vmatpush1.bf16.msra.mxu0 %v1075
    %1295 = vmatprep.subr.bf16.mxu0 %v1080
    %1296 = vmatpush1.bf16.msra.mxu0 %v1079
    %1297 = vmatprep.subr.bf16.mxu0 %v1084
    %1298 = vmatpush1.bf16.msra.mxu0 %v1083
    %1299 = vmatprep.subr.bf16.mxu0 %v1088
    %1300 = vmatpush1.bf16.msra.mxu0 %v1087
    %1301 = vmatprep.subr.bf16.mxu0 %v1092
    %1302 = vmatpush1.bf16.msra.mxu0 %v1091
    %1303 = vmatprep.subr.bf16.mxu0 %v1096
    %1304 = vmatpush1.bf16.msra.mxu0 %v1095
    %1305 = vmatprep.subr.bf16.mxu0 %v1100
    %1306 = vmatpush1.bf16.msra.mxu0 %v1099
    %1307 = vmatprep.subr.bf16.mxu0 %v1104
    %1308 = vmatpush1.bf16.msra.mxu0 %v1103
    %1309 = vmatprep.subr.bf16.mxu0 %v1108
    %1310 = vmatpush1.bf16.msra.mxu0 %v1107
    %1311 = vmatprep.subr.bf16.mxu0 %v1112
    %1312 = vmatpush1.bf16.msra.mxu0 %v1111
    %1313 = vmatprep.subr.bf16.mxu0 %v1116
    %1314 = vmatpush1.bf16.msra.mxu0 %v1115
    %1315 = vmatprep.subr.bf16.mxu0 %v1120
    %1316 = vmatpush1.bf16.msra.mxu0 %v1119
    %1317 = vmatprep.subr.bf16.mxu0 %v1124
    %1318 = vmatpush1.bf16.msra.mxu0 %v1123
    %1319 = vmatprep.mubr.bf16.mxu0 %v189
    %1320 = vmatmul.mubr.bf16.gmra.mrb[0].mxu0 %v188
    %v1321 = vpop.f32.mrb[0].mxu0
    %v1322 = vadd.f32 0.0, %v1321
    %v1323 = vpop.f32.mrb[0].mxu0
    %v1324 = vadd.f32 0.0, %v1323
    %v1325 = vpop.f32.mrb[0].mxu0
    %v1326 = vpop.f32.mrb[0].mxu0
    %1327 = vdwg.mxu0
    %1328 = vmatprep.subr.bf16.mxu0 %v1128
    %1329 = vmatpush1.bf16.msra.mxu0 %v1127
    %1330 = vmatprep.subr.bf16.mxu0 %v1132
    %1331 = vmatpush1.bf16.msra.mxu0 %v1131
    %1332 = vmatprep.subr.bf16.mxu0 %v1136
    %1333 = vmatpush1.bf16.msra.mxu0 %v1135
    %1334 = vmatprep.subr.bf16.mxu0 %v1140
    %1335 = vmatpush1.bf16.msra.mxu0 %v1139
    %1336 = vmatprep.subr.bf16.mxu0 %v1144
    %1337 = vmatpush1.bf16.msra.mxu0 %v1143
    %1338 = vmatprep.subr.bf16.mxu0 %v1148
    %1339 = vmatpush1.bf16.msra.mxu0 %v1147
    %1340 = vmatprep.subr.bf16.mxu0 %v1152
    %1341 = vmatpush1.bf16.msra.mxu0 %v1151
    %1342 = vmatprep.subr.bf16.mxu0 %v1156
    %1343 = vmatpush1.bf16.msra.mxu0 %v1155
    %1344 = vmatprep.subr.bf16.mxu0 %v1160
    %1345 = vmatpush1.bf16.msra.mxu0 %v1159
    %1346 = vmatprep.subr.bf16.mxu0 %v1164
    %1347 = vmatpush1.bf16.msra.mxu0 %v1163
    %1348 = vmatprep.subr.bf16.mxu0 %v1168
    %1349 = vmatpush1.bf16.msra.mxu0 %v1167
    %1350 = vmatprep.subr.bf16.mxu0 %v1172
    %1351 = vmatpush1.bf16.msra.mxu0 %v1171
    %1352 = vmatprep.subr.bf16.mxu0 %v1176
    %1353 = vmatpush1.bf16.msra.mxu0 %v1175
    %1354 = vmatprep.subr.bf16.mxu0 %v1180
    %1355 = vmatpush1.bf16.msra.mxu0 %v1179
    %1356 = vmatprep.subr.bf16.mxu0 %v1184
    %1357 = vmatpush1.bf16.msra.mxu0 %v1183
    %1358 = vmatprep.subr.bf16.mxu0 %v1188
    %1359 = vmatpush1.bf16.msra.mxu0 %v1187
    %1360 = vmatprep.mubr.bf16.mxu0 %v191
    %1361 = vmatmul.mubr.bf16.gmra.mrb[0].mxu0 %v190
    %v1362 = vpop.f32.mrb[0].mxu0
    %v1363 = vadd.f32 %v1322, %v1362
    %v1364 = vpop.f32.mrb[0].mxu0
    %v1365 = vadd.f32 %v1324, %v1364
    %v1366 = vpop.f32.mrb[0].mxu0
    %v1367 = vpop.f32.mrb[0].mxu0
    %1368 = vdwg.mxu0
    %1369 = vmatprep.subr.bf16.mxu0 %v1192
    %1370 = vmatpush1.bf16.msra.mxu0 %v1191
    %1371 = vmatprep.subr.bf16.mxu0 %v1196
    %1372 = vmatpush1.bf16.msra.mxu0 %v1195
    %1373 = vmatprep.subr.bf16.mxu0 %v1200
    %1374 = vmatpush1.bf16.msra.mxu0 %v1199
    %1375 = vmatprep.subr.bf16.mxu0 %v1204
    %1376 = vmatpush1.bf16.msra.mxu0 %v1203
    %1377 = vmatprep.subr.bf16.mxu0 %v1208
    %1378 = vmatpush1.bf16.msra.mxu0 %v1207
    %1379 = vmatprep.subr.bf16.mxu0 %v1212
    %1380 = vmatpush1.bf16.msra.mxu0 %v1211
    %1381 = vmatprep.subr.bf16.mxu0 %v1216
    %1382 = vmatpush1.bf16.msra.mxu0 %v1215
    %1383 = vmatprep.subr.bf16.mxu0 %v1220
    %1384 = vmatpush1.bf16.msra.mxu0 %v1219
    %1385 = vmatprep.subr.bf16.mxu0 %v1224
    %1386 = vmatpush1.bf16.msra.mxu0 %v1223
    %1387 = vmatprep.subr.bf16.mxu0 %v1228
    %1388 = vmatpush1.bf16.msra.mxu0 %v1227
    %1389 = vmatprep.subr.bf16.mxu0 %v1232
    %1390 = vmatpush1.bf16.msra.mxu0 %v1231
    %1391 = vmatprep.subr.bf16.mxu0 %v1236
    %1392 = vmatpush1.bf16.msra.mxu0 %v1235
    %1393 = vmatprep.subr.bf16.mxu0 %v1240
    %1394 = vmatpush1.bf16.msra.mxu0 %v1239
    %1395 = vmatprep.subr.bf16.mxu0 %v1244
    %1396 = vmatpush1.bf16.msra.mxu0 %v1243
    %1397 = vmatprep.subr.bf16.mxu0 %v1248
    %1398 = vmatpush1.bf16.msra.mxu0 %v1247
    %1399 = vmatprep.subr.bf16.mxu0 %v1252
    %1400 = vmatpush1.bf16.msra.mxu0 %v1251
    %1401 = vmatprep.mubr.bf16.mxu0 %v193
    %1402 = vmatmul.mubr.bf16.gmra.mrb[0].mxu0 %v192
    %v1403 = vpop.f32.mrb[0].mxu0
    %v1404 = vadd.f32 %v1363, %v1403
    %v1405 = vpop.f32.mrb[0].mxu0
    %v1406 = vadd.f32 %v1365, %v1405
    %v1407 = vpop.f32.mrb[0].mxu0
    %v1408 = vpop.f32.mrb[0].mxu0
    %1409 = vdwg.mxu0
    %1410 = vmatprep.subr.bf16.mxu0 %v1256
    %1411 = vmatpush1.bf16.msra.mxu0 %v1255
    %1412 = vmatprep.subr.bf16.mxu0 %v1260
    %1413 = vmatpush1.bf16.msra.mxu0 %v1259
    %1414 = vmatprep.subr.bf16.mxu0 %v1264
    %1415 = vmatpush1.bf16.msra.mxu0 %v1263
    %1416 = vmatprep.subr.bf16.mxu0 %v1268
    %1417 = vmatpush1.bf16.msra.mxu0 %v1267
    %1418 = vmatprep.subr.bf16.mxu0 %v1272
    %1419 = vmatpush1.bf16.msra.mxu0 %v1271
    %1420 = vmatprep.subr.bf16.mxu0 %v1276
    %1421 = vmatpush1.bf16.msra.mxu0 %v1275
    %1422 = vmatprep.subr.bf16.mxu0 %v1280
    %1423 = vmatpush1.bf16.msra.mxu0 %v1279
    %1424 = vmatprep.subr.bf16.mxu0 %v1284
    %1425 = vmatpush1.bf16.msra.mxu0 %v1283
    %1426 = vmatprep.subr.bf16.mxu0 0
    %1427 = vmatpush1.bf16.msra.mxu0 0
    %1428 = vmatprep.subr.bf16.mxu0 0
    %1429 = vmatpush1.bf16.msra.mxu0 0
    %1430 = vmatprep.subr.bf16.mxu0 0
    %1431 = vmatpush1.bf16.msra.mxu0 0
    %1432 = vmatprep.subr.bf16.mxu0 0
    %1433 = vmatpush1.bf16.msra.mxu0 0
    %1434 = vmatprep.subr.bf16.mxu0 0
    %1435 = vmatpush1.bf16.msra.mxu0 0
    %1436 = vmatprep.subr.bf16.mxu0 0
    %1437 = vmatpush1.bf16.msra.mxu0 0
    %1438 = vmatprep.subr.bf16.mxu0 0
    %1439 = vmatpush1.bf16.msra.mxu0 0
    %1440 = vmatprep.subr.bf16.mxu0 0
    %1441 = vmatpush1.bf16.msra.mxu0 0
    %1442 = vmatprep.mubr.bf16.mxu0 0
    %1443 = vmatmul.mubr.bf16.gmra.mrb[0].mxu0 %v194
    %v1444 = vpop.f32.mrb[0].mxu0
    %v1445 = vadd.f32 %v1404, %v1444
    %v1446 = vpop.f32.mrb[0].mxu0
    %v1447 = vadd.f32 %v1406, %v1446
    %v1448 = vpop.f32.mrb[0].mxu0
    %v1449 = vpop.f32.mrb[0].mxu0
    %1450 = vdwg.mxu0
    %1451 = vmatprep.subr.bf16.mxu0 %v1066
    %1452 = vmatpush1.bf16.msra.mxu0 %v1065
    %1453 = vmatprep.subr.bf16.mxu0 %v1070
    %1454 = vmatpush1.bf16.msra.mxu0 %v1069
    %1455 = vmatprep.subr.bf16.mxu0 %v1074
    %1456 = vmatpush1.bf16.msra.mxu0 %v1073
    %1457 = vmatprep.subr.bf16.mxu0 %v1078
    %1458 = vmatpush1.bf16.msra.mxu0 %v1077
    %1459 = vmatprep.subr.bf16.mxu0 %v1082
    %1460 = vmatpush1.bf16.msra.mxu0 %v1081
    %1461 = vmatprep.subr.bf16.mxu0 %v1086
    %1462 = vmatpush1.bf16.msra.mxu0 %v1085
    %1463 = vmatprep.subr.bf16.mxu0 %v1090
    %1464 = vmatpush1.bf16.msra.mxu0 %v1089
    %1465 = vmatprep.subr.bf16.mxu0 %v1094
    %1466 = vmatpush1.bf16.msra.mxu0 %v1093
    %1467 = vmatprep.subr.bf16.mxu0 %v1098
    %1468 = vmatpush1.bf16.msra.mxu0 %v1097
    %1469 = vmatprep.subr.bf16.mxu0 %v1102
    %1470 = vmatpush1.bf16.msra.mxu0 %v1101
    %1471 = vmatprep.subr.bf16.mxu0 %v1106
    %1472 = vmatpush1.bf16.msra.mxu0 %v1105
    %1473 = vmatprep.subr.bf16.mxu0 %v1110
    %1474 = vmatpush1.bf16.msra.mxu0 %v1109
    %1475 = vmatprep.subr.bf16.mxu0 %v1114
    %1476 = vmatpush1.bf16.msra.mxu0 %v1113
    %1477 = vmatprep.subr.bf16.mxu0 %v1118
    %1478 = vmatpush1.bf16.msra.mxu0 %v1117
    %1479 = vmatprep.subr.bf16.mxu0 %v1122
    %1480 = vmatpush1.bf16.msra.mxu0 %v1121
    %1481 = vmatprep.subr.bf16.mxu0 %v1126
    %1482 = vmatpush1.bf16.msra.mxu0 %v1125
    %1483 = vmatprep.mubr.bf16.mxu0 %v189
    %1484 = vmatmul.mubr.bf16.gmra.mrb[0].mxu0 %v188
    %v1485 = vpop.f32.mrb[0].mxu0
    %v1486 = vadd.f32 0.0, %v1485
    %v1487 = vpop.f32.mrb[0].mxu0
    %v1488 = vadd.f32 0.0, %v1487
    %v1489 = vpop.f32.mrb[0].mxu0
    %v1490 = vpop.f32.mrb[0].mxu0
    %1491 = vdwg.mxu0
    %1492 = vmatprep.subr.bf16.mxu0 %v1130
    %1493 = vmatpush1.bf16.msra.mxu0 %v1129
    %1494 = vmatprep.subr.bf16.mxu0 %v1134
    %1495 = vmatpush1.bf16.msra.mxu0 %v1133
    %1496 = vmatprep.subr.bf16.mxu0 %v1138
    %1497 = vmatpush1.bf16.msra.mxu0 %v1137
    %1498 = vmatprep.subr.bf16.mxu0 %v1142
    %1499 = vmatpush1.bf16.msra.mxu0 %v1141
    %1500 = vmatprep.subr.bf16.mxu0 %v1146
    %1501 = vmatpush1.bf16.msra.mxu0 %v1145
    %1502 = vmatprep.subr.bf16.mxu0 %v1150
    %1503 = vmatpush1.bf16.msra.mxu0 %v1149
    %1504 = vmatprep.subr.bf16.mxu0 %v1154
    %1505 = vmatpush1.bf16.msra.mxu0 %v1153
    %1506 = vmatprep.subr.bf16.mxu0 %v1158
    %1507 = vmatpush1.bf16.msra.mxu0 %v1157
    %1508 = vmatprep.subr.bf16.mxu0 %v1162
    %1509 = vmatpush1.bf16.msra.mxu0 %v1161
    %1510 = vmatprep.subr.bf16.mxu0 %v1166
    %1511 = vmatpush1.bf16.msra.mxu0 %v1165
    %1512 = vmatprep.subr.bf16.mxu0 %v1170
    %1513 = vmatpush1.bf16.msra.mxu0 %v1169
    %1514 = vmatprep.subr.bf16.mxu0 %v1174
    %1515 = vmatpush1.bf16.msra.mxu0 %v1173
    %1516 = vmatprep.subr.bf16.mxu0 %v1178
    %1517 = vmatpush1.bf16.msra.mxu0 %v1177
    %1518 = vmatprep.subr.bf16.mxu0 %v1182
    %1519 = vmatpush1.bf16.msra.mxu0 %v1181
    %1520 = vmatprep.subr.bf16.mxu0 %v1186
    %1521 = vmatpush1.bf16.msra.mxu0 %v1185
    %1522 = vmatprep.subr.bf16.mxu0 %v1190
    %1523 = vmatpush1.bf16.msra.mxu0 %v1189
    %1524 = vmatprep.mubr.bf16.mxu0 %v191
    %1525 = vmatmul.mubr.bf16.gmra.mrb[0].mxu0 %v190
    %v1526 = vpop.f32.mrb[0].mxu0
    %v1527 = vadd.f32 %v1486, %v1526
    %v1528 = vpop.f32.mrb[0].mxu0
    %v1529 = vadd.f32 %v1488, %v1528
    %v1530 = vpop.f32.mrb[0].mxu0
    %v1531 = vpop.f32.mrb[0].mxu0
    %1532 = vdwg.mxu0
    %1533 = vmatprep.subr.bf16.mxu0 %v1194
    %1534 = vmatpush1.bf16.msra.mxu0 %v1193
    %1535 = vmatprep.subr.bf16.mxu0 %v1198
    %1536 = vmatpush1.bf16.msra.mxu0 %v1197
    %1537 = vmatprep.subr.bf16.mxu0 %v1202
    %1538 = vmatpush1.bf16.msra.mxu0 %v1201
    %1539 = vmatprep.subr.bf16.mxu0 %v1206
    %1540 = vmatpush1.bf16.msra.mxu0 %v1205
    %1541 = vmatprep.subr.bf16.mxu0 %v1210
    %1542 = vmatpush1.bf16.msra.mxu0 %v1209
    %1543 = vmatprep.subr.bf16.mxu0 %v1214
    %1544 = vmatpush1.bf16.msra.mxu0 %v1213
    %1545 = vmatprep.subr.bf16.mxu0 %v1218
    %1546 = vmatpush1.bf16.msra.mxu0 %v1217
    %1547 = vmatprep.subr.bf16.mxu0 %v1222
    %1548 = vmatpush1.bf16.msra.mxu0 %v1221
    %1549 = vmatprep.subr.bf16.mxu0 %v1226
    %1550 = vmatpush1.bf16.msra.mxu0 %v1225
    %1551 = vmatprep.subr.bf16.mxu0 %v1230
    %1552 = vmatpush1.bf16.msra.mxu0 %v1229
    %1553 = vmatprep.subr.bf16.mxu0 %v1234
    %1554 = vmatpush1.bf16.msra.mxu0 %v1233
    %1555 = vmatprep.subr.bf16.mxu0 %v1238
    %1556 = vmatpush1.bf16.msra.mxu0 %v1237
    %1557 = vmatprep.subr.bf16.mxu0 %v1242
    %1558 = vmatpush1.bf16.msra.mxu0 %v1241
    %1559 = vmatprep.subr.bf16.mxu0 %v1246
    %1560 = vmatpush1.bf16.msra.mxu0 %v1245
    %1561 = vmatprep.subr.bf16.mxu0 %v1250
    %1562 = vmatpush1.bf16.msra.mxu0 %v1249
    %1563 = vmatprep.subr.bf16.mxu0 %v1254
    %1564 = vmatpush1.bf16.msra.mxu0 %v1253
    %1565 = vmatprep.mubr.bf16.mxu0 %v193
    %1566 = vmatmul.mubr.bf16.gmra.mrb[0].mxu0 %v192
    %v1567 = vpop.f32.mrb[0].mxu0
    %v1568 = vadd.f32 %v1527, %v1567
    %v1569 = vpop.f32.mrb[0].mxu0
    %v1570 = vadd.f32 %v1529, %v1569
    %v1571 = vpop.f32.mrb[0].mxu0
    %v1572 = vpop.f32.mrb[0].mxu0
    %1573 = vdwg.mxu0
    %1574 = vmatprep.subr.bf16.mxu0 %v1258
    %1575 = vmatpush1.bf16.msra.mxu0 %v1257
    %1576 = vmatprep.subr.bf16.mxu0 %v1262
    %1577 = vmatpush1.bf16.msra.mxu0 %v1261
    %1578 = vmatprep.subr.bf16.mxu0 %v1266
    %1579 = vmatpush1.bf16.msra.mxu0 %v1265
    %1580 = vmatprep.subr.bf16.mxu0 %v1270
    %1581 = vmatpush1.bf16.msra.mxu0 %v1269
    %1582 = vmatprep.subr.bf16.mxu0 %v1274
    %1583 = vmatpush1.bf16.msra.mxu0 %v1273
    %1584 = vmatprep.subr.bf16.mxu0 %v1278
    %1585 = vmatpush1.bf16.msra.mxu0 %v1277
    %1586 = vmatprep.subr.bf16.mxu0 %v1282
    %1587 = vmatpush1.bf16.msra.mxu0 %v1281
    %1588 = vmatprep.subr.bf16.mxu0 %v1286
    %1589 = vmatpush1.bf16.msra.mxu0 %v1285
    %1590 = vmatprep.subr.bf16.mxu0 0
    %1591 = vmatpush1.bf16.msra.mxu0 0
    %1592 = vmatprep.subr.bf16.mxu0 0
    %1593 = vmatpush1.bf16.msra.mxu0 0
    %1594 = vmatprep.subr.bf16.mxu0 0
    %1595 = vmatpush1.bf16.msra.mxu0 0
    %1596 = vmatprep.subr.bf16.mxu0 0
    %1597 = vmatpush1.bf16.msra.mxu0 0
    %1598 = vmatprep.subr.bf16.mxu0 0
    %1599 = vmatpush1.bf16.msra.mxu0 0
    %1600 = vmatprep.subr.bf16.mxu0 0
    %1601 = vmatpush1.bf16.msra.mxu0 0
    %1602 = vmatprep.subr.bf16.mxu0 0
    %1603 = vmatpush1.bf16.msra.mxu0 0
    %1604 = vmatprep.subr.bf16.mxu0 0
    %1605 = vmatpush1.bf16.msra.mxu0 0
    %1606 = vmatprep.mubr.bf16.mxu0 0
    %1607 = vmatmul.mubr.bf16.gmra.mrb[0].mxu0 %v194
    %v1608 = vpop.f32.mrb[0].mxu0
    %v1609 = vadd.f32 %v1568, %v1608
    %v1610 = vpop.f32.mrb[0].mxu0
    %v1611 = vadd.f32 %v1570, %v1610
    %v1612 = vpop.f32.mrb[0].mxu0
    %v1613 = vpop.f32.mrb[0].mxu0
    %1614 = vdwg.mxu0
    %v1615 = vld [vmem:[#allocation9 + $0x4] sm:$0xf]
    %v1617 = vlaneseq
    %v1618 = vshrl.u32 %v1617, 7
    %v1619 = vsub.s32 0, %v1618
    %v1620 = vrot.slane %v1615, %v1619
    %v1621 = vlaneseq
    %v1622 = vshrl.u32 %v1621, 7
    %v1623 = vsub.s32 1, %v1622
    %v1624 = vrot.slane %v1615, %v1623
    %v1625 = vlaneseq
    %v1626 = vshrl.u32 %v1625, 7
    %v1627 = vsub.s32 2, %v1626
    %v1628 = vrot.slane %v1615, %v1627
    %v1629 = vlaneseq
    %v1630 = vshrl.u32 %v1629, 7
    %v1631 = vsub.s32 3, %v1630
    %v1632 = vrot.slane %v1615, %v1631
    %v1637 = vmul.f32 %v1445, %v1620
    %v1638 = vmul.f32 %v1447, %v1624
    %v1639 = vmul.f32 %v1609, %v1628
    %v1640 = vmul.f32 %v1611, %v1632
    %v1641 = vld [vmem:[#allocation12 + $0x4] sm:$0xf]
    %v1643 = vlaneseq
    %v1644 = vshrl.u32 %v1643, 7
    %v1645 = vsub.s32 0, %v1644
    %v1646 = vrot.slane %v1641, %v1645
    %v1647 = vlaneseq
    %v1648 = vshrl.u32 %v1647, 7
    %v1649 = vsub.s32 1, %v1648
    %v1650 = vrot.slane %v1641, %v1649
    %v1651 = vlaneseq
    %v1652 = vshrl.u32 %v1651, 7
    %v1653 = vsub.s32 2, %v1652
    %v1654 = vrot.slane %v1641, %v1653
    %v1655 = vlaneseq
    %v1656 = vshrl.u32 %v1655, 7
    %v1657 = vsub.s32 3, %v1656
    %v1658 = vrot.slane %v1641, %v1657
    %v1663 = vadd.f32 %v1637, %v1646
    %v1664 = vadd.f32 %v1638, %v1650
    %v1665 = vadd.f32 %v1639, %v1654
    %v1666 = vadd.f32 %v1640, %v1658
    %v1667 = vmax.f32 %v1663, 0.0
    %v1668 = vmax.f32 %v1664, 0.0
    %v1669 = vmax.f32 %v1665, 0.0
    %v1670 = vmax.f32 %v1666, 0.0
    %1671 = vst [vmem:[#allocation2 + $0x20] sm:$0xff] %v1667
    %1672 = vst [vmem:[#allocation2 + $0x28] sm:$0xff] %v1668
    %1673 = vst [vmem:[#allocation2 + $0x30] sm:$0xff] %v1669
    %1674 = vst [vmem:[#allocation2 + $0x38] sm:$0xff] %v1670
    %s1675 = sshll.u32 %s196, 4
    %1676 = dma.done [#allocation8], %s1675
    %s1677 = scalar_lea.hbm %s1, 43008
    // Predicated region
    $region98: #{adversarial_forward.1} parent=1 // pred_check
      _
    $region99: #{adversarial_forward.1} parent=1 // pred_check_branch
      %1679 = sbr.rel target = $region101
    $region100: #{adversarial_forward.1} parent=1 // pred_region
      %1680 = sst [smem:[#allocation27]] [#allocation38]
      %1681 = sst [smem:[#allocation28]] [#allocation37]
    $region101: #{adversarial_forward.1} parent=1 // pred_fallthru
      _
    %1683 = shalt.err (0)
    %s1685 = sshll.u32 %s200, 4
    %s1686 = int_to_ptr.vmem [resolvable:$true] %s1685
    %1688 = dma.hbm_to_vmem [thread:$0]  %s1677, 14336, %s1686, %s201
    %v1689 = vld [vmem:[#allocation5] sm:$0xff]
    %v1690 = vld [vmem:[#allocation5 + $0x8] sm:$0xff]
    %v1691 = vld [vmem:[#allocation5 + $0x10] sm:$0xff]
    %v1692 = vld [vmem:[#allocation5 + $0x18] sm:$0xff]
    %v1693 = vld [vmem:[#allocation5 + $0x20] sm:$0xff]
    %v1694 = vld [vmem:[#allocation5 + $0x28] sm:$0xff]
    %v1695 = vld [vmem:[#allocation5 + $0x30] sm:$0xff]
    %v1696 = vld [vmem:[#allocation5 + $0x38] sm:$0xff]
    %v1697 = vld [vmem:[#allocation5 + $0x40] sm:$0xff]
    %v1698 = vld [vmem:[#allocation5 + $0x48] sm:$0xff]
    %v1699 = vld [vmem:[#allocation5 + $0x50] sm:$0xff]
    %v1700 = vld [vmem:[#allocation5 + $0x58] sm:$0xff]
    %v1701 = vld [vmem:[#allocation5 + $0x60] sm:$0xff]
    %v1702 = vld [vmem:[#allocation5 + $0x68] sm:$0xff]
    %v1703 = vld [vmem:[#allocation5 + $0x70] sm:$0xff]
    %v1704 = vld [vmem:[#allocation5 + $0x78] sm:$0xff]
    %v1705 = vld [vmem:[#allocation5 + $0x80] sm:$0xff]
    %v1706 = vld [vmem:[#allocation5 + $0x88] sm:$0xff]
    %v1707 = vld [vmem:[#allocation5 + $0x90] sm:$0xff]
    %v1708 = vld [vmem:[#allocation5 + $0x98] sm:$0xff]
    %v1709 = vld [vmem:[#allocation5 + $0xa0] sm:$0xff]
    %v1710 = vld [vmem:[#allocation5 + $0xa8] sm:$0xff]
    %v1711 = vld [vmem:[#allocation5 + $0xb0] sm:$0xff]
    %v1712 = vld [vmem:[#allocation5 + $0xb8] sm:$0xff]
    %v1713 = vld [vmem:[#allocation5 + $0xc0] sm:$0xff]
    %v1714 = vld [vmem:[#allocation5 + $0xc8] sm:$0xff]
    %v1715 = vld [vmem:[#allocation5 + $0xd0] sm:$0xff]
    %v1716 = vld [vmem:[#allocation5 + $0xd8] sm:$0xff]
    %v1717 = vld [vmem:[#allocation5 + $0xe0] sm:$0xff]
    %v1718 = vld [vmem:[#allocation5 + $0xe8] sm:$0xff]
    %v1719 = vld [vmem:[#allocation5 + $0xf0] sm:$0xff]
    %v1720 = vld [vmem:[#allocation5 + $0xf8] sm:$0xff]
    %v1721 = vld [vmem:[#allocation5 + $0x100] sm:$0xff]
    %v1722 = vld [vmem:[#allocation5 + $0x108] sm:$0xff]
    %v1723 = vld [vmem:[#allocation5 + $0x110] sm:$0xff]
    %v1724 = vld [vmem:[#allocation5 + $0x118] sm:$0xff]
    %v1725 = vld [vmem:[#allocation5 + $0x120] sm:$0xff]
    %v1726 = vld [vmem:[#allocation5 + $0x128] sm:$0xff]
    %v1727 = vld [vmem:[#allocation5 + $0x130] sm:$0xff]
    %v1728 = vld [vmem:[#allocation5 + $0x138] sm:$0xff]
    %v1729 = vld [vmem:[#allocation5 + $0x140] sm:$0xff]
    %v1730 = vld [vmem:[#allocation5 + $0x148] sm:$0xff]
    %v1731 = vld [vmem:[#allocation5 + $0x150] sm:$0xff]
    %v1732 = vld [vmem:[#allocation5 + $0x158] sm:$0xff]
    %v1733 = vld [vmem:[#allocation5 + $0x160] sm:$0xff]
    %v1734 = vld [vmem:[#allocation5 + $0x168] sm:$0xff]
    %v1735 = vld [vmem:[#allocation5 + $0x170] sm:$0xff]
    %v1736 = vld [vmem:[#allocation5 + $0x178] sm:$0xff]
    %v1737 = vld [vmem:[#allocation5 + $0x180] sm:$0xff]
    %v1738 = vld [vmem:[#allocation5 + $0x188] sm:$0xff]
    %v1739 = vld [vmem:[#allocation5 + $0x190] sm:$0xff]
    %v1740 = vld [vmem:[#allocation5 + $0x198] sm:$0xff]
    %v1741 = vld [vmem:[#allocation5 + $0x1a0] sm:$0xff]
    %v1742 = vld [vmem:[#allocation5 + $0x1a8] sm:$0xff]
    %v1743 = vld [vmem:[#allocation5 + $0x1b0] sm:$0xff]
    %v1744 = vld [vmem:[#allocation5 + $0x1b8] sm:$0xff]
    %v1745 = vld [vmem:[#allocation5 + $0x1c0] sm:$0xff]
    %v1746 = vld [vmem:[#allocation5 + $0x1c8] sm:$0xff]
    %v1747 = vld [vmem:[#allocation5 + $0x1d0] sm:$0xff]
    %v1748 = vld [vmem:[#allocation5 + $0x1d8] sm:$0xff]
    %v1749 = vld [vmem:[#allocation5 + $0x1e0] sm:$0xff]
    %v1750 = vld [vmem:[#allocation5 + $0x1e8] sm:$0xff]
    %v1751 = vld [vmem:[#allocation5 + $0x1f0] sm:$0xff]
    %v1752 = vld [vmem:[#allocation5 + $0x1f8] sm:$0xff]
    %v1753 = vld [vmem:[#allocation5 + $0x200] sm:$0xff]
    %v1754 = vld [vmem:[#allocation5 + $0x208] sm:$0xff]
    %v1755 = vld [vmem:[#allocation5 + $0x210] sm:$0xff]
    %v1756 = vld [vmem:[#allocation5 + $0x218] sm:$0xff]
    %v1757 = vld [vmem:[#allocation5 + $0x220] sm:$0xff]
    %v1758 = vld [vmem:[#allocation5 + $0x228] sm:$0xff]
    %v1759 = vld [vmem:[#allocation5 + $0x230] sm:$0xff]
    %v1760 = vld [vmem:[#allocation5 + $0x238] sm:$0xff]
    %v1761 = vld [vmem:[#allocation5 + $0x240] sm:$0xff]
    %v1762 = vld [vmem:[#allocation5 + $0x248] sm:$0xff]
    %v1763 = vld [vmem:[#allocation5 + $0x250] sm:$0xff]
    %v1764 = vld [vmem:[#allocation5 + $0x258] sm:$0xff]
    %v1765 = vld [vmem:[#allocation5 + $0x260] sm:$0xff]
    %v1766 = vld [vmem:[#allocation5 + $0x268] sm:$0xff]
    %v1767 = vld [vmem:[#allocation5 + $0x270] sm:$0xff]
    %v1768 = vld [vmem:[#allocation5 + $0x278] sm:$0xff]
    %v1769 = vld [vmem:[#allocation5 + $0x280] sm:$0xff]
    %v1770 = vld [vmem:[#allocation5 + $0x288] sm:$0xff]
    %v1771 = vld [vmem:[#allocation5 + $0x290] sm:$0xff]
    %v1772 = vld [vmem:[#allocation5 + $0x298] sm:$0xff]
    %v1773 = vld [vmem:[#allocation5 + $0x2a0] sm:$0xff]
    %v1774 = vld [vmem:[#allocation5 + $0x2a8] sm:$0xff]
    %v1775 = vld [vmem:[#allocation5 + $0x2b0] sm:$0xff]
    %v1776 = vld [vmem:[#allocation5 + $0x2b8] sm:$0xff]
    %v1777 = vld [vmem:[#allocation5 + $0x2c0] sm:$0xff]
    %v1778 = vld [vmem:[#allocation5 + $0x2c8] sm:$0xff]
    %v1779 = vld [vmem:[#allocation5 + $0x2d0] sm:$0xff]
    %v1780 = vld [vmem:[#allocation5 + $0x2d8] sm:$0xff]
    %v1781 = vld [vmem:[#allocation5 + $0x2e0] sm:$0xff]
    %v1782 = vld [vmem:[#allocation5 + $0x2e8] sm:$0xff]
    %v1783 = vld [vmem:[#allocation5 + $0x2f0] sm:$0xff]
    %v1784 = vld [vmem:[#allocation5 + $0x2f8] sm:$0xff]
    %v1785 = vld [vmem:[#allocation5 + $0x300] sm:$0xff]
    %v1786 = vld [vmem:[#allocation5 + $0x308] sm:$0xff]
    %v1787 = vld [vmem:[#allocation5 + $0x310] sm:$0xff]
    %v1788 = vld [vmem:[#allocation5 + $0x318] sm:$0xff]
    %v1789 = vld [vmem:[#allocation5 + $0x320] sm:$0xff]
    %v1790 = vld [vmem:[#allocation5 + $0x328] sm:$0xff]
    %v1791 = vld [vmem:[#allocation5 + $0x330] sm:$0xff]
    %v1792 = vld [vmem:[#allocation5 + $0x338] sm:$0xff]
    %v1793 = vld [vmem:[#allocation5 + $0x340] sm:$0xff]
    %v1794 = vld [vmem:[#allocation5 + $0x348] sm:$0xff]
    %v1795 = vld [vmem:[#allocation5 + $0x350] sm:$0xff]
    %v1796 = vld [vmem:[#allocation5 + $0x358] sm:$0xff]
    %v1797 = vld [vmem:[#allocation5 + $0x360] sm:$0xff]
    %v1798 = vld [vmem:[#allocation5 + $0x368] sm:$0xff]
    %v1799 = vld [vmem:[#allocation5 + $0x370] sm:$0xff]
    %v1800 = vld [vmem:[#allocation5 + $0x378] sm:$0xff]
    %v1801 = vunpack.c.l.s8.bf16 %v1689
    %v1802 = vunpack.c.l.s8.bf16 %v1690
    %v1803 = vunpack.c.l.s8.bf16 %v1691
    %v1804 = vunpack.c.l.s8.bf16 %v1692
    %v1805 = vunpack.c.h.s8.bf16 %v1689
    %v1806 = vunpack.c.h.s8.bf16 %v1690
    %v1807 = vunpack.c.h.s8.bf16 %v1691
    %v1808 = vunpack.c.h.s8.bf16 %v1692
    %v1809 = vunpack.c.l.s8.bf16 %v1693
    %v1810 = vunpack.c.l.s8.bf16 %v1694
    %v1811 = vunpack.c.l.s8.bf16 %v1695
    %v1812 = vunpack.c.l.s8.bf16 %v1696
    %v1813 = vunpack.c.h.s8.bf16 %v1693
    %v1814 = vunpack.c.h.s8.bf16 %v1694
    %v1815 = vunpack.c.h.s8.bf16 %v1695
    %v1816 = vunpack.c.h.s8.bf16 %v1696
    %v1817 = vunpack.c.l.s8.bf16 %v1697
    %v1818 = vunpack.c.l.s8.bf16 %v1698
    %v1819 = vunpack.c.l.s8.bf16 %v1699
    %v1820 = vunpack.c.l.s8.bf16 %v1700
    %v1821 = vunpack.c.h.s8.bf16 %v1697
    %v1822 = vunpack.c.h.s8.bf16 %v1698
    %v1823 = vunpack.c.h.s8.bf16 %v1699
    %v1824 = vunpack.c.h.s8.bf16 %v1700
    %v1825 = vunpack.c.l.s8.bf16 %v1701
    %v1826 = vunpack.c.l.s8.bf16 %v1702
    %v1827 = vunpack.c.l.s8.bf16 %v1703
    %v1828 = vunpack.c.l.s8.bf16 %v1704
    %v1829 = vunpack.c.h.s8.bf16 %v1701
    %v1830 = vunpack.c.h.s8.bf16 %v1702
    %v1831 = vunpack.c.h.s8.bf16 %v1703
    %v1832 = vunpack.c.h.s8.bf16 %v1704
    %v1833 = vunpack.c.l.s8.bf16 %v1705
    %v1834 = vunpack.c.l.s8.bf16 %v1706
    %v1835 = vunpack.c.l.s8.bf16 %v1707
    %v1836 = vunpack.c.l.s8.bf16 %v1708
    %v1837 = vunpack.c.h.s8.bf16 %v1705
    %v1838 = vunpack.c.h.s8.bf16 %v1706
    %v1839 = vunpack.c.h.s8.bf16 %v1707
    %v1840 = vunpack.c.h.s8.bf16 %v1708
    %v1841 = vunpack.c.l.s8.bf16 %v1709
    %v1842 = vunpack.c.l.s8.bf16 %v1710
    %v1843 = vunpack.c.l.s8.bf16 %v1711
    %v1844 = vunpack.c.l.s8.bf16 %v1712
    %v1845 = vunpack.c.h.s8.bf16 %v1709
    %v1846 = vunpack.c.h.s8.bf16 %v1710
    %v1847 = vunpack.c.h.s8.bf16 %v1711
    %v1848 = vunpack.c.h.s8.bf16 %v1712
    %v1849 = vunpack.c.l.s8.bf16 %v1713
    %v1850 = vunpack.c.l.s8.bf16 %v1714
    %v1851 = vunpack.c.l.s8.bf16 %v1715
    %v1852 = vunpack.c.l.s8.bf16 %v1716
    %v1853 = vunpack.c.h.s8.bf16 %v1713
    %v1854 = vunpack.c.h.s8.bf16 %v1714
    %v1855 = vunpack.c.h.s8.bf16 %v1715
    %v1856 = vunpack.c.h.s8.bf16 %v1716
    %v1857 = vunpack.c.l.s8.bf16 %v1717
    %v1858 = vunpack.c.l.s8.bf16 %v1718
    %v1859 = vunpack.c.l.s8.bf16 %v1719
    %v1860 = vunpack.c.l.s8.bf16 %v1720
    %v1861 = vunpack.c.h.s8.bf16 %v1717
    %v1862 = vunpack.c.h.s8.bf16 %v1718
    %v1863 = vunpack.c.h.s8.bf16 %v1719
    %v1864 = vunpack.c.h.s8.bf16 %v1720
    %v1865 = vunpack.c.l.s8.bf16 %v1721
    %v1866 = vunpack.c.l.s8.bf16 %v1722
    %v1867 = vunpack.c.l.s8.bf16 %v1723
    %v1868 = vunpack.c.l.s8.bf16 %v1724
    %v1869 = vunpack.c.h.s8.bf16 %v1721
    %v1870 = vunpack.c.h.s8.bf16 %v1722
    %v1871 = vunpack.c.h.s8.bf16 %v1723
    %v1872 = vunpack.c.h.s8.bf16 %v1724
    %v1873 = vunpack.c.l.s8.bf16 %v1725
    %v1874 = vunpack.c.l.s8.bf16 %v1726
    %v1875 = vunpack.c.l.s8.bf16 %v1727
    %v1876 = vunpack.c.l.s8.bf16 %v1728
    %v1877 = vunpack.c.h.s8.bf16 %v1725
    %v1878 = vunpack.c.h.s8.bf16 %v1726
    %v1879 = vunpack.c.h.s8.bf16 %v1727
    %v1880 = vunpack.c.h.s8.bf16 %v1728
    %v1881 = vunpack.c.l.s8.bf16 %v1729
    %v1882 = vunpack.c.l.s8.bf16 %v1730
    %v1883 = vunpack.c.l.s8.bf16 %v1731
    %v1884 = vunpack.c.l.s8.bf16 %v1732
    %v1885 = vunpack.c.h.s8.bf16 %v1729
    %v1886 = vunpack.c.h.s8.bf16 %v1730
    %v1887 = vunpack.c.h.s8.bf16 %v1731
    %v1888 = vunpack.c.h.s8.bf16 %v1732
    %v1889 = vunpack.c.l.s8.bf16 %v1733
    %v1890 = vunpack.c.l.s8.bf16 %v1734
    %v1891 = vunpack.c.l.s8.bf16 %v1735
    %v1892 = vunpack.c.l.s8.bf16 %v1736
    %v1893 = vunpack.c.h.s8.bf16 %v1733
    %v1894 = vunpack.c.h.s8.bf16 %v1734
    %v1895 = vunpack.c.h.s8.bf16 %v1735
    %v1896 = vunpack.c.h.s8.bf16 %v1736
    %v1897 = vunpack.c.l.s8.bf16 %v1737
    %v1898 = vunpack.c.l.s8.bf16 %v1738
    %v1899 = vunpack.c.l.s8.bf16 %v1739
    %v1900 = vunpack.c.l.s8.bf16 %v1740
    %v1901 = vunpack.c.h.s8.bf16 %v1737
    %v1902 = vunpack.c.h.s8.bf16 %v1738
    %v1903 = vunpack.c.h.s8.bf16 %v1739
    %v1904 = vunpack.c.h.s8.bf16 %v1740
    %v1905 = vunpack.c.l.s8.bf16 %v1741
    %v1906 = vunpack.c.l.s8.bf16 %v1742
    %v1907 = vunpack.c.l.s8.bf16 %v1743
    %v1908 = vunpack.c.l.s8.bf16 %v1744
    %v1909 = vunpack.c.h.s8.bf16 %v1741
    %v1910 = vunpack.c.h.s8.bf16 %v1742
    %v1911 = vunpack.c.h.s8.bf16 %v1743
    %v1912 = vunpack.c.h.s8.bf16 %v1744
    %v1913 = vunpack.c.l.s8.bf16 %v1745
    %v1914 = vunpack.c.l.s8.bf16 %v1746
    %v1915 = vunpack.c.l.s8.bf16 %v1747
    %v1916 = vunpack.c.l.s8.bf16 %v1748
    %v1917 = vunpack.c.h.s8.bf16 %v1745
    %v1918 = vunpack.c.h.s8.bf16 %v1746
    %v1919 = vunpack.c.h.s8.bf16 %v1747
    %v1920 = vunpack.c.h.s8.bf16 %v1748
    %v1921 = vunpack.c.l.s8.bf16 %v1749
    %v1922 = vunpack.c.l.s8.bf16 %v1750
    %v1923 = vunpack.c.l.s8.bf16 %v1751
    %v1924 = vunpack.c.l.s8.bf16 %v1752
    %v1925 = vunpack.c.h.s8.bf16 %v1749
    %v1926 = vunpack.c.h.s8.bf16 %v1750
    %v1927 = vunpack.c.h.s8.bf16 %v1751
    %v1928 = vunpack.c.h.s8.bf16 %v1752
    %v1929 = vunpack.c.l.s8.bf16 %v1753
    %v1930 = vunpack.c.l.s8.bf16 %v1754
    %v1931 = vunpack.c.l.s8.bf16 %v1755
    %v1932 = vunpack.c.l.s8.bf16 %v1756
    %v1933 = vunpack.c.h.s8.bf16 %v1753
    %v1934 = vunpack.c.h.s8.bf16 %v1754
    %v1935 = vunpack.c.h.s8.bf16 %v1755
    %v1936 = vunpack.c.h.s8.bf16 %v1756
    %v1937 = vunpack.c.l.s8.bf16 %v1757
    %v1938 = vunpack.c.l.s8.bf16 %v1758
    %v1939 = vunpack.c.l.s8.bf16 %v1759
    %v1940 = vunpack.c.l.s8.bf16 %v1760
    %v1941 = vunpack.c.h.s8.bf16 %v1757
    %v1942 = vunpack.c.h.s8.bf16 %v1758
    %v1943 = vunpack.c.h.s8.bf16 %v1759
    %v1944 = vunpack.c.h.s8.bf16 %v1760
    %v1945 = vunpack.c.l.s8.bf16 %v1761
    %v1946 = vunpack.c.l.s8.bf16 %v1762
    %v1947 = vunpack.c.l.s8.bf16 %v1763
    %v1948 = vunpack.c.l.s8.bf16 %v1764
    %v1949 = vunpack.c.h.s8.bf16 %v1761
    %v1950 = vunpack.c.h.s8.bf16 %v1762
    %v1951 = vunpack.c.h.s8.bf16 %v1763
    %v1952 = vunpack.c.h.s8.bf16 %v1764
    %v1953 = vunpack.c.l.s8.bf16 %v1765
    %v1954 = vunpack.c.l.s8.bf16 %v1766
    %v1955 = vunpack.c.l.s8.bf16 %v1767
    %v1956 = vunpack.c.l.s8.bf16 %v1768
    %v1957 = vunpack.c.h.s8.bf16 %v1765
    %v1958 = vunpack.c.h.s8.bf16 %v1766
    %v1959 = vunpack.c.h.s8.bf16 %v1767
    %v1960 = vunpack.c.h.s8.bf16 %v1768
    %v1961 = vunpack.c.l.s8.bf16 %v1769
    %v1962 = vunpack.c.l.s8.bf16 %v1770
    %v1963 = vunpack.c.l.s8.bf16 %v1771
    %v1964 = vunpack.c.l.s8.bf16 %v1772
    %v1965 = vunpack.c.h.s8.bf16 %v1769
    %v1966 = vunpack.c.h.s8.bf16 %v1770
    %v1967 = vunpack.c.h.s8.bf16 %v1771
    %v1968 = vunpack.c.h.s8.bf16 %v1772
    %v1969 = vunpack.c.l.s8.bf16 %v1773
    %v1970 = vunpack.c.l.s8.bf16 %v1774
    %v1971 = vunpack.c.l.s8.bf16 %v1775
    %v1972 = vunpack.c.l.s8.bf16 %v1776
    %v1973 = vunpack.c.h.s8.bf16 %v1773
    %v1974 = vunpack.c.h.s8.bf16 %v1774
    %v1975 = vunpack.c.h.s8.bf16 %v1775
    %v1976 = vunpack.c.h.s8.bf16 %v1776
    %v1977 = vunpack.c.l.s8.bf16 %v1777
    %v1978 = vunpack.c.l.s8.bf16 %v1778
    %v1979 = vunpack.c.l.s8.bf16 %v1779
    %v1980 = vunpack.c.l.s8.bf16 %v1780
    %v1981 = vunpack.c.h.s8.bf16 %v1777
    %v1982 = vunpack.c.h.s8.bf16 %v1778
    %v1983 = vunpack.c.h.s8.bf16 %v1779
    %v1984 = vunpack.c.h.s8.bf16 %v1780
    %v1985 = vunpack.c.l.s8.bf16 %v1781
    %v1986 = vunpack.c.l.s8.bf16 %v1782
    %v1987 = vunpack.c.l.s8.bf16 %v1783
    %v1988 = vunpack.c.l.s8.bf16 %v1784
    %v1989 = vunpack.c.h.s8.bf16 %v1781
    %v1990 = vunpack.c.h.s8.bf16 %v1782
    %v1991 = vunpack.c.h.s8.bf16 %v1783
    %v1992 = vunpack.c.h.s8.bf16 %v1784
    %v1993 = vunpack.c.l.s8.bf16 %v1785
    %v1994 = vunpack.c.l.s8.bf16 %v1786
    %v1995 = vunpack.c.l.s8.bf16 %v1787
    %v1996 = vunpack.c.l.s8.bf16 %v1788
    %v1997 = vunpack.c.h.s8.bf16 %v1785
    %v1998 = vunpack.c.h.s8.bf16 %v1786
    %v1999 = vunpack.c.h.s8.bf16 %v1787
    %v2000 = vunpack.c.h.s8.bf16 %v1788
    %v2001 = vunpack.c.l.s8.bf16 %v1789
    %v2002 = vunpack.c.l.s8.bf16 %v1790
    %v2003 = vunpack.c.l.s8.bf16 %v1791
    %v2004 = vunpack.c.l.s8.bf16 %v1792
    %v2005 = vunpack.c.h.s8.bf16 %v1789
    %v2006 = vunpack.c.h.s8.bf16 %v1790
    %v2007 = vunpack.c.h.s8.bf16 %v1791
    %v2008 = vunpack.c.h.s8.bf16 %v1792
    %v2009 = vunpack.c.l.s8.bf16 %v1793
    %v2010 = vunpack.c.l.s8.bf16 %v1794
    %v2011 = vunpack.c.l.s8.bf16 %v1795
    %v2012 = vunpack.c.l.s8.bf16 %v1796
    %v2013 = vunpack.c.h.s8.bf16 %v1793
    %v2014 = vunpack.c.h.s8.bf16 %v1794
    %v2015 = vunpack.c.h.s8.bf16 %v1795
    %v2016 = vunpack.c.h.s8.bf16 %v1796
    %v2017 = vunpack.c.l.s8.bf16 %v1797
    %v2018 = vunpack.c.l.s8.bf16 %v1798
    %v2019 = vunpack.c.l.s8.bf16 %v1799
    %v2020 = vunpack.c.l.s8.bf16 %v1800
    %v2021 = vunpack.c.h.s8.bf16 %v1797
    %v2022 = vunpack.c.h.s8.bf16 %v1798
    %v2023 = vunpack.c.h.s8.bf16 %v1799
    %v2024 = vunpack.c.h.s8.bf16 %v1800
    %2025 = vmatprep.subr.bf16.mxu0 %v1802
    %2026 = vmatpush1.bf16.msra.mxu0 %v1801
    %2027 = vmatprep.subr.bf16.mxu0 %v1806
    %2028 = vmatpush1.bf16.msra.mxu0 %v1805
    %2029 = vmatprep.subr.bf16.mxu0 %v1810
    %2030 = vmatpush1.bf16.msra.mxu0 %v1809
    %2031 = vmatprep.subr.bf16.mxu0 %v1814
    %2032 = vmatpush1.bf16.msra.mxu0 %v1813
    %2033 = vmatprep.subr.bf16.mxu0 %v1818
    %2034 = vmatpush1.bf16.msra.mxu0 %v1817
    %2035 = vmatprep.subr.bf16.mxu0 %v1822
    %2036 = vmatpush1.bf16.msra.mxu0 %v1821
    %2037 = vmatprep.subr.bf16.mxu0 %v1826
    %2038 = vmatpush1.bf16.msra.mxu0 %v1825
    %2039 = vmatprep.subr.bf16.mxu0 %v1830
    %2040 = vmatpush1.bf16.msra.mxu0 %v1829
    %2041 = vmatprep.subr.bf16.mxu0 %v1834
    %2042 = vmatpush1.bf16.msra.mxu0 %v1833
    %2043 = vmatprep.subr.bf16.mxu0 %v1838
    %2044 = vmatpush1.bf16.msra.mxu0 %v1837
    %2045 = vmatprep.subr.bf16.mxu0 %v1842
    %2046 = vmatpush1.bf16.msra.mxu0 %v1841
    %2047 = vmatprep.subr.bf16.mxu0 %v1846
    %2048 = vmatpush1.bf16.msra.mxu0 %v1845
    %2049 = vmatprep.subr.bf16.mxu0 %v1850
    %2050 = vmatpush1.bf16.msra.mxu0 %v1849
    %2051 = vmatprep.subr.bf16.mxu0 %v1854
    %2052 = vmatpush1.bf16.msra.mxu0 %v1853
    %2053 = vmatprep.subr.bf16.mxu0 %v1858
    %2054 = vmatpush1.bf16.msra.mxu0 %v1857
    %2055 = vmatprep.subr.bf16.mxu0 %v1862
    %2056 = vmatpush1.bf16.msra.mxu0 %v1861
    %2057 = vmatprep.mubr.bf16.mxu0 %v189
    %2058 = vmatmul.mubr.bf16.gmra.mrb[0].mxu0 %v188
    %v2059 = vpop.f32.mrb[0].mxu0
    %v2060 = vadd.f32 0.0, %v2059
    %v2061 = vpop.f32.mrb[0].mxu0
    %v2062 = vadd.f32 0.0, %v2061
    %v2063 = vpop.f32.mrb[0].mxu0
    %v2064 = vpop.f32.mrb[0].mxu0
    %2065 = vdwg.mxu0
    %2066 = vmatprep.subr.bf16.mxu0 %v1866
    %2067 = vmatpush1.bf16.msra.mxu0 %v1865
    %2068 = vmatprep.subr.bf16.mxu0 %v1870
    %2069 = vmatpush1.bf16.msra.mxu0 %v1869
    %2070 = vmatprep.subr.bf16.mxu0 %v1874
    %2071 = vmatpush1.bf16.msra.mxu0 %v1873
    %2072 = vmatprep.subr.bf16.mxu0 %v1878
    %2073 = vmatpush1.bf16.msra.mxu0 %v1877
    %2074 = vmatprep.subr.bf16.mxu0 %v1882
    %2075 = vmatpush1.bf16.msra.mxu0 %v1881
    %2076 = vmatprep.subr.bf16.mxu0 %v1886
    %2077 = vmatpush1.bf16.msra.mxu0 %v1885
    %2078 = vmatprep.subr.bf16.mxu0 %v1890
    %2079 = vmatpush1.bf16.msra.mxu0 %v1889
    %2080 = vmatprep.subr.bf16.mxu0 %v1894
    %2081 = vmatpush1.bf16.msra.mxu0 %v1893
    %2082 = vmatprep.subr.bf16.mxu0 %v1898
    %2083 = vmatpush1.bf16.msra.mxu0 %v1897
    %2084 = vmatprep.subr.bf16.mxu0 %v1902
    %2085 = vmatpush1.bf16.msra.mxu0 %v1901
    %2086 = vmatprep.subr.bf16.mxu0 %v1906
    %2087 = vmatpush1.bf16.msra.mxu0 %v1905
    %2088 = vmatprep.subr.bf16.mxu0 %v1910
    %2089 = vmatpush1.bf16.msra.mxu0 %v1909
    %2090 = vmatprep.subr.bf16.mxu0 %v1914
    %2091 = vmatpush1.bf16.msra.mxu0 %v1913
    %2092 = vmatprep.subr.bf16.mxu0 %v1918
    %2093 = vmatpush1.bf16.msra.mxu0 %v1917
    %2094 = vmatprep.subr.bf16.mxu0 %v1922
    %2095 = vmatpush1.bf16.msra.mxu0 %v1921
    %2096 = vmatprep.subr.bf16.mxu0 %v1926
    %2097 = vmatpush1.bf16.msra.mxu0 %v1925
    %2098 = vmatprep.mubr.bf16.mxu0 %v191
    %2099 = vmatmul.mubr.bf16.gmra.mrb[0].mxu0 %v190
    %v2100 = vpop.f32.mrb[0].mxu0
    %v2101 = vadd.f32 %v2060, %v2100
    %v2102 = vpop.f32.mrb[0].mxu0
    %v2103 = vadd.f32 %v2062, %v2102
    %v2104 = vpop.f32.mrb[0].mxu0
    %v2105 = vpop.f32.mrb[0].mxu0
    %2106 = vdwg.mxu0
    %2107 = vmatprep.subr.bf16.mxu0 %v1930
    %2108 = vmatpush1.bf16.msra.mxu0 %v1929
    %2109 = vmatprep.subr.bf16.mxu0 %v1934
    %2110 = vmatpush1.bf16.msra.mxu0 %v1933
    %2111 = vmatprep.subr.bf16.mxu0 %v1938
    %2112 = vmatpush1.bf16.msra.mxu0 %v1937
    %2113 = vmatprep.subr.bf16.mxu0 %v1942
    %2114 = vmatpush1.bf16.msra.mxu0 %v1941
    %2115 = vmatprep.subr.bf16.mxu0 %v1946
    %2116 = vmatpush1.bf16.msra.mxu0 %v1945
    %2117 = vmatprep.subr.bf16.mxu0 %v1950
    %2118 = vmatpush1.bf16.msra.mxu0 %v1949
    %2119 = vmatprep.subr.bf16.mxu0 %v1954
    %2120 = vmatpush1.bf16.msra.mxu0 %v1953
    %2121 = vmatprep.subr.bf16.mxu0 %v1958
    %2122 = vmatpush1.bf16.msra.mxu0 %v1957
    %2123 = vmatprep.subr.bf16.mxu0 %v1962
    %2124 = vmatpush1.bf16.msra.mxu0 %v1961
    %2125 = vmatprep.subr.bf16.mxu0 %v1966
    %2126 = vmatpush1.bf16.msra.mxu0 %v1965
    %2127 = vmatprep.subr.bf16.mxu0 %v1970
    %2128 = vmatpush1.bf16.msra.mxu0 %v1969
    %2129 = vmatprep.subr.bf16.mxu0 %v1974
    %2130 = vmatpush1.bf16.msra.mxu0 %v1973
    %2131 = vmatprep.subr.bf16.mxu0 %v1978
    %2132 = vmatpush1.bf16.msra.mxu0 %v1977
    %2133 = vmatprep.subr.bf16.mxu0 %v1982
    %2134 = vmatpush1.bf16.msra.mxu0 %v1981
    %2135 = vmatprep.subr.bf16.mxu0 %v1986
    %2136 = vmatpush1.bf16.msra.mxu0 %v1985
    %2137 = vmatprep.subr.bf16.mxu0 %v1990
    %2138 = vmatpush1.bf16.msra.mxu0 %v1989
    %2139 = vmatprep.mubr.bf16.mxu0 %v193
    %2140 = vmatmul.mubr.bf16.gmra.mrb[0].mxu0 %v192
    %v2141 = vpop.f32.mrb[0].mxu0
    %v2142 = vadd.f32 %v2101, %v2141
    %v2143 = vpop.f32.mrb[0].mxu0
    %v2144 = vadd.f32 %v2103, %v2143
    %v2145 = vpop.f32.mrb[0].mxu0
    %v2146 = vpop.f32.mrb[0].mxu0
    %2147 = vdwg.mxu0
    %2148 = vmatprep.subr.bf16.mxu0 %v1994
    %2149 = vmatpush1.bf16.msra.mxu0 %v1993
    %2150 = vmatprep.subr.bf16.mxu0 %v1998
    %2151 = vmatpush1.bf16.msra.mxu0 %v1997
    %2152 = vmatprep.subr.bf16.mxu0 %v2002
    %2153 = vmatpush1.bf16.msra.mxu0 %v2001
    %2154 = vmatprep.subr.bf16.mxu0 %v2006
    %2155 = vmatpush1.bf16.msra.mxu0 %v2005
    %2156 = vmatprep.subr.bf16.mxu0 %v2010
    %2157 = vmatpush1.bf16.msra.mxu0 %v2009
    %2158 = vmatprep.subr.bf16.mxu0 %v2014
    %2159 = vmatpush1.bf16.msra.mxu0 %v2013
    %2160 = vmatprep.subr.bf16.mxu0 %v2018
    %2161 = vmatpush1.bf16.msra.mxu0 %v2017
    %2162 = vmatprep.subr.bf16.mxu0 %v2022
    %2163 = vmatpush1.bf16.msra.mxu0 %v2021
    %2164 = vmatprep.subr.bf16.mxu0 0
    %2165 = vmatpush1.bf16.msra.mxu0 0
    %2166 = vmatprep.subr.bf16.mxu0 0
    %2167 = vmatpush1.bf16.msra.mxu0 0
    %2168 = vmatprep.subr.bf16.mxu0 0
    %2169 = vmatpush1.bf16.msra.mxu0 0
    %2170 = vmatprep.subr.bf16.mxu0 0
    %2171 = vmatpush1.bf16.msra.mxu0 0
    %2172 = vmatprep.subr.bf16.mxu0 0
    %2173 = vmatpush1.bf16.msra.mxu0 0
    %2174 = vmatprep.subr.bf16.mxu0 0
    %2175 = vmatpush1.bf16.msra.mxu0 0
    %2176 = vmatprep.subr.bf16.mxu0 0
    %2177 = vmatpush1.bf16.msra.mxu0 0
    %2178 = vmatprep.subr.bf16.mxu0 0
    %2179 = vmatpush1.bf16.msra.mxu0 0
    %2180 = vmatprep.mubr.bf16.mxu0 0
    %2181 = vmatmul.mubr.bf16.gmra.mrb[0].mxu0 %v194
    %v2182 = vpop.f32.mrb[0].mxu0
    %v2183 = vadd.f32 %v2142, %v2182
    %v2184 = vpop.f32.mrb[0].mxu0
    %v2185 = vadd.f32 %v2144, %v2184
    %v2186 = vpop.f32.mrb[0].mxu0
    %v2187 = vpop.f32.mrb[0].mxu0
    %2188 = vdwg.mxu0
    %2189 = vmatprep.subr.bf16.mxu0 %v1804
    %2190 = vmatpush1.bf16.msra.mxu0 %v1803
    %2191 = vmatprep.subr.bf16.mxu0 %v1808
    %2192 = vmatpush1.bf16.msra.mxu0 %v1807
    %2193 = vmatprep.subr.bf16.mxu0 %v1812
    %2194 = vmatpush1.bf16.msra.mxu0 %v1811
    %2195 = vmatprep.subr.bf16.mxu0 %v1816
    %2196 = vmatpush1.bf16.msra.mxu0 %v1815
    %2197 = vmatprep.subr.bf16.mxu0 %v1820
    %2198 = vmatpush1.bf16.msra.mxu0 %v1819
    %2199 = vmatprep.subr.bf16.mxu0 %v1824
    %2200 = vmatpush1.bf16.msra.mxu0 %v1823
    %2201 = vmatprep.subr.bf16.mxu0 %v1828
    %2202 = vmatpush1.bf16.msra.mxu0 %v1827
    %2203 = vmatprep.subr.bf16.mxu0 %v1832
    %2204 = vmatpush1.bf16.msra.mxu0 %v1831
    %2205 = vmatprep.subr.bf16.mxu0 %v1836
    %2206 = vmatpush1.bf16.msra.mxu0 %v1835
    %2207 = vmatprep.subr.bf16.mxu0 %v1840
    %2208 = vmatpush1.bf16.msra.mxu0 %v1839
    %2209 = vmatprep.subr.bf16.mxu0 %v1844
    %2210 = vmatpush1.bf16.msra.mxu0 %v1843
    %2211 = vmatprep.subr.bf16.mxu0 %v1848
    %2212 = vmatpush1.bf16.msra.mxu0 %v1847
    %2213 = vmatprep.subr.bf16.mxu0 %v1852
    %2214 = vmatpush1.bf16.msra.mxu0 %v1851
    %2215 = vmatprep.subr.bf16.mxu0 %v1856
    %2216 = vmatpush1.bf16.msra.mxu0 %v1855
    %2217 = vmatprep.subr.bf16.mxu0 %v1860
    %2218 = vmatpush1.bf16.msra.mxu0 %v1859
    %2219 = vmatprep.subr.bf16.mxu0 %v1864
    %2220 = vmatpush1.bf16.msra.mxu0 %v1863
    %2221 = vmatprep.mubr.bf16.mxu0 %v189
    %2222 = vmatmul.mubr.bf16.gmra.mrb[0].mxu0 %v188
    %v2223 = vpop.f32.mrb[0].mxu0
    %v2224 = vadd.f32 0.0, %v2223
    %v2225 = vpop.f32.mrb[0].mxu0
    %v2226 = vadd.f32 0.0, %v2225
    %v2227 = vpop.f32.mrb[0].mxu0
    %v2228 = vpop.f32.mrb[0].mxu0
    %2229 = vdwg.mxu0
    %2230 = vmatprep.subr.bf16.mxu0 %v1868
    %2231 = vmatpush1.bf16.msra.mxu0 %v1867
    %2232 = vmatprep.subr.bf16.mxu0 %v1872
    %2233 = vmatpush1.bf16.msra.mxu0 %v1871
    %2234 = vmatprep.subr.bf16.mxu0 %v1876
    %2235 = vmatpush1.bf16.msra.mxu0 %v1875
    %2236 = vmatprep.subr.bf16.mxu0 %v1880
    %2237 = vmatpush1.bf16.msra.mxu0 %v1879
    %2238 = vmatprep.subr.bf16.mxu0 %v1884
    %2239 = vmatpush1.bf16.msra.mxu0 %v1883
    %2240 = vmatprep.subr.bf16.mxu0 %v1888
    %2241 = vmatpush1.bf16.msra.mxu0 %v1887
    %2242 = vmatprep.subr.bf16.mxu0 %v1892
    %2243 = vmatpush1.bf16.msra.mxu0 %v1891
    %2244 = vmatprep.subr.bf16.mxu0 %v1896
    %2245 = vmatpush1.bf16.msra.mxu0 %v1895
    %2246 = vmatprep.subr.bf16.mxu0 %v1900
    %2247 = vmatpush1.bf16.msra.mxu0 %v1899
    %2248 = vmatprep.subr.bf16.mxu0 %v1904
    %2249 = vmatpush1.bf16.msra.mxu0 %v1903
    %2250 = vmatprep.subr.bf16.mxu0 %v1908
    %2251 = vmatpush1.bf16.msra.mxu0 %v1907
    %2252 = vmatprep.subr.bf16.mxu0 %v1912
    %2253 = vmatpush1.bf16.msra.mxu0 %v1911
    %2254 = vmatprep.subr.bf16.mxu0 %v1916
    %2255 = vmatpush1.bf16.msra.mxu0 %v1915
    %2256 = vmatprep.subr.bf16.mxu0 %v1920
    %2257 = vmatpush1.bf16.msra.mxu0 %v1919
    %2258 = vmatprep.subr.bf16.mxu0 %v1924
    %2259 = vmatpush1.bf16.msra.mxu0 %v1923
    %2260 = vmatprep.subr.bf16.mxu0 %v1928
    %2261 = vmatpush1.bf16.msra.mxu0 %v1927
    %2262 = vmatprep.mubr.bf16.mxu0 %v191
    %2263 = vmatmul.mubr.bf16.gmra.mrb[0].mxu0 %v190
    %v2264 = vpop.f32.mrb[0].mxu0
    %v2265 = vadd.f32 %v2224, %v2264
    %v2266 = vpop.f32.mrb[0].mxu0
    %v2267 = vadd.f32 %v2226, %v2266
    %v2268 = vpop.f32.mrb[0].mxu0
    %v2269 = vpop.f32.mrb[0].mxu0
    %2270 = vdwg.mxu0
    %2271 = vmatprep.subr.bf16.mxu0 %v1932
    %2272 = vmatpush1.bf16.msra.mxu0 %v1931
    %2273 = vmatprep.subr.bf16.mxu0 %v1936
    %2274 = vmatpush1.bf16.msra.mxu0 %v1935
    %2275 = vmatprep.subr.bf16.mxu0 %v1940
    %2276 = vmatpush1.bf16.msra.mxu0 %v1939
    %2277 = vmatprep.subr.bf16.mxu0 %v1944
    %2278 = vmatpush1.bf16.msra.mxu0 %v1943
    %2279 = vmatprep.subr.bf16.mxu0 %v1948
    %2280 = vmatpush1.bf16.msra.mxu0 %v1947
    %2281 = vmatprep.subr.bf16.mxu0 %v1952
    %2282 = vmatpush1.bf16.msra.mxu0 %v1951
    %2283 = vmatprep.subr.bf16.mxu0 %v1956
    %2284 = vmatpush1.bf16.msra.mxu0 %v1955
    %2285 = vmatprep.subr.bf16.mxu0 %v1960
    %2286 = vmatpush1.bf16.msra.mxu0 %v1959
    %2287 = vmatprep.subr.bf16.mxu0 %v1964
    %2288 = vmatpush1.bf16.msra.mxu0 %v1963
    %2289 = vmatprep.subr.bf16.mxu0 %v1968
    %2290 = vmatpush1.bf16.msra.mxu0 %v1967
    %2291 = vmatprep.subr.bf16.mxu0 %v1972
    %2292 = vmatpush1.bf16.msra.mxu0 %v1971
    %2293 = vmatprep.subr.bf16.mxu0 %v1976
    %2294 = vmatpush1.bf16.msra.mxu0 %v1975
    %2295 = vmatprep.subr.bf16.mxu0 %v1980
    %2296 = vmatpush1.bf16.msra.mxu0 %v1979
    %2297 = vmatprep.subr.bf16.mxu0 %v1984
    %2298 = vmatpush1.bf16.msra.mxu0 %v1983
    %2299 = vmatprep.subr.bf16.mxu0 %v1988
    %2300 = vmatpush1.bf16.msra.mxu0 %v1987
    %2301 = vmatprep.subr.bf16.mxu0 %v1992
    %2302 = vmatpush1.bf16.msra.mxu0 %v1991
    %2303 = vmatprep.mubr.bf16.mxu0 %v193
    %2304 = vmatmul.mubr.bf16.gmra.mrb[0].mxu0 %v192
    %v2305 = vpop.f32.mrb[0].mxu0
    %v2306 = vadd.f32 %v2265, %v2305
    %v2307 = vpop.f32.mrb[0].mxu0
    %v2308 = vadd.f32 %v2267, %v2307
    %v2309 = vpop.f32.mrb[0].mxu0
    %v2310 = vpop.f32.mrb[0].mxu0
    %2311 = vdwg.mxu0
    %2312 = vmatprep.subr.bf16.mxu0 %v1996
    %2313 = vmatpush1.bf16.msra.mxu0 %v1995
    %2314 = vmatprep.subr.bf16.mxu0 %v2000
    %2315 = vmatpush1.bf16.msra.mxu0 %v1999
    %2316 = vmatprep.subr.bf16.mxu0 %v2004
    %2317 = vmatpush1.bf16.msra.mxu0 %v2003
    %2318 = vmatprep.subr.bf16.mxu0 %v2008
    %2319 = vmatpush1.bf16.msra.mxu0 %v2007
    %2320 = vmatprep.subr.bf16.mxu0 %v2012
    %2321 = vmatpush1.bf16.msra.mxu0 %v2011
    %2322 = vmatprep.subr.bf16.mxu0 %v2016
    %2323 = vmatpush1.bf16.msra.mxu0 %v2015
    %2324 = vmatprep.subr.bf16.mxu0 %v2020
    %2325 = vmatpush1.bf16.msra.mxu0 %v2019
    %2326 = vmatprep.subr.bf16.mxu0 %v2024
    %2327 = vmatpush1.bf16.msra.mxu0 %v2023
    %2328 = vmatprep.subr.bf16.mxu0 0
    %2329 = vmatpush1.bf16.msra.mxu0 0
    %2330 = vmatprep.subr.bf16.mxu0 0
    %2331 = vmatpush1.bf16.msra.mxu0 0
    %2332 = vmatprep.subr.bf16.mxu0 0
    %2333 = vmatpush1.bf16.msra.mxu0 0
    %2334 = vmatprep.subr.bf16.mxu0 0
    %2335 = vmatpush1.bf16.msra.mxu0 0
    %2336 = vmatprep.subr.bf16.mxu0 0
    %2337 = vmatpush1.bf16.msra.mxu0 0
    %2338 = vmatprep.subr.bf16.mxu0 0
    %2339 = vmatpush1.bf16.msra.mxu0 0
    %2340 = vmatprep.subr.bf16.mxu0 0
    %2341 = vmatpush1.bf16.msra.mxu0 0
    %2342 = vmatprep.subr.bf16.mxu0 0
    %2343 = vmatpush1.bf16.msra.mxu0 0
    %2344 = vmatprep.mubr.bf16.mxu0 0
    %2345 = vmatmul.mubr.bf16.gmra.mrb[0].mxu0 %v194
    %v2346 = vpop.f32.mrb[0].mxu0
    %v2347 = vadd.f32 %v2306, %v2346
    %v2348 = vpop.f32.mrb[0].mxu0
    %v2349 = vadd.f32 %v2308, %v2348
    %v2350 = vpop.f32.mrb[0].mxu0
    %v2351 = vpop.f32.mrb[0].mxu0
    %2352 = vdwg.mxu0
    %v2353 = vld [vmem:[#allocation9 + $0x8] sm:$0xf]
    %v2355 = vlaneseq
    %v2356 = vshrl.u32 %v2355, 7
    %v2357 = vsub.s32 0, %v2356
    %v2358 = vrot.slane %v2353, %v2357
    %v2359 = vlaneseq
    %v2360 = vshrl.u32 %v2359, 7
    %v2361 = vsub.s32 1, %v2360
    %v2362 = vrot.slane %v2353, %v2361
    %v2363 = vlaneseq
    %v2364 = vshrl.u32 %v2363, 7
    %v2365 = vsub.s32 2, %v2364
    %v2366 = vrot.slane %v2353, %v2365
    %v2367 = vlaneseq
    %v2368 = vshrl.u32 %v2367, 7
    %v2369 = vsub.s32 3, %v2368
    %v2370 = vrot.slane %v2353, %v2369
    %v2375 = vmul.f32 %v2183, %v2358
    %v2376 = vmul.f32 %v2185, %v2362
    %v2377 = vmul.f32 %v2347, %v2366
    %v2378 = vmul.f32 %v2349, %v2370
    %v2379 = vld [vmem:[#allocation12 + $0x8] sm:$0xf]
    %v2381 = vlaneseq
    %v2382 = vshrl.u32 %v2381, 7
    %v2383 = vsub.s32 0, %v2382
    %v2384 = vrot.slane %v2379, %v2383
    %v2385 = vlaneseq
    %v2386 = vshrl.u32 %v2385, 7
    %v2387 = vsub.s32 1, %v2386
    %v2388 = vrot.slane %v2379, %v2387
    %v2389 = vlaneseq
    %v2390 = vshrl.u32 %v2389, 7
    %v2391 = vsub.s32 2, %v2390
    %v2392 = vrot.slane %v2379, %v2391
    %v2393 = vlaneseq
    %v2394 = vshrl.u32 %v2393, 7
    %v2395 = vsub.s32 3, %v2394
    %v2396 = vrot.slane %v2379, %v2395
    %v2401 = vadd.f32 %v2375, %v2384
    %v2402 = vadd.f32 %v2376, %v2388
    %v2403 = vadd.f32 %v2377, %v2392
    %v2404 = vadd.f32 %v2378, %v2396
    %v2405 = vmax.f32 %v2401, 0.0
    %v2406 = vmax.f32 %v2402, 0.0
    %v2407 = vmax.f32 %v2403, 0.0
    %v2408 = vmax.f32 %v2404, 0.0
    %2409 = vst [vmem:[#allocation2 + $0x40] sm:$0xff] %v2405
    %2410 = vst [vmem:[#allocation2 + $0x48] sm:$0xff] %v2406
    %2411 = vst [vmem:[#allocation2 + $0x50] sm:$0xff] %v2407
    %2412 = vst [vmem:[#allocation2 + $0x58] sm:$0xff] %v2408
    %s2413 = sshll.u32 %s196, 4
    %2414 = dma.done %s201, %s2413
    %v2415 = vld [vmem:[%s200] sm:$0xff]
    %v2416 = vld [vmem:[%s200 + $0x8] sm:$0xff]
    %v2417 = vld [vmem:[%s200 + $0x10] sm:$0xff]
    %v2418 = vld [vmem:[%s200 + $0x18] sm:$0xff]
    %v2419 = vld [vmem:[%s200 + $0x20] sm:$0xff]
    %v2420 = vld [vmem:[%s200 + $0x28] sm:$0xff]
    %v2421 = vld [vmem:[%s200 + $0x30] sm:$0xff]
    %v2422 = vld [vmem:[%s200 + $0x38] sm:$0xff]
    %v2423 = vld [vmem:[%s200 + $0x40] sm:$0xff]
    %v2424 = vld [vmem:[%s200 + $0x48] sm:$0xff]
    %v2425 = vld [vmem:[%s200 + $0x50] sm:$0xff]
    %v2426 = vld [vmem:[%s200 + $0x58] sm:$0xff]
    %v2427 = vld [vmem:[%s200 + $0x60] sm:$0xff]
    %v2428 = vld [vmem:[%s200 + $0x68] sm:$0xff]
    %v2429 = vld [vmem:[%s200 + $0x70] sm:$0xff]
    %v2430 = vld [vmem:[%s200 + $0x78] sm:$0xff]
    %v2431 = vld [vmem:[%s200 + $0x80] sm:$0xff]
    %v2432 = vld [vmem:[%s200 + $0x88] sm:$0xff]
    %v2433 = vld [vmem:[%s200 + $0x90] sm:$0xff]
    %v2434 = vld [vmem:[%s200 + $0x98] sm:$0xff]
    %v2435 = vld [vmem:[%s200 + $0xa0] sm:$0xff]
    %v2436 = vld [vmem:[%s200 + $0xa8] sm:$0xff]
    %v2437 = vld [vmem:[%s200 + $0xb0] sm:$0xff]
    %v2438 = vld [vmem:[%s200 + $0xb8] sm:$0xff]
    %v2439 = vld [vmem:[%s200 + $0xc0] sm:$0xff]
    %v2440 = vld [vmem:[%s200 + $0xc8] sm:$0xff]
    %v2441 = vld [vmem:[%s200 + $0xd0] sm:$0xff]
    %v2442 = vld [vmem:[%s200 + $0xd8] sm:$0xff]
    %v2443 = vld [vmem:[%s200 + $0xe0] sm:$0xff]
    %v2444 = vld [vmem:[%s200 + $0xe8] sm:$0xff]
    %v2445 = vld [vmem:[%s200 + $0xf0] sm:$0xff]
    %v2446 = vld [vmem:[%s200 + $0xf8] sm:$0xff]
    %v2447 = vld [vmem:[%s200 + $0x100] sm:$0xff]
    %v2448 = vld [vmem:[%s200 + $0x108] sm:$0xff]
    %v2449 = vld [vmem:[%s200 + $0x110] sm:$0xff]
    %v2450 = vld [vmem:[%s200 + $0x118] sm:$0xff]
    %v2451 = vld [vmem:[%s200 + $0x120] sm:$0xff]
    %v2452 = vld [vmem:[%s200 + $0x128] sm:$0xff]
    %v2453 = vld [vmem:[%s200 + $0x130] sm:$0xff]
    %v2454 = vld [vmem:[%s200 + $0x138] sm:$0xff]
    %v2455 = vld [vmem:[%s200 + $0x140] sm:$0xff]
    %v2456 = vld [vmem:[%s200 + $0x148] sm:$0xff]
    %v2457 = vld [vmem:[%s200 + $0x150] sm:$0xff]
    %v2458 = vld [vmem:[%s200 + $0x158] sm:$0xff]
    %v2459 = vld [vmem:[%s200 + $0x160] sm:$0xff]
    %v2460 = vld [vmem:[%s200 + $0x168] sm:$0xff]
    %v2461 = vld [vmem:[%s200 + $0x170] sm:$0xff]
    %v2462 = vld [vmem:[%s200 + $0x178] sm:$0xff]
    %v2463 = vld [vmem:[%s200 + $0x180] sm:$0xff]
    %v2464 = vld [vmem:[%s200 + $0x188] sm:$0xff]
    %v2465 = vld [vmem:[%s200 + $0x190] sm:$0xff]
    %v2466 = vld [vmem:[%s200 + $0x198] sm:$0xff]
    %v2467 = vld [vmem:[%s200 + $0x1a0] sm:$0xff]
    %v2468 = vld [vmem:[%s200 + $0x1a8] sm:$0xff]
    %v2469 = vld [vmem:[%s200 + $0x1b0] sm:$0xff]
    %v2470 = vld [vmem:[%s200 + $0x1b8] sm:$0xff]
    %v2471 = vld [vmem:[%s200 + $0x1c0] sm:$0xff]
    %v2472 = vld [vmem:[%s200 + $0x1c8] sm:$0xff]
    %v2473 = vld [vmem:[%s200 + $0x1d0] sm:$0xff]
    %v2474 = vld [vmem:[%s200 + $0x1d8] sm:$0xff]
    %v2475 = vld [vmem:[%s200 + $0x1e0] sm:$0xff]
    %v2476 = vld [vmem:[%s200 + $0x1e8] sm:$0xff]
    %v2477 = vld [vmem:[%s200 + $0x1f0] sm:$0xff]
    %v2478 = vld [vmem:[%s200 + $0x1f8] sm:$0xff]
    %v2479 = vld [vmem:[%s200 + $0x200] sm:$0xff]
    %v2480 = vld [vmem:[%s200 + $0x208] sm:$0xff]
    %v2481 = vld [vmem:[%s200 + $0x210] sm:$0xff]
    %v2482 = vld [vmem:[%s200 + $0x218] sm:$0xff]
    %v2483 = vld [vmem:[%s200 + $0x220] sm:$0xff]
    %v2484 = vld [vmem:[%s200 + $0x228] sm:$0xff]
    %v2485 = vld [vmem:[%s200 + $0x230] sm:$0xff]
    %v2486 = vld [vmem:[%s200 + $0x238] sm:$0xff]
    %v2487 = vld [vmem:[%s200 + $0x240] sm:$0xff]
    %v2488 = vld [vmem:[%s200 + $0x248] sm:$0xff]
    %v2489 = vld [vmem:[%s200 + $0x250] sm:$0xff]
    %v2490 = vld [vmem:[%s200 + $0x258] sm:$0xff]
    %v2491 = vld [vmem:[%s200 + $0x260] sm:$0xff]
    %v2492 = vld [vmem:[%s200 + $0x268] sm:$0xff]
    %v2493 = vld [vmem:[%s200 + $0x270] sm:$0xff]
    %v2494 = vld [vmem:[%s200 + $0x278] sm:$0xff]
    %v2495 = vld [vmem:[%s200 + $0x280] sm:$0xff]
    %v2496 = vld [vmem:[%s200 + $0x288] sm:$0xff]
    %v2497 = vld [vmem:[%s200 + $0x290] sm:$0xff]
    %v2498 = vld [vmem:[%s200 + $0x298] sm:$0xff]
    %v2499 = vld [vmem:[%s200 + $0x2a0] sm:$0xff]
    %v2500 = vld [vmem:[%s200 + $0x2a8] sm:$0xff]
    %v2501 = vld [vmem:[%s200 + $0x2b0] sm:$0xff]
    %v2502 = vld [vmem:[%s200 + $0x2b8] sm:$0xff]
    %v2503 = vld [vmem:[%s200 + $0x2c0] sm:$0xff]
    %v2504 = vld [vmem:[%s200 + $0x2c8] sm:$0xff]
    %v2505 = vld [vmem:[%s200 + $0x2d0] sm:$0xff]
    %v2506 = vld [vmem:[%s200 + $0x2d8] sm:$0xff]
    %v2507 = vld [vmem:[%s200 + $0x2e0] sm:$0xff]
    %v2508 = vld [vmem:[%s200 + $0x2e8] sm:$0xff]
    %v2509 = vld [vmem:[%s200 + $0x2f0] sm:$0xff]
    %v2510 = vld [vmem:[%s200 + $0x2f8] sm:$0xff]
    %v2511 = vld [vmem:[%s200 + $0x300] sm:$0xff]
    %v2512 = vld [vmem:[%s200 + $0x308] sm:$0xff]
    %v2513 = vld [vmem:[%s200 + $0x310] sm:$0xff]
    %v2514 = vld [vmem:[%s200 + $0x318] sm:$0xff]
    %v2515 = vld [vmem:[%s200 + $0x320] sm:$0xff]
    %v2516 = vld [vmem:[%s200 + $0x328] sm:$0xff]
    %v2517 = vld [vmem:[%s200 + $0x330] sm:$0xff]
    %v2518 = vld [vmem:[%s200 + $0x338] sm:$0xff]
    %v2519 = vld [vmem:[%s200 + $0x340] sm:$0xff]
    %v2520 = vld [vmem:[%s200 + $0x348] sm:$0xff]
    %v2521 = vld [vmem:[%s200 + $0x350] sm:$0xff]
    %v2522 = vld [vmem:[%s200 + $0x358] sm:$0xff]
    %v2523 = vld [vmem:[%s200 + $0x360] sm:$0xff]
    %v2524 = vld [vmem:[%s200 + $0x368] sm:$0xff]
    %v2525 = vld [vmem:[%s200 + $0x370] sm:$0xff]
    %v2526 = vld [vmem:[%s200 + $0x378] sm:$0xff]
    %v2527 = vunpack.c.l.s8.bf16 %v2415
    %v2528 = vunpack.c.l.s8.bf16 %v2416
    %v2529 = vunpack.c.l.s8.bf16 %v2417
    %v2530 = vunpack.c.l.s8.bf16 %v2418
    %v2531 = vunpack.c.h.s8.bf16 %v2415
    %v2532 = vunpack.c.h.s8.bf16 %v2416
    %v2533 = vunpack.c.h.s8.bf16 %v2417
    %v2534 = vunpack.c.h.s8.bf16 %v2418
    %v2535 = vunpack.c.l.s8.bf16 %v2419
    %v2536 = vunpack.c.l.s8.bf16 %v2420
    %v2537 = vunpack.c.l.s8.bf16 %v2421
    %v2538 = vunpack.c.l.s8.bf16 %v2422
    %v2539 = vunpack.c.h.s8.bf16 %v2419
    %v2540 = vunpack.c.h.s8.bf16 %v2420
    %v2541 = vunpack.c.h.s8.bf16 %v2421
    %v2542 = vunpack.c.h.s8.bf16 %v2422
    %v2543 = vunpack.c.l.s8.bf16 %v2423
    %v2544 = vunpack.c.l.s8.bf16 %v2424
    %v2545 = vunpack.c.l.s8.bf16 %v2425
    %v2546 = vunpack.c.l.s8.bf16 %v2426
    %v2547 = vunpack.c.h.s8.bf16 %v2423
    %v2548 = vunpack.c.h.s8.bf16 %v2424
    %v2549 = vunpack.c.h.s8.bf16 %v2425
    %v2550 = vunpack.c.h.s8.bf16 %v2426
    %v2551 = vunpack.c.l.s8.bf16 %v2427
    %v2552 = vunpack.c.l.s8.bf16 %v2428
    %v2553 = vunpack.c.l.s8.bf16 %v2429
    %v2554 = vunpack.c.l.s8.bf16 %v2430
    %v2555 = vunpack.c.h.s8.bf16 %v2427
    %v2556 = vunpack.c.h.s8.bf16 %v2428
    %v2557 = vunpack.c.h.s8.bf16 %v2429
    %v2558 = vunpack.c.h.s8.bf16 %v2430
    %v2559 = vunpack.c.l.s8.bf16 %v2431
    %v2560 = vunpack.c.l.s8.bf16 %v2432
    %v2561 = vunpack.c.l.s8.bf16 %v2433
    %v2562 = vunpack.c.l.s8.bf16 %v2434
    %v2563 = vunpack.c.h.s8.bf16 %v2431
    %v2564 = vunpack.c.h.s8.bf16 %v2432
    %v2565 = vunpack.c.h.s8.bf16 %v2433
    %v2566 = vunpack.c.h.s8.bf16 %v2434
    %v2567 = vunpack.c.l.s8.bf16 %v2435
    %v2568 = vunpack.c.l.s8.bf16 %v2436
    %v2569 = vunpack.c.l.s8.bf16 %v2437
    %v2570 = vunpack.c.l.s8.bf16 %v2438
    %v2571 = vunpack.c.h.s8.bf16 %v2435
    %v2572 = vunpack.c.h.s8.bf16 %v2436
    %v2573 = vunpack.c.h.s8.bf16 %v2437
    %v2574 = vunpack.c.h.s8.bf16 %v2438
    %v2575 = vunpack.c.l.s8.bf16 %v2439
    %v2576 = vunpack.c.l.s8.bf16 %v2440
    %v2577 = vunpack.c.l.s8.bf16 %v2441
    %v2578 = vunpack.c.l.s8.bf16 %v2442
    %v2579 = vunpack.c.h.s8.bf16 %v2439
    %v2580 = vunpack.c.h.s8.bf16 %v2440
    %v2581 = vunpack.c.h.s8.bf16 %v2441
    %v2582 = vunpack.c.h.s8.bf16 %v2442
    %v2583 = vunpack.c.l.s8.bf16 %v2443
    %v2584 = vunpack.c.l.s8.bf16 %v2444
    %v2585 = vunpack.c.l.s8.bf16 %v2445
    %v2586 = vunpack.c.l.s8.bf16 %v2446
    %v2587 = vunpack.c.h.s8.bf16 %v2443
    %v2588 = vunpack.c.h.s8.bf16 %v2444
    %v2589 = vunpack.c.h.s8.bf16 %v2445
    %v2590 = vunpack.c.h.s8.bf16 %v2446
    %v2591 = vunpack.c.l.s8.bf16 %v2447
    %v2592 = vunpack.c.l.s8.bf16 %v2448
    %v2593 = vunpack.c.l.s8.bf16 %v2449
    %v2594 = vunpack.c.l.s8.bf16 %v2450
    %v2595 = vunpack.c.h.s8.bf16 %v2447
    %v2596 = vunpack.c.h.s8.bf16 %v2448
    %v2597 = vunpack.c.h.s8.bf16 %v2449
    %v2598 = vunpack.c.h.s8.bf16 %v2450
    %v2599 = vunpack.c.l.s8.bf16 %v2451
    %v2600 = vunpack.c.l.s8.bf16 %v2452
    %v2601 = vunpack.c.l.s8.bf16 %v2453
    %v2602 = vunpack.c.l.s8.bf16 %v2454
    %v2603 = vunpack.c.h.s8.bf16 %v2451
    %v2604 = vunpack.c.h.s8.bf16 %v2452
    %v2605 = vunpack.c.h.s8.bf16 %v2453
    %v2606 = vunpack.c.h.s8.bf16 %v2454
    %v2607 = vunpack.c.l.s8.bf16 %v2455
    %v2608 = vunpack.c.l.s8.bf16 %v2456
    %v2609 = vunpack.c.l.s8.bf16 %v2457
    %v2610 = vunpack.c.l.s8.bf16 %v2458
    %v2611 = vunpack.c.h.s8.bf16 %v2455
    %v2612 = vunpack.c.h.s8.bf16 %v2456
    %v2613 = vunpack.c.h.s8.bf16 %v2457
    %v2614 = vunpack.c.h.s8.bf16 %v2458
    %v2615 = vunpack.c.l.s8.bf16 %v2459
    %v2616 = vunpack.c.l.s8.bf16 %v2460
    %v2617 = vunpack.c.l.s8.bf16 %v2461
    %v2618 = vunpack.c.l.s8.bf16 %v2462
    %v2619 = vunpack.c.h.s8.bf16 %v2459
    %v2620 = vunpack.c.h.s8.bf16 %v2460
    %v2621 = vunpack.c.h.s8.bf16 %v2461
    %v2622 = vunpack.c.h.s8.bf16 %v2462
    %v2623 = vunpack.c.l.s8.bf16 %v2463
    %v2624 = vunpack.c.l.s8.bf16 %v2464
    %v2625 = vunpack.c.l.s8.bf16 %v2465
    %v2626 = vunpack.c.l.s8.bf16 %v2466
    %v2627 = vunpack.c.h.s8.bf16 %v2463
    %v2628 = vunpack.c.h.s8.bf16 %v2464
    %v2629 = vunpack.c.h.s8.bf16 %v2465
    %v2630 = vunpack.c.h.s8.bf16 %v2466
    %v2631 = vunpack.c.l.s8.bf16 %v2467
    %v2632 = vunpack.c.l.s8.bf16 %v2468
    %v2633 = vunpack.c.l.s8.bf16 %v2469
    %v2634 = vunpack.c.l.s8.bf16 %v2470
    %v2635 = vunpack.c.h.s8.bf16 %v2467
    %v2636 = vunpack.c.h.s8.bf16 %v2468
    %v2637 = vunpack.c.h.s8.bf16 %v2469
    %v2638 = vunpack.c.h.s8.bf16 %v2470
    %v2639 = vunpack.c.l.s8.bf16 %v2471
    %v2640 = vunpack.c.l.s8.bf16 %v2472
    %v2641 = vunpack.c.l.s8.bf16 %v2473
    %v2642 = vunpack.c.l.s8.bf16 %v2474
    %v2643 = vunpack.c.h.s8.bf16 %v2471
    %v2644 = vunpack.c.h.s8.bf16 %v2472
    %v2645 = vunpack.c.h.s8.bf16 %v2473
    %v2646 = vunpack.c.h.s8.bf16 %v2474
    %v2647 = vunpack.c.l.s8.bf16 %v2475
    %v2648 = vunpack.c.l.s8.bf16 %v2476
    %v2649 = vunpack.c.l.s8.bf16 %v2477
    %v2650 = vunpack.c.l.s8.bf16 %v2478
    %v2651 = vunpack.c.h.s8.bf16 %v2475
    %v2652 = vunpack.c.h.s8.bf16 %v2476
    %v2653 = vunpack.c.h.s8.bf16 %v2477
    %v2654 = vunpack.c.h.s8.bf16 %v2478
    %v2655 = vunpack.c.l.s8.bf16 %v2479
    %v2656 = vunpack.c.l.s8.bf16 %v2480
    %v2657 = vunpack.c.l.s8.bf16 %v2481
    %v2658 = vunpack.c.l.s8.bf16 %v2482
    %v2659 = vunpack.c.h.s8.bf16 %v2479
    %v2660 = vunpack.c.h.s8.bf16 %v2480
    %v2661 = vunpack.c.h.s8.bf16 %v2481
    %v2662 = vunpack.c.h.s8.bf16 %v2482
    %v2663 = vunpack.c.l.s8.bf16 %v2483
    %v2664 = vunpack.c.l.s8.bf16 %v2484
    %v2665 = vunpack.c.l.s8.bf16 %v2485
    %v2666 = vunpack.c.l.s8.bf16 %v2486
    %v2667 = vunpack.c.h.s8.bf16 %v2483
    %v2668 = vunpack.c.h.s8.bf16 %v2484
    %v2669 = vunpack.c.h.s8.bf16 %v2485
    %v2670 = vunpack.c.h.s8.bf16 %v2486
    %v2671 = vunpack.c.l.s8.bf16 %v2487
    %v2672 = vunpack.c.l.s8.bf16 %v2488
    %v2673 = vunpack.c.l.s8.bf16 %v2489
    %v2674 = vunpack.c.l.s8.bf16 %v2490
    %v2675 = vunpack.c.h.s8.bf16 %v2487
    %v2676 = vunpack.c.h.s8.bf16 %v2488
    %v2677 = vunpack.c.h.s8.bf16 %v2489
    %v2678 = vunpack.c.h.s8.bf16 %v2490
    %v2679 = vunpack.c.l.s8.bf16 %v2491
    %v2680 = vunpack.c.l.s8.bf16 %v2492
    %v2681 = vunpack.c.l.s8.bf16 %v2493
    %v2682 = vunpack.c.l.s8.bf16 %v2494
    %v2683 = vunpack.c.h.s8.bf16 %v2491
    %v2684 = vunpack.c.h.s8.bf16 %v2492
    %v2685 = vunpack.c.h.s8.bf16 %v2493
    %v2686 = vunpack.c.h.s8.bf16 %v2494
    %v2687 = vunpack.c.l.s8.bf16 %v2495
    %v2688 = vunpack.c.l.s8.bf16 %v2496
    %v2689 = vunpack.c.l.s8.bf16 %v2497
    %v2690 = vunpack.c.l.s8.bf16 %v2498
    %v2691 = vunpack.c.h.s8.bf16 %v2495
    %v2692 = vunpack.c.h.s8.bf16 %v2496
    %v2693 = vunpack.c.h.s8.bf16 %v2497
    %v2694 = vunpack.c.h.s8.bf16 %v2498
    %v2695 = vunpack.c.l.s8.bf16 %v2499
    %v2696 = vunpack.c.l.s8.bf16 %v2500
    %v2697 = vunpack.c.l.s8.bf16 %v2501
    %v2698 = vunpack.c.l.s8.bf16 %v2502
    %v2699 = vunpack.c.h.s8.bf16 %v2499
    %v2700 = vunpack.c.h.s8.bf16 %v2500
    %v2701 = vunpack.c.h.s8.bf16 %v2501
    %v2702 = vunpack.c.h.s8.bf16 %v2502
    %v2703 = vunpack.c.l.s8.bf16 %v2503
    %v2704 = vunpack.c.l.s8.bf16 %v2504
    %v2705 = vunpack.c.l.s8.bf16 %v2505
    %v2706 = vunpack.c.l.s8.bf16 %v2506
    %v2707 = vunpack.c.h.s8.bf16 %v2503
    %v2708 = vunpack.c.h.s8.bf16 %v2504
    %v2709 = vunpack.c.h.s8.bf16 %v2505
    %v2710 = vunpack.c.h.s8.bf16 %v2506
    %v2711 = vunpack.c.l.s8.bf16 %v2507
    %v2712 = vunpack.c.l.s8.bf16 %v2508
    %v2713 = vunpack.c.l.s8.bf16 %v2509
    %v2714 = vunpack.c.l.s8.bf16 %v2510
    %v2715 = vunpack.c.h.s8.bf16 %v2507
    %v2716 = vunpack.c.h.s8.bf16 %v2508
    %v2717 = vunpack.c.h.s8.bf16 %v2509
    %v2718 = vunpack.c.h.s8.bf16 %v2510
    %v2719 = vunpack.c.l.s8.bf16 %v2511
    %v2720 = vunpack.c.l.s8.bf16 %v2512
    %v2721 = vunpack.c.l.s8.bf16 %v2513
    %v2722 = vunpack.c.l.s8.bf16 %v2514
    %v2723 = vunpack.c.h.s8.bf16 %v2511
    %v2724 = vunpack.c.h.s8.bf16 %v2512
    %v2725 = vunpack.c.h.s8.bf16 %v2513
    %v2726 = vunpack.c.h.s8.bf16 %v2514
    %v2727 = vunpack.c.l.s8.bf16 %v2515
    %v2728 = vunpack.c.l.s8.bf16 %v2516
    %v2729 = vunpack.c.l.s8.bf16 %v2517
    %v2730 = vunpack.c.l.s8.bf16 %v2518
    %v2731 = vunpack.c.h.s8.bf16 %v2515
    %v2732 = vunpack.c.h.s8.bf16 %v2516
    %v2733 = vunpack.c.h.s8.bf16 %v2517
    %v2734 = vunpack.c.h.s8.bf16 %v2518
    %v2735 = vunpack.c.l.s8.bf16 %v2519
    %v2736 = vunpack.c.l.s8.bf16 %v2520
    %v2737 = vunpack.c.l.s8.bf16 %v2521
    %v2738 = vunpack.c.l.s8.bf16 %v2522
    %v2739 = vunpack.c.h.s8.bf16 %v2519
    %v2740 = vunpack.c.h.s8.bf16 %v2520
    %v2741 = vunpack.c.h.s8.bf16 %v2521
    %v2742 = vunpack.c.h.s8.bf16 %v2522
    %v2743 = vunpack.c.l.s8.bf16 %v2523
    %v2744 = vunpack.c.l.s8.bf16 %v2524
    %v2745 = vunpack.c.l.s8.bf16 %v2525
    %v2746 = vunpack.c.l.s8.bf16 %v2526
    %v2747 = vunpack.c.h.s8.bf16 %v2523
    %v2748 = vunpack.c.h.s8.bf16 %v2524
    %v2749 = vunpack.c.h.s8.bf16 %v2525
    %v2750 = vunpack.c.h.s8.bf16 %v2526
    %2751 = vmatprep.subr.bf16.mxu0 %v2528
    %2752 = vmatpush1.bf16.msra.mxu0 %v2527
    %2753 = vmatprep.subr.bf16.mxu0 %v2532
    %2754 = vmatpush1.bf16.msra.mxu0 %v2531
    %2755 = vmatprep.subr.bf16.mxu0 %v2536
    %2756 = vmatpush1.bf16.msra.mxu0 %v2535
    %2757 = vmatprep.subr.bf16.mxu0 %v2540
    %2758 = vmatpush1.bf16.msra.mxu0 %v2539
    %2759 = vmatprep.subr.bf16.mxu0 %v2544
    %2760 = vmatpush1.bf16.msra.mxu0 %v2543
    %2761 = vmatprep.subr.bf16.mxu0 %v2548
    %2762 = vmatpush1.bf16.msra.mxu0 %v2547
    %2763 = vmatprep.subr.bf16.mxu0 %v2552
    %2764 = vmatpush1.bf16.msra.mxu0 %v2551
    %2765 = vmatprep.subr.bf16.mxu0 %v2556
    %2766 = vmatpush1.bf16.msra.mxu0 %v2555
    %2767 = vmatprep.subr.bf16.mxu0 %v2560
    %2768 = vmatpush1.bf16.msra.mxu0 %v2559
    %2769 = vmatprep.subr.bf16.mxu0 %v2564
    %2770 = vmatpush1.bf16.msra.mxu0 %v2563
    %2771 = vmatprep.subr.bf16.mxu0 %v2568
    %2772 = vmatpush1.bf16.msra.mxu0 %v2567
    %2773 = vmatprep.subr.bf16.mxu0 %v2572
    %2774 = vmatpush1.bf16.msra.mxu0 %v2571
    %2775 = vmatprep.subr.bf16.mxu0 %v2576
    %2776 = vmatpush1.bf16.msra.mxu0 %v2575
    %2777 = vmatprep.subr.bf16.mxu0 %v2580
    %2778 = vmatpush1.bf16.msra.mxu0 %v2579
    %2779 = vmatprep.subr.bf16.mxu0 %v2584
    %2780 = vmatpush1.bf16.msra.mxu0 %v2583
    %2781 = vmatprep.subr.bf16.mxu0 %v2588
    %2782 = vmatpush1.bf16.msra.mxu0 %v2587
    %2783 = vmatprep.mubr.bf16.mxu0 %v189
    %2784 = vmatmul.mubr.bf16.gmra.mrb[0].mxu0 %v188
    %v2785 = vpop.f32.mrb[0].mxu0
    %v2786 = vadd.f32 0.0, %v2785
    %v2787 = vpop.f32.mrb[0].mxu0
    %v2788 = vadd.f32 0.0, %v2787
    %v2789 = vpop.f32.mrb[0].mxu0
    %v2790 = vpop.f32.mrb[0].mxu0
    %2791 = vdwg.mxu0
    %2792 = vmatprep.subr.bf16.mxu0 %v2592
    %2793 = vmatpush1.bf16.msra.mxu0 %v2591
    %2794 = vmatprep.subr.bf16.mxu0 %v2596
    %2795 = vmatpush1.bf16.msra.mxu0 %v2595
    %2796 = vmatprep.subr.bf16.mxu0 %v2600
    %2797 = vmatpush1.bf16.msra.mxu0 %v2599
    %2798 = vmatprep.subr.bf16.mxu0 %v2604
    %2799 = vmatpush1.bf16.msra.mxu0 %v2603
    %2800 = vmatprep.subr.bf16.mxu0 %v2608
    %2801 = vmatpush1.bf16.msra.mxu0 %v2607
    %2802 = vmatprep.subr.bf16.mxu0 %v2612
    %2803 = vmatpush1.bf16.msra.mxu0 %v2611
    %2804 = vmatprep.subr.bf16.mxu0 %v2616
    %2805 = vmatpush1.bf16.msra.mxu0 %v2615
    %2806 = vmatprep.subr.bf16.mxu0 %v2620
    %2807 = vmatpush1.bf16.msra.mxu0 %v2619
    %2808 = vmatprep.subr.bf16.mxu0 %v2624
    %2809 = vmatpush1.bf16.msra.mxu0 %v2623
    %2810 = vmatprep.subr.bf16.mxu0 %v2628
    %2811 = vmatpush1.bf16.msra.mxu0 %v2627
    %2812 = vmatprep.subr.bf16.mxu0 %v2632
    %2813 = vmatpush1.bf16.msra.mxu0 %v2631
    %2814 = vmatprep.subr.bf16.mxu0 %v2636
    %2815 = vmatpush1.bf16.msra.mxu0 %v2635
    %2816 = vmatprep.subr.bf16.mxu0 %v2640
    %2817 = vmatpush1.bf16.msra.mxu0 %v2639
    %2818 = vmatprep.subr.bf16.mxu0 %v2644
    %2819 = vmatpush1.bf16.msra.mxu0 %v2643
    %2820 = vmatprep.subr.bf16.mxu0 %v2648
    %2821 = vmatpush1.bf16.msra.mxu0 %v2647
    %2822 = vmatprep.subr.bf16.mxu0 %v2652
    %2823 = vmatpush1.bf16.msra.mxu0 %v2651
    %2824 = vmatprep.mubr.bf16.mxu0 %v191
    %2825 = vmatmul.mubr.bf16.gmra.mrb[0].mxu0 %v190
    %v2826 = vpop.f32.mrb[0].mxu0
    %v2827 = vadd.f32 %v2786, %v2826
    %v2828 = vpop.f32.mrb[0].mxu0
    %v2829 = vadd.f32 %v2788, %v2828
    %v2830 = vpop.f32.mrb[0].mxu0
    %v2831 = vpop.f32.mrb[0].mxu0
    %2832 = vdwg.mxu0
    %2833 = vmatprep.subr.bf16.mxu0 %v2656
    %2834 = vmatpush1.bf16.msra.mxu0 %v2655
    %2835 = vmatprep.subr.bf16.mxu0 %v2660
    %2836 = vmatpush1.bf16.msra.mxu0 %v2659
    %2837 = vmatprep.subr.bf16.mxu0 %v2664
    %2838 = vmatpush1.bf16.msra.mxu0 %v2663
    %2839 = vmatprep.subr.bf16.mxu0 %v2668
    %2840 = vmatpush1.bf16.msra.mxu0 %v2667
    %2841 = vmatprep.subr.bf16.mxu0 %v2672
    %2842 = vmatpush1.bf16.msra.mxu0 %v2671
    %2843 = vmatprep.subr.bf16.mxu0 %v2676
    %2844 = vmatpush1.bf16.msra.mxu0 %v2675
    %2845 = vmatprep.subr.bf16.mxu0 %v2680
    %2846 = vmatpush1.bf16.msra.mxu0 %v2679
    %2847 = vmatprep.subr.bf16.mxu0 %v2684
    %2848 = vmatpush1.bf16.msra.mxu0 %v2683
    %2849 = vmatprep.subr.bf16.mxu0 %v2688
    %2850 = vmatpush1.bf16.msra.mxu0 %v2687
    %2851 = vmatprep.subr.bf16.mxu0 %v2692
    %2852 = vmatpush1.bf16.msra.mxu0 %v2691
    %2853 = vmatprep.subr.bf16.mxu0 %v2696
    %2854 = vmatpush1.bf16.msra.mxu0 %v2695
    %2855 = vmatprep.subr.bf16.mxu0 %v2700
    %2856 = vmatpush1.bf16.msra.mxu0 %v2699
    %2857 = vmatprep.subr.bf16.mxu0 %v2704
    %2858 = vmatpush1.bf16.msra.mxu0 %v2703
    %2859 = vmatprep.subr.bf16.mxu0 %v2708
    %2860 = vmatpush1.bf16.msra.mxu0 %v2707
    %2861 = vmatprep.subr.bf16.mxu0 %v2712
    %2862 = vmatpush1.bf16.msra.mxu0 %v2711
    %2863 = vmatprep.subr.bf16.mxu0 %v2716
    %2864 = vmatpush1.bf16.msra.mxu0 %v2715
    %2865 = vmatprep.mubr.bf16.mxu0 %v193
    %2866 = vmatmul.mubr.bf16.gmra.mrb[0].mxu0 %v192
    %v2867 = vpop.f32.mrb[0].mxu0
    %v2868 = vadd.f32 %v2827, %v2867
    %v2869 = vpop.f32.mrb[0].mxu0
    %v2870 = vadd.f32 %v2829, %v2869
    %v2871 = vpop.f32.mrb[0].mxu0
    %v2872 = vpop.f32.mrb[0].mxu0
    %2873 = vdwg.mxu0
    %2874 = vmatprep.subr.bf16.mxu0 %v2720
    %2875 = vmatpush1.bf16.msra.mxu0 %v2719
    %2876 = vmatprep.subr.bf16.mxu0 %v2724
    %2877 = vmatpush1.bf16.msra.mxu0 %v2723
    %2878 = vmatprep.subr.bf16.mxu0 %v2728
    %2879 = vmatpush1.bf16.msra.mxu0 %v2727
    %2880 = vmatprep.subr.bf16.mxu0 %v2732
    %2881 = vmatpush1.bf16.msra.mxu0 %v2731
    %2882 = vmatprep.subr.bf16.mxu0 %v2736
    %2883 = vmatpush1.bf16.msra.mxu0 %v2735
    %2884 = vmatprep.subr.bf16.mxu0 %v2740
    %2885 = vmatpush1.bf16.msra.mxu0 %v2739
    %2886 = vmatprep.subr.bf16.mxu0 %v2744
    %2887 = vmatpush1.bf16.msra.mxu0 %v2743
    %2888 = vmatprep.subr.bf16.mxu0 %v2748
    %2889 = vmatpush1.bf16.msra.mxu0 %v2747
    %2890 = vmatprep.subr.bf16.mxu0 0
    %2891 = vmatpush1.bf16.msra.mxu0 0
    %2892 = vmatprep.subr.bf16.mxu0 0
    %2893 = vmatpush1.bf16.msra.mxu0 0
    %2894 = vmatprep.subr.bf16.mxu0 0
    %2895 = vmatpush1.bf16.msra.mxu0 0
    %2896 = vmatprep.subr.bf16.mxu0 0
    %2897 = vmatpush1.bf16.msra.mxu0 0
    %2898 = vmatprep.subr.bf16.mxu0 0
    %2899 = vmatpush1.bf16.msra.mxu0 0
    %2900 = vmatprep.subr.bf16.mxu0 0
    %2901 = vmatpush1.bf16.msra.mxu0 0
    %2902 = vmatprep.subr.bf16.mxu0 0
    %2903 = vmatpush1.bf16.msra.mxu0 0
    %2904 = vmatprep.subr.bf16.mxu0 0
    %2905 = vmatpush1.bf16.msra.mxu0 0
    %2906 = vmatprep.mubr.bf16.mxu0 0
    %2907 = vmatmul.mubr.bf16.gmra.mrb[0].mxu0 %v194
    %v2908 = vpop.f32.mrb[0].mxu0
    %v2909 = vadd.f32 %v2868, %v2908
    %v2910 = vpop.f32.mrb[0].mxu0
    %v2911 = vadd.f32 %v2870, %v2910
    %v2912 = vpop.f32.mrb[0].mxu0
    %v2913 = vpop.f32.mrb[0].mxu0
    %2914 = vdwg.mxu0
    %2915 = vmatprep.subr.bf16.mxu0 %v2530
    %2916 = vmatpush1.bf16.msra.mxu0 %v2529
    %2917 = vmatprep.subr.bf16.mxu0 %v2534
    %2918 = vmatpush1.bf16.msra.mxu0 %v2533
    %2919 = vmatprep.subr.bf16.mxu0 %v2538
    %2920 = vmatpush1.bf16.msra.mxu0 %v2537
    %2921 = vmatprep.subr.bf16.mxu0 %v2542
    %2922 = vmatpush1.bf16.msra.mxu0 %v2541
    %2923 = vmatprep.subr.bf16.mxu0 %v2546
    %2924 = vmatpush1.bf16.msra.mxu0 %v2545
    %2925 = vmatprep.subr.bf16.mxu0 %v2550
    %2926 = vmatpush1.bf16.msra.mxu0 %v2549
    %2927 = vmatprep.subr.bf16.mxu0 %v2554
    %2928 = vmatpush1.bf16.msra.mxu0 %v2553
    %2929 = vmatprep.subr.bf16.mxu0 %v2558
    %2930 = vmatpush1.bf16.msra.mxu0 %v2557
    %2931 = vmatprep.subr.bf16.mxu0 %v2562
    %2932 = vmatpush1.bf16.msra.mxu0 %v2561
    %2933 = vmatprep.subr.bf16.mxu0 %v2566
    %2934 = vmatpush1.bf16.msra.mxu0 %v2565
    %2935 = vmatprep.subr.bf16.mxu0 %v2570
    %2936 = vmatpush1.bf16.msra.mxu0 %v2569
    %2937 = vmatprep.subr.bf16.mxu0 %v2574
    %2938 = vmatpush1.bf16.msra.mxu0 %v2573
    %2939 = vmatprep.subr.bf16.mxu0 %v2578
    %2940 = vmatpush1.bf16.msra.mxu0 %v2577
    %2941 = vmatprep.subr.bf16.mxu0 %v2582
    %2942 = vmatpush1.bf16.msra.mxu0 %v2581
    %2943 = vmatprep.subr.bf16.mxu0 %v2586
    %2944 = vmatpush1.bf16.msra.mxu0 %v2585
    %2945 = vmatprep.subr.bf16.mxu0 %v2590
    %2946 = vmatpush1.bf16.msra.mxu0 %v2589
    %2947 = vmatprep.mubr.bf16.mxu0 %v189
    %2948 = vmatmul.mubr.bf16.gmra.mrb[0].mxu0 %v188
    %v2949 = vpop.f32.mrb[0].mxu0
    %v2950 = vadd.f32 0.0, %v2949
    %v2951 = vpop.f32.mrb[0].mxu0
    %v2952 = vadd.f32 0.0, %v2951
    %v2953 = vpop.f32.mrb[0].mxu0
    %v2954 = vpop.f32.mrb[0].mxu0
    %2955 = vdwg.mxu0
    %2956 = vmatprep.subr.bf16.mxu0 %v2594
    %2957 = vmatpush1.bf16.msra.mxu0 %v2593
    %2958 = vmatprep.subr.bf16.mxu0 %v2598
    %2959 = vmatpush1.bf16.msra.mxu0 %v2597
    %2960 = vmatprep.subr.bf16.mxu0 %v2602
    %2961 = vmatpush1.bf16.msra.mxu0 %v2601
    %2962 = vmatprep.subr.bf16.mxu0 %v2606
    %2963 = vmatpush1.bf16.msra.mxu0 %v2605
    %2964 = vmatprep.subr.bf16.mxu0 %v2610
    %2965 = vmatpush1.bf16.msra.mxu0 %v2609
    %2966 = vmatprep.subr.bf16.mxu0 %v2614
    %2967 = vmatpush1.bf16.msra.mxu0 %v2613
    %2968 = vmatprep.subr.bf16.mxu0 %v2618
    %2969 = vmatpush1.bf16.msra.mxu0 %v2617
    %2970 = vmatprep.subr.bf16.mxu0 %v2622
    %2971 = vmatpush1.bf16.msra.mxu0 %v2621
    %2972 = vmatprep.subr.bf16.mxu0 %v2626
    %2973 = vmatpush1.bf16.msra.mxu0 %v2625
    %2974 = vmatprep.subr.bf16.mxu0 %v2630
    %2975 = vmatpush1.bf16.msra.mxu0 %v2629
    %2976 = vmatprep.subr.bf16.mxu0 %v2634
    %2977 = vmatpush1.bf16.msra.mxu0 %v2633
    %2978 = vmatprep.subr.bf16.mxu0 %v2638
    %2979 = vmatpush1.bf16.msra.mxu0 %v2637
    %2980 = vmatprep.subr.bf16.mxu0 %v2642
    %2981 = vmatpush1.bf16.msra.mxu0 %v2641
    %2982 = vmatprep.subr.bf16.mxu0 %v2646
    %2983 = vmatpush1.bf16.msra.mxu0 %v2645
    %2984 = vmatprep.subr.bf16.mxu0 %v2650
    %2985 = vmatpush1.bf16.msra.mxu0 %v2649
    %2986 = vmatprep.subr.bf16.mxu0 %v2654
    %2987 = vmatpush1.bf16.msra.mxu0 %v2653
    %2988 = vmatprep.mubr.bf16.mxu0 %v191
    %2989 = vmatmul.mubr.bf16.gmra.mrb[0].mxu0 %v190
    %v2990 = vpop.f32.mrb[0].mxu0
    %v2991 = vadd.f32 %v2950, %v2990
    %v2992 = vpop.f32.mrb[0].mxu0
    %v2993 = vadd.f32 %v2952, %v2992
    %v2994 = vpop.f32.mrb[0].mxu0
    %v2995 = vpop.f32.mrb[0].mxu0
    %2996 = vdwg.mxu0
    %2997 = vmatprep.subr.bf16.mxu0 %v2658
    %2998 = vmatpush1.bf16.msra.mxu0 %v2657
    %2999 = vmatprep.subr.bf16.mxu0 %v2662
    %3000 = vmatpush1.bf16.msra.mxu0 %v2661
    %3001 = vmatprep.subr.bf16.mxu0 %v2666
    %3002 = vmatpush1.bf16.msra.mxu0 %v2665
    %3003 = vmatprep.subr.bf16.mxu0 %v2670
    %3004 = vmatpush1.bf16.msra.mxu0 %v2669
    %3005 = vmatprep.subr.bf16.mxu0 %v2674
    %3006 = vmatpush1.bf16.msra.mxu0 %v2673
    %3007 = vmatprep.subr.bf16.mxu0 %v2678
    %3008 = vmatpush1.bf16.msra.mxu0 %v2677
    %3009 = vmatprep.subr.bf16.mxu0 %v2682
    %3010 = vmatpush1.bf16.msra.mxu0 %v2681
    %3011 = vmatprep.subr.bf16.mxu0 %v2686
    %3012 = vmatpush1.bf16.msra.mxu0 %v2685
    %3013 = vmatprep.subr.bf16.mxu0 %v2690
    %3014 = vmatpush1.bf16.msra.mxu0 %v2689
    %3015 = vmatprep.subr.bf16.mxu0 %v2694
    %3016 = vmatpush1.bf16.msra.mxu0 %v2693
    %3017 = vmatprep.subr.bf16.mxu0 %v2698
    %3018 = vmatpush1.bf16.msra.mxu0 %v2697
    %3019 = vmatprep.subr.bf16.mxu0 %v2702
    %3020 = vmatpush1.bf16.msra.mxu0 %v2701
    %3021 = vmatprep.subr.bf16.mxu0 %v2706
    %3022 = vmatpush1.bf16.msra.mxu0 %v2705
    %3023 = vmatprep.subr.bf16.mxu0 %v2710
    %3024 = vmatpush1.bf16.msra.mxu0 %v2709
    %3025 = vmatprep.subr.bf16.mxu0 %v2714
    %3026 = vmatpush1.bf16.msra.mxu0 %v2713
    %3027 = vmatprep.subr.bf16.mxu0 %v2718
    %3028 = vmatpush1.bf16.msra.mxu0 %v2717
    %3029 = vmatprep.mubr.bf16.mxu0 %v193
    %3030 = vmatmul.mubr.bf16.gmra.mrb[0].mxu0 %v192
    %v3031 = vpop.f32.mrb[0].mxu0
    %v3032 = vadd.f32 %v2991, %v3031
    %v3033 = vpop.f32.mrb[0].mxu0
    %v3034 = vadd.f32 %v2993, %v3033
    %v3035 = vpop.f32.mrb[0].mxu0
    %v3036 = vpop.f32.mrb[0].mxu0
    %3037 = vdwg.mxu0
    %3038 = vmatprep.subr.bf16.mxu0 %v2722
    %3039 = vmatpush1.bf16.msra.mxu0 %v2721
    %3040 = vmatprep.subr.bf16.mxu0 %v2726
    %3041 = vmatpush1.bf16.msra.mxu0 %v2725
    %3042 = vmatprep.subr.bf16.mxu0 %v2730
    %3043 = vmatpush1.bf16.msra.mxu0 %v2729
    %3044 = vmatprep.subr.bf16.mxu0 %v2734
    %3045 = vmatpush1.bf16.msra.mxu0 %v2733
    %3046 = vmatprep.subr.bf16.mxu0 %v2738
    %3047 = vmatpush1.bf16.msra.mxu0 %v2737
    %3048 = vmatprep.subr.bf16.mxu0 %v2742
    %3049 = vmatpush1.bf16.msra.mxu0 %v2741
    %3050 = vmatprep.subr.bf16.mxu0 %v2746
    %3051 = vmatpush1.bf16.msra.mxu0 %v2745
    %3052 = vmatprep.subr.bf16.mxu0 %v2750
    %3053 = vmatpush1.bf16.msra.mxu0 %v2749
    %3054 = vmatprep.subr.bf16.mxu0 0
    %3055 = vmatpush1.bf16.msra.mxu0 0
    %3056 = vmatprep.subr.bf16.mxu0 0
    %3057 = vmatpush1.bf16.msra.mxu0 0
    %3058 = vmatprep.subr.bf16.mxu0 0
    %3059 = vmatpush1.bf16.msra.mxu0 0
    %3060 = vmatprep.subr.bf16.mxu0 0
    %3061 = vmatpush1.bf16.msra.mxu0 0
    %3062 = vmatprep.subr.bf16.mxu0 0
    %3063 = vmatpush1.bf16.msra.mxu0 0
    %3064 = vmatprep.subr.bf16.mxu0 0
    %3065 = vmatpush1.bf16.msra.mxu0 0
    %3066 = vmatprep.subr.bf16.mxu0 0
    %3067 = vmatpush1.bf16.msra.mxu0 0
    %3068 = vmatprep.subr.bf16.mxu0 0
    %3069 = vmatpush1.bf16.msra.mxu0 0
    %3070 = vmatprep.mubr.bf16.mxu0 0
    %3071 = vmatmul.mubr.bf16.gmra.mrb[0].mxu0 %v194
    %v3072 = vpop.f32.mrb[0].mxu0
    %v3073 = vadd.f32 %v3032, %v3072
    %v3074 = vpop.f32.mrb[0].mxu0
    %v3075 = vadd.f32 %v3034, %v3074
    %v3076 = vpop.f32.mrb[0].mxu0
    %v3077 = vpop.f32.mrb[0].mxu0
    %3078 = vdwg.mxu0
    %v3079 = vld [vmem:[#allocation9 + $0xc] sm:$0xf]
    %v3081 = vlaneseq
    %v3082 = vshrl.u32 %v3081, 7
    %v3083 = vsub.s32 0, %v3082
    %v3084 = vrot.slane %v3079, %v3083
    %v3085 = vlaneseq
    %v3086 = vshrl.u32 %v3085, 7
    %v3087 = vsub.s32 1, %v3086
    %v3088 = vrot.slane %v3079, %v3087
    %v3089 = vlaneseq
    %v3090 = vshrl.u32 %v3089, 7
    %v3091 = vsub.s32 2, %v3090
    %v3092 = vrot.slane %v3079, %v3091
    %v3093 = vlaneseq
    %v3094 = vshrl.u32 %v3093, 7
    %v3095 = vsub.s32 3, %v3094
    %v3096 = vrot.slane %v3079, %v3095
    %v3101 = vmul.f32 %v2909, %v3084
    %v3102 = vmul.f32 %v2911, %v3088
    %v3103 = vmul.f32 %v3073, %v3092
    %v3104 = vmul.f32 %v3075, %v3096
    %v3105 = vld [vmem:[#allocation12 + $0xc] sm:$0xf]
    %v3107 = vlaneseq
    %v3108 = vshrl.u32 %v3107, 7
    %v3109 = vsub.s32 0, %v3108
    %v3110 = vrot.slane %v3105, %v3109
    %v3111 = vlaneseq
    %v3112 = vshrl.u32 %v3111, 7
    %v3113 = vsub.s32 1, %v3112
    %v3114 = vrot.slane %v3105, %v3113
    %v3115 = vlaneseq
    %v3116 = vshrl.u32 %v3115, 7
    %v3117 = vsub.s32 2, %v3116
    %v3118 = vrot.slane %v3105, %v3117
    %v3119 = vlaneseq
    %v3120 = vshrl.u32 %v3119, 7
    %v3121 = vsub.s32 3, %v3120
    %v3122 = vrot.slane %v3105, %v3121
    %v3127 = vadd.f32 %v3101, %v3110
    %v3128 = vadd.f32 %v3102, %v3114
    %v3129 = vadd.f32 %v3103, %v3118
    %v3130 = vadd.f32 %v3104, %v3122
    %v3131 = vmax.f32 %v3127, 0.0
    %v3132 = vmax.f32 %v3128, 0.0
    %v3133 = vmax.f32 %v3129, 0.0
    %v3134 = vmax.f32 %v3130, 0.0
    %3135 = vst [vmem:[#allocation2 + $0x60] sm:$0xff] %v3131
    %3136 = vst [vmem:[#allocation2 + $0x68] sm:$0xff] %v3132
    %3137 = vst [vmem:[#allocation2 + $0x70] sm:$0xff] %v3133
    %3138 = vst [vmem:[#allocation2 + $0x78] sm:$0xff] %v3134
    %v3139 = vld [vmem:[#allocation2] sm:$0xff]
    %v3140 = vld [vmem:[#allocation2 + $0x8] sm:$0xff]
    %v3141 = vld [vmem:[#allocation2 + $0x10] sm:$0xff]
    %v3142 = vld [vmem:[#allocation2 + $0x18] sm:$0xff]
    %v3143 = vld [vmem:[#allocation2 + $0x20] sm:$0xff]
    %v3144 = vld [vmem:[#allocation2 + $0x28] sm:$0xff]
    %v3145 = vld [vmem:[#allocation2 + $0x30] sm:$0xff]
    %v3146 = vld [vmem:[#allocation2 + $0x38] sm:$0xff]
    %v3147 = vld [vmem:[#allocation2 + $0x40] sm:$0xff]
    %v3148 = vld [vmem:[#allocation2 + $0x48] sm:$0xff]
    %v3149 = vld [vmem:[#allocation2 + $0x50] sm:$0xff]
    %v3150 = vld [vmem:[#allocation2 + $0x58] sm:$0xff]
    %v3151 = vld [vmem:[#allocation2 + $0x60] sm:$0xff]
    %v3152 = vld [vmem:[#allocation2 + $0x68] sm:$0xff]
    %v3153 = vld [vmem:[#allocation2 + $0x70] sm:$0xff]
    %v3154 = vld [vmem:[#allocation2 + $0x78] sm:$0xff]
    %v3155 = vpack.c.bf16 %v3139, %v3139
    %v3156 = vpack.c.bf16 %v3140, %v3140
    %v3157 = vpack.c.bf16 %v3141, %v3141
    %v3158 = vpack.c.bf16 %v3142, %v3142
    %v3159 = vpack.c.bf16 %v3143, %v3143
    %v3160 = vpack.c.bf16 %v3144, %v3144
    %v3161 = vpack.c.bf16 %v3145, %v3145
    %v3162 = vpack.c.bf16 %v3146, %v3146
    %v3163 = vpack.c.bf16 %v3147, %v3147
    %v3164 = vpack.c.bf16 %v3148, %v3148
    %v3165 = vpack.c.bf16 %v3149, %v3149
    %v3166 = vpack.c.bf16 %v3150, %v3150
    %v3167 = vpack.c.bf16 %v3151, %v3151
    %v3168 = vpack.c.bf16 %v3152, %v3152
    %v3169 = vpack.c.bf16 %v3153, %v3153
    %v3170 = vpack.c.bf16 %v3154, %v3154
    %s3171 = smul.u32 2, 256
    %s3172 = smul.u32 %s3171, 4
    %s3173 = sshll.u32 %s3172, 4
    %3174 = dma.done %s157, %s3173
    %s3175 = scalar_lea.hbm %s4, 32768
    %s3176 = scalar_lea.vmem [#allocation6], 2048
    %s3177 = scalar_lea.sflag [#allocation8], 3
    // Predicated region
    $region102: #{adversarial_forward.1} parent=1 // pred_check
      _
    $region103: #{adversarial_forward.1} parent=1 // pred_check_branch
      %3179 = sbr.rel target = $region105
    $region104: #{adversarial_forward.1} parent=1 // pred_region
      %3180 = sst [smem:[#allocation27]] [#allocation40]
      %3181 = sst [smem:[#allocation28]] [#allocation39]
    $region105: #{adversarial_forward.1} parent=1 // pred_fallthru
      _
    %3183 = shalt.err (0)
    %s3185 = sshll.u32 %s3176, 4
    %s3186 = int_to_ptr.vmem [resolvable:$true] %s3185
    %3188 = dma.hbm_to_vmem [thread:$0]  %s3175, 32768, %s3186, %s3177
    %v3189 = vld [vmem:[#allocation6] sm:$0xff]
    %v3190 = vld [vmem:[#allocation6 + $0x8] sm:$0xff]
    %v3191 = vld [vmem:[#allocation6 + $0x10] sm:$0xff]
    %v3192 = vld [vmem:[#allocation6 + $0x18] sm:$0xff]
    %v3193 = vld [vmem:[#allocation6 + $0x20] sm:$0xff]
    %v3194 = vld [vmem:[#allocation6 + $0x28] sm:$0xff]
    %v3195 = vld [vmem:[#allocation6 + $0x30] sm:$0xff]
    %v3196 = vld [vmem:[#allocation6 + $0x38] sm:$0xff]
    %v3197 = vld [vmem:[#allocation6 + $0x40] sm:$0xff]
    %v3198 = vld [vmem:[#allocation6 + $0x48] sm:$0xff]
    %v3199 = vld [vmem:[#allocation6 + $0x50] sm:$0xff]
    %v3200 = vld [vmem:[#allocation6 + $0x58] sm:$0xff]
    %v3201 = vld [vmem:[#allocation6 + $0x60] sm:$0xff]
    %v3202 = vld [vmem:[#allocation6 + $0x68] sm:$0xff]
    %v3203 = vld [vmem:[#allocation6 + $0x70] sm:$0xff]
    %v3204 = vld [vmem:[#allocation6 + $0x78] sm:$0xff]
    %v3205 = vld [vmem:[#allocation6 + $0x80] sm:$0xff]
    %v3206 = vld [vmem:[#allocation6 + $0x88] sm:$0xff]
    %v3207 = vld [vmem:[#allocation6 + $0x90] sm:$0xff]
    %v3208 = vld [vmem:[#allocation6 + $0x98] sm:$0xff]
    %v3209 = vld [vmem:[#allocation6 + $0xa0] sm:$0xff]
    %v3210 = vld [vmem:[#allocation6 + $0xa8] sm:$0xff]
    %v3211 = vld [vmem:[#allocation6 + $0xb0] sm:$0xff]
    %v3212 = vld [vmem:[#allocation6 + $0xb8] sm:$0xff]
    %v3213 = vld [vmem:[#allocation6 + $0xc0] sm:$0xff]
    %v3214 = vld [vmem:[#allocation6 + $0xc8] sm:$0xff]
    %v3215 = vld [vmem:[#allocation6 + $0xd0] sm:$0xff]
    %v3216 = vld [vmem:[#allocation6 + $0xd8] sm:$0xff]
    %v3217 = vld [vmem:[#allocation6 + $0xe0] sm:$0xff]
    %v3218 = vld [vmem:[#allocation6 + $0xe8] sm:$0xff]
    %v3219 = vld [vmem:[#allocation6 + $0xf0] sm:$0xff]
    %v3220 = vld [vmem:[#allocation6 + $0xf8] sm:$0xff]
    %v3221 = vld [vmem:[#allocation6 + $0x100] sm:$0xff]
    %v3222 = vld [vmem:[#allocation6 + $0x108] sm:$0xff]
    %v3223 = vld [vmem:[#allocation6 + $0x110] sm:$0xff]
    %v3224 = vld [vmem:[#allocation6 + $0x118] sm:$0xff]
    %v3225 = vld [vmem:[#allocation6 + $0x120] sm:$0xff]
    %v3226 = vld [vmem:[#allocation6 + $0x128] sm:$0xff]
    %v3227 = vld [vmem:[#allocation6 + $0x130] sm:$0xff]
    %v3228 = vld [vmem:[#allocation6 + $0x138] sm:$0xff]
    %v3229 = vld [vmem:[#allocation6 + $0x140] sm:$0xff]
    %v3230 = vld [vmem:[#allocation6 + $0x148] sm:$0xff]
    %v3231 = vld [vmem:[#allocation6 + $0x150] sm:$0xff]
    %v3232 = vld [vmem:[#allocation6 + $0x158] sm:$0xff]
    %v3233 = vld [vmem:[#allocation6 + $0x160] sm:$0xff]
    %v3234 = vld [vmem:[#allocation6 + $0x168] sm:$0xff]
    %v3235 = vld [vmem:[#allocation6 + $0x170] sm:$0xff]
    %v3236 = vld [vmem:[#allocation6 + $0x178] sm:$0xff]
    %v3237 = vld [vmem:[#allocation6 + $0x180] sm:$0xff]
    %v3238 = vld [vmem:[#allocation6 + $0x188] sm:$0xff]
    %v3239 = vld [vmem:[#allocation6 + $0x190] sm:$0xff]
    %v3240 = vld [vmem:[#allocation6 + $0x198] sm:$0xff]
    %v3241 = vld [vmem:[#allocation6 + $0x1a0] sm:$0xff]
    %v3242 = vld [vmem:[#allocation6 + $0x1a8] sm:$0xff]
    %v3243 = vld [vmem:[#allocation6 + $0x1b0] sm:$0xff]
    %v3244 = vld [vmem:[#allocation6 + $0x1b8] sm:$0xff]
    %v3245 = vld [vmem:[#allocation6 + $0x1c0] sm:$0xff]
    %v3246 = vld [vmem:[#allocation6 + $0x1c8] sm:$0xff]
    %v3247 = vld [vmem:[#allocation6 + $0x1d0] sm:$0xff]
    %v3248 = vld [vmem:[#allocation6 + $0x1d8] sm:$0xff]
    %v3249 = vld [vmem:[#allocation6 + $0x1e0] sm:$0xff]
    %v3250 = vld [vmem:[#allocation6 + $0x1e8] sm:$0xff]
    %v3251 = vld [vmem:[#allocation6 + $0x1f0] sm:$0xff]
    %v3252 = vld [vmem:[#allocation6 + $0x1f8] sm:$0xff]
    %v3253 = vld [vmem:[#allocation6 + $0x200] sm:$0xff]
    %v3254 = vld [vmem:[#allocation6 + $0x208] sm:$0xff]
    %v3255 = vld [vmem:[#allocation6 + $0x210] sm:$0xff]
    %v3256 = vld [vmem:[#allocation6 + $0x218] sm:$0xff]
    %v3257 = vld [vmem:[#allocation6 + $0x220] sm:$0xff]
    %v3258 = vld [vmem:[#allocation6 + $0x228] sm:$0xff]
    %v3259 = vld [vmem:[#allocation6 + $0x230] sm:$0xff]
    %v3260 = vld [vmem:[#allocation6 + $0x238] sm:$0xff]
    %v3261 = vld [vmem:[#allocation6 + $0x240] sm:$0xff]
    %v3262 = vld [vmem:[#allocation6 + $0x248] sm:$0xff]
    %v3263 = vld [vmem:[#allocation6 + $0x250] sm:$0xff]
    %v3264 = vld [vmem:[#allocation6 + $0x258] sm:$0xff]
    %v3265 = vld [vmem:[#allocation6 + $0x260] sm:$0xff]
    %v3266 = vld [vmem:[#allocation6 + $0x268] sm:$0xff]
    %v3267 = vld [vmem:[#allocation6 + $0x270] sm:$0xff]
    %v3268 = vld [vmem:[#allocation6 + $0x278] sm:$0xff]
    %v3269 = vld [vmem:[#allocation6 + $0x280] sm:$0xff]
    %v3270 = vld [vmem:[#allocation6 + $0x288] sm:$0xff]
    %v3271 = vld [vmem:[#allocation6 + $0x290] sm:$0xff]
    %v3272 = vld [vmem:[#allocation6 + $0x298] sm:$0xff]
    %v3273 = vld [vmem:[#allocation6 + $0x2a0] sm:$0xff]
    %v3274 = vld [vmem:[#allocation6 + $0x2a8] sm:$0xff]
    %v3275 = vld [vmem:[#allocation6 + $0x2b0] sm:$0xff]
    %v3276 = vld [vmem:[#allocation6 + $0x2b8] sm:$0xff]
    %v3277 = vld [vmem:[#allocation6 + $0x2c0] sm:$0xff]
    %v3278 = vld [vmem:[#allocation6 + $0x2c8] sm:$0xff]
    %v3279 = vld [vmem:[#allocation6 + $0x2d0] sm:$0xff]
    %v3280 = vld [vmem:[#allocation6 + $0x2d8] sm:$0xff]
    %v3281 = vld [vmem:[#allocation6 + $0x2e0] sm:$0xff]
    %v3282 = vld [vmem:[#allocation6 + $0x2e8] sm:$0xff]
    %v3283 = vld [vmem:[#allocation6 + $0x2f0] sm:$0xff]
    %v3284 = vld [vmem:[#allocation6 + $0x2f8] sm:$0xff]
    %v3285 = vld [vmem:[#allocation6 + $0x300] sm:$0xff]
    %v3286 = vld [vmem:[#allocation6 + $0x308] sm:$0xff]
    %v3287 = vld [vmem:[#allocation6 + $0x310] sm:$0xff]
    %v3288 = vld [vmem:[#allocation6 + $0x318] sm:$0xff]
    %v3289 = vld [vmem:[#allocation6 + $0x320] sm:$0xff]
    %v3290 = vld [vmem:[#allocation6 + $0x328] sm:$0xff]
    %v3291 = vld [vmem:[#allocation6 + $0x330] sm:$0xff]
    %v3292 = vld [vmem:[#allocation6 + $0x338] sm:$0xff]
    %v3293 = vld [vmem:[#allocation6 + $0x340] sm:$0xff]
    %v3294 = vld [vmem:[#allocation6 + $0x348] sm:$0xff]
    %v3295 = vld [vmem:[#allocation6 + $0x350] sm:$0xff]
    %v3296 = vld [vmem:[#allocation6 + $0x358] sm:$0xff]
    %v3297 = vld [vmem:[#allocation6 + $0x360] sm:$0xff]
    %v3298 = vld [vmem:[#allocation6 + $0x368] sm:$0xff]
    %v3299 = vld [vmem:[#allocation6 + $0x370] sm:$0xff]
    %v3300 = vld [vmem:[#allocation6 + $0x378] sm:$0xff]
    %v3301 = vld [vmem:[#allocation6 + $0x380] sm:$0xff]
    %v3302 = vld [vmem:[#allocation6 + $0x388] sm:$0xff]
    %v3303 = vld [vmem:[#allocation6 + $0x390] sm:$0xff]
    %v3304 = vld [vmem:[#allocation6 + $0x398] sm:$0xff]
    %v3305 = vld [vmem:[#allocation6 + $0x3a0] sm:$0xff]
    %v3306 = vld [vmem:[#allocation6 + $0x3a8] sm:$0xff]
    %v3307 = vld [vmem:[#allocation6 + $0x3b0] sm:$0xff]
    %v3308 = vld [vmem:[#allocation6 + $0x3b8] sm:$0xff]
    %v3309 = vld [vmem:[#allocation6 + $0x3c0] sm:$0xff]
    %v3310 = vld [vmem:[#allocation6 + $0x3c8] sm:$0xff]
    %v3311 = vld [vmem:[#allocation6 + $0x3d0] sm:$0xff]
    %v3312 = vld [vmem:[#allocation6 + $0x3d8] sm:$0xff]
    %v3313 = vld [vmem:[#allocation6 + $0x3e0] sm:$0xff]
    %v3314 = vld [vmem:[#allocation6 + $0x3e8] sm:$0xff]
    %v3315 = vld [vmem:[#allocation6 + $0x3f0] sm:$0xff]
    %v3316 = vld [vmem:[#allocation6 + $0x3f8] sm:$0xff]
    %v3317 = vld [vmem:[#allocation6 + $0x400] sm:$0xff]
    %v3318 = vld [vmem:[#allocation6 + $0x408] sm:$0xff]
    %v3319 = vld [vmem:[#allocation6 + $0x410] sm:$0xff]
    %v3320 = vld [vmem:[#allocation6 + $0x418] sm:$0xff]
    %v3321 = vld [vmem:[#allocation6 + $0x420] sm:$0xff]
    %v3322 = vld [vmem:[#allocation6 + $0x428] sm:$0xff]
    %v3323 = vld [vmem:[#allocation6 + $0x430] sm:$0xff]
    %v3324 = vld [vmem:[#allocation6 + $0x438] sm:$0xff]
    %v3325 = vld [vmem:[#allocation6 + $0x440] sm:$0xff]
    %v3326 = vld [vmem:[#allocation6 + $0x448] sm:$0xff]
    %v3327 = vld [vmem:[#allocation6 + $0x450] sm:$0xff]
    %v3328 = vld [vmem:[#allocation6 + $0x458] sm:$0xff]
    %v3329 = vld [vmem:[#allocation6 + $0x460] sm:$0xff]
    %v3330 = vld [vmem:[#allocation6 + $0x468] sm:$0xff]
    %v3331 = vld [vmem:[#allocation6 + $0x470] sm:$0xff]
    %v3332 = vld [vmem:[#allocation6 + $0x478] sm:$0xff]
    %v3333 = vld [vmem:[#allocation6 + $0x480] sm:$0xff]
    %v3334 = vld [vmem:[#allocation6 + $0x488] sm:$0xff]
    %v3335 = vld [vmem:[#allocation6 + $0x490] sm:$0xff]
    %v3336 = vld [vmem:[#allocation6 + $0x498] sm:$0xff]
    %v3337 = vld [vmem:[#allocation6 + $0x4a0] sm:$0xff]
    %v3338 = vld [vmem:[#allocation6 + $0x4a8] sm:$0xff]
    %v3339 = vld [vmem:[#allocation6 + $0x4b0] sm:$0xff]
    %v3340 = vld [vmem:[#allocation6 + $0x4b8] sm:$0xff]
    %v3341 = vld [vmem:[#allocation6 + $0x4c0] sm:$0xff]
    %v3342 = vld [vmem:[#allocation6 + $0x4c8] sm:$0xff]
    %v3343 = vld [vmem:[#allocation6 + $0x4d0] sm:$0xff]
    %v3344 = vld [vmem:[#allocation6 + $0x4d8] sm:$0xff]
    %v3345 = vld [vmem:[#allocation6 + $0x4e0] sm:$0xff]
    %v3346 = vld [vmem:[#allocation6 + $0x4e8] sm:$0xff]
    %v3347 = vld [vmem:[#allocation6 + $0x4f0] sm:$0xff]
    %v3348 = vld [vmem:[#allocation6 + $0x4f8] sm:$0xff]
    %v3349 = vld [vmem:[#allocation6 + $0x500] sm:$0xff]
    %v3350 = vld [vmem:[#allocation6 + $0x508] sm:$0xff]
    %v3351 = vld [vmem:[#allocation6 + $0x510] sm:$0xff]
    %v3352 = vld [vmem:[#allocation6 + $0x518] sm:$0xff]
    %v3353 = vld [vmem:[#allocation6 + $0x520] sm:$0xff]
    %v3354 = vld [vmem:[#allocation6 + $0x528] sm:$0xff]
    %v3355 = vld [vmem:[#allocation6 + $0x530] sm:$0xff]
    %v3356 = vld [vmem:[#allocation6 + $0x538] sm:$0xff]
    %v3357 = vld [vmem:[#allocation6 + $0x540] sm:$0xff]
    %v3358 = vld [vmem:[#allocation6 + $0x548] sm:$0xff]
    %v3359 = vld [vmem:[#allocation6 + $0x550] sm:$0xff]
    %v3360 = vld [vmem:[#allocation6 + $0x558] sm:$0xff]
    %v3361 = vld [vmem:[#allocation6 + $0x560] sm:$0xff]
    %v3362 = vld [vmem:[#allocation6 + $0x568] sm:$0xff]
    %v3363 = vld [vmem:[#allocation6 + $0x570] sm:$0xff]
    %v3364 = vld [vmem:[#allocation6 + $0x578] sm:$0xff]
    %v3365 = vld [vmem:[#allocation6 + $0x580] sm:$0xff]
    %v3366 = vld [vmem:[#allocation6 + $0x588] sm:$0xff]
    %v3367 = vld [vmem:[#allocation6 + $0x590] sm:$0xff]
    %v3368 = vld [vmem:[#allocation6 + $0x598] sm:$0xff]
    %v3369 = vld [vmem:[#allocation6 + $0x5a0] sm:$0xff]
    %v3370 = vld [vmem:[#allocation6 + $0x5a8] sm:$0xff]
    %v3371 = vld [vmem:[#allocation6 + $0x5b0] sm:$0xff]
    %v3372 = vld [vmem:[#allocation6 + $0x5b8] sm:$0xff]
    %v3373 = vld [vmem:[#allocation6 + $0x5c0] sm:$0xff]
    %v3374 = vld [vmem:[#allocation6 + $0x5c8] sm:$0xff]
    %v3375 = vld [vmem:[#allocation6 + $0x5d0] sm:$0xff]
    %v3376 = vld [vmem:[#allocation6 + $0x5d8] sm:$0xff]
    %v3377 = vld [vmem:[#allocation6 + $0x5e0] sm:$0xff]
    %v3378 = vld [vmem:[#allocation6 + $0x5e8] sm:$0xff]
    %v3379 = vld [vmem:[#allocation6 + $0x5f0] sm:$0xff]
    %v3380 = vld [vmem:[#allocation6 + $0x5f8] sm:$0xff]
    %v3381 = vld [vmem:[#allocation6 + $0x600] sm:$0xff]
    %v3382 = vld [vmem:[#allocation6 + $0x608] sm:$0xff]
    %v3383 = vld [vmem:[#allocation6 + $0x610] sm:$0xff]
    %v3384 = vld [vmem:[#allocation6 + $0x618] sm:$0xff]
    %v3385 = vld [vmem:[#allocation6 + $0x620] sm:$0xff]
    %v3386 = vld [vmem:[#allocation6 + $0x628] sm:$0xff]
    %v3387 = vld [vmem:[#allocation6 + $0x630] sm:$0xff]
    %v3388 = vld [vmem:[#allocation6 + $0x638] sm:$0xff]
    %v3389 = vld [vmem:[#allocation6 + $0x640] sm:$0xff]
    %v3390 = vld [vmem:[#allocation6 + $0x648] sm:$0xff]
    %v3391 = vld [vmem:[#allocation6 + $0x650] sm:$0xff]
    %v3392 = vld [vmem:[#allocation6 + $0x658] sm:$0xff]
    %v3393 = vld [vmem:[#allocation6 + $0x660] sm:$0xff]
    %v3394 = vld [vmem:[#allocation6 + $0x668] sm:$0xff]
    %v3395 = vld [vmem:[#allocation6 + $0x670] sm:$0xff]
    %v3396 = vld [vmem:[#allocation6 + $0x678] sm:$0xff]
    %v3397 = vld [vmem:[#allocation6 + $0x680] sm:$0xff]
    %v3398 = vld [vmem:[#allocation6 + $0x688] sm:$0xff]
    %v3399 = vld [vmem:[#allocation6 + $0x690] sm:$0xff]
    %v3400 = vld [vmem:[#allocation6 + $0x698] sm:$0xff]
    %v3401 = vld [vmem:[#allocation6 + $0x6a0] sm:$0xff]
    %v3402 = vld [vmem:[#allocation6 + $0x6a8] sm:$0xff]
    %v3403 = vld [vmem:[#allocation6 + $0x6b0] sm:$0xff]
    %v3404 = vld [vmem:[#allocation6 + $0x6b8] sm:$0xff]
    %v3405 = vld [vmem:[#allocation6 + $0x6c0] sm:$0xff]
    %v3406 = vld [vmem:[#allocation6 + $0x6c8] sm:$0xff]
    %v3407 = vld [vmem:[#allocation6 + $0x6d0] sm:$0xff]
    %v3408 = vld [vmem:[#allocation6 + $0x6d8] sm:$0xff]
    %v3409 = vld [vmem:[#allocation6 + $0x6e0] sm:$0xff]
    %v3410 = vld [vmem:[#allocation6 + $0x6e8] sm:$0xff]
    %v3411 = vld [vmem:[#allocation6 + $0x6f0] sm:$0xff]
    %v3412 = vld [vmem:[#allocation6 + $0x6f8] sm:$0xff]
    %v3413 = vld [vmem:[#allocation6 + $0x700] sm:$0xff]
    %v3414 = vld [vmem:[#allocation6 + $0x708] sm:$0xff]
    %v3415 = vld [vmem:[#allocation6 + $0x710] sm:$0xff]
    %v3416 = vld [vmem:[#allocation6 + $0x718] sm:$0xff]
    %v3417 = vld [vmem:[#allocation6 + $0x720] sm:$0xff]
    %v3418 = vld [vmem:[#allocation6 + $0x728] sm:$0xff]
    %v3419 = vld [vmem:[#allocation6 + $0x730] sm:$0xff]
    %v3420 = vld [vmem:[#allocation6 + $0x738] sm:$0xff]
    %v3421 = vld [vmem:[#allocation6 + $0x740] sm:$0xff]
    %v3422 = vld [vmem:[#allocation6 + $0x748] sm:$0xff]
    %v3423 = vld [vmem:[#allocation6 + $0x750] sm:$0xff]
    %v3424 = vld [vmem:[#allocation6 + $0x758] sm:$0xff]
    %v3425 = vld [vmem:[#allocation6 + $0x760] sm:$0xff]
    %v3426 = vld [vmem:[#allocation6 + $0x768] sm:$0xff]
    %v3427 = vld [vmem:[#allocation6 + $0x770] sm:$0xff]
    %v3428 = vld [vmem:[#allocation6 + $0x778] sm:$0xff]
    %v3429 = vld [vmem:[#allocation6 + $0x780] sm:$0xff]
    %v3430 = vld [vmem:[#allocation6 + $0x788] sm:$0xff]
    %v3431 = vld [vmem:[#allocation6 + $0x790] sm:$0xff]
    %v3432 = vld [vmem:[#allocation6 + $0x798] sm:$0xff]
    %v3433 = vld [vmem:[#allocation6 + $0x7a0] sm:$0xff]
    %v3434 = vld [vmem:[#allocation6 + $0x7a8] sm:$0xff]
    %v3435 = vld [vmem:[#allocation6 + $0x7b0] sm:$0xff]
    %v3436 = vld [vmem:[#allocation6 + $0x7b8] sm:$0xff]
    %v3437 = vld [vmem:[#allocation6 + $0x7c0] sm:$0xff]
    %v3438 = vld [vmem:[#allocation6 + $0x7c8] sm:$0xff]
    %v3439 = vld [vmem:[#allocation6 + $0x7d0] sm:$0xff]
    %v3440 = vld [vmem:[#allocation6 + $0x7d8] sm:$0xff]
    %v3441 = vld [vmem:[#allocation6 + $0x7e0] sm:$0xff]
    %v3442 = vld [vmem:[#allocation6 + $0x7e8] sm:$0xff]
    %v3443 = vld [vmem:[#allocation6 + $0x7f0] sm:$0xff]
    %v3444 = vld [vmem:[#allocation6 + $0x7f8] sm:$0xff]
    %v3445 = vunpack.c.l.s8.bf16 %v3189
    %v3446 = vunpack.c.l.s8.bf16 %v3190
    %v3447 = vunpack.c.l.s8.bf16 %v3191
    %v3448 = vunpack.c.l.s8.bf16 %v3192
    %v3449 = vunpack.c.h.s8.bf16 %v3189
    %v3450 = vunpack.c.h.s8.bf16 %v3190
    %v3451 = vunpack.c.h.s8.bf16 %v3191
    %v3452 = vunpack.c.h.s8.bf16 %v3192
    %v3453 = vunpack.c.l.s8.bf16 %v3193
    %v3454 = vunpack.c.l.s8.bf16 %v3194
    %v3455 = vunpack.c.l.s8.bf16 %v3195
    %v3456 = vunpack.c.l.s8.bf16 %v3196
    %v3457 = vunpack.c.h.s8.bf16 %v3193
    %v3458 = vunpack.c.h.s8.bf16 %v3194
    %v3459 = vunpack.c.h.s8.bf16 %v3195
    %v3460 = vunpack.c.h.s8.bf16 %v3196
    %v3461 = vunpack.c.l.s8.bf16 %v3197
    %v3462 = vunpack.c.l.s8.bf16 %v3198
    %v3463 = vunpack.c.l.s8.bf16 %v3199
    %v3464 = vunpack.c.l.s8.bf16 %v3200
    %v3465 = vunpack.c.h.s8.bf16 %v3197
    %v3466 = vunpack.c.h.s8.bf16 %v3198
    %v3467 = vunpack.c.h.s8.bf16 %v3199
    %v3468 = vunpack.c.h.s8.bf16 %v3200
    %v3469 = vunpack.c.l.s8.bf16 %v3201
    %v3470 = vunpack.c.l.s8.bf16 %v3202
    %v3471 = vunpack.c.l.s8.bf16 %v3203
    %v3472 = vunpack.c.l.s8.bf16 %v3204
    %v3473 = vunpack.c.h.s8.bf16 %v3201
    %v3474 = vunpack.c.h.s8.bf16 %v3202
    %v3475 = vunpack.c.h.s8.bf16 %v3203
    %v3476 = vunpack.c.h.s8.bf16 %v3204
    %v3477 = vunpack.c.l.s8.bf16 %v3205
    %v3478 = vunpack.c.l.s8.bf16 %v3206
    %v3479 = vunpack.c.l.s8.bf16 %v3207
    %v3480 = vunpack.c.l.s8.bf16 %v3208
    %v3481 = vunpack.c.h.s8.bf16 %v3205
    %v3482 = vunpack.c.h.s8.bf16 %v3206
    %v3483 = vunpack.c.h.s8.bf16 %v3207
    %v3484 = vunpack.c.h.s8.bf16 %v3208
    %v3485 = vunpack.c.l.s8.bf16 %v3209
    %v3486 = vunpack.c.l.s8.bf16 %v3210
    %v3487 = vunpack.c.l.s8.bf16 %v3211
    %v3488 = vunpack.c.l.s8.bf16 %v3212
    %v3489 = vunpack.c.h.s8.bf16 %v3209
    %v3490 = vunpack.c.h.s8.bf16 %v3210
    %v3491 = vunpack.c.h.s8.bf16 %v3211
    %v3492 = vunpack.c.h.s8.bf16 %v3212
    %v3493 = vunpack.c.l.s8.bf16 %v3213
    %v3494 = vunpack.c.l.s8.bf16 %v3214
    %v3495 = vunpack.c.l.s8.bf16 %v3215
    %v3496 = vunpack.c.l.s8.bf16 %v3216
    %v3497 = vunpack.c.h.s8.bf16 %v3213
    %v3498 = vunpack.c.h.s8.bf16 %v3214
    %v3499 = vunpack.c.h.s8.bf16 %v3215
    %v3500 = vunpack.c.h.s8.bf16 %v3216
    %v3501 = vunpack.c.l.s8.bf16 %v3217
    %v3502 = vunpack.c.l.s8.bf16 %v3218
    %v3503 = vunpack.c.l.s8.bf16 %v3219
    %v3504 = vunpack.c.l.s8.bf16 %v3220
    %v3505 = vunpack.c.h.s8.bf16 %v3217
    %v3506 = vunpack.c.h.s8.bf16 %v3218
    %v3507 = vunpack.c.h.s8.bf16 %v3219
    %v3508 = vunpack.c.h.s8.bf16 %v3220
    %v3509 = vunpack.c.l.s8.bf16 %v3221
    %v3510 = vunpack.c.l.s8.bf16 %v3222
    %v3511 = vunpack.c.l.s8.bf16 %v3223
    %v3512 = vunpack.c.l.s8.bf16 %v3224
    %v3513 = vunpack.c.h.s8.bf16 %v3221
    %v3514 = vunpack.c.h.s8.bf16 %v3222
    %v3515 = vunpack.c.h.s8.bf16 %v3223
    %v3516 = vunpack.c.h.s8.bf16 %v3224
    %v3517 = vunpack.c.l.s8.bf16 %v3225
    %v3518 = vunpack.c.l.s8.bf16 %v3226
    %v3519 = vunpack.c.l.s8.bf16 %v3227
    %v3520 = vunpack.c.l.s8.bf16 %v3228
    %v3521 = vunpack.c.h.s8.bf16 %v3225
    %v3522 = vunpack.c.h.s8.bf16 %v3226
    %v3523 = vunpack.c.h.s8.bf16 %v3227
    %v3524 = vunpack.c.h.s8.bf16 %v3228
    %v3525 = vunpack.c.l.s8.bf16 %v3229
    %v3526 = vunpack.c.l.s8.bf16 %v3230
    %v3527 = vunpack.c.l.s8.bf16 %v3231
    %v3528 = vunpack.c.l.s8.bf16 %v3232
    %v3529 = vunpack.c.h.s8.bf16 %v3229
    %v3530 = vunpack.c.h.s8.bf16 %v3230
    %v3531 = vunpack.c.h.s8.bf16 %v3231
    %v3532 = vunpack.c.h.s8.bf16 %v3232
    %v3533 = vunpack.c.l.s8.bf16 %v3233
    %v3534 = vunpack.c.l.s8.bf16 %v3234
    %v3535 = vunpack.c.l.s8.bf16 %v3235
    %v3536 = vunpack.c.l.s8.bf16 %v3236
    %v3537 = vunpack.c.h.s8.bf16 %v3233
    %v3538 = vunpack.c.h.s8.bf16 %v3234
    %v3539 = vunpack.c.h.s8.bf16 %v3235
    %v3540 = vunpack.c.h.s8.bf16 %v3236
    %v3541 = vunpack.c.l.s8.bf16 %v3237
    %v3542 = vunpack.c.l.s8.bf16 %v3238
    %v3543 = vunpack.c.l.s8.bf16 %v3239
    %v3544 = vunpack.c.l.s8.bf16 %v3240
    %v3545 = vunpack.c.h.s8.bf16 %v3237
    %v3546 = vunpack.c.h.s8.bf16 %v3238
    %v3547 = vunpack.c.h.s8.bf16 %v3239
    %v3548 = vunpack.c.h.s8.bf16 %v3240
    %v3549 = vunpack.c.l.s8.bf16 %v3241
    %v3550 = vunpack.c.l.s8.bf16 %v3242
    %v3551 = vunpack.c.l.s8.bf16 %v3243
    %v3552 = vunpack.c.l.s8.bf16 %v3244
    %v3553 = vunpack.c.h.s8.bf16 %v3241
    %v3554 = vunpack.c.h.s8.bf16 %v3242
    %v3555 = vunpack.c.h.s8.bf16 %v3243
    %v3556 = vunpack.c.h.s8.bf16 %v3244
    %v3557 = vunpack.c.l.s8.bf16 %v3245
    %v3558 = vunpack.c.l.s8.bf16 %v3246
    %v3559 = vunpack.c.l.s8.bf16 %v3247
    %v3560 = vunpack.c.l.s8.bf16 %v3248
    %v3561 = vunpack.c.h.s8.bf16 %v3245
    %v3562 = vunpack.c.h.s8.bf16 %v3246
    %v3563 = vunpack.c.h.s8.bf16 %v3247
    %v3564 = vunpack.c.h.s8.bf16 %v3248
    %v3565 = vunpack.c.l.s8.bf16 %v3249
    %v3566 = vunpack.c.l.s8.bf16 %v3250
    %v3567 = vunpack.c.l.s8.bf16 %v3251
    %v3568 = vunpack.c.l.s8.bf16 %v3252
    %v3569 = vunpack.c.h.s8.bf16 %v3249
    %v3570 = vunpack.c.h.s8.bf16 %v3250
    %v3571 = vunpack.c.h.s8.bf16 %v3251
    %v3572 = vunpack.c.h.s8.bf16 %v3252
    %v3573 = vunpack.c.l.s8.bf16 %v3253
    %v3574 = vunpack.c.l.s8.bf16 %v3254
    %v3575 = vunpack.c.l.s8.bf16 %v3255
    %v3576 = vunpack.c.l.s8.bf16 %v3256
    %v3577 = vunpack.c.h.s8.bf16 %v3253
    %v3578 = vunpack.c.h.s8.bf16 %v3254
    %v3579 = vunpack.c.h.s8.bf16 %v3255
    %v3580 = vunpack.c.h.s8.bf16 %v3256
    %v3581 = vunpack.c.l.s8.bf16 %v3257
    %v3582 = vunpack.c.l.s8.bf16 %v3258
    %v3583 = vunpack.c.l.s8.bf16 %v3259
    %v3584 = vunpack.c.l.s8.bf16 %v3260
    %v3585 = vunpack.c.h.s8.bf16 %v3257
    %v3586 = vunpack.c.h.s8.bf16 %v3258
    %v3587 = vunpack.c.h.s8.bf16 %v3259
    %v3588 = vunpack.c.h.s8.bf16 %v3260
    %v3589 = vunpack.c.l.s8.bf16 %v3261
    %v3590 = vunpack.c.l.s8.bf16 %v3262
    %v3591 = vunpack.c.l.s8.bf16 %v3263
    %v3592 = vunpack.c.l.s8.bf16 %v3264
    %v3593 = vunpack.c.h.s8.bf16 %v3261
    %v3594 = vunpack.c.h.s8.bf16 %v3262
    %v3595 = vunpack.c.h.s8.bf16 %v3263
    %v3596 = vunpack.c.h.s8.bf16 %v3264
    %v3597 = vunpack.c.l.s8.bf16 %v3265
    %v3598 = vunpack.c.l.s8.bf16 %v3266
    %v3599 = vunpack.c.l.s8.bf16 %v3267
    %v3600 = vunpack.c.l.s8.bf16 %v3268
    %v3601 = vunpack.c.h.s8.bf16 %v3265
    %v3602 = vunpack.c.h.s8.bf16 %v3266
    %v3603 = vunpack.c.h.s8.bf16 %v3267
    %v3604 = vunpack.c.h.s8.bf16 %v3268
    %v3605 = vunpack.c.l.s8.bf16 %v3269
    %v3606 = vunpack.c.l.s8.bf16 %v3270
    %v3607 = vunpack.c.l.s8.bf16 %v3271
    %v3608 = vunpack.c.l.s8.bf16 %v3272
    %v3609 = vunpack.c.h.s8.bf16 %v3269
    %v3610 = vunpack.c.h.s8.bf16 %v3270
    %v3611 = vunpack.c.h.s8.bf16 %v3271
    %v3612 = vunpack.c.h.s8.bf16 %v3272
    %v3613 = vunpack.c.l.s8.bf16 %v3273
    %v3614 = vunpack.c.l.s8.bf16 %v3274
    %v3615 = vunpack.c.l.s8.bf16 %v3275
    %v3616 = vunpack.c.l.s8.bf16 %v3276
    %v3617 = vunpack.c.h.s8.bf16 %v3273
    %v3618 = vunpack.c.h.s8.bf16 %v3274
    %v3619 = vunpack.c.h.s8.bf16 %v3275
    %v3620 = vunpack.c.h.s8.bf16 %v3276
    %v3621 = vunpack.c.l.s8.bf16 %v3277
    %v3622 = vunpack.c.l.s8.bf16 %v3278
    %v3623 = vunpack.c.l.s8.bf16 %v3279
    %v3624 = vunpack.c.l.s8.bf16 %v3280
    %v3625 = vunpack.c.h.s8.bf16 %v3277
    %v3626 = vunpack.c.h.s8.bf16 %v3278
    %v3627 = vunpack.c.h.s8.bf16 %v3279
    %v3628 = vunpack.c.h.s8.bf16 %v3280
    %v3629 = vunpack.c.l.s8.bf16 %v3281
    %v3630 = vunpack.c.l.s8.bf16 %v3282
    %v3631 = vunpack.c.l.s8.bf16 %v3283
    %v3632 = vunpack.c.l.s8.bf16 %v3284
    %v3633 = vunpack.c.h.s8.bf16 %v3281
    %v3634 = vunpack.c.h.s8.bf16 %v3282
    %v3635 = vunpack.c.h.s8.bf16 %v3283
    %v3636 = vunpack.c.h.s8.bf16 %v3284
    %v3637 = vunpack.c.l.s8.bf16 %v3285
    %v3638 = vunpack.c.l.s8.bf16 %v3286
    %v3639 = vunpack.c.l.s8.bf16 %v3287
    %v3640 = vunpack.c.l.s8.bf16 %v3288
    %v3641 = vunpack.c.h.s8.bf16 %v3285
    %v3642 = vunpack.c.h.s8.bf16 %v3286
    %v3643 = vunpack.c.h.s8.bf16 %v3287
    %v3644 = vunpack.c.h.s8.bf16 %v3288
    %v3645 = vunpack.c.l.s8.bf16 %v3289
    %v3646 = vunpack.c.l.s8.bf16 %v3290
    %v3647 = vunpack.c.l.s8.bf16 %v3291
    %v3648 = vunpack.c.l.s8.bf16 %v3292
    %v3649 = vunpack.c.h.s8.bf16 %v3289
    %v3650 = vunpack.c.h.s8.bf16 %v3290
    %v3651 = vunpack.c.h.s8.bf16 %v3291
    %v3652 = vunpack.c.h.s8.bf16 %v3292
    %v3653 = vunpack.c.l.s8.bf16 %v3293
    %v3654 = vunpack.c.l.s8.bf16 %v3294
    %v3655 = vunpack.c.l.s8.bf16 %v3295
    %v3656 = vunpack.c.l.s8.bf16 %v3296
    %v3657 = vunpack.c.h.s8.bf16 %v3293
    %v3658 = vunpack.c.h.s8.bf16 %v3294
    %v3659 = vunpack.c.h.s8.bf16 %v3295
    %v3660 = vunpack.c.h.s8.bf16 %v3296
    %v3661 = vunpack.c.l.s8.bf16 %v3297
    %v3662 = vunpack.c.l.s8.bf16 %v3298
    %v3663 = vunpack.c.l.s8.bf16 %v3299
    %v3664 = vunpack.c.l.s8.bf16 %v3300
    %v3665 = vunpack.c.h.s8.bf16 %v3297
    %v3666 = vunpack.c.h.s8.bf16 %v3298
    %v3667 = vunpack.c.h.s8.bf16 %v3299
    %v3668 = vunpack.c.h.s8.bf16 %v3300
    %v3669 = vunpack.c.l.s8.bf16 %v3301
    %v3670 = vunpack.c.l.s8.bf16 %v3302
    %v3671 = vunpack.c.l.s8.bf16 %v3303
    %v3672 = vunpack.c.l.s8.bf16 %v3304
    %v3673 = vunpack.c.h.s8.bf16 %v3301
    %v3674 = vunpack.c.h.s8.bf16 %v3302
    %v3675 = vunpack.c.h.s8.bf16 %v3303
    %v3676 = vunpack.c.h.s8.bf16 %v3304
    %v3677 = vunpack.c.l.s8.bf16 %v3305
    %v3678 = vunpack.c.l.s8.bf16 %v3306
    %v3679 = vunpack.c.l.s8.bf16 %v3307
    %v3680 = vunpack.c.l.s8.bf16 %v3308
    %v3681 = vunpack.c.h.s8.bf16 %v3305
    %v3682 = vunpack.c.h.s8.bf16 %v3306
    %v3683 = vunpack.c.h.s8.bf16 %v3307
    %v3684 = vunpack.c.h.s8.bf16 %v3308
    %v3685 = vunpack.c.l.s8.bf16 %v3309
    %v3686 = vunpack.c.l.s8.bf16 %v3310
    %v3687 = vunpack.c.l.s8.bf16 %v3311
    %v3688 = vunpack.c.l.s8.bf16 %v3312
    %v3689 = vunpack.c.h.s8.bf16 %v3309
    %v3690 = vunpack.c.h.s8.bf16 %v3310
    %v3691 = vunpack.c.h.s8.bf16 %v3311
    %v3692 = vunpack.c.h.s8.bf16 %v3312
    %v3693 = vunpack.c.l.s8.bf16 %v3313
    %v3694 = vunpack.c.l.s8.bf16 %v3314
    %v3695 = vunpack.c.l.s8.bf16 %v3315
    %v3696 = vunpack.c.l.s8.bf16 %v3316
    %v3697 = vunpack.c.h.s8.bf16 %v3313
    %v3698 = vunpack.c.h.s8.bf16 %v3314
    %v3699 = vunpack.c.h.s8.bf16 %v3315
    %v3700 = vunpack.c.h.s8.bf16 %v3316
    %v3701 = vunpack.c.l.s8.bf16 %v3317
    %v3702 = vunpack.c.l.s8.bf16 %v3318
    %v3703 = vunpack.c.l.s8.bf16 %v3319
    %v3704 = vunpack.c.l.s8.bf16 %v3320
    %v3705 = vunpack.c.h.s8.bf16 %v3317
    %v3706 = vunpack.c.h.s8.bf16 %v3318
    %v3707 = vunpack.c.h.s8.bf16 %v3319
    %v3708 = vunpack.c.h.s8.bf16 %v3320
    %v3709 = vunpack.c.l.s8.bf16 %v3321
    %v3710 = vunpack.c.l.s8.bf16 %v3322
    %v3711 = vunpack.c.l.s8.bf16 %v3323
    %v3712 = vunpack.c.l.s8.bf16 %v3324
    %v3713 = vunpack.c.h.s8.bf16 %v3321
    %v3714 = vunpack.c.h.s8.bf16 %v3322
    %v3715 = vunpack.c.h.s8.bf16 %v3323
    %v3716 = vunpack.c.h.s8.bf16 %v3324
    %v3717 = vunpack.c.l.s8.bf16 %v3325
    %v3718 = vunpack.c.l.s8.bf16 %v3326
    %v3719 = vunpack.c.l.s8.bf16 %v3327
    %v3720 = vunpack.c.l.s8.bf16 %v3328
    %v3721 = vunpack.c.h.s8.bf16 %v3325
    %v3722 = vunpack.c.h.s8.bf16 %v3326
    %v3723 = vunpack.c.h.s8.bf16 %v3327
    %v3724 = vunpack.c.h.s8.bf16 %v3328
    %v3725 = vunpack.c.l.s8.bf16 %v3329
    %v3726 = vunpack.c.l.s8.bf16 %v3330
    %v3727 = vunpack.c.l.s8.bf16 %v3331
    %v3728 = vunpack.c.l.s8.bf16 %v3332
    %v3729 = vunpack.c.h.s8.bf16 %v3329
    %v3730 = vunpack.c.h.s8.bf16 %v3330
    %v3731 = vunpack.c.h.s8.bf16 %v3331
    %v3732 = vunpack.c.h.s8.bf16 %v3332
    %v3733 = vunpack.c.l.s8.bf16 %v3333
    %v3734 = vunpack.c.l.s8.bf16 %v3334
    %v3735 = vunpack.c.l.s8.bf16 %v3335
    %v3736 = vunpack.c.l.s8.bf16 %v3336
    %v3737 = vunpack.c.h.s8.bf16 %v3333
    %v3738 = vunpack.c.h.s8.bf16 %v3334
    %v3739 = vunpack.c.h.s8.bf16 %v3335
    %v3740 = vunpack.c.h.s8.bf16 %v3336
    %v3741 = vunpack.c.l.s8.bf16 %v3337
    %v3742 = vunpack.c.l.s8.bf16 %v3338
    %v3743 = vunpack.c.l.s8.bf16 %v3339
    %v3744 = vunpack.c.l.s8.bf16 %v3340
    %v3745 = vunpack.c.h.s8.bf16 %v3337
    %v3746 = vunpack.c.h.s8.bf16 %v3338
    %v3747 = vunpack.c.h.s8.bf16 %v3339
    %v3748 = vunpack.c.h.s8.bf16 %v3340
    %v3749 = vunpack.c.l.s8.bf16 %v3341
    %v3750 = vunpack.c.l.s8.bf16 %v3342
    %v3751 = vunpack.c.l.s8.bf16 %v3343
    %v3752 = vunpack.c.l.s8.bf16 %v3344
    %v3753 = vunpack.c.h.s8.bf16 %v3341
    %v3754 = vunpack.c.h.s8.bf16 %v3342
    %v3755 = vunpack.c.h.s8.bf16 %v3343
    %v3756 = vunpack.c.h.s8.bf16 %v3344
    %v3757 = vunpack.c.l.s8.bf16 %v3345
    %v3758 = vunpack.c.l.s8.bf16 %v3346
    %v3759 = vunpack.c.l.s8.bf16 %v3347
    %v3760 = vunpack.c.l.s8.bf16 %v3348
    %v3761 = vunpack.c.h.s8.bf16 %v3345
    %v3762 = vunpack.c.h.s8.bf16 %v3346
    %v3763 = vunpack.c.h.s8.bf16 %v3347
    %v3764 = vunpack.c.h.s8.bf16 %v3348
    %v3765 = vunpack.c.l.s8.bf16 %v3349
    %v3766 = vunpack.c.l.s8.bf16 %v3350
    %v3767 = vunpack.c.l.s8.bf16 %v3351
    %v3768 = vunpack.c.l.s8.bf16 %v3352
    %v3769 = vunpack.c.h.s8.bf16 %v3349
    %v3770 = vunpack.c.h.s8.bf16 %v3350
    %v3771 = vunpack.c.h.s8.bf16 %v3351
    %v3772 = vunpack.c.h.s8.bf16 %v3352
    %v3773 = vunpack.c.l.s8.bf16 %v3353
    %v3774 = vunpack.c.l.s8.bf16 %v3354
    %v3775 = vunpack.c.l.s8.bf16 %v3355
    %v3776 = vunpack.c.l.s8.bf16 %v3356
    %v3777 = vunpack.c.h.s8.bf16 %v3353
    %v3778 = vunpack.c.h.s8.bf16 %v3354
    %v3779 = vunpack.c.h.s8.bf16 %v3355
    %v3780 = vunpack.c.h.s8.bf16 %v3356
    %v3781 = vunpack.c.l.s8.bf16 %v3357
    %v3782 = vunpack.c.l.s8.bf16 %v3358
    %v3783 = vunpack.c.l.s8.bf16 %v3359
    %v3784 = vunpack.c.l.s8.bf16 %v3360
    %v3785 = vunpack.c.h.s8.bf16 %v3357
    %v3786 = vunpack.c.h.s8.bf16 %v3358
    %v3787 = vunpack.c.h.s8.bf16 %v3359
    %v3788 = vunpack.c.h.s8.bf16 %v3360
    %v3789 = vunpack.c.l.s8.bf16 %v3361
    %v3790 = vunpack.c.l.s8.bf16 %v3362
    %v3791 = vunpack.c.l.s8.bf16 %v3363
    %v3792 = vunpack.c.l.s8.bf16 %v3364
    %v3793 = vunpack.c.h.s8.bf16 %v3361
    %v3794 = vunpack.c.h.s8.bf16 %v3362
    %v3795 = vunpack.c.h.s8.bf16 %v3363
    %v3796 = vunpack.c.h.s8.bf16 %v3364
    %v3797 = vunpack.c.l.s8.bf16 %v3365
    %v3798 = vunpack.c.l.s8.bf16 %v3366
    %v3799 = vunpack.c.l.s8.bf16 %v3367
    %v3800 = vunpack.c.l.s8.bf16 %v3368
    %v3801 = vunpack.c.h.s8.bf16 %v3365
    %v3802 = vunpack.c.h.s8.bf16 %v3366
    %v3803 = vunpack.c.h.s8.bf16 %v3367
    %v3804 = vunpack.c.h.s8.bf16 %v3368
    %v3805 = vunpack.c.l.s8.bf16 %v3369
    %v3806 = vunpack.c.l.s8.bf16 %v3370
    %v3807 = vunpack.c.l.s8.bf16 %v3371
    %v3808 = vunpack.c.l.s8.bf16 %v3372
    %v3809 = vunpack.c.h.s8.bf16 %v3369
    %v3810 = vunpack.c.h.s8.bf16 %v3370
    %v3811 = vunpack.c.h.s8.bf16 %v3371
    %v3812 = vunpack.c.h.s8.bf16 %v3372
    %v3813 = vunpack.c.l.s8.bf16 %v3373
    %v3814 = vunpack.c.l.s8.bf16 %v3374
    %v3815 = vunpack.c.l.s8.bf16 %v3375
    %v3816 = vunpack.c.l.s8.bf16 %v3376
    %v3817 = vunpack.c.h.s8.bf16 %v3373
    %v3818 = vunpack.c.h.s8.bf16 %v3374
    %v3819 = vunpack.c.h.s8.bf16 %v3375
    %v3820 = vunpack.c.h.s8.bf16 %v3376
    %v3821 = vunpack.c.l.s8.bf16 %v3377
    %v3822 = vunpack.c.l.s8.bf16 %v3378
    %v3823 = vunpack.c.l.s8.bf16 %v3379
    %v3824 = vunpack.c.l.s8.bf16 %v3380
    %v3825 = vunpack.c.h.s8.bf16 %v3377
    %v3826 = vunpack.c.h.s8.bf16 %v3378
    %v3827 = vunpack.c.h.s8.bf16 %v3379
    %v3828 = vunpack.c.h.s8.bf16 %v3380
    %v3829 = vunpack.c.l.s8.bf16 %v3381
    %v3830 = vunpack.c.l.s8.bf16 %v3382
    %v3831 = vunpack.c.l.s8.bf16 %v3383
    %v3832 = vunpack.c.l.s8.bf16 %v3384
    %v3833 = vunpack.c.h.s8.bf16 %v3381
    %v3834 = vunpack.c.h.s8.bf16 %v3382
    %v3835 = vunpack.c.h.s8.bf16 %v3383
    %v3836 = vunpack.c.h.s8.bf16 %v3384
    %v3837 = vunpack.c.l.s8.bf16 %v3385
    %v3838 = vunpack.c.l.s8.bf16 %v3386
    %v3839 = vunpack.c.l.s8.bf16 %v3387
    %v3840 = vunpack.c.l.s8.bf16 %v3388
    %v3841 = vunpack.c.h.s8.bf16 %v3385
    %v3842 = vunpack.c.h.s8.bf16 %v3386
    %v3843 = vunpack.c.h.s8.bf16 %v3387
    %v3844 = vunpack.c.h.s8.bf16 %v3388
    %v3845 = vunpack.c.l.s8.bf16 %v3389
    %v3846 = vunpack.c.l.s8.bf16 %v3390
    %v3847 = vunpack.c.l.s8.bf16 %v3391
    %v3848 = vunpack.c.l.s8.bf16 %v3392
    %v3849 = vunpack.c.h.s8.bf16 %v3389
    %v3850 = vunpack.c.h.s8.bf16 %v3390
    %v3851 = vunpack.c.h.s8.bf16 %v3391
    %v3852 = vunpack.c.h.s8.bf16 %v3392
    %v3853 = vunpack.c.l.s8.bf16 %v3393
    %v3854 = vunpack.c.l.s8.bf16 %v3394
    %v3855 = vunpack.c.l.s8.bf16 %v3395
    %v3856 = vunpack.c.l.s8.bf16 %v3396
    %v3857 = vunpack.c.h.s8.bf16 %v3393
    %v3858 = vunpack.c.h.s8.bf16 %v3394
    %v3859 = vunpack.c.h.s8.bf16 %v3395
    %v3860 = vunpack.c.h.s8.bf16 %v3396
    %v3861 = vunpack.c.l.s8.bf16 %v3397
    %v3862 = vunpack.c.l.s8.bf16 %v3398
    %v3863 = vunpack.c.l.s8.bf16 %v3399
    %v3864 = vunpack.c.l.s8.bf16 %v3400
    %v3865 = vunpack.c.h.s8.bf16 %v3397
    %v3866 = vunpack.c.h.s8.bf16 %v3398
    %v3867 = vunpack.c.h.s8.bf16 %v3399
    %v3868 = vunpack.c.h.s8.bf16 %v3400
    %v3869 = vunpack.c.l.s8.bf16 %v3401
    %v3870 = vunpack.c.l.s8.bf16 %v3402
    %v3871 = vunpack.c.l.s8.bf16 %v3403
    %v3872 = vunpack.c.l.s8.bf16 %v3404
    %v3873 = vunpack.c.h.s8.bf16 %v3401
    %v3874 = vunpack.c.h.s8.bf16 %v3402
    %v3875 = vunpack.c.h.s8.bf16 %v3403
    %v3876 = vunpack.c.h.s8.bf16 %v3404
    %v3877 = vunpack.c.l.s8.bf16 %v3405
    %v3878 = vunpack.c.l.s8.bf16 %v3406
    %v3879 = vunpack.c.l.s8.bf16 %v3407
    %v3880 = vunpack.c.l.s8.bf16 %v3408
    %v3881 = vunpack.c.h.s8.bf16 %v3405
    %v3882 = vunpack.c.h.s8.bf16 %v3406
    %v3883 = vunpack.c.h.s8.bf16 %v3407
    %v3884 = vunpack.c.h.s8.bf16 %v3408
    %v3885 = vunpack.c.l.s8.bf16 %v3409
    %v3886 = vunpack.c.l.s8.bf16 %v3410
    %v3887 = vunpack.c.l.s8.bf16 %v3411
    %v3888 = vunpack.c.l.s8.bf16 %v3412
    %v3889 = vunpack.c.h.s8.bf16 %v3409
    %v3890 = vunpack.c.h.s8.bf16 %v3410
    %v3891 = vunpack.c.h.s8.bf16 %v3411
    %v3892 = vunpack.c.h.s8.bf16 %v3412
    %v3893 = vunpack.c.l.s8.bf16 %v3413
    %v3894 = vunpack.c.l.s8.bf16 %v3414
    %v3895 = vunpack.c.l.s8.bf16 %v3415
    %v3896 = vunpack.c.l.s8.bf16 %v3416
    %v3897 = vunpack.c.h.s8.bf16 %v3413
    %v3898 = vunpack.c.h.s8.bf16 %v3414
    %v3899 = vunpack.c.h.s8.bf16 %v3415
    %v3900 = vunpack.c.h.s8.bf16 %v3416
    %v3901 = vunpack.c.l.s8.bf16 %v3417
    %v3902 = vunpack.c.l.s8.bf16 %v3418
    %v3903 = vunpack.c.l.s8.bf16 %v3419
    %v3904 = vunpack.c.l.s8.bf16 %v3420
    %v3905 = vunpack.c.h.s8.bf16 %v3417
    %v3906 = vunpack.c.h.s8.bf16 %v3418
    %v3907 = vunpack.c.h.s8.bf16 %v3419
    %v3908 = vunpack.c.h.s8.bf16 %v3420
    %v3909 = vunpack.c.l.s8.bf16 %v3421
    %v3910 = vunpack.c.l.s8.bf16 %v3422
    %v3911 = vunpack.c.l.s8.bf16 %v3423
    %v3912 = vunpack.c.l.s8.bf16 %v3424
    %v3913 = vunpack.c.h.s8.bf16 %v3421
    %v3914 = vunpack.c.h.s8.bf16 %v3422
    %v3915 = vunpack.c.h.s8.bf16 %v3423
    %v3916 = vunpack.c.h.s8.bf16 %v3424
    %v3917 = vunpack.c.l.s8.bf16 %v3425
    %v3918 = vunpack.c.l.s8.bf16 %v3426
    %v3919 = vunpack.c.l.s8.bf16 %v3427
    %v3920 = vunpack.c.l.s8.bf16 %v3428
    %v3921 = vunpack.c.h.s8.bf16 %v3425
    %v3922 = vunpack.c.h.s8.bf16 %v3426
    %v3923 = vunpack.c.h.s8.bf16 %v3427
    %v3924 = vunpack.c.h.s8.bf16 %v3428
    %v3925 = vunpack.c.l.s8.bf16 %v3429
    %v3926 = vunpack.c.l.s8.bf16 %v3430
    %v3927 = vunpack.c.l.s8.bf16 %v3431
    %v3928 = vunpack.c.l.s8.bf16 %v3432
    %v3929 = vunpack.c.h.s8.bf16 %v3429
    %v3930 = vunpack.c.h.s8.bf16 %v3430
    %v3931 = vunpack.c.h.s8.bf16 %v3431
    %v3932 = vunpack.c.h.s8.bf16 %v3432
    %v3933 = vunpack.c.l.s8.bf16 %v3433
    %v3934 = vunpack.c.l.s8.bf16 %v3434
    %v3935 = vunpack.c.l.s8.bf16 %v3435
    %v3936 = vunpack.c.l.s8.bf16 %v3436
    %v3937 = vunpack.c.h.s8.bf16 %v3433
    %v3938 = vunpack.c.h.s8.bf16 %v3434
    %v3939 = vunpack.c.h.s8.bf16 %v3435
    %v3940 = vunpack.c.h.s8.bf16 %v3436
    %v3941 = vunpack.c.l.s8.bf16 %v3437
    %v3942 = vunpack.c.l.s8.bf16 %v3438
    %v3943 = vunpack.c.l.s8.bf16 %v3439
    %v3944 = vunpack.c.l.s8.bf16 %v3440
    %v3945 = vunpack.c.h.s8.bf16 %v3437
    %v3946 = vunpack.c.h.s8.bf16 %v3438
    %v3947 = vunpack.c.h.s8.bf16 %v3439
    %v3948 = vunpack.c.h.s8.bf16 %v3440
    %v3949 = vunpack.c.l.s8.bf16 %v3441
    %v3950 = vunpack.c.l.s8.bf16 %v3442
    %v3951 = vunpack.c.l.s8.bf16 %v3443
    %v3952 = vunpack.c.l.s8.bf16 %v3444
    %v3953 = vunpack.c.h.s8.bf16 %v3441
    %v3954 = vunpack.c.h.s8.bf16 %v3442
    %v3955 = vunpack.c.h.s8.bf16 %v3443
    %v3956 = vunpack.c.h.s8.bf16 %v3444
    %3957 = vmatprep.subr.bf16.mxu0 %v3446
    %3958 = vmatpush1.bf16.msra.mxu0 %v3445
    %3959 = vmatprep.subr.bf16.mxu0 %v3450
    %3960 = vmatpush1.bf16.msra.mxu0 %v3449
    %3961 = vmatprep.subr.bf16.mxu0 %v3454
    %3962 = vmatpush1.bf16.msra.mxu0 %v3453
    %3963 = vmatprep.subr.bf16.mxu0 %v3458
    %3964 = vmatpush1.bf16.msra.mxu0 %v3457
    %3965 = vmatprep.subr.bf16.mxu0 %v3462
    %3966 = vmatpush1.bf16.msra.mxu0 %v3461
    %3967 = vmatprep.subr.bf16.mxu0 %v3466
    %3968 = vmatpush1.bf16.msra.mxu0 %v3465
    %3969 = vmatprep.subr.bf16.mxu0 %v3470
    %3970 = vmatpush1.bf16.msra.mxu0 %v3469
    %3971 = vmatprep.subr.bf16.mxu0 %v3474
    %3972 = vmatpush1.bf16.msra.mxu0 %v3473
    %3973 = vmatprep.subr.bf16.mxu0 %v3478
    %3974 = vmatpush1.bf16.msra.mxu0 %v3477
    %3975 = vmatprep.subr.bf16.mxu0 %v3482
    %3976 = vmatpush1.bf16.msra.mxu0 %v3481
    %3977 = vmatprep.subr.bf16.mxu0 %v3486
    %3978 = vmatpush1.bf16.msra.mxu0 %v3485
    %3979 = vmatprep.subr.bf16.mxu0 %v3490
    %3980 = vmatpush1.bf16.msra.mxu0 %v3489
    %3981 = vmatprep.subr.bf16.mxu0 %v3494
    %3982 = vmatpush1.bf16.msra.mxu0 %v3493
    %3983 = vmatprep.subr.bf16.mxu0 %v3498
    %3984 = vmatpush1.bf16.msra.mxu0 %v3497
    %3985 = vmatprep.subr.bf16.mxu0 %v3502
    %3986 = vmatpush1.bf16.msra.mxu0 %v3501
    %3987 = vmatprep.subr.bf16.mxu0 %v3506
    %3988 = vmatpush1.bf16.msra.mxu0 %v3505
    %3989 = vmatprep.mubr.bf16.mxu0 %v3156
    %3990 = vmatmul.mubr.bf16.gmra.mrb[0].mxu0 %v3155
    %v3991 = vpop.f32.mrb[0].mxu0
    %v3992 = vadd.f32 0.0, %v3991
    %v3993 = vpop.f32.mrb[0].mxu0
    %v3994 = vadd.f32 0.0, %v3993
    %v3995 = vpop.f32.mrb[0].mxu0
    %v3996 = vpop.f32.mrb[0].mxu0
    %3997 = vdwg.mxu0
    %3998 = vmatprep.subr.bf16.mxu0 %v3510
    %3999 = vmatpush1.bf16.msra.mxu0 %v3509
    %4000 = vmatprep.subr.bf16.mxu0 %v3514
    %4001 = vmatpush1.bf16.msra.mxu0 %v3513
    %4002 = vmatprep.subr.bf16.mxu0 %v3518
    %4003 = vmatpush1.bf16.msra.mxu0 %v3517
    %4004 = vmatprep.subr.bf16.mxu0 %v3522
    %4005 = vmatpush1.bf16.msra.mxu0 %v3521
    %4006 = vmatprep.subr.bf16.mxu0 %v3526
    %4007 = vmatpush1.bf16.msra.mxu0 %v3525
    %4008 = vmatprep.subr.bf16.mxu0 %v3530
    %4009 = vmatpush1.bf16.msra.mxu0 %v3529
    %4010 = vmatprep.subr.bf16.mxu0 %v3534
    %4011 = vmatpush1.bf16.msra.mxu0 %v3533
    %4012 = vmatprep.subr.bf16.mxu0 %v3538
    %4013 = vmatpush1.bf16.msra.mxu0 %v3537
    %4014 = vmatprep.subr.bf16.mxu0 %v3542
    %4015 = vmatpush1.bf16.msra.mxu0 %v3541
    %4016 = vmatprep.subr.bf16.mxu0 %v3546
    %4017 = vmatpush1.bf16.msra.mxu0 %v3545
    %4018 = vmatprep.subr.bf16.mxu0 %v3550
    %4019 = vmatpush1.bf16.msra.mxu0 %v3549
    %4020 = vmatprep.subr.bf16.mxu0 %v3554
    %4021 = vmatpush1.bf16.msra.mxu0 %v3553
    %4022 = vmatprep.subr.bf16.mxu0 %v3558
    %4023 = vmatpush1.bf16.msra.mxu0 %v3557
    %4024 = vmatprep.subr.bf16.mxu0 %v3562
    %4025 = vmatpush1.bf16.msra.mxu0 %v3561
    %4026 = vmatprep.subr.bf16.mxu0 %v3566
    %4027 = vmatpush1.bf16.msra.mxu0 %v3565
    %4028 = vmatprep.subr.bf16.mxu0 %v3570
    %4029 = vmatpush1.bf16.msra.mxu0 %v3569
    %4030 = vmatprep.mubr.bf16.mxu0 %v3158
    %4031 = vmatmul.mubr.bf16.gmra.mrb[0].mxu0 %v3157
    %v4032 = vpop.f32.mrb[0].mxu0
    %v4033 = vadd.f32 %v3992, %v4032
    %v4034 = vpop.f32.mrb[0].mxu0
    %v4035 = vadd.f32 %v3994, %v4034
    %v4036 = vpop.f32.mrb[0].mxu0
    %v4037 = vpop.f32.mrb[0].mxu0
    %4038 = vdwg.mxu0
    %4039 = vmatprep.subr.bf16.mxu0 %v3574
    %4040 = vmatpush1.bf16.msra.mxu0 %v3573
    %4041 = vmatprep.subr.bf16.mxu0 %v3578
    %4042 = vmatpush1.bf16.msra.mxu0 %v3577
    %4043 = vmatprep.subr.bf16.mxu0 %v3582
    %4044 = vmatpush1.bf16.msra.mxu0 %v3581
    %4045 = vmatprep.subr.bf16.mxu0 %v3586
    %4046 = vmatpush1.bf16.msra.mxu0 %v3585
    %4047 = vmatprep.subr.bf16.mxu0 %v3590
    %4048 = vmatpush1.bf16.msra.mxu0 %v3589
    %4049 = vmatprep.subr.bf16.mxu0 %v3594
    %4050 = vmatpush1.bf16.msra.mxu0 %v3593
    %4051 = vmatprep.subr.bf16.mxu0 %v3598
    %4052 = vmatpush1.bf16.msra.mxu0 %v3597
    %4053 = vmatprep.subr.bf16.mxu0 %v3602
    %4054 = vmatpush1.bf16.msra.mxu0 %v3601
    %4055 = vmatprep.subr.bf16.mxu0 %v3606
    %4056 = vmatpush1.bf16.msra.mxu0 %v3605
    %4057 = vmatprep.subr.bf16.mxu0 %v3610
    %4058 = vmatpush1.bf16.msra.mxu0 %v3609
    %4059 = vmatprep.subr.bf16.mxu0 %v3614
    %4060 = vmatpush1.bf16.msra.mxu0 %v3613
    %4061 = vmatprep.subr.bf16.mxu0 %v3618
    %4062 = vmatpush1.bf16.msra.mxu0 %v3617
    %4063 = vmatprep.subr.bf16.mxu0 %v3622
    %4064 = vmatpush1.bf16.msra.mxu0 %v3621
    %4065 = vmatprep.subr.bf16.mxu0 %v3626
    %4066 = vmatpush1.bf16.msra.mxu0 %v3625
    %4067 = vmatprep.subr.bf16.mxu0 %v3630
    %4068 = vmatpush1.bf16.msra.mxu0 %v3629
    %4069 = vmatprep.subr.bf16.mxu0 %v3634
    %4070 = vmatpush1.bf16.msra.mxu0 %v3633
    %4071 = vmatprep.mubr.bf16.mxu0 %v3160
    %4072 = vmatmul.mubr.bf16.gmra.mrb[0].mxu0 %v3159
    %v4073 = vpop.f32.mrb[0].mxu0
    %v4074 = vadd.f32 %v4033, %v4073
    %v4075 = vpop.f32.mrb[0].mxu0
    %v4076 = vadd.f32 %v4035, %v4075
    %v4077 = vpop.f32.mrb[0].mxu0
    %v4078 = vpop.f32.mrb[0].mxu0
    %4079 = vdwg.mxu0
    %4080 = vmatprep.subr.bf16.mxu0 %v3638
    %4081 = vmatpush1.bf16.msra.mxu0 %v3637
    %4082 = vmatprep.subr.bf16.mxu0 %v3642
    %4083 = vmatpush1.bf16.msra.mxu0 %v3641
    %4084 = vmatprep.subr.bf16.mxu0 %v3646
    %4085 = vmatpush1.bf16.msra.mxu0 %v3645
    %4086 = vmatprep.subr.bf16.mxu0 %v3650
    %4087 = vmatpush1.bf16.msra.mxu0 %v3649
    %4088 = vmatprep.subr.bf16.mxu0 %v3654
    %4089 = vmatpush1.bf16.msra.mxu0 %v3653
    %4090 = vmatprep.subr.bf16.mxu0 %v3658
    %4091 = vmatpush1.bf16.msra.mxu0 %v3657
    %4092 = vmatprep.subr.bf16.mxu0 %v3662
    %4093 = vmatpush1.bf16.msra.mxu0 %v3661
    %4094 = vmatprep.subr.bf16.mxu0 %v3666
    %4095 = vmatpush1.bf16.msra.mxu0 %v3665
    %4096 = vmatprep.subr.bf16.mxu0 %v3670
    %4097 = vmatpush1.bf16.msra.mxu0 %v3669
    %4098 = vmatprep.subr.bf16.mxu0 %v3674
    %4099 = vmatpush1.bf16.msra.mxu0 %v3673
    %4100 = vmatprep.subr.bf16.mxu0 %v3678
    %4101 = vmatpush1.bf16.msra.mxu0 %v3677
    %4102 = vmatprep.subr.bf16.mxu0 %v3682
    %4103 = vmatpush1.bf16.msra.mxu0 %v3681
    %4104 = vmatprep.subr.bf16.mxu0 %v3686
    %4105 = vmatpush1.bf16.msra.mxu0 %v3685
    %4106 = vmatprep.subr.bf16.mxu0 %v3690
    %4107 = vmatpush1.bf16.msra.mxu0 %v3689
    %4108 = vmatprep.subr.bf16.mxu0 %v3694
    %4109 = vmatpush1.bf16.msra.mxu0 %v3693
    %4110 = vmatprep.subr.bf16.mxu0 %v3698
    %4111 = vmatpush1.bf16.msra.mxu0 %v3697
    %4112 = vmatprep.mubr.bf16.mxu0 %v3162
    %4113 = vmatmul.mubr.bf16.gmra.mrb[0].mxu0 %v3161
    %v4114 = vpop.f32.mrb[0].mxu0
    %v4115 = vadd.f32 %v4074, %v4114
    %v4116 = vpop.f32.mrb[0].mxu0
    %v4117 = vadd.f32 %v4076, %v4116
    %v4118 = vpop.f32.mrb[0].mxu0
    %v4119 = vpop.f32.mrb[0].mxu0
    %4120 = vdwg.mxu0
    %4121 = vmatprep.subr.bf16.mxu0 %v3702
    %4122 = vmatpush1.bf16.msra.mxu0 %v3701
    %4123 = vmatprep.subr.bf16.mxu0 %v3706
    %4124 = vmatpush1.bf16.msra.mxu0 %v3705
    %4125 = vmatprep.subr.bf16.mxu0 %v3710
    %4126 = vmatpush1.bf16.msra.mxu0 %v3709
    %4127 = vmatprep.subr.bf16.mxu0 %v3714
    %4128 = vmatpush1.bf16.msra.mxu0 %v3713
    %4129 = vmatprep.subr.bf16.mxu0 %v3718
    %4130 = vmatpush1.bf16.msra.mxu0 %v3717
    %4131 = vmatprep.subr.bf16.mxu0 %v3722
    %4132 = vmatpush1.bf16.msra.mxu0 %v3721
    %4133 = vmatprep.subr.bf16.mxu0 %v3726
    %4134 = vmatpush1.bf16.msra.mxu0 %v3725
    %4135 = vmatprep.subr.bf16.mxu0 %v3730
    %4136 = vmatpush1.bf16.msra.mxu0 %v3729
    %4137 = vmatprep.subr.bf16.mxu0 %v3734
    %4138 = vmatpush1.bf16.msra.mxu0 %v3733
    %4139 = vmatprep.subr.bf16.mxu0 %v3738
    %4140 = vmatpush1.bf16.msra.mxu0 %v3737
    %4141 = vmatprep.subr.bf16.mxu0 %v3742
    %4142 = vmatpush1.bf16.msra.mxu0 %v3741
    %4143 = vmatprep.subr.bf16.mxu0 %v3746
    %4144 = vmatpush1.bf16.msra.mxu0 %v3745
    %4145 = vmatprep.subr.bf16.mxu0 %v3750
    %4146 = vmatpush1.bf16.msra.mxu0 %v3749
    %4147 = vmatprep.subr.bf16.mxu0 %v3754
    %4148 = vmatpush1.bf16.msra.mxu0 %v3753
    %4149 = vmatprep.subr.bf16.mxu0 %v3758
    %4150 = vmatpush1.bf16.msra.mxu0 %v3757
    %4151 = vmatprep.subr.bf16.mxu0 %v3762
    %4152 = vmatpush1.bf16.msra.mxu0 %v3761
    %4153 = vmatprep.mubr.bf16.mxu0 %v3164
    %4154 = vmatmul.mubr.bf16.gmra.mrb[0].mxu0 %v3163
    %v4155 = vpop.f32.mrb[0].mxu0
    %v4156 = vadd.f32 %v4115, %v4155
    %v4157 = vpop.f32.mrb[0].mxu0
    %v4158 = vadd.f32 %v4117, %v4157
    %v4159 = vpop.f32.mrb[0].mxu0
    %v4160 = vpop.f32.mrb[0].mxu0
    %4161 = vdwg.mxu0
    %4162 = vmatprep.subr.bf16.mxu0 %v3766
    %4163 = vmatpush1.bf16.msra.mxu0 %v3765
    %4164 = vmatprep.subr.bf16.mxu0 %v3770
    %4165 = vmatpush1.bf16.msra.mxu0 %v3769
    %4166 = vmatprep.subr.bf16.mxu0 %v3774
    %4167 = vmatpush1.bf16.msra.mxu0 %v3773
    %4168 = vmatprep.subr.bf16.mxu0 %v3778
    %4169 = vmatpush1.bf16.msra.mxu0 %v3777
    %4170 = vmatprep.subr.bf16.mxu0 %v3782
    %4171 = vmatpush1.bf16.msra.mxu0 %v3781
    %4172 = vmatprep.subr.bf16.mxu0 %v3786
    %4173 = vmatpush1.bf16.msra.mxu0 %v3785
    %4174 = vmatprep.subr.bf16.mxu0 %v3790
    %4175 = vmatpush1.bf16.msra.mxu0 %v3789
    %4176 = vmatprep.subr.bf16.mxu0 %v3794
    %4177 = vmatpush1.bf16.msra.mxu0 %v3793
    %4178 = vmatprep.subr.bf16.mxu0 %v3798
    %4179 = vmatpush1.bf16.msra.mxu0 %v3797
    %4180 = vmatprep.subr.bf16.mxu0 %v3802
    %4181 = vmatpush1.bf16.msra.mxu0 %v3801
    %4182 = vmatprep.subr.bf16.mxu0 %v3806
    %4183 = vmatpush1.bf16.msra.mxu0 %v3805
    %4184 = vmatprep.subr.bf16.mxu0 %v3810
    %4185 = vmatpush1.bf16.msra.mxu0 %v3809
    %4186 = vmatprep.subr.bf16.mxu0 %v3814
    %4187 = vmatpush1.bf16.msra.mxu0 %v3813
    %4188 = vmatprep.subr.bf16.mxu0 %v3818
    %4189 = vmatpush1.bf16.msra.mxu0 %v3817
    %4190 = vmatprep.subr.bf16.mxu0 %v3822
    %4191 = vmatpush1.bf16.msra.mxu0 %v3821
    %4192 = vmatprep.subr.bf16.mxu0 %v3826
    %4193 = vmatpush1.bf16.msra.mxu0 %v3825
    %4194 = vmatprep.mubr.bf16.mxu0 %v3166
    %4195 = vmatmul.mubr.bf16.gmra.mrb[0].mxu0 %v3165
    %v4196 = vpop.f32.mrb[0].mxu0
    %v4197 = vadd.f32 %v4156, %v4196
    %v4198 = vpop.f32.mrb[0].mxu0
    %v4199 = vadd.f32 %v4158, %v4198
    %v4200 = vpop.f32.mrb[0].mxu0
    %v4201 = vpop.f32.mrb[0].mxu0
    %4202 = vdwg.mxu0
    %4203 = vmatprep.subr.bf16.mxu0 %v3830
    %4204 = vmatpush1.bf16.msra.mxu0 %v3829
    %4205 = vmatprep.subr.bf16.mxu0 %v3834
    %4206 = vmatpush1.bf16.msra.mxu0 %v3833
    %4207 = vmatprep.subr.bf16.mxu0 %v3838
    %4208 = vmatpush1.bf16.msra.mxu0 %v3837
    %4209 = vmatprep.subr.bf16.mxu0 %v3842
    %4210 = vmatpush1.bf16.msra.mxu0 %v3841
    %4211 = vmatprep.subr.bf16.mxu0 %v3846
    %4212 = vmatpush1.bf16.msra.mxu0 %v3845
    %4213 = vmatprep.subr.bf16.mxu0 %v3850
    %4214 = vmatpush1.bf16.msra.mxu0 %v3849
    %4215 = vmatprep.subr.bf16.mxu0 %v3854
    %4216 = vmatpush1.bf16.msra.mxu0 %v3853
    %4217 = vmatprep.subr.bf16.mxu0 %v3858
    %4218 = vmatpush1.bf16.msra.mxu0 %v3857
    %4219 = vmatprep.subr.bf16.mxu0 %v3862
    %4220 = vmatpush1.bf16.msra.mxu0 %v3861
    %4221 = vmatprep.subr.bf16.mxu0 %v3866
    %4222 = vmatpush1.bf16.msra.mxu0 %v3865
    %4223 = vmatprep.subr.bf16.mxu0 %v3870
    %4224 = vmatpush1.bf16.msra.mxu0 %v3869
    %4225 = vmatprep.subr.bf16.mxu0 %v3874
    %4226 = vmatpush1.bf16.msra.mxu0 %v3873
    %4227 = vmatprep.subr.bf16.mxu0 %v3878
    %4228 = vmatpush1.bf16.msra.mxu0 %v3877
    %4229 = vmatprep.subr.bf16.mxu0 %v3882
    %4230 = vmatpush1.bf16.msra.mxu0 %v3881
    %4231 = vmatprep.subr.bf16.mxu0 %v3886
    %4232 = vmatpush1.bf16.msra.mxu0 %v3885
    %4233 = vmatprep.subr.bf16.mxu0 %v3890
    %4234 = vmatpush1.bf16.msra.mxu0 %v3889
    %4235 = vmatprep.mubr.bf16.mxu0 %v3168
    %4236 = vmatmul.mubr.bf16.gmra.mrb[0].mxu0 %v3167
    %v4237 = vpop.f32.mrb[0].mxu0
    %v4238 = vadd.f32 %v4197, %v4237
    %v4239 = vpop.f32.mrb[0].mxu0
    %v4240 = vadd.f32 %v4199, %v4239
    %v4241 = vpop.f32.mrb[0].mxu0
    %v4242 = vpop.f32.mrb[0].mxu0
    %4243 = vdwg.mxu0
    %4244 = vmatprep.subr.bf16.mxu0 %v3894
    %4245 = vmatpush1.bf16.msra.mxu0 %v3893
    %4246 = vmatprep.subr.bf16.mxu0 %v3898
    %4247 = vmatpush1.bf16.msra.mxu0 %v3897
    %4248 = vmatprep.subr.bf16.mxu0 %v3902
    %4249 = vmatpush1.bf16.msra.mxu0 %v3901
    %4250 = vmatprep.subr.bf16.mxu0 %v3906
    %4251 = vmatpush1.bf16.msra.mxu0 %v3905
    %4252 = vmatprep.subr.bf16.mxu0 %v3910
    %4253 = vmatpush1.bf16.msra.mxu0 %v3909
    %4254 = vmatprep.subr.bf16.mxu0 %v3914
    %4255 = vmatpush1.bf16.msra.mxu0 %v3913
    %4256 = vmatprep.subr.bf16.mxu0 %v3918
    %4257 = vmatpush1.bf16.msra.mxu0 %v3917
    %4258 = vmatprep.subr.bf16.mxu0 %v3922
    %4259 = vmatpush1.bf16.msra.mxu0 %v3921
    %4260 = vmatprep.subr.bf16.mxu0 %v3926
    %4261 = vmatpush1.bf16.msra.mxu0 %v3925
    %4262 = vmatprep.subr.bf16.mxu0 %v3930
    %4263 = vmatpush1.bf16.msra.mxu0 %v3929
    %4264 = vmatprep.subr.bf16.mxu0 %v3934
    %4265 = vmatpush1.bf16.msra.mxu0 %v3933
    %4266 = vmatprep.subr.bf16.mxu0 %v3938
    %4267 = vmatpush1.bf16.msra.mxu0 %v3937
    %4268 = vmatprep.subr.bf16.mxu0 %v3942
    %4269 = vmatpush1.bf16.msra.mxu0 %v3941
    %4270 = vmatprep.subr.bf16.mxu0 %v3946
    %4271 = vmatpush1.bf16.msra.mxu0 %v3945
    %4272 = vmatprep.subr.bf16.mxu0 %v3950
    %4273 = vmatpush1.bf16.msra.mxu0 %v3949
    %4274 = vmatprep.subr.bf16.mxu0 %v3954
    %4275 = vmatpush1.bf16.msra.mxu0 %v3953
    %4276 = vmatprep.mubr.bf16.mxu0 %v3170
    %4277 = vmatmul.mubr.bf16.gmra.mrb[0].mxu0 %v3169
    %v4278 = vpop.f32.mrb[0].mxu0
    %v4279 = vadd.f32 %v4238, %v4278
    %v4280 = vpop.f32.mrb[0].mxu0
    %v4281 = vadd.f32 %v4240, %v4280
    %v4282 = vpop.f32.mrb[0].mxu0
    %v4283 = vpop.f32.mrb[0].mxu0
    %4284 = vdwg.mxu0
    %4285 = vmatprep.subr.bf16.mxu0 %v3448
    %4286 = vmatpush1.bf16.msra.mxu0 %v3447
    %4287 = vmatprep.subr.bf16.mxu0 %v3452
    %4288 = vmatpush1.bf16.msra.mxu0 %v3451
    %4289 = vmatprep.subr.bf16.mxu0 %v3456
    %4290 = vmatpush1.bf16.msra.mxu0 %v3455
    %4291 = vmatprep.subr.bf16.mxu0 %v3460
    %4292 = vmatpush1.bf16.msra.mxu0 %v3459
    %4293 = vmatprep.subr.bf16.mxu0 %v3464
    %4294 = vmatpush1.bf16.msra.mxu0 %v3463
    %4295 = vmatprep.subr.bf16.mxu0 %v3468
    %4296 = vmatpush1.bf16.msra.mxu0 %v3467
    %4297 = vmatprep.subr.bf16.mxu0 %v3472
    %4298 = vmatpush1.bf16.msra.mxu0 %v3471
    %4299 = vmatprep.subr.bf16.mxu0 %v3476
    %4300 = vmatpush1.bf16.msra.mxu0 %v3475
    %4301 = vmatprep.subr.bf16.mxu0 %v3480
    %4302 = vmatpush1.bf16.msra.mxu0 %v3479
    %4303 = vmatprep.subr.bf16.mxu0 %v3484
    %4304 = vmatpush1.bf16.msra.mxu0 %v3483
    %4305 = vmatprep.subr.bf16.mxu0 %v3488
    %4306 = vmatpush1.bf16.msra.mxu0 %v3487
    %4307 = vmatprep.subr.bf16.mxu0 %v3492
    %4308 = vmatpush1.bf16.msra.mxu0 %v3491
    %4309 = vmatprep.subr.bf16.mxu0 %v3496
    %4310 = vmatpush1.bf16.msra.mxu0 %v3495
    %4311 = vmatprep.subr.bf16.mxu0 %v3500
    %4312 = vmatpush1.bf16.msra.mxu0 %v3499
    %4313 = vmatprep.subr.bf16.mxu0 %v3504
    %4314 = vmatpush1.bf16.msra.mxu0 %v3503
    %4315 = vmatprep.subr.bf16.mxu0 %v3508
    %4316 = vmatpush1.bf16.msra.mxu0 %v3507
    %4317 = vmatprep.mubr.bf16.mxu0 %v3156
    %4318 = vmatmul.mubr.bf16.gmra.mrb[0].mxu0 %v3155
    %v4319 = vpop.f32.mrb[0].mxu0
    %v4320 = vadd.f32 0.0, %v4319
    %v4321 = vpop.f32.mrb[0].mxu0
    %v4322 = vadd.f32 0.0, %v4321
    %v4323 = vpop.f32.mrb[0].mxu0
    %v4324 = vpop.f32.mrb[0].mxu0
    %4325 = vdwg.mxu0
    %4326 = vmatprep.subr.bf16.mxu0 %v3512
    %4327 = vmatpush1.bf16.msra.mxu0 %v3511
    %4328 = vmatprep.subr.bf16.mxu0 %v3516
    %4329 = vmatpush1.bf16.msra.mxu0 %v3515
    %4330 = vmatprep.subr.bf16.mxu0 %v3520
    %4331 = vmatpush1.bf16.msra.mxu0 %v3519
    %4332 = vmatprep.subr.bf16.mxu0 %v3524
    %4333 = vmatpush1.bf16.msra.mxu0 %v3523
    %4334 = vmatprep.subr.bf16.mxu0 %v3528
    %4335 = vmatpush1.bf16.msra.mxu0 %v3527
    %4336 = vmatprep.subr.bf16.mxu0 %v3532
    %4337 = vmatpush1.bf16.msra.mxu0 %v3531
    %4338 = vmatprep.subr.bf16.mxu0 %v3536
    %4339 = vmatpush1.bf16.msra.mxu0 %v3535
    %4340 = vmatprep.subr.bf16.mxu0 %v3540
    %4341 = vmatpush1.bf16.msra.mxu0 %v3539
    %4342 = vmatprep.subr.bf16.mxu0 %v3544
    %4343 = vmatpush1.bf16.msra.mxu0 %v3543
    %4344 = vmatprep.subr.bf16.mxu0 %v3548
    %4345 = vmatpush1.bf16.msra.mxu0 %v3547
    %4346 = vmatprep.subr.bf16.mxu0 %v3552
    %4347 = vmatpush1.bf16.msra.mxu0 %v3551
    %4348 = vmatprep.subr.bf16.mxu0 %v3556
    %4349 = vmatpush1.bf16.msra.mxu0 %v3555
    %4350 = vmatprep.subr.bf16.mxu0 %v3560
    %4351 = vmatpush1.bf16.msra.mxu0 %v3559
    %4352 = vmatprep.subr.bf16.mxu0 %v3564
    %4353 = vmatpush1.bf16.msra.mxu0 %v3563
    %4354 = vmatprep.subr.bf16.mxu0 %v3568
    %4355 = vmatpush1.bf16.msra.mxu0 %v3567
    %4356 = vmatprep.subr.bf16.mxu0 %v3572
    %4357 = vmatpush1.bf16.msra.mxu0 %v3571
    %4358 = vmatprep.mubr.bf16.mxu0 %v3158
    %4359 = vmatmul.mubr.bf16.gmra.mrb[0].mxu0 %v3157
    %v4360 = vpop.f32.mrb[0].mxu0
    %v4361 = vadd.f32 %v4320, %v4360
    %v4362 = vpop.f32.mrb[0].mxu0
    %v4363 = vadd.f32 %v4322, %v4362
    %v4364 = vpop.f32.mrb[0].mxu0
    %v4365 = vpop.f32.mrb[0].mxu0
    %4366 = vdwg.mxu0
    %4367 = vmatprep.subr.bf16.mxu0 %v3576
    %4368 = vmatpush1.bf16.msra.mxu0 %v3575
    %4369 = vmatprep.subr.bf16.mxu0 %v3580
    %4370 = vmatpush1.bf16.msra.mxu0 %v3579
    %4371 = vmatprep.subr.bf16.mxu0 %v3584
    %4372 = vmatpush1.bf16.msra.mxu0 %v3583
    %4373 = vmatprep.subr.bf16.mxu0 %v3588
    %4374 = vmatpush1.bf16.msra.mxu0 %v3587
    %4375 = vmatprep.subr.bf16.mxu0 %v3592
    %4376 = vmatpush1.bf16.msra.mxu0 %v3591
    %4377 = vmatprep.subr.bf16.mxu0 %v3596
    %4378 = vmatpush1.bf16.msra.mxu0 %v3595
    %4379 = vmatprep.subr.bf16.mxu0 %v3600
    %4380 = vmatpush1.bf16.msra.mxu0 %v3599
    %4381 = vmatprep.subr.bf16.mxu0 %v3604
    %4382 = vmatpush1.bf16.msra.mxu0 %v3603
    %4383 = vmatprep.subr.bf16.mxu0 %v3608
    %4384 = vmatpush1.bf16.msra.mxu0 %v3607
    %4385 = vmatprep.subr.bf16.mxu0 %v3612
    %4386 = vmatpush1.bf16.msra.mxu0 %v3611
    %4387 = vmatprep.subr.bf16.mxu0 %v3616
    %4388 = vmatpush1.bf16.msra.mxu0 %v3615
    %4389 = vmatprep.subr.bf16.mxu0 %v3620
    %4390 = vmatpush1.bf16.msra.mxu0 %v3619
    %4391 = vmatprep.subr.bf16.mxu0 %v3624
    %4392 = vmatpush1.bf16.msra.mxu0 %v3623
    %4393 = vmatprep.subr.bf16.mxu0 %v3628
    %4394 = vmatpush1.bf16.msra.mxu0 %v3627
    %4395 = vmatprep.subr.bf16.mxu0 %v3632
    %4396 = vmatpush1.bf16.msra.mxu0 %v3631
    %4397 = vmatprep.subr.bf16.mxu0 %v3636
    %4398 = vmatpush1.bf16.msra.mxu0 %v3635
    %4399 = vmatprep.mubr.bf16.mxu0 %v3160
    %4400 = vmatmul.mubr.bf16.gmra.mrb[0].mxu0 %v3159
    %v4401 = vpop.f32.mrb[0].mxu0
    %v4402 = vadd.f32 %v4361, %v4401
    %v4403 = vpop.f32.mrb[0].mxu0
    %v4404 = vadd.f32 %v4363, %v4403
    %v4405 = vpop.f32.mrb[0].mxu0
    %v4406 = vpop.f32.mrb[0].mxu0
    %4407 = vdwg.mxu0
    %4408 = vmatprep.subr.bf16.mxu0 %v3640
    %4409 = vmatpush1.bf16.msra.mxu0 %v3639
    %4410 = vmatprep.subr.bf16.mxu0 %v3644
    %4411 = vmatpush1.bf16.msra.mxu0 %v3643
    %4412 = vmatprep.subr.bf16.mxu0 %v3648
    %4413 = vmatpush1.bf16.msra.mxu0 %v3647
    %4414 = vmatprep.subr.bf16.mxu0 %v3652
    %4415 = vmatpush1.bf16.msra.mxu0 %v3651
    %4416 = vmatprep.subr.bf16.mxu0 %v3656
    %4417 = vmatpush1.bf16.msra.mxu0 %v3655
    %4418 = vmatprep.subr.bf16.mxu0 %v3660
    %4419 = vmatpush1.bf16.msra.mxu0 %v3659
    %4420 = vmatprep.subr.bf16.mxu0 %v3664
    %4421 = vmatpush1.bf16.msra.mxu0 %v3663
    %4422 = vmatprep.subr.bf16.mxu0 %v3668
    %4423 = vmatpush1.bf16.msra.mxu0 %v3667
    %4424 = vmatprep.subr.bf16.mxu0 %v3672
    %4425 = vmatpush1.bf16.msra.mxu0 %v3671
    %4426 = vmatprep.subr.bf16.mxu0 %v3676
    %4427 = vmatpush1.bf16.msra.mxu0 %v3675
    %4428 = vmatprep.subr.bf16.mxu0 %v3680
    %4429 = vmatpush1.bf16.msra.mxu0 %v3679
    %4430 = vmatprep.subr.bf16.mxu0 %v3684
    %4431 = vmatpush1.bf16.msra.mxu0 %v3683
    %4432 = vmatprep.subr.bf16.mxu0 %v3688
    %4433 = vmatpush1.bf16.msra.mxu0 %v3687
    %4434 = vmatprep.subr.bf16.mxu0 %v3692
    %4435 = vmatpush1.bf16.msra.mxu0 %v3691
    %4436 = vmatprep.subr.bf16.mxu0 %v3696
    %4437 = vmatpush1.bf16.msra.mxu0 %v3695
    %4438 = vmatprep.subr.bf16.mxu0 %v3700
    %4439 = vmatpush1.bf16.msra.mxu0 %v3699
    %4440 = vmatprep.mubr.bf16.mxu0 %v3162
    %4441 = vmatmul.mubr.bf16.gmra.mrb[0].mxu0 %v3161
    %v4442 = vpop.f32.mrb[0].mxu0
    %v4443 = vadd.f32 %v4402, %v4442
    %v4444 = vpop.f32.mrb[0].mxu0
    %v4445 = vadd.f32 %v4404, %v4444
    %v4446 = vpop.f32.mrb[0].mxu0
    %v4447 = vpop.f32.mrb[0].mxu0
    %4448 = vdwg.mxu0
    %4449 = vmatprep.subr.bf16.mxu0 %v3704
    %4450 = vmatpush1.bf16.msra.mxu0 %v3703
    %4451 = vmatprep.subr.bf16.mxu0 %v3708
    %4452 = vmatpush1.bf16.msra.mxu0 %v3707
    %4453 = vmatprep.subr.bf16.mxu0 %v3712
    %4454 = vmatpush1.bf16.msra.mxu0 %v3711
    %4455 = vmatprep.subr.bf16.mxu0 %v3716
    %4456 = vmatpush1.bf16.msra.mxu0 %v3715
    %4457 = vmatprep.subr.bf16.mxu0 %v3720
    %4458 = vmatpush1.bf16.msra.mxu0 %v3719
    %4459 = vmatprep.subr.bf16.mxu0 %v3724
    %4460 = vmatpush1.bf16.msra.mxu0 %v3723
    %4461 = vmatprep.subr.bf16.mxu0 %v3728
    %4462 = vmatpush1.bf16.msra.mxu0 %v3727
    %4463 = vmatprep.subr.bf16.mxu0 %v3732
    %4464 = vmatpush1.bf16.msra.mxu0 %v3731
    %4465 = vmatprep.subr.bf16.mxu0 %v3736
    %4466 = vmatpush1.bf16.msra.mxu0 %v3735
    %4467 = vmatprep.subr.bf16.mxu0 %v3740
    %4468 = vmatpush1.bf16.msra.mxu0 %v3739
    %4469 = vmatprep.subr.bf16.mxu0 %v3744
    %4470 = vmatpush1.bf16.msra.mxu0 %v3743
    %4471 = vmatprep.subr.bf16.mxu0 %v3748
    %4472 = vmatpush1.bf16.msra.mxu0 %v3747
    %4473 = vmatprep.subr.bf16.mxu0 %v3752
    %4474 = vmatpush1.bf16.msra.mxu0 %v3751
    %4475 = vmatprep.subr.bf16.mxu0 %v3756
    %4476 = vmatpush1.bf16.msra.mxu0 %v3755
    %4477 = vmatprep.subr.bf16.mxu0 %v3760
    %4478 = vmatpush1.bf16.msra.mxu0 %v3759
    %4479 = vmatprep.subr.bf16.mxu0 %v3764
    %4480 = vmatpush1.bf16.msra.mxu0 %v3763
    %4481 = vmatprep.mubr.bf16.mxu0 %v3164
    %4482 = vmatmul.mubr.bf16.gmra.mrb[0].mxu0 %v3163
    %v4483 = vpop.f32.mrb[0].mxu0
    %v4484 = vadd.f32 %v4443, %v4483
    %v4485 = vpop.f32.mrb[0].mxu0
    %v4486 = vadd.f32 %v4445, %v4485
    %v4487 = vpop.f32.mrb[0].mxu0
    %v4488 = vpop.f32.mrb[0].mxu0
    %4489 = vdwg.mxu0
    %4490 = vmatprep.subr.bf16.mxu0 %v3768
    %4491 = vmatpush1.bf16.msra.mxu0 %v3767
    %4492 = vmatprep.subr.bf16.mxu0 %v3772
    %4493 = vmatpush1.bf16.msra.mxu0 %v3771
    %4494 = vmatprep.subr.bf16.mxu0 %v3776
    %4495 = vmatpush1.bf16.msra.mxu0 %v3775
    %4496 = vmatprep.subr.bf16.mxu0 %v3780
    %4497 = vmatpush1.bf16.msra.mxu0 %v3779
    %4498 = vmatprep.subr.bf16.mxu0 %v3784
    %4499 = vmatpush1.bf16.msra.mxu0 %v3783
    %4500 = vmatprep.subr.bf16.mxu0 %v3788
    %4501 = vmatpush1.bf16.msra.mxu0 %v3787
    %4502 = vmatprep.subr.bf16.mxu0 %v3792
    %4503 = vmatpush1.bf16.msra.mxu0 %v3791
    %4504 = vmatprep.subr.bf16.mxu0 %v3796
    %4505 = vmatpush1.bf16.msra.mxu0 %v3795
    %4506 = vmatprep.subr.bf16.mxu0 %v3800
    %4507 = vmatpush1.bf16.msra.mxu0 %v3799
    %4508 = vmatprep.subr.bf16.mxu0 %v3804
    %4509 = vmatpush1.bf16.msra.mxu0 %v3803
    %4510 = vmatprep.subr.bf16.mxu0 %v3808
    %4511 = vmatpush1.bf16.msra.mxu0 %v3807
    %4512 = vmatprep.subr.bf16.mxu0 %v3812
    %4513 = vmatpush1.bf16.msra.mxu0 %v3811
    %4514 = vmatprep.subr.bf16.mxu0 %v3816
    %4515 = vmatpush1.bf16.msra.mxu0 %v3815
    %4516 = vmatprep.subr.bf16.mxu0 %v3820
    %4517 = vmatpush1.bf16.msra.mxu0 %v3819
    %4518 = vmatprep.subr.bf16.mxu0 %v3824
    %4519 = vmatpush1.bf16.msra.mxu0 %v3823
    %4520 = vmatprep.subr.bf16.mxu0 %v3828
    %4521 = vmatpush1.bf16.msra.mxu0 %v3827
    %4522 = vmatprep.mubr.bf16.mxu0 %v3166
    %4523 = vmatmul.mubr.bf16.gmra.mrb[0].mxu0 %v3165
    %v4524 = vpop.f32.mrb[0].mxu0
    %v4525 = vadd.f32 %v4484, %v4524
    %v4526 = vpop.f32.mrb[0].mxu0
    %v4527 = vadd.f32 %v4486, %v4526
    %v4528 = vpop.f32.mrb[0].mxu0
    %v4529 = vpop.f32.mrb[0].mxu0
    %4530 = vdwg.mxu0
    %4531 = vmatprep.subr.bf16.mxu0 %v3832
    %4532 = vmatpush1.bf16.msra.mxu0 %v3831
    %4533 = vmatprep.subr.bf16.mxu0 %v3836
    %4534 = vmatpush1.bf16.msra.mxu0 %v3835
    %4535 = vmatprep.subr.bf16.mxu0 %v3840
    %4536 = vmatpush1.bf16.msra.mxu0 %v3839
    %4537 = vmatprep.subr.bf16.mxu0 %v3844
    %4538 = vmatpush1.bf16.msra.mxu0 %v3843
    %4539 = vmatprep.subr.bf16.mxu0 %v3848
    %4540 = vmatpush1.bf16.msra.mxu0 %v3847
    %4541 = vmatprep.subr.bf16.mxu0 %v3852
    %4542 = vmatpush1.bf16.msra.mxu0 %v3851
    %4543 = vmatprep.subr.bf16.mxu0 %v3856
    %4544 = vmatpush1.bf16.msra.mxu0 %v3855
    %4545 = vmatprep.subr.bf16.mxu0 %v3860
    %4546 = vmatpush1.bf16.msra.mxu0 %v3859
    %4547 = vmatprep.subr.bf16.mxu0 %v3864
    %4548 = vmatpush1.bf16.msra.mxu0 %v3863
    %4549 = vmatprep.subr.bf16.mxu0 %v3868
    %4550 = vmatpush1.bf16.msra.mxu0 %v3867
    %4551 = vmatprep.subr.bf16.mxu0 %v3872
    %4552 = vmatpush1.bf16.msra.mxu0 %v3871
    %4553 = vmatprep.subr.bf16.mxu0 %v3876
    %4554 = vmatpush1.bf16.msra.mxu0 %v3875
    %4555 = vmatprep.subr.bf16.mxu0 %v3880
    %4556 = vmatpush1.bf16.msra.mxu0 %v3879
    %4557 = vmatprep.subr.bf16.mxu0 %v3884
    %4558 = vmatpush1.bf16.msra.mxu0 %v3883
    %4559 = vmatprep.subr.bf16.mxu0 %v3888
    %4560 = vmatpush1.bf16.msra.mxu0 %v3887
    %4561 = vmatprep.subr.bf16.mxu0 %v3892
    %4562 = vmatpush1.bf16.msra.mxu0 %v3891
    %4563 = vmatprep.mubr.bf16.mxu0 %v3168
    %4564 = vmatmul.mubr.bf16.gmra.mrb[0].mxu0 %v3167
    %v4565 = vpop.f32.mrb[0].mxu0
    %v4566 = vadd.f32 %v4525, %v4565
    %v4567 = vpop.f32.mrb[0].mxu0
    %v4568 = vadd.f32 %v4527, %v4567
    %v4569 = vpop.f32.mrb[0].mxu0
    %v4570 = vpop.f32.mrb[0].mxu0
    %4571 = vdwg.mxu0
    %4572 = vmatprep.subr.bf16.mxu0 %v3896
    %4573 = vmatpush1.bf16.msra.mxu0 %v3895
    %4574 = vmatprep.subr.bf16.mxu0 %v3900
    %4575 = vmatpush1.bf16.msra.mxu0 %v3899
    %4576 = vmatprep.subr.bf16.mxu0 %v3904
    %4577 = vmatpush1.bf16.msra.mxu0 %v3903
    %4578 = vmatprep.subr.bf16.mxu0 %v3908
    %4579 = vmatpush1.bf16.msra.mxu0 %v3907
    %4580 = vmatprep.subr.bf16.mxu0 %v3912
    %4581 = vmatpush1.bf16.msra.mxu0 %v3911
    %4582 = vmatprep.subr.bf16.mxu0 %v3916
    %4583 = vmatpush1.bf16.msra.mxu0 %v3915
    %4584 = vmatprep.subr.bf16.mxu0 %v3920
    %4585 = vmatpush1.bf16.msra.mxu0 %v3919
    %4586 = vmatprep.subr.bf16.mxu0 %v3924
    %4587 = vmatpush1.bf16.msra.mxu0 %v3923
    %4588 = vmatprep.subr.bf16.mxu0 %v3928
    %4589 = vmatpush1.bf16.msra.mxu0 %v3927
    %4590 = vmatprep.subr.bf16.mxu0 %v3932
    %4591 = vmatpush1.bf16.msra.mxu0 %v3931
    %4592 = vmatprep.subr.bf16.mxu0 %v3936
    %4593 = vmatpush1.bf16.msra.mxu0 %v3935
    %4594 = vmatprep.subr.bf16.mxu0 %v3940
    %4595 = vmatpush1.bf16.msra.mxu0 %v3939
    %4596 = vmatprep.subr.bf16.mxu0 %v3944
    %4597 = vmatpush1.bf16.msra.mxu0 %v3943
    %4598 = vmatprep.subr.bf16.mxu0 %v3948
    %4599 = vmatpush1.bf16.msra.mxu0 %v3947
    %4600 = vmatprep.subr.bf16.mxu0 %v3952
    %4601 = vmatpush1.bf16.msra.mxu0 %v3951
    %4602 = vmatprep.subr.bf16.mxu0 %v3956
    %4603 = vmatpush1.bf16.msra.mxu0 %v3955
    %4604 = vmatprep.mubr.bf16.mxu0 %v3170
    %4605 = vmatmul.mubr.bf16.gmra.mrb[0].mxu0 %v3169
    %v4606 = vpop.f32.mrb[0].mxu0
    %v4607 = vadd.f32 %v4566, %v4606
    %v4608 = vpop.f32.mrb[0].mxu0
    %v4609 = vadd.f32 %v4568, %v4608
    %v4610 = vpop.f32.mrb[0].mxu0
    %v4611 = vpop.f32.mrb[0].mxu0
    %4612 = vdwg.mxu0
    %v4613 = vld [vmem:[#allocation14] sm:$0xf]
    %v4615 = vlaneseq
    %v4616 = vshrl.u32 %v4615, 7
    %v4617 = vsub.s32 0, %v4616
    %v4618 = vrot.slane %v4613, %v4617
    %v4619 = vlaneseq
    %v4620 = vshrl.u32 %v4619, 7
    %v4621 = vsub.s32 1, %v4620
    %v4622 = vrot.slane %v4613, %v4621
    %v4623 = vlaneseq
    %v4624 = vshrl.u32 %v4623, 7
    %v4625 = vsub.s32 2, %v4624
    %v4626 = vrot.slane %v4613, %v4625
    %v4627 = vlaneseq
    %v4628 = vshrl.u32 %v4627, 7
    %v4629 = vsub.s32 3, %v4628
    %v4630 = vrot.slane %v4613, %v4629
    %v4635 = vmul.f32 %v4279, %v4618
    %v4636 = vmul.f32 %v4281, %v4622
    %v4637 = vmul.f32 %v4607, %v4626
    %v4638 = vmul.f32 %v4609, %v4630
    %v4639 = vld [vmem:[#allocation15] sm:$0xf]
    %v4641 = vlaneseq
    %v4642 = vshrl.u32 %v4641, 7
    %v4643 = vsub.s32 0, %v4642
    %v4644 = vrot.slane %v4639, %v4643
    %v4645 = vlaneseq
    %v4646 = vshrl.u32 %v4645, 7
    %v4647 = vsub.s32 1, %v4646
    %v4648 = vrot.slane %v4639, %v4647
    %v4649 = vlaneseq
    %v4650 = vshrl.u32 %v4649, 7
    %v4651 = vsub.s32 2, %v4650
    %v4652 = vrot.slane %v4639, %v4651
    %v4653 = vlaneseq
    %v4654 = vshrl.u32 %v4653, 7
    %v4655 = vsub.s32 3, %v4654
    %v4656 = vrot.slane %v4639, %v4655
    %v4661 = vadd.f32 %v4635, %v4644
    %v4662 = vadd.f32 %v4636, %v4648
    %v4663 = vadd.f32 %v4637, %v4652
    %v4664 = vadd.f32 %v4638, %v4656
    %v4665 = vmax.f32 %v4661, 0.0
    %v4666 = vmax.f32 %v4662, 0.0
    %v4667 = vmax.f32 %v4663, 0.0
    %v4668 = vmax.f32 %v4664, 0.0
    %4669 = vst [vmem:[#allocation3] sm:$0xff] %v4665
    %4670 = vst [vmem:[#allocation3 + $0x8] sm:$0xff] %v4666
    %4671 = vst [vmem:[#allocation3 + $0x10] sm:$0xff] %v4667
    %4672 = vst [vmem:[#allocation3 + $0x18] sm:$0xff] %v4668
    %s4673 = sshll.u32 %s3172, 4
    %4674 = dma.done %s3177, %s4673
    %v4675 = vld [vmem:[%s3176] sm:$0xff]
    %v4676 = vld [vmem:[%s3176 + $0x8] sm:$0xff]
    %v4677 = vld [vmem:[%s3176 + $0x10] sm:$0xff]
    %v4678 = vld [vmem:[%s3176 + $0x18] sm:$0xff]
    %v4679 = vld [vmem:[%s3176 + $0x20] sm:$0xff]
    %v4680 = vld [vmem:[%s3176 + $0x28] sm:$0xff]
    %v4681 = vld [vmem:[%s3176 + $0x30] sm:$0xff]
    %v4682 = vld [vmem:[%s3176 + $0x38] sm:$0xff]
    %v4683 = vld [vmem:[%s3176 + $0x40] sm:$0xff]
    %v4684 = vld [vmem:[%s3176 + $0x48] sm:$0xff]
    %v4685 = vld [vmem:[%s3176 + $0x50] sm:$0xff]
    %v4686 = vld [vmem:[%s3176 + $0x58] sm:$0xff]
    %v4687 = vld [vmem:[%s3176 + $0x60] sm:$0xff]
    %v4688 = vld [vmem:[%s3176 + $0x68] sm:$0xff]
    %v4689 = vld [vmem:[%s3176 + $0x70] sm:$0xff]
    %v4690 = vld [vmem:[%s3176 + $0x78] sm:$0xff]
    %v4691 = vld [vmem:[%s3176 + $0x80] sm:$0xff]
    %v4692 = vld [vmem:[%s3176 + $0x88] sm:$0xff]
    %v4693 = vld [vmem:[%s3176 + $0x90] sm:$0xff]
    %v4694 = vld [vmem:[%s3176 + $0x98] sm:$0xff]
    %v4695 = vld [vmem:[%s3176 + $0xa0] sm:$0xff]
    %v4696 = vld [vmem:[%s3176 + $0xa8] sm:$0xff]
    %v4697 = vld [vmem:[%s3176 + $0xb0] sm:$0xff]
    %v4698 = vld [vmem:[%s3176 + $0xb8] sm:$0xff]
    %v4699 = vld [vmem:[%s3176 + $0xc0] sm:$0xff]
    %v4700 = vld [vmem:[%s3176 + $0xc8] sm:$0xff]
    %v4701 = vld [vmem:[%s3176 + $0xd0] sm:$0xff]
    %v4702 = vld [vmem:[%s3176 + $0xd8] sm:$0xff]
    %v4703 = vld [vmem:[%s3176 + $0xe0] sm:$0xff]
    %v4704 = vld [vmem:[%s3176 + $0xe8] sm:$0xff]
    %v4705 = vld [vmem:[%s3176 + $0xf0] sm:$0xff]
    %v4706 = vld [vmem:[%s3176 + $0xf8] sm:$0xff]
    %v4707 = vld [vmem:[%s3176 + $0x100] sm:$0xff]
    %v4708 = vld [vmem:[%s3176 + $0x108] sm:$0xff]
    %v4709 = vld [vmem:[%s3176 + $0x110] sm:$0xff]
    %v4710 = vld [vmem:[%s3176 + $0x118] sm:$0xff]
    %v4711 = vld [vmem:[%s3176 + $0x120] sm:$0xff]
    %v4712 = vld [vmem:[%s3176 + $0x128] sm:$0xff]
    %v4713 = vld [vmem:[%s3176 + $0x130] sm:$0xff]
    %v4714 = vld [vmem:[%s3176 + $0x138] sm:$0xff]
    %v4715 = vld [vmem:[%s3176 + $0x140] sm:$0xff]
    %v4716 = vld [vmem:[%s3176 + $0x148] sm:$0xff]
    %v4717 = vld [vmem:[%s3176 + $0x150] sm:$0xff]
    %v4718 = vld [vmem:[%s3176 + $0x158] sm:$0xff]
    %v4719 = vld [vmem:[%s3176 + $0x160] sm:$0xff]
    %v4720 = vld [vmem:[%s3176 + $0x168] sm:$0xff]
    %v4721 = vld [vmem:[%s3176 + $0x170] sm:$0xff]
    %v4722 = vld [vmem:[%s3176 + $0x178] sm:$0xff]
    %v4723 = vld [vmem:[%s3176 + $0x180] sm:$0xff]
    %v4724 = vld [vmem:[%s3176 + $0x188] sm:$0xff]
    %v4725 = vld [vmem:[%s3176 + $0x190] sm:$0xff]
    %v4726 = vld [vmem:[%s3176 + $0x198] sm:$0xff]
    %v4727 = vld [vmem:[%s3176 + $0x1a0] sm:$0xff]
    %v4728 = vld [vmem:[%s3176 + $0x1a8] sm:$0xff]
    %v4729 = vld [vmem:[%s3176 + $0x1b0] sm:$0xff]
    %v4730 = vld [vmem:[%s3176 + $0x1b8] sm:$0xff]
    %v4731 = vld [vmem:[%s3176 + $0x1c0] sm:$0xff]
    %v4732 = vld [vmem:[%s3176 + $0x1c8] sm:$0xff]
    %v4733 = vld [vmem:[%s3176 + $0x1d0] sm:$0xff]
    %v4734 = vld [vmem:[%s3176 + $0x1d8] sm:$0xff]
    %v4735 = vld [vmem:[%s3176 + $0x1e0] sm:$0xff]
    %v4736 = vld [vmem:[%s3176 + $0x1e8] sm:$0xff]
    %v4737 = vld [vmem:[%s3176 + $0x1f0] sm:$0xff]
    %v4738 = vld [vmem:[%s3176 + $0x1f8] sm:$0xff]
    %v4739 = vld [vmem:[%s3176 + $0x200] sm:$0xff]
    %v4740 = vld [vmem:[%s3176 + $0x208] sm:$0xff]
    %v4741 = vld [vmem:[%s3176 + $0x210] sm:$0xff]
    %v4742 = vld [vmem:[%s3176 + $0x218] sm:$0xff]
    %v4743 = vld [vmem:[%s3176 + $0x220] sm:$0xff]
    %v4744 = vld [vmem:[%s3176 + $0x228] sm:$0xff]
    %v4745 = vld [vmem:[%s3176 + $0x230] sm:$0xff]
    %v4746 = vld [vmem:[%s3176 + $0x238] sm:$0xff]
    %v4747 = vld [vmem:[%s3176 + $0x240] sm:$0xff]
    %v4748 = vld [vmem:[%s3176 + $0x248] sm:$0xff]
    %v4749 = vld [vmem:[%s3176 + $0x250] sm:$0xff]
    %v4750 = vld [vmem:[%s3176 + $0x258] sm:$0xff]
    %v4751 = vld [vmem:[%s3176 + $0x260] sm:$0xff]
    %v4752 = vld [vmem:[%s3176 + $0x268] sm:$0xff]
    %v4753 = vld [vmem:[%s3176 + $0x270] sm:$0xff]
    %v4754 = vld [vmem:[%s3176 + $0x278] sm:$0xff]
    %v4755 = vld [vmem:[%s3176 + $0x280] sm:$0xff]
    %v4756 = vld [vmem:[%s3176 + $0x288] sm:$0xff]
    %v4757 = vld [vmem:[%s3176 + $0x290] sm:$0xff]
    %v4758 = vld [vmem:[%s3176 + $0x298] sm:$0xff]
    %v4759 = vld [vmem:[%s3176 + $0x2a0] sm:$0xff]
    %v4760 = vld [vmem:[%s3176 + $0x2a8] sm:$0xff]
    %v4761 = vld [vmem:[%s3176 + $0x2b0] sm:$0xff]
    %v4762 = vld [vmem:[%s3176 + $0x2b8] sm:$0xff]
    %v4763 = vld [vmem:[%s3176 + $0x2c0] sm:$0xff]
    %v4764 = vld [vmem:[%s3176 + $0x2c8] sm:$0xff]
    %v4765 = vld [vmem:[%s3176 + $0x2d0] sm:$0xff]
    %v4766 = vld [vmem:[%s3176 + $0x2d8] sm:$0xff]
    %v4767 = vld [vmem:[%s3176 + $0x2e0] sm:$0xff]
    %v4768 = vld [vmem:[%s3176 + $0x2e8] sm:$0xff]
    %v4769 = vld [vmem:[%s3176 + $0x2f0] sm:$0xff]
    %v4770 = vld [vmem:[%s3176 + $0x2f8] sm:$0xff]
    %v4771 = vld [vmem:[%s3176 + $0x300] sm:$0xff]
    %v4772 = vld [vmem:[%s3176 + $0x308] sm:$0xff]
    %v4773 = vld [vmem:[%s3176 + $0x310] sm:$0xff]
    %v4774 = vld [vmem:[%s3176 + $0x318] sm:$0xff]
    %v4775 = vld [vmem:[%s3176 + $0x320] sm:$0xff]
    %v4776 = vld [vmem:[%s3176 + $0x328] sm:$0xff]
    %v4777 = vld [vmem:[%s3176 + $0x330] sm:$0xff]
    %v4778 = vld [vmem:[%s3176 + $0x338] sm:$0xff]
    %v4779 = vld [vmem:[%s3176 + $0x340] sm:$0xff]
    %v4780 = vld [vmem:[%s3176 + $0x348] sm:$0xff]
    %v4781 = vld [vmem:[%s3176 + $0x350] sm:$0xff]
    %v4782 = vld [vmem:[%s3176 + $0x358] sm:$0xff]
    %v4783 = vld [vmem:[%s3176 + $0x360] sm:$0xff]
    %v4784 = vld [vmem:[%s3176 + $0x368] sm:$0xff]
    %v4785 = vld [vmem:[%s3176 + $0x370] sm:$0xff]
    %v4786 = vld [vmem:[%s3176 + $0x378] sm:$0xff]
    %v4787 = vld [vmem:[%s3176 + $0x380] sm:$0xff]
    %v4788 = vld [vmem:[%s3176 + $0x388] sm:$0xff]
    %v4789 = vld [vmem:[%s3176 + $0x390] sm:$0xff]
    %v4790 = vld [vmem:[%s3176 + $0x398] sm:$0xff]
    %v4791 = vld [vmem:[%s3176 + $0x3a0] sm:$0xff]
    %v4792 = vld [vmem:[%s3176 + $0x3a8] sm:$0xff]
    %v4793 = vld [vmem:[%s3176 + $0x3b0] sm:$0xff]
    %v4794 = vld [vmem:[%s3176 + $0x3b8] sm:$0xff]
    %v4795 = vld [vmem:[%s3176 + $0x3c0] sm:$0xff]
    %v4796 = vld [vmem:[%s3176 + $0x3c8] sm:$0xff]
    %v4797 = vld [vmem:[%s3176 + $0x3d0] sm:$0xff]
    %v4798 = vld [vmem:[%s3176 + $0x3d8] sm:$0xff]
    %v4799 = vld [vmem:[%s3176 + $0x3e0] sm:$0xff]
    %v4800 = vld [vmem:[%s3176 + $0x3e8] sm:$0xff]
    %v4801 = vld [vmem:[%s3176 + $0x3f0] sm:$0xff]
    %v4802 = vld [vmem:[%s3176 + $0x3f8] sm:$0xff]
    %v4803 = vld [vmem:[%s3176 + $0x400] sm:$0xff]
    %v4804 = vld [vmem:[%s3176 + $0x408] sm:$0xff]
    %v4805 = vld [vmem:[%s3176 + $0x410] sm:$0xff]
    %v4806 = vld [vmem:[%s3176 + $0x418] sm:$0xff]
    %v4807 = vld [vmem:[%s3176 + $0x420] sm:$0xff]
    %v4808 = vld [vmem:[%s3176 + $0x428] sm:$0xff]
    %v4809 = vld [vmem:[%s3176 + $0x430] sm:$0xff]
    %v4810 = vld [vmem:[%s3176 + $0x438] sm:$0xff]
    %v4811 = vld [vmem:[%s3176 + $0x440] sm:$0xff]
    %v4812 = vld [vmem:[%s3176 + $0x448] sm:$0xff]
    %v4813 = vld [vmem:[%s3176 + $0x450] sm:$0xff]
    %v4814 = vld [vmem:[%s3176 + $0x458] sm:$0xff]
    %v4815 = vld [vmem:[%s3176 + $0x460] sm:$0xff]
    %v4816 = vld [vmem:[%s3176 + $0x468] sm:$0xff]
    %v4817 = vld [vmem:[%s3176 + $0x470] sm:$0xff]
    %v4818 = vld [vmem:[%s3176 + $0x478] sm:$0xff]
    %v4819 = vld [vmem:[%s3176 + $0x480] sm:$0xff]
    %v4820 = vld [vmem:[%s3176 + $0x488] sm:$0xff]
    %v4821 = vld [vmem:[%s3176 + $0x490] sm:$0xff]
    %v4822 = vld [vmem:[%s3176 + $0x498] sm:$0xff]
    %v4823 = vld [vmem:[%s3176 + $0x4a0] sm:$0xff]
    %v4824 = vld [vmem:[%s3176 + $0x4a8] sm:$0xff]
    %v4825 = vld [vmem:[%s3176 + $0x4b0] sm:$0xff]
    %v4826 = vld [vmem:[%s3176 + $0x4b8] sm:$0xff]
    %v4827 = vld [vmem:[%s3176 + $0x4c0] sm:$0xff]
    %v4828 = vld [vmem:[%s3176 + $0x4c8] sm:$0xff]
    %v4829 = vld [vmem:[%s3176 + $0x4d0] sm:$0xff]
    %v4830 = vld [vmem:[%s3176 + $0x4d8] sm:$0xff]
    %v4831 = vld [vmem:[%s3176 + $0x4e0] sm:$0xff]
    %v4832 = vld [vmem:[%s3176 + $0x4e8] sm:$0xff]
    %v4833 = vld [vmem:[%s3176 + $0x4f0] sm:$0xff]
    %v4834 = vld [vmem:[%s3176 + $0x4f8] sm:$0xff]
    %v4835 = vld [vmem:[%s3176 + $0x500] sm:$0xff]
    %v4836 = vld [vmem:[%s3176 + $0x508] sm:$0xff]
    %v4837 = vld [vmem:[%s3176 + $0x510] sm:$0xff]
    %v4838 = vld [vmem:[%s3176 + $0x518] sm:$0xff]
    %v4839 = vld [vmem:[%s3176 + $0x520] sm:$0xff]
    %v4840 = vld [vmem:[%s3176 + $0x528] sm:$0xff]
    %v4841 = vld [vmem:[%s3176 + $0x530] sm:$0xff]
    %v4842 = vld [vmem:[%s3176 + $0x538] sm:$0xff]
    %v4843 = vld [vmem:[%s3176 + $0x540] sm:$0xff]
    %v4844 = vld [vmem:[%s3176 + $0x548] sm:$0xff]
    %v4845 = vld [vmem:[%s3176 + $0x550] sm:$0xff]
    %v4846 = vld [vmem:[%s3176 + $0x558] sm:$0xff]
    %v4847 = vld [vmem:[%s3176 + $0x560] sm:$0xff]
    %v4848 = vld [vmem:[%s3176 + $0x568] sm:$0xff]
    %v4849 = vld [vmem:[%s3176 + $0x570] sm:$0xff]
    %v4850 = vld [vmem:[%s3176 + $0x578] sm:$0xff]
    %v4851 = vld [vmem:[%s3176 + $0x580] sm:$0xff]
    %v4852 = vld [vmem:[%s3176 + $0x588] sm:$0xff]
    %v4853 = vld [vmem:[%s3176 + $0x590] sm:$0xff]
    %v4854 = vld [vmem:[%s3176 + $0x598] sm:$0xff]
    %v4855 = vld [vmem:[%s3176 + $0x5a0] sm:$0xff]
    %v4856 = vld [vmem:[%s3176 + $0x5a8] sm:$0xff]
    %v4857 = vld [vmem:[%s3176 + $0x5b0] sm:$0xff]
    %v4858 = vld [vmem:[%s3176 + $0x5b8] sm:$0xff]
    %v4859 = vld [vmem:[%s3176 + $0x5c0] sm:$0xff]
    %v4860 = vld [vmem:[%s3176 + $0x5c8] sm:$0xff]
    %v4861 = vld [vmem:[%s3176 + $0x5d0] sm:$0xff]
    %v4862 = vld [vmem:[%s3176 + $0x5d8] sm:$0xff]
    %v4863 = vld [vmem:[%s3176 + $0x5e0] sm:$0xff]
    %v4864 = vld [vmem:[%s3176 + $0x5e8] sm:$0xff]
    %v4865 = vld [vmem:[%s3176 + $0x5f0] sm:$0xff]
    %v4866 = vld [vmem:[%s3176 + $0x5f8] sm:$0xff]
    %v4867 = vld [vmem:[%s3176 + $0x600] sm:$0xff]
    %v4868 = vld [vmem:[%s3176 + $0x608] sm:$0xff]
    %v4869 = vld [vmem:[%s3176 + $0x610] sm:$0xff]
    %v4870 = vld [vmem:[%s3176 + $0x618] sm:$0xff]
    %v4871 = vld [vmem:[%s3176 + $0x620] sm:$0xff]
    %v4872 = vld [vmem:[%s3176 + $0x628] sm:$0xff]
    %v4873 = vld [vmem:[%s3176 + $0x630] sm:$0xff]
    %v4874 = vld [vmem:[%s3176 + $0x638] sm:$0xff]
    %v4875 = vld [vmem:[%s3176 + $0x640] sm:$0xff]
    %v4876 = vld [vmem:[%s3176 + $0x648] sm:$0xff]
    %v4877 = vld [vmem:[%s3176 + $0x650] sm:$0xff]
    %v4878 = vld [vmem:[%s3176 + $0x658] sm:$0xff]
    %v4879 = vld [vmem:[%s3176 + $0x660] sm:$0xff]
    %v4880 = vld [vmem:[%s3176 + $0x668] sm:$0xff]
    %v4881 = vld [vmem:[%s3176 + $0x670] sm:$0xff]
    %v4882 = vld [vmem:[%s3176 + $0x678] sm:$0xff]
    %v4883 = vld [vmem:[%s3176 + $0x680] sm:$0xff]
    %v4884 = vld [vmem:[%s3176 + $0x688] sm:$0xff]
    %v4885 = vld [vmem:[%s3176 + $0x690] sm:$0xff]
    %v4886 = vld [vmem:[%s3176 + $0x698] sm:$0xff]
    %v4887 = vld [vmem:[%s3176 + $0x6a0] sm:$0xff]
    %v4888 = vld [vmem:[%s3176 + $0x6a8] sm:$0xff]
    %v4889 = vld [vmem:[%s3176 + $0x6b0] sm:$0xff]
    %v4890 = vld [vmem:[%s3176 + $0x6b8] sm:$0xff]
    %v4891 = vld [vmem:[%s3176 + $0x6c0] sm:$0xff]
    %v4892 = vld [vmem:[%s3176 + $0x6c8] sm:$0xff]
    %v4893 = vld [vmem:[%s3176 + $0x6d0] sm:$0xff]
    %v4894 = vld [vmem:[%s3176 + $0x6d8] sm:$0xff]
    %v4895 = vld [vmem:[%s3176 + $0x6e0] sm:$0xff]
    %v4896 = vld [vmem:[%s3176 + $0x6e8] sm:$0xff]
    %v4897 = vld [vmem:[%s3176 + $0x6f0] sm:$0xff]
    %v4898 = vld [vmem:[%s3176 + $0x6f8] sm:$0xff]
    %v4899 = vld [vmem:[%s3176 + $0x700] sm:$0xff]
    %v4900 = vld [vmem:[%s3176 + $0x708] sm:$0xff]
    %v4901 = vld [vmem:[%s3176 + $0x710] sm:$0xff]
    %v4902 = vld [vmem:[%s3176 + $0x718] sm:$0xff]
    %v4903 = vld [vmem:[%s3176 + $0x720] sm:$0xff]
    %v4904 = vld [vmem:[%s3176 + $0x728] sm:$0xff]
    %v4905 = vld [vmem:[%s3176 + $0x730] sm:$0xff]
    %v4906 = vld [vmem:[%s3176 + $0x738] sm:$0xff]
    %v4907 = vld [vmem:[%s3176 + $0x740] sm:$0xff]
    %v4908 = vld [vmem:[%s3176 + $0x748] sm:$0xff]
    %v4909 = vld [vmem:[%s3176 + $0x750] sm:$0xff]
    %v4910 = vld [vmem:[%s3176 + $0x758] sm:$0xff]
    %v4911 = vld [vmem:[%s3176 + $0x760] sm:$0xff]
    %v4912 = vld [vmem:[%s3176 + $0x768] sm:$0xff]
    %v4913 = vld [vmem:[%s3176 + $0x770] sm:$0xff]
    %v4914 = vld [vmem:[%s3176 + $0x778] sm:$0xff]
    %v4915 = vld [vmem:[%s3176 + $0x780] sm:$0xff]
    %v4916 = vld [vmem:[%s3176 + $0x788] sm:$0xff]
    %v4917 = vld [vmem:[%s3176 + $0x790] sm:$0xff]
    %v4918 = vld [vmem:[%s3176 + $0x798] sm:$0xff]
    %v4919 = vld [vmem:[%s3176 + $0x7a0] sm:$0xff]
    %v4920 = vld [vmem:[%s3176 + $0x7a8] sm:$0xff]
    %v4921 = vld [vmem:[%s3176 + $0x7b0] sm:$0xff]
    %v4922 = vld [vmem:[%s3176 + $0x7b8] sm:$0xff]
    %v4923 = vld [vmem:[%s3176 + $0x7c0] sm:$0xff]
    %v4924 = vld [vmem:[%s3176 + $0x7c8] sm:$0xff]
    %v4925 = vld [vmem:[%s3176 + $0x7d0] sm:$0xff]
    %v4926 = vld [vmem:[%s3176 + $0x7d8] sm:$0xff]
    %v4927 = vld [vmem:[%s3176 + $0x7e0] sm:$0xff]
    %v4928 = vld [vmem:[%s3176 + $0x7e8] sm:$0xff]
    %v4929 = vld [vmem:[%s3176 + $0x7f0] sm:$0xff]
    %v4930 = vld [vmem:[%s3176 + $0x7f8] sm:$0xff]
    %v4931 = vunpack.c.l.s8.bf16 %v4675
    %v4932 = vunpack.c.l.s8.bf16 %v4676
    %v4933 = vunpack.c.l.s8.bf16 %v4677
    %v4934 = vunpack.c.l.s8.bf16 %v4678
    %v4935 = vunpack.c.h.s8.bf16 %v4675
    %v4936 = vunpack.c.h.s8.bf16 %v4676
    %v4937 = vunpack.c.h.s8.bf16 %v4677
    %v4938 = vunpack.c.h.s8.bf16 %v4678
    %v4939 = vunpack.c.l.s8.bf16 %v4679
    %v4940 = vunpack.c.l.s8.bf16 %v4680
    %v4941 = vunpack.c.l.s8.bf16 %v4681
    %v4942 = vunpack.c.l.s8.bf16 %v4682
    %v4943 = vunpack.c.h.s8.bf16 %v4679
    %v4944 = vunpack.c.h.s8.bf16 %v4680
    %v4945 = vunpack.c.h.s8.bf16 %v4681
    %v4946 = vunpack.c.h.s8.bf16 %v4682
    %v4947 = vunpack.c.l.s8.bf16 %v4683
    %v4948 = vunpack.c.l.s8.bf16 %v4684
    %v4949 = vunpack.c.l.s8.bf16 %v4685
    %v4950 = vunpack.c.l.s8.bf16 %v4686
    %v4951 = vunpack.c.h.s8.bf16 %v4683
    %v4952 = vunpack.c.h.s8.bf16 %v4684
    %v4953 = vunpack.c.h.s8.bf16 %v4685
    %v4954 = vunpack.c.h.s8.bf16 %v4686
    %v4955 = vunpack.c.l.s8.bf16 %v4687
    %v4956 = vunpack.c.l.s8.bf16 %v4688
    %v4957 = vunpack.c.l.s8.bf16 %v4689
    %v4958 = vunpack.c.l.s8.bf16 %v4690
    %v4959 = vunpack.c.h.s8.bf16 %v4687
    %v4960 = vunpack.c.h.s8.bf16 %v4688
    %v4961 = vunpack.c.h.s8.bf16 %v4689
    %v4962 = vunpack.c.h.s8.bf16 %v4690
    %v4963 = vunpack.c.l.s8.bf16 %v4691
    %v4964 = vunpack.c.l.s8.bf16 %v4692
    %v4965 = vunpack.c.l.s8.bf16 %v4693
    %v4966 = vunpack.c.l.s8.bf16 %v4694
    %v4967 = vunpack.c.h.s8.bf16 %v4691
    %v4968 = vunpack.c.h.s8.bf16 %v4692
    %v4969 = vunpack.c.h.s8.bf16 %v4693
    %v4970 = vunpack.c.h.s8.bf16 %v4694
    %v4971 = vunpack.c.l.s8.bf16 %v4695
    %v4972 = vunpack.c.l.s8.bf16 %v4696
    %v4973 = vunpack.c.l.s8.bf16 %v4697
    %v4974 = vunpack.c.l.s8.bf16 %v4698
    %v4975 = vunpack.c.h.s8.bf16 %v4695
    %v4976 = vunpack.c.h.s8.bf16 %v4696
    %v4977 = vunpack.c.h.s8.bf16 %v4697
    %v4978 = vunpack.c.h.s8.bf16 %v4698
    %v4979 = vunpack.c.l.s8.bf16 %v4699
    %v4980 = vunpack.c.l.s8.bf16 %v4700
    %v4981 = vunpack.c.l.s8.bf16 %v4701
    %v4982 = vunpack.c.l.s8.bf16 %v4702
    %v4983 = vunpack.c.h.s8.bf16 %v4699
    %v4984 = vunpack.c.h.s8.bf16 %v4700
    %v4985 = vunpack.c.h.s8.bf16 %v4701
    %v4986 = vunpack.c.h.s8.bf16 %v4702
    %v4987 = vunpack.c.l.s8.bf16 %v4703
    %v4988 = vunpack.c.l.s8.bf16 %v4704
    %v4989 = vunpack.c.l.s8.bf16 %v4705
    %v4990 = vunpack.c.l.s8.bf16 %v4706
    %v4991 = vunpack.c.h.s8.bf16 %v4703
    %v4992 = vunpack.c.h.s8.bf16 %v4704
    %v4993 = vunpack.c.h.s8.bf16 %v4705
    %v4994 = vunpack.c.h.s8.bf16 %v4706
    %v4995 = vunpack.c.l.s8.bf16 %v4707
    %v4996 = vunpack.c.l.s8.bf16 %v4708
    %v4997 = vunpack.c.l.s8.bf16 %v4709
    %v4998 = vunpack.c.l.s8.bf16 %v4710
    %v4999 = vunpack.c.h.s8.bf16 %v4707
    %v5000 = vunpack.c.h.s8.bf16 %v4708
    %v5001 = vunpack.c.h.s8.bf16 %v4709
    %v5002 = vunpack.c.h.s8.bf16 %v4710
    %v5003 = vunpack.c.l.s8.bf16 %v4711
    %v5004 = vunpack.c.l.s8.bf16 %v4712
    %v5005 = vunpack.c.l.s8.bf16 %v4713
    %v5006 = vunpack.c.l.s8.bf16 %v4714
    %v5007 = vunpack.c.h.s8.bf16 %v4711
    %v5008 = vunpack.c.h.s8.bf16 %v4712
    %v5009 = vunpack.c.h.s8.bf16 %v4713
    %v5010 = vunpack.c.h.s8.bf16 %v4714
    %v5011 = vunpack.c.l.s8.bf16 %v4715
    %v5012 = vunpack.c.l.s8.bf16 %v4716
    %v5013 = vunpack.c.l.s8.bf16 %v4717
    %v5014 = vunpack.c.l.s8.bf16 %v4718
    %v5015 = vunpack.c.h.s8.bf16 %v4715
    %v5016 = vunpack.c.h.s8.bf16 %v4716
    %v5017 = vunpack.c.h.s8.bf16 %v4717
    %v5018 = vunpack.c.h.s8.bf16 %v4718
    %v5019 = vunpack.c.l.s8.bf16 %v4719
    %v5020 = vunpack.c.l.s8.bf16 %v4720
    %v5021 = vunpack.c.l.s8.bf16 %v4721
    %v5022 = vunpack.c.l.s8.bf16 %v4722
    %v5023 = vunpack.c.h.s8.bf16 %v4719
    %v5024 = vunpack.c.h.s8.bf16 %v4720
    %v5025 = vunpack.c.h.s8.bf16 %v4721
    %v5026 = vunpack.c.h.s8.bf16 %v4722
    %v5027 = vunpack.c.l.s8.bf16 %v4723
    %v5028 = vunpack.c.l.s8.bf16 %v4724
    %v5029 = vunpack.c.l.s8.bf16 %v4725
    %v5030 = vunpack.c.l.s8.bf16 %v4726
    %v5031 = vunpack.c.h.s8.bf16 %v4723
    %v5032 = vunpack.c.h.s8.bf16 %v4724
    %v5033 = vunpack.c.h.s8.bf16 %v4725
    %v5034 = vunpack.c.h.s8.bf16 %v4726
    %v5035 = vunpack.c.l.s8.bf16 %v4727
    %v5036 = vunpack.c.l.s8.bf16 %v4728
    %v5037 = vunpack.c.l.s8.bf16 %v4729
    %v5038 = vunpack.c.l.s8.bf16 %v4730
    %v5039 = vunpack.c.h.s8.bf16 %v4727
    %v5040 = vunpack.c.h.s8.bf16 %v4728
    %v5041 = vunpack.c.h.s8.bf16 %v4729
    %v5042 = vunpack.c.h.s8.bf16 %v4730
    %v5043 = vunpack.c.l.s8.bf16 %v4731
    %v5044 = vunpack.c.l.s8.bf16 %v4732
    %v5045 = vunpack.c.l.s8.bf16 %v4733
    %v5046 = vunpack.c.l.s8.bf16 %v4734
    %v5047 = vunpack.c.h.s8.bf16 %v4731
    %v5048 = vunpack.c.h.s8.bf16 %v4732
    %v5049 = vunpack.c.h.s8.bf16 %v4733
    %v5050 = vunpack.c.h.s8.bf16 %v4734
    %v5051 = vunpack.c.l.s8.bf16 %v4735
    %v5052 = vunpack.c.l.s8.bf16 %v4736
    %v5053 = vunpack.c.l.s8.bf16 %v4737
    %v5054 = vunpack.c.l.s8.bf16 %v4738
    %v5055 = vunpack.c.h.s8.bf16 %v4735
    %v5056 = vunpack.c.h.s8.bf16 %v4736
    %v5057 = vunpack.c.h.s8.bf16 %v4737
    %v5058 = vunpack.c.h.s8.bf16 %v4738
    %v5059 = vunpack.c.l.s8.bf16 %v4739
    %v5060 = vunpack.c.l.s8.bf16 %v4740
    %v5061 = vunpack.c.l.s8.bf16 %v4741
    %v5062 = vunpack.c.l.s8.bf16 %v4742
    %v5063 = vunpack.c.h.s8.bf16 %v4739
    %v5064 = vunpack.c.h.s8.bf16 %v4740
    %v5065 = vunpack.c.h.s8.bf16 %v4741
    %v5066 = vunpack.c.h.s8.bf16 %v4742
    %v5067 = vunpack.c.l.s8.bf16 %v4743
    %v5068 = vunpack.c.l.s8.bf16 %v4744
    %v5069 = vunpack.c.l.s8.bf16 %v4745
    %v5070 = vunpack.c.l.s8.bf16 %v4746
    %v5071 = vunpack.c.h.s8.bf16 %v4743
    %v5072 = vunpack.c.h.s8.bf16 %v4744
    %v5073 = vunpack.c.h.s8.bf16 %v4745
    %v5074 = vunpack.c.h.s8.bf16 %v4746
    %v5075 = vunpack.c.l.s8.bf16 %v4747
    %v5076 = vunpack.c.l.s8.bf16 %v4748
    %v5077 = vunpack.c.l.s8.bf16 %v4749
    %v5078 = vunpack.c.l.s8.bf16 %v4750
    %v5079 = vunpack.c.h.s8.bf16 %v4747
    %v5080 = vunpack.c.h.s8.bf16 %v4748
    %v5081 = vunpack.c.h.s8.bf16 %v4749
    %v5082 = vunpack.c.h.s8.bf16 %v4750
    %v5083 = vunpack.c.l.s8.bf16 %v4751
    %v5084 = vunpack.c.l.s8.bf16 %v4752
    %v5085 = vunpack.c.l.s8.bf16 %v4753
    %v5086 = vunpack.c.l.s8.bf16 %v4754
    %v5087 = vunpack.c.h.s8.bf16 %v4751
    %v5088 = vunpack.c.h.s8.bf16 %v4752
    %v5089 = vunpack.c.h.s8.bf16 %v4753
    %v5090 = vunpack.c.h.s8.bf16 %v4754
    %v5091 = vunpack.c.l.s8.bf16 %v4755
    %v5092 = vunpack.c.l.s8.bf16 %v4756
    %v5093 = vunpack.c.l.s8.bf16 %v4757
    %v5094 = vunpack.c.l.s8.bf16 %v4758
    %v5095 = vunpack.c.h.s8.bf16 %v4755
    %v5096 = vunpack.c.h.s8.bf16 %v4756
    %v5097 = vunpack.c.h.s8.bf16 %v4757
    %v5098 = vunpack.c.h.s8.bf16 %v4758
    %v5099 = vunpack.c.l.s8.bf16 %v4759
    %v5100 = vunpack.c.l.s8.bf16 %v4760
    %v5101 = vunpack.c.l.s8.bf16 %v4761
    %v5102 = vunpack.c.l.s8.bf16 %v4762
    %v5103 = vunpack.c.h.s8.bf16 %v4759
    %v5104 = vunpack.c.h.s8.bf16 %v4760
    %v5105 = vunpack.c.h.s8.bf16 %v4761
    %v5106 = vunpack.c.h.s8.bf16 %v4762
    %v5107 = vunpack.c.l.s8.bf16 %v4763
    %v5108 = vunpack.c.l.s8.bf16 %v4764
    %v5109 = vunpack.c.l.s8.bf16 %v4765
    %v5110 = vunpack.c.l.s8.bf16 %v4766
    %v5111 = vunpack.c.h.s8.bf16 %v4763
    %v5112 = vunpack.c.h.s8.bf16 %v4764
    %v5113 = vunpack.c.h.s8.bf16 %v4765
    %v5114 = vunpack.c.h.s8.bf16 %v4766
    %v5115 = vunpack.c.l.s8.bf16 %v4767
    %v5116 = vunpack.c.l.s8.bf16 %v4768
    %v5117 = vunpack.c.l.s8.bf16 %v4769
    %v5118 = vunpack.c.l.s8.bf16 %v4770
    %v5119 = vunpack.c.h.s8.bf16 %v4767
    %v5120 = vunpack.c.h.s8.bf16 %v4768
    %v5121 = vunpack.c.h.s8.bf16 %v4769
    %v5122 = vunpack.c.h.s8.bf16 %v4770
    %v5123 = vunpack.c.l.s8.bf16 %v4771
    %v5124 = vunpack.c.l.s8.bf16 %v4772
    %v5125 = vunpack.c.l.s8.bf16 %v4773
    %v5126 = vunpack.c.l.s8.bf16 %v4774
    %v5127 = vunpack.c.h.s8.bf16 %v4771
    %v5128 = vunpack.c.h.s8.bf16 %v4772
    %v5129 = vunpack.c.h.s8.bf16 %v4773
    %v5130 = vunpack.c.h.s8.bf16 %v4774
    %v5131 = vunpack.c.l.s8.bf16 %v4775
    %v5132 = vunpack.c.l.s8.bf16 %v4776
    %v5133 = vunpack.c.l.s8.bf16 %v4777
    %v5134 = vunpack.c.l.s8.bf16 %v4778
    %v5135 = vunpack.c.h.s8.bf16 %v4775
    %v5136 = vunpack.c.h.s8.bf16 %v4776
    %v5137 = vunpack.c.h.s8.bf16 %v4777
    %v5138 = vunpack.c.h.s8.bf16 %v4778
    %v5139 = vunpack.c.l.s8.bf16 %v4779
    %v5140 = vunpack.c.l.s8.bf16 %v4780
    %v5141 = vunpack.c.l.s8.bf16 %v4781
    %v5142 = vunpack.c.l.s8.bf16 %v4782
    %v5143 = vunpack.c.h.s8.bf16 %v4779
    %v5144 = vunpack.c.h.s8.bf16 %v4780
    %v5145 = vunpack.c.h.s8.bf16 %v4781
    %v5146 = vunpack.c.h.s8.bf16 %v4782
    %v5147 = vunpack.c.l.s8.bf16 %v4783
    %v5148 = vunpack.c.l.s8.bf16 %v4784
    %v5149 = vunpack.c.l.s8.bf16 %v4785
    %v5150 = vunpack.c.l.s8.bf16 %v4786
    %v5151 = vunpack.c.h.s8.bf16 %v4783
    %v5152 = vunpack.c.h.s8.bf16 %v4784
    %v5153 = vunpack.c.h.s8.bf16 %v4785
    %v5154 = vunpack.c.h.s8.bf16 %v4786
    %v5155 = vunpack.c.l.s8.bf16 %v4787
    %v5156 = vunpack.c.l.s8.bf16 %v4788
    %v5157 = vunpack.c.l.s8.bf16 %v4789
    %v5158 = vunpack.c.l.s8.bf16 %v4790
    %v5159 = vunpack.c.h.s8.bf16 %v4787
    %v5160 = vunpack.c.h.s8.bf16 %v4788
    %v5161 = vunpack.c.h.s8.bf16 %v4789
    %v5162 = vunpack.c.h.s8.bf16 %v4790
    %v5163 = vunpack.c.l.s8.bf16 %v4791
    %v5164 = vunpack.c.l.s8.bf16 %v4792
    %v5165 = vunpack.c.l.s8.bf16 %v4793
    %v5166 = vunpack.c.l.s8.bf16 %v4794
    %v5167 = vunpack.c.h.s8.bf16 %v4791
    %v5168 = vunpack.c.h.s8.bf16 %v4792
    %v5169 = vunpack.c.h.s8.bf16 %v4793
    %v5170 = vunpack.c.h.s8.bf16 %v4794
    %v5171 = vunpack.c.l.s8.bf16 %v4795
    %v5172 = vunpack.c.l.s8.bf16 %v4796
    %v5173 = vunpack.c.l.s8.bf16 %v4797
    %v5174 = vunpack.c.l.s8.bf16 %v4798
    %v5175 = vunpack.c.h.s8.bf16 %v4795
    %v5176 = vunpack.c.h.s8.bf16 %v4796
    %v5177 = vunpack.c.h.s8.bf16 %v4797
    %v5178 = vunpack.c.h.s8.bf16 %v4798
    %v5179 = vunpack.c.l.s8.bf16 %v4799
    %v5180 = vunpack.c.l.s8.bf16 %v4800
    %v5181 = vunpack.c.l.s8.bf16 %v4801
    %v5182 = vunpack.c.l.s8.bf16 %v4802
    %v5183 = vunpack.c.h.s8.bf16 %v4799
    %v5184 = vunpack.c.h.s8.bf16 %v4800
    %v5185 = vunpack.c.h.s8.bf16 %v4801
    %v5186 = vunpack.c.h.s8.bf16 %v4802
    %v5187 = vunpack.c.l.s8.bf16 %v4803
    %v5188 = vunpack.c.l.s8.bf16 %v4804
    %v5189 = vunpack.c.l.s8.bf16 %v4805
    %v5190 = vunpack.c.l.s8.bf16 %v4806
    %v5191 = vunpack.c.h.s8.bf16 %v4803
    %v5192 = vunpack.c.h.s8.bf16 %v4804
    %v5193 = vunpack.c.h.s8.bf16 %v4805
    %v5194 = vunpack.c.h.s8.bf16 %v4806
    %v5195 = vunpack.c.l.s8.bf16 %v4807
    %v5196 = vunpack.c.l.s8.bf16 %v4808
    %v5197 = vunpack.c.l.s8.bf16 %v4809
    %v5198 = vunpack.c.l.s8.bf16 %v4810
    %v5199 = vunpack.c.h.s8.bf16 %v4807
    %v5200 = vunpack.c.h.s8.bf16 %v4808
    %v5201 = vunpack.c.h.s8.bf16 %v4809
    %v5202 = vunpack.c.h.s8.bf16 %v4810
    %v5203 = vunpack.c.l.s8.bf16 %v4811
    %v5204 = vunpack.c.l.s8.bf16 %v4812
    %v5205 = vunpack.c.l.s8.bf16 %v4813
    %v5206 = vunpack.c.l.s8.bf16 %v4814
    %v5207 = vunpack.c.h.s8.bf16 %v4811
    %v5208 = vunpack.c.h.s8.bf16 %v4812
    %v5209 = vunpack.c.h.s8.bf16 %v4813
    %v5210 = vunpack.c.h.s8.bf16 %v4814
    %v5211 = vunpack.c.l.s8.bf16 %v4815
    %v5212 = vunpack.c.l.s8.bf16 %v4816
    %v5213 = vunpack.c.l.s8.bf16 %v4817
    %v5214 = vunpack.c.l.s8.bf16 %v4818
    %v5215 = vunpack.c.h.s8.bf16 %v4815
    %v5216 = vunpack.c.h.s8.bf16 %v4816
    %v5217 = vunpack.c.h.s8.bf16 %v4817
    %v5218 = vunpack.c.h.s8.bf16 %v4818
    %v5219 = vunpack.c.l.s8.bf16 %v4819
    %v5220 = vunpack.c.l.s8.bf16 %v4820
    %v5221 = vunpack.c.l.s8.bf16 %v4821
    %v5222 = vunpack.c.l.s8.bf16 %v4822
    %v5223 = vunpack.c.h.s8.bf16 %v4819
    %v5224 = vunpack.c.h.s8.bf16 %v4820
    %v5225 = vunpack.c.h.s8.bf16 %v4821
    %v5226 = vunpack.c.h.s8.bf16 %v4822
    %v5227 = vunpack.c.l.s8.bf16 %v4823
    %v5228 = vunpack.c.l.s8.bf16 %v4824
    %v5229 = vunpack.c.l.s8.bf16 %v4825
    %v5230 = vunpack.c.l.s8.bf16 %v4826
    %v5231 = vunpack.c.h.s8.bf16 %v4823
    %v5232 = vunpack.c.h.s8.bf16 %v4824
    %v5233 = vunpack.c.h.s8.bf16 %v4825
    %v5234 = vunpack.c.h.s8.bf16 %v4826
    %v5235 = vunpack.c.l.s8.bf16 %v4827
    %v5236 = vunpack.c.l.s8.bf16 %v4828
    %v5237 = vunpack.c.l.s8.bf16 %v4829
    %v5238 = vunpack.c.l.s8.bf16 %v4830
    %v5239 = vunpack.c.h.s8.bf16 %v4827
    %v5240 = vunpack.c.h.s8.bf16 %v4828
    %v5241 = vunpack.c.h.s8.bf16 %v4829
    %v5242 = vunpack.c.h.s8.bf16 %v4830
    %v5243 = vunpack.c.l.s8.bf16 %v4831
    %v5244 = vunpack.c.l.s8.bf16 %v4832
    %v5245 = vunpack.c.l.s8.bf16 %v4833
    %v5246 = vunpack.c.l.s8.bf16 %v4834
    %v5247 = vunpack.c.h.s8.bf16 %v4831
    %v5248 = vunpack.c.h.s8.bf16 %v4832
    %v5249 = vunpack.c.h.s8.bf16 %v4833
    %v5250 = vunpack.c.h.s8.bf16 %v4834
    %v5251 = vunpack.c.l.s8.bf16 %v4835
    %v5252 = vunpack.c.l.s8.bf16 %v4836
    %v5253 = vunpack.c.l.s8.bf16 %v4837
    %v5254 = vunpack.c.l.s8.bf16 %v4838
    %v5255 = vunpack.c.h.s8.bf16 %v4835
    %v5256 = vunpack.c.h.s8.bf16 %v4836
    %v5257 = vunpack.c.h.s8.bf16 %v4837
    %v5258 = vunpack.c.h.s8.bf16 %v4838
    %v5259 = vunpack.c.l.s8.bf16 %v4839
    %v5260 = vunpack.c.l.s8.bf16 %v4840
    %v5261 = vunpack.c.l.s8.bf16 %v4841
    %v5262 = vunpack.c.l.s8.bf16 %v4842
    %v5263 = vunpack.c.h.s8.bf16 %v4839
    %v5264 = vunpack.c.h.s8.bf16 %v4840
    %v5265 = vunpack.c.h.s8.bf16 %v4841
    %v5266 = vunpack.c.h.s8.bf16 %v4842
    %v5267 = vunpack.c.l.s8.bf16 %v4843
    %v5268 = vunpack.c.l.s8.bf16 %v4844
    %v5269 = vunpack.c.l.s8.bf16 %v4845
    %v5270 = vunpack.c.l.s8.bf16 %v4846
    %v5271 = vunpack.c.h.s8.bf16 %v4843
    %v5272 = vunpack.c.h.s8.bf16 %v4844
    %v5273 = vunpack.c.h.s8.bf16 %v4845
    %v5274 = vunpack.c.h.s8.bf16 %v4846
    %v5275 = vunpack.c.l.s8.bf16 %v4847
    %v5276 = vunpack.c.l.s8.bf16 %v4848
    %v5277 = vunpack.c.l.s8.bf16 %v4849
    %v5278 = vunpack.c.l.s8.bf16 %v4850
    %v5279 = vunpack.c.h.s8.bf16 %v4847
    %v5280 = vunpack.c.h.s8.bf16 %v4848
    %v5281 = vunpack.c.h.s8.bf16 %v4849
    %v5282 = vunpack.c.h.s8.bf16 %v4850
    %v5283 = vunpack.c.l.s8.bf16 %v4851
    %v5284 = vunpack.c.l.s8.bf16 %v4852
    %v5285 = vunpack.c.l.s8.bf16 %v4853
    %v5286 = vunpack.c.l.s8.bf16 %v4854
    %v5287 = vunpack.c.h.s8.bf16 %v4851
    %v5288 = vunpack.c.h.s8.bf16 %v4852
    %v5289 = vunpack.c.h.s8.bf16 %v4853
    %v5290 = vunpack.c.h.s8.bf16 %v4854
    %v5291 = vunpack.c.l.s8.bf16 %v4855
    %v5292 = vunpack.c.l.s8.bf16 %v4856
    %v5293 = vunpack.c.l.s8.bf16 %v4857
    %v5294 = vunpack.c.l.s8.bf16 %v4858
    %v5295 = vunpack.c.h.s8.bf16 %v4855
    %v5296 = vunpack.c.h.s8.bf16 %v4856
    %v5297 = vunpack.c.h.s8.bf16 %v4857
    %v5298 = vunpack.c.h.s8.bf16 %v4858
    %v5299 = vunpack.c.l.s8.bf16 %v4859
    %v5300 = vunpack.c.l.s8.bf16 %v4860
    %v5301 = vunpack.c.l.s8.bf16 %v4861
    %v5302 = vunpack.c.l.s8.bf16 %v4862
    %v5303 = vunpack.c.h.s8.bf16 %v4859
    %v5304 = vunpack.c.h.s8.bf16 %v4860
    %v5305 = vunpack.c.h.s8.bf16 %v4861
    %v5306 = vunpack.c.h.s8.bf16 %v4862
    %v5307 = vunpack.c.l.s8.bf16 %v4863
    %v5308 = vunpack.c.l.s8.bf16 %v4864
    %v5309 = vunpack.c.l.s8.bf16 %v4865
    %v5310 = vunpack.c.l.s8.bf16 %v4866
    %v5311 = vunpack.c.h.s8.bf16 %v4863
    %v5312 = vunpack.c.h.s8.bf16 %v4864
    %v5313 = vunpack.c.h.s8.bf16 %v4865
    %v5314 = vunpack.c.h.s8.bf16 %v4866
    %v5315 = vunpack.c.l.s8.bf16 %v4867
    %v5316 = vunpack.c.l.s8.bf16 %v4868
    %v5317 = vunpack.c.l.s8.bf16 %v4869
    %v5318 = vunpack.c.l.s8.bf16 %v4870
    %v5319 = vunpack.c.h.s8.bf16 %v4867
    %v5320 = vunpack.c.h.s8.bf16 %v4868
    %v5321 = vunpack.c.h.s8.bf16 %v4869
    %v5322 = vunpack.c.h.s8.bf16 %v4870
    %v5323 = vunpack.c.l.s8.bf16 %v4871
    %v5324 = vunpack.c.l.s8.bf16 %v4872
    %v5325 = vunpack.c.l.s8.bf16 %v4873
    %v5326 = vunpack.c.l.s8.bf16 %v4874
    %v5327 = vunpack.c.h.s8.bf16 %v4871
    %v5328 = vunpack.c.h.s8.bf16 %v4872
    %v5329 = vunpack.c.h.s8.bf16 %v4873
    %v5330 = vunpack.c.h.s8.bf16 %v4874
    %v5331 = vunpack.c.l.s8.bf16 %v4875
    %v5332 = vunpack.c.l.s8.bf16 %v4876
    %v5333 = vunpack.c.l.s8.bf16 %v4877
    %v5334 = vunpack.c.l.s8.bf16 %v4878
    %v5335 = vunpack.c.h.s8.bf16 %v4875
    %v5336 = vunpack.c.h.s8.bf16 %v4876
    %v5337 = vunpack.c.h.s8.bf16 %v4877
    %v5338 = vunpack.c.h.s8.bf16 %v4878
    %v5339 = vunpack.c.l.s8.bf16 %v4879
    %v5340 = vunpack.c.l.s8.bf16 %v4880
    %v5341 = vunpack.c.l.s8.bf16 %v4881
    %v5342 = vunpack.c.l.s8.bf16 %v4882
    %v5343 = vunpack.c.h.s8.bf16 %v4879
    %v5344 = vunpack.c.h.s8.bf16 %v4880
    %v5345 = vunpack.c.h.s8.bf16 %v4881
    %v5346 = vunpack.c.h.s8.bf16 %v4882
    %v5347 = vunpack.c.l.s8.bf16 %v4883
    %v5348 = vunpack.c.l.s8.bf16 %v4884
    %v5349 = vunpack.c.l.s8.bf16 %v4885
    %v5350 = vunpack.c.l.s8.bf16 %v4886
    %v5351 = vunpack.c.h.s8.bf16 %v4883
    %v5352 = vunpack.c.h.s8.bf16 %v4884
    %v5353 = vunpack.c.h.s8.bf16 %v4885
    %v5354 = vunpack.c.h.s8.bf16 %v4886
    %v5355 = vunpack.c.l.s8.bf16 %v4887
    %v5356 = vunpack.c.l.s8.bf16 %v4888
    %v5357 = vunpack.c.l.s8.bf16 %v4889
    %v5358 = vunpack.c.l.s8.bf16 %v4890
    %v5359 = vunpack.c.h.s8.bf16 %v4887
    %v5360 = vunpack.c.h.s8.bf16 %v4888
    %v5361 = vunpack.c.h.s8.bf16 %v4889
    %v5362 = vunpack.c.h.s8.bf16 %v4890
    %v5363 = vunpack.c.l.s8.bf16 %v4891
    %v5364 = vunpack.c.l.s8.bf16 %v4892
    %v5365 = vunpack.c.l.s8.bf16 %v4893
    %v5366 = vunpack.c.l.s8.bf16 %v4894
    %v5367 = vunpack.c.h.s8.bf16 %v4891
    %v5368 = vunpack.c.h.s8.bf16 %v4892
    %v5369 = vunpack.c.h.s8.bf16 %v4893
    %v5370 = vunpack.c.h.s8.bf16 %v4894
    %v5371 = vunpack.c.l.s8.bf16 %v4895
    %v5372 = vunpack.c.l.s8.bf16 %v4896
    %v5373 = vunpack.c.l.s8.bf16 %v4897
    %v5374 = vunpack.c.l.s8.bf16 %v4898
    %v5375 = vunpack.c.h.s8.bf16 %v4895
    %v5376 = vunpack.c.h.s8.bf16 %v4896
    %v5377 = vunpack.c.h.s8.bf16 %v4897
    %v5378 = vunpack.c.h.s8.bf16 %v4898
    %v5379 = vunpack.c.l.s8.bf16 %v4899
    %v5380 = vunpack.c.l.s8.bf16 %v4900
    %v5381 = vunpack.c.l.s8.bf16 %v4901
    %v5382 = vunpack.c.l.s8.bf16 %v4902
    %v5383 = vunpack.c.h.s8.bf16 %v4899
    %v5384 = vunpack.c.h.s8.bf16 %v4900
    %v5385 = vunpack.c.h.s8.bf16 %v4901
    %v5386 = vunpack.c.h.s8.bf16 %v4902
    %v5387 = vunpack.c.l.s8.bf16 %v4903
    %v5388 = vunpack.c.l.s8.bf16 %v4904
    %v5389 = vunpack.c.l.s8.bf16 %v4905
    %v5390 = vunpack.c.l.s8.bf16 %v4906
    %v5391 = vunpack.c.h.s8.bf16 %v4903
    %v5392 = vunpack.c.h.s8.bf16 %v4904
    %v5393 = vunpack.c.h.s8.bf16 %v4905
    %v5394 = vunpack.c.h.s8.bf16 %v4906
    %v5395 = vunpack.c.l.s8.bf16 %v4907
    %v5396 = vunpack.c.l.s8.bf16 %v4908
    %v5397 = vunpack.c.l.s8.bf16 %v4909
    %v5398 = vunpack.c.l.s8.bf16 %v4910
    %v5399 = vunpack.c.h.s8.bf16 %v4907
    %v5400 = vunpack.c.h.s8.bf16 %v4908
    %v5401 = vunpack.c.h.s8.bf16 %v4909
    %v5402 = vunpack.c.h.s8.bf16 %v4910
    %v5403 = vunpack.c.l.s8.bf16 %v4911
    %v5404 = vunpack.c.l.s8.bf16 %v4912
    %v5405 = vunpack.c.l.s8.bf16 %v4913
    %v5406 = vunpack.c.l.s8.bf16 %v4914
    %v5407 = vunpack.c.h.s8.bf16 %v4911
    %v5408 = vunpack.c.h.s8.bf16 %v4912
    %v5409 = vunpack.c.h.s8.bf16 %v4913
    %v5410 = vunpack.c.h.s8.bf16 %v4914
    %v5411 = vunpack.c.l.s8.bf16 %v4915
    %v5412 = vunpack.c.l.s8.bf16 %v4916
    %v5413 = vunpack.c.l.s8.bf16 %v4917
    %v5414 = vunpack.c.l.s8.bf16 %v4918
    %v5415 = vunpack.c.h.s8.bf16 %v4915
    %v5416 = vunpack.c.h.s8.bf16 %v4916
    %v5417 = vunpack.c.h.s8.bf16 %v4917
    %v5418 = vunpack.c.h.s8.bf16 %v4918
    %v5419 = vunpack.c.l.s8.bf16 %v4919
    %v5420 = vunpack.c.l.s8.bf16 %v4920
    %v5421 = vunpack.c.l.s8.bf16 %v4921
    %v5422 = vunpack.c.l.s8.bf16 %v4922
    %v5423 = vunpack.c.h.s8.bf16 %v4919
    %v5424 = vunpack.c.h.s8.bf16 %v4920
    %v5425 = vunpack.c.h.s8.bf16 %v4921
    %v5426 = vunpack.c.h.s8.bf16 %v4922
    %v5427 = vunpack.c.l.s8.bf16 %v4923
    %v5428 = vunpack.c.l.s8.bf16 %v4924
    %v5429 = vunpack.c.l.s8.bf16 %v4925
    %v5430 = vunpack.c.l.s8.bf16 %v4926
    %v5431 = vunpack.c.h.s8.bf16 %v4923
    %v5432 = vunpack.c.h.s8.bf16 %v4924
    %v5433 = vunpack.c.h.s8.bf16 %v4925
    %v5434 = vunpack.c.h.s8.bf16 %v4926
    %v5435 = vunpack.c.l.s8.bf16 %v4927
    %v5436 = vunpack.c.l.s8.bf16 %v4928
    %v5437 = vunpack.c.l.s8.bf16 %v4929
    %v5438 = vunpack.c.l.s8.bf16 %v4930
    %v5439 = vunpack.c.h.s8.bf16 %v4927
    %v5440 = vunpack.c.h.s8.bf16 %v4928
    %v5441 = vunpack.c.h.s8.bf16 %v4929
    %v5442 = vunpack.c.h.s8.bf16 %v4930
    %5443 = vmatprep.subr.bf16.mxu0 %v4932
    %5444 = vmatpush1.bf16.msra.mxu0 %v4931
    %5445 = vmatprep.subr.bf16.mxu0 %v4936
    %5446 = vmatpush1.bf16.msra.mxu0 %v4935
    %5447 = vmatprep.subr.bf16.mxu0 %v4940
    %5448 = vmatpush1.bf16.msra.mxu0 %v4939
    %5449 = vmatprep.subr.bf16.mxu0 %v4944
    %5450 = vmatpush1.bf16.msra.mxu0 %v4943
    %5451 = vmatprep.subr.bf16.mxu0 %v4948
    %5452 = vmatpush1.bf16.msra.mxu0 %v4947
    %5453 = vmatprep.subr.bf16.mxu0 %v4952
    %5454 = vmatpush1.bf16.msra.mxu0 %v4951
    %5455 = vmatprep.subr.bf16.mxu0 %v4956
    %5456 = vmatpush1.bf16.msra.mxu0 %v4955
    %5457 = vmatprep.subr.bf16.mxu0 %v4960
    %5458 = vmatpush1.bf16.msra.mxu0 %v4959
    %5459 = vmatprep.subr.bf16.mxu0 %v4964
    %5460 = vmatpush1.bf16.msra.mxu0 %v4963
    %5461 = vmatprep.subr.bf16.mxu0 %v4968
    %5462 = vmatpush1.bf16.msra.mxu0 %v4967
    %5463 = vmatprep.subr.bf16.mxu0 %v4972
    %5464 = vmatpush1.bf16.msra.mxu0 %v4971
    %5465 = vmatprep.subr.bf16.mxu0 %v4976
    %5466 = vmatpush1.bf16.msra.mxu0 %v4975
    %5467 = vmatprep.subr.bf16.mxu0 %v4980
    %5468 = vmatpush1.bf16.msra.mxu0 %v4979
    %5469 = vmatprep.subr.bf16.mxu0 %v4984
    %5470 = vmatpush1.bf16.msra.mxu0 %v4983
    %5471 = vmatprep.subr.bf16.mxu0 %v4988
    %5472 = vmatpush1.bf16.msra.mxu0 %v4987
    %5473 = vmatprep.subr.bf16.mxu0 %v4992
    %5474 = vmatpush1.bf16.msra.mxu0 %v4991
    %5475 = vmatprep.mubr.bf16.mxu0 %v3156
    %5476 = vmatmul.mubr.bf16.gmra.mrb[0].mxu0 %v3155
    %v5477 = vpop.f32.mrb[0].mxu0
    %v5478 = vadd.f32 0.0, %v5477
    %v5479 = vpop.f32.mrb[0].mxu0
    %v5480 = vadd.f32 0.0, %v5479
    %v5481 = vpop.f32.mrb[0].mxu0
    %v5482 = vpop.f32.mrb[0].mxu0
    %5483 = vdwg.mxu0
    %5484 = vmatprep.subr.bf16.mxu0 %v4996
    %5485 = vmatpush1.bf16.msra.mxu0 %v4995
    %5486 = vmatprep.subr.bf16.mxu0 %v5000
    %5487 = vmatpush1.bf16.msra.mxu0 %v4999
    %5488 = vmatprep.subr.bf16.mxu0 %v5004
    %5489 = vmatpush1.bf16.msra.mxu0 %v5003
    %5490 = vmatprep.subr.bf16.mxu0 %v5008
    %5491 = vmatpush1.bf16.msra.mxu0 %v5007
    %5492 = vmatprep.subr.bf16.mxu0 %v5012
    %5493 = vmatpush1.bf16.msra.mxu0 %v5011
    %5494 = vmatprep.subr.bf16.mxu0 %v5016
    %5495 = vmatpush1.bf16.msra.mxu0 %v5015
    %5496 = vmatprep.subr.bf16.mxu0 %v5020
    %5497 = vmatpush1.bf16.msra.mxu0 %v5019
    %5498 = vmatprep.subr.bf16.mxu0 %v5024
    %5499 = vmatpush1.bf16.msra.mxu0 %v5023
    %5500 = vmatprep.subr.bf16.mxu0 %v5028
    %5501 = vmatpush1.bf16.msra.mxu0 %v5027
    %5502 = vmatprep.subr.bf16.mxu0 %v5032
    %5503 = vmatpush1.bf16.msra.mxu0 %v5031
    %5504 = vmatprep.subr.bf16.mxu0 %v5036
    %5505 = vmatpush1.bf16.msra.mxu0 %v5035
    %5506 = vmatprep.subr.bf16.mxu0 %v5040
    %5507 = vmatpush1.bf16.msra.mxu0 %v5039
    %5508 = vmatprep.subr.bf16.mxu0 %v5044
    %5509 = vmatpush1.bf16.msra.mxu0 %v5043
    %5510 = vmatprep.subr.bf16.mxu0 %v5048
    %5511 = vmatpush1.bf16.msra.mxu0 %v5047
    %5512 = vmatprep.subr.bf16.mxu0 %v5052
    %5513 = vmatpush1.bf16.msra.mxu0 %v5051
    %5514 = vmatprep.subr.bf16.mxu0 %v5056
    %5515 = vmatpush1.bf16.msra.mxu0 %v5055
    %5516 = vmatprep.mubr.bf16.mxu0 %v3158
    %5517 = vmatmul.mubr.bf16.gmra.mrb[0].mxu0 %v3157
    %v5518 = vpop.f32.mrb[0].mxu0
    %v5519 = vadd.f32 %v5478, %v5518
    %v5520 = vpop.f32.mrb[0].mxu0
    %v5521 = vadd.f32 %v5480, %v5520
    %v5522 = vpop.f32.mrb[0].mxu0
    %v5523 = vpop.f32.mrb[0].mxu0
    %5524 = vdwg.mxu0
    %5525 = vmatprep.subr.bf16.mxu0 %v5060
    %5526 = vmatpush1.bf16.msra.mxu0 %v5059
    %5527 = vmatprep.subr.bf16.mxu0 %v5064
    %5528 = vmatpush1.bf16.msra.mxu0 %v5063
    %5529 = vmatprep.subr.bf16.mxu0 %v5068
    %5530 = vmatpush1.bf16.msra.mxu0 %v5067
    %5531 = vmatprep.subr.bf16.mxu0 %v5072
    %5532 = vmatpush1.bf16.msra.mxu0 %v5071
    %5533 = vmatprep.subr.bf16.mxu0 %v5076
    %5534 = vmatpush1.bf16.msra.mxu0 %v5075
    %5535 = vmatprep.subr.bf16.mxu0 %v5080
    %5536 = vmatpush1.bf16.msra.mxu0 %v5079
    %5537 = vmatprep.subr.bf16.mxu0 %v5084
    %5538 = vmatpush1.bf16.msra.mxu0 %v5083
    %5539 = vmatprep.subr.bf16.mxu0 %v5088
    %5540 = vmatpush1.bf16.msra.mxu0 %v5087
    %5541 = vmatprep.subr.bf16.mxu0 %v5092
    %5542 = vmatpush1.bf16.msra.mxu0 %v5091
    %5543 = vmatprep.subr.bf16.mxu0 %v5096
    %5544 = vmatpush1.bf16.msra.mxu0 %v5095
    %5545 = vmatprep.subr.bf16.mxu0 %v5100
    %5546 = vmatpush1.bf16.msra.mxu0 %v5099
    %5547 = vmatprep.subr.bf16.mxu0 %v5104
    %5548 = vmatpush1.bf16.msra.mxu0 %v5103
    %5549 = vmatprep.subr.bf16.mxu0 %v5108
    %5550 = vmatpush1.bf16.msra.mxu0 %v5107
    %5551 = vmatprep.subr.bf16.mxu0 %v5112
    %5552 = vmatpush1.bf16.msra.mxu0 %v5111
    %5553 = vmatprep.subr.bf16.mxu0 %v5116
    %5554 = vmatpush1.bf16.msra.mxu0 %v5115
    %5555 = vmatprep.subr.bf16.mxu0 %v5120
    %5556 = vmatpush1.bf16.msra.mxu0 %v5119
    %5557 = vmatprep.mubr.bf16.mxu0 %v3160
    %5558 = vmatmul.mubr.bf16.gmra.mrb[0].mxu0 %v3159
    %v5559 = vpop.f32.mrb[0].mxu0
    %v5560 = vadd.f32 %v5519, %v5559
    %v5561 = vpop.f32.mrb[0].mxu0
    %v5562 = vadd.f32 %v5521, %v5561
    %v5563 = vpop.f32.mrb[0].mxu0
    %v5564 = vpop.f32.mrb[0].mxu0
    %5565 = vdwg.mxu0
    %5566 = vmatprep.subr.bf16.mxu0 %v5124
    %5567 = vmatpush1.bf16.msra.mxu0 %v5123
    %5568 = vmatprep.subr.bf16.mxu0 %v5128
    %5569 = vmatpush1.bf16.msra.mxu0 %v5127
    %5570 = vmatprep.subr.bf16.mxu0 %v5132
    %5571 = vmatpush1.bf16.msra.mxu0 %v5131
    %5572 = vmatprep.subr.bf16.mxu0 %v5136
    %5573 = vmatpush1.bf16.msra.mxu0 %v5135
    %5574 = vmatprep.subr.bf16.mxu0 %v5140
    %5575 = vmatpush1.bf16.msra.mxu0 %v5139
    %5576 = vmatprep.subr.bf16.mxu0 %v5144
    %5577 = vmatpush1.bf16.msra.mxu0 %v5143
    %5578 = vmatprep.subr.bf16.mxu0 %v5148
    %5579 = vmatpush1.bf16.msra.mxu0 %v5147
    %5580 = vmatprep.subr.bf16.mxu0 %v5152
    %5581 = vmatpush1.bf16.msra.mxu0 %v5151
    %5582 = vmatprep.subr.bf16.mxu0 %v5156
    %5583 = vmatpush1.bf16.msra.mxu0 %v5155
    %5584 = vmatprep.subr.bf16.mxu0 %v5160
    %5585 = vmatpush1.bf16.msra.mxu0 %v5159
    %5586 = vmatprep.subr.bf16.mxu0 %v5164
    %5587 = vmatpush1.bf16.msra.mxu0 %v5163
    %5588 = vmatprep.subr.bf16.mxu0 %v5168
    %5589 = vmatpush1.bf16.msra.mxu0 %v5167
    %5590 = vmatprep.subr.bf16.mxu0 %v5172
    %5591 = vmatpush1.bf16.msra.mxu0 %v5171
    %5592 = vmatprep.subr.bf16.mxu0 %v5176
    %5593 = vmatpush1.bf16.msra.mxu0 %v5175
    %5594 = vmatprep.subr.bf16.mxu0 %v5180
    %5595 = vmatpush1.bf16.msra.mxu0 %v5179
    %5596 = vmatprep.subr.bf16.mxu0 %v5184
    %5597 = vmatpush1.bf16.msra.mxu0 %v5183
    %5598 = vmatprep.mubr.bf16.mxu0 %v3162
    %5599 = vmatmul.mubr.bf16.gmra.mrb[0].mxu0 %v3161
    %v5600 = vpop.f32.mrb[0].mxu0
    %v5601 = vadd.f32 %v5560, %v5600
    %v5602 = vpop.f32.mrb[0].mxu0
    %v5603 = vadd.f32 %v5562, %v5602
    %v5604 = vpop.f32.mrb[0].mxu0
    %v5605 = vpop.f32.mrb[0].mxu0
    %5606 = vdwg.mxu0
    %5607 = vmatprep.subr.bf16.mxu0 %v5188
    %5608 = vmatpush1.bf16.msra.mxu0 %v5187
    %5609 = vmatprep.subr.bf16.mxu0 %v5192
    %5610 = vmatpush1.bf16.msra.mxu0 %v5191
    %5611 = vmatprep.subr.bf16.mxu0 %v5196
    %5612 = vmatpush1.bf16.msra.mxu0 %v5195
    %5613 = vmatprep.subr.bf16.mxu0 %v5200
    %5614 = vmatpush1.bf16.msra.mxu0 %v5199
    %5615 = vmatprep.subr.bf16.mxu0 %v5204
    %5616 = vmatpush1.bf16.msra.mxu0 %v5203
    %5617 = vmatprep.subr.bf16.mxu0 %v5208
    %5618 = vmatpush1.bf16.msra.mxu0 %v5207
    %5619 = vmatprep.subr.bf16.mxu0 %v5212
    %5620 = vmatpush1.bf16.msra.mxu0 %v5211
    %5621 = vmatprep.subr.bf16.mxu0 %v5216
    %5622 = vmatpush1.bf16.msra.mxu0 %v5215
    %5623 = vmatprep.subr.bf16.mxu0 %v5220
    %5624 = vmatpush1.bf16.msra.mxu0 %v5219
    %5625 = vmatprep.subr.bf16.mxu0 %v5224
    %5626 = vmatpush1.bf16.msra.mxu0 %v5223
    %5627 = vmatprep.subr.bf16.mxu0 %v5228
    %5628 = vmatpush1.bf16.msra.mxu0 %v5227
    %5629 = vmatprep.subr.bf16.mxu0 %v5232
    %5630 = vmatpush1.bf16.msra.mxu0 %v5231
    %5631 = vmatprep.subr.bf16.mxu0 %v5236
    %5632 = vmatpush1.bf16.msra.mxu0 %v5235
    %5633 = vmatprep.subr.bf16.mxu0 %v5240
    %5634 = vmatpush1.bf16.msra.mxu0 %v5239
    %5635 = vmatprep.subr.bf16.mxu0 %v5244
    %5636 = vmatpush1.bf16.msra.mxu0 %v5243
    %5637 = vmatprep.subr.bf16.mxu0 %v5248
    %5638 = vmatpush1.bf16.msra.mxu0 %v5247
    %5639 = vmatprep.mubr.bf16.mxu0 %v3164
    %5640 = vmatmul.mubr.bf16.gmra.mrb[0].mxu0 %v3163
    %v5641 = vpop.f32.mrb[0].mxu0
    %v5642 = vadd.f32 %v5601, %v5641
    %v5643 = vpop.f32.mrb[0].mxu0
    %v5644 = vadd.f32 %v5603, %v5643
    %v5645 = vpop.f32.mrb[0].mxu0
    %v5646 = vpop.f32.mrb[0].mxu0
    %5647 = vdwg.mxu0
    %5648 = vmatprep.subr.bf16.mxu0 %v5252
    %5649 = vmatpush1.bf16.msra.mxu0 %v5251
    %5650 = vmatprep.subr.bf16.mxu0 %v5256
    %5651 = vmatpush1.bf16.msra.mxu0 %v5255
    %5652 = vmatprep.subr.bf16.mxu0 %v5260
    %5653 = vmatpush1.bf16.msra.mxu0 %v5259
    %5654 = vmatprep.subr.bf16.mxu0 %v5264
    %5655 = vmatpush1.bf16.msra.mxu0 %v5263
    %5656 = vmatprep.subr.bf16.mxu0 %v5268
    %5657 = vmatpush1.bf16.msra.mxu0 %v5267
    %5658 = vmatprep.subr.bf16.mxu0 %v5272
    %5659 = vmatpush1.bf16.msra.mxu0 %v5271
    %5660 = vmatprep.subr.bf16.mxu0 %v5276
    %5661 = vmatpush1.bf16.msra.mxu0 %v5275
    %5662 = vmatprep.subr.bf16.mxu0 %v5280
    %5663 = vmatpush1.bf16.msra.mxu0 %v5279
    %5664 = vmatprep.subr.bf16.mxu0 %v5284
    %5665 = vmatpush1.bf16.msra.mxu0 %v5283
    %5666 = vmatprep.subr.bf16.mxu0 %v5288
    %5667 = vmatpush1.bf16.msra.mxu0 %v5287
    %5668 = vmatprep.subr.bf16.mxu0 %v5292
    %5669 = vmatpush1.bf16.msra.mxu0 %v5291
    %5670 = vmatprep.subr.bf16.mxu0 %v5296
    %5671 = vmatpush1.bf16.msra.mxu0 %v5295
    %5672 = vmatprep.subr.bf16.mxu0 %v5300
    %5673 = vmatpush1.bf16.msra.mxu0 %v5299
    %5674 = vmatprep.subr.bf16.mxu0 %v5304
    %5675 = vmatpush1.bf16.msra.mxu0 %v5303
    %5676 = vmatprep.subr.bf16.mxu0 %v5308
    %5677 = vmatpush1.bf16.msra.mxu0 %v5307
    %5678 = vmatprep.subr.bf16.mxu0 %v5312
    %5679 = vmatpush1.bf16.msra.mxu0 %v5311
    %5680 = vmatprep.mubr.bf16.mxu0 %v3166
    %5681 = vmatmul.mubr.bf16.gmra.mrb[0].mxu0 %v3165
    %v5682 = vpop.f32.mrb[0].mxu0
    %v5683 = vadd.f32 %v5642, %v5682
    %v5684 = vpop.f32.mrb[0].mxu0
    %v5685 = vadd.f32 %v5644, %v5684
    %v5686 = vpop.f32.mrb[0].mxu0
    %v5687 = vpop.f32.mrb[0].mxu0
    %5688 = vdwg.mxu0
    %5689 = vmatprep.subr.bf16.mxu0 %v5316
    %5690 = vmatpush1.bf16.msra.mxu0 %v5315
    %5691 = vmatprep.subr.bf16.mxu0 %v5320
    %5692 = vmatpush1.bf16.msra.mxu0 %v5319
    %5693 = vmatprep.subr.bf16.mxu0 %v5324
    %5694 = vmatpush1.bf16.msra.mxu0 %v5323
    %5695 = vmatprep.subr.bf16.mxu0 %v5328
    %5696 = vmatpush1.bf16.msra.mxu0 %v5327
    %5697 = vmatprep.subr.bf16.mxu0 %v5332
    %5698 = vmatpush1.bf16.msra.mxu0 %v5331
    %5699 = vmatprep.subr.bf16.mxu0 %v5336
    %5700 = vmatpush1.bf16.msra.mxu0 %v5335
    %5701 = vmatprep.subr.bf16.mxu0 %v5340
    %5702 = vmatpush1.bf16.msra.mxu0 %v5339
    %5703 = vmatprep.subr.bf16.mxu0 %v5344
    %5704 = vmatpush1.bf16.msra.mxu0 %v5343
    %5705 = vmatprep.subr.bf16.mxu0 %v5348
    %5706 = vmatpush1.bf16.msra.mxu0 %v5347
    %5707 = vmatprep.subr.bf16.mxu0 %v5352
    %5708 = vmatpush1.bf16.msra.mxu0 %v5351
    %5709 = vmatprep.subr.bf16.mxu0 %v5356
    %5710 = vmatpush1.bf16.msra.mxu0 %v5355
    %5711 = vmatprep.subr.bf16.mxu0 %v5360
    %5712 = vmatpush1.bf16.msra.mxu0 %v5359
    %5713 = vmatprep.subr.bf16.mxu0 %v5364
    %5714 = vmatpush1.bf16.msra.mxu0 %v5363
    %5715 = vmatprep.subr.bf16.mxu0 %v5368
    %5716 = vmatpush1.bf16.msra.mxu0 %v5367
    %5717 = vmatprep.subr.bf16.mxu0 %v5372
    %5718 = vmatpush1.bf16.msra.mxu0 %v5371
    %5719 = vmatprep.subr.bf16.mxu0 %v5376
    %5720 = vmatpush1.bf16.msra.mxu0 %v5375
    %5721 = vmatprep.mubr.bf16.mxu0 %v3168
    %5722 = vmatmul.mubr.bf16.gmra.mrb[0].mxu0 %v3167
    %v5723 = vpop.f32.mrb[0].mxu0
    %v5724 = vadd.f32 %v5683, %v5723
    %v5725 = vpop.f32.mrb[0].mxu0
    %v5726 = vadd.f32 %v5685, %v5725
    %v5727 = vpop.f32.mrb[0].mxu0
    %v5728 = vpop.f32.mrb[0].mxu0
    %5729 = vdwg.mxu0
    %5730 = vmatprep.subr.bf16.mxu0 %v5380
    %5731 = vmatpush1.bf16.msra.mxu0 %v5379
    %5732 = vmatprep.subr.bf16.mxu0 %v5384
    %5733 = vmatpush1.bf16.msra.mxu0 %v5383
    %5734 = vmatprep.subr.bf16.mxu0 %v5388
    %5735 = vmatpush1.bf16.msra.mxu0 %v5387
    %5736 = vmatprep.subr.bf16.mxu0 %v5392
    %5737 = vmatpush1.bf16.msra.mxu0 %v5391
    %5738 = vmatprep.subr.bf16.mxu0 %v5396
    %5739 = vmatpush1.bf16.msra.mxu0 %v5395
    %5740 = vmatprep.subr.bf16.mxu0 %v5400
    %5741 = vmatpush1.bf16.msra.mxu0 %v5399
    %5742 = vmatprep.subr.bf16.mxu0 %v5404
    %5743 = vmatpush1.bf16.msra.mxu0 %v5403
    %5744 = vmatprep.subr.bf16.mxu0 %v5408
    %5745 = vmatpush1.bf16.msra.mxu0 %v5407
    %5746 = vmatprep.subr.bf16.mxu0 %v5412
    %5747 = vmatpush1.bf16.msra.mxu0 %v5411
    %5748 = vmatprep.subr.bf16.mxu0 %v5416
    %5749 = vmatpush1.bf16.msra.mxu0 %v5415
    %5750 = vmatprep.subr.bf16.mxu0 %v5420
    %5751 = vmatpush1.bf16.msra.mxu0 %v5419
    %5752 = vmatprep.subr.bf16.mxu0 %v5424
    %5753 = vmatpush1.bf16.msra.mxu0 %v5423
    %5754 = vmatprep.subr.bf16.mxu0 %v5428
    %5755 = vmatpush1.bf16.msra.mxu0 %v5427
    %5756 = vmatprep.subr.bf16.mxu0 %v5432
    %5757 = vmatpush1.bf16.msra.mxu0 %v5431
    %5758 = vmatprep.subr.bf16.mxu0 %v5436
    %5759 = vmatpush1.bf16.msra.mxu0 %v5435
    %5760 = vmatprep.subr.bf16.mxu0 %v5440
    %5761 = vmatpush1.bf16.msra.mxu0 %v5439
    %5762 = vmatprep.mubr.bf16.mxu0 %v3170
    %5763 = vmatmul.mubr.bf16.gmra.mrb[0].mxu0 %v3169
    %v5764 = vpop.f32.mrb[0].mxu0
    %v5765 = vadd.f32 %v5724, %v5764
    %v5766 = vpop.f32.mrb[0].mxu0
    %v5767 = vadd.f32 %v5726, %v5766
    %v5768 = vpop.f32.mrb[0].mxu0
    %v5769 = vpop.f32.mrb[0].mxu0
    %5770 = vdwg.mxu0
    %5771 = vmatprep.subr.bf16.mxu0 %v4934
    %5772 = vmatpush1.bf16.msra.mxu0 %v4933
    %5773 = vmatprep.subr.bf16.mxu0 %v4938
    %5774 = vmatpush1.bf16.msra.mxu0 %v4937
    %5775 = vmatprep.subr.bf16.mxu0 %v4942
    %5776 = vmatpush1.bf16.msra.mxu0 %v4941
    %5777 = vmatprep.subr.bf16.mxu0 %v4946
    %5778 = vmatpush1.bf16.msra.mxu0 %v4945
    %5779 = vmatprep.subr.bf16.mxu0 %v4950
    %5780 = vmatpush1.bf16.msra.mxu0 %v4949
    %5781 = vmatprep.subr.bf16.mxu0 %v4954
    %5782 = vmatpush1.bf16.msra.mxu0 %v4953
    %5783 = vmatprep.subr.bf16.mxu0 %v4958
    %5784 = vmatpush1.bf16.msra.mxu0 %v4957
    %5785 = vmatprep.subr.bf16.mxu0 %v4962
    %5786 = vmatpush1.bf16.msra.mxu0 %v4961
    %5787 = vmatprep.subr.bf16.mxu0 %v4966
    %5788 = vmatpush1.bf16.msra.mxu0 %v4965
    %5789 = vmatprep.subr.bf16.mxu0 %v4970
    %5790 = vmatpush1.bf16.msra.mxu0 %v4969
    %5791 = vmatprep.subr.bf16.mxu0 %v4974
    %5792 = vmatpush1.bf16.msra.mxu0 %v4973
    %5793 = vmatprep.subr.bf16.mxu0 %v4978
    %5794 = vmatpush1.bf16.msra.mxu0 %v4977
    %5795 = vmatprep.subr.bf16.mxu0 %v4982
    %5796 = vmatpush1.bf16.msra.mxu0 %v4981
    %5797 = vmatprep.subr.bf16.mxu0 %v4986
    %5798 = vmatpush1.bf16.msra.mxu0 %v4985
    %5799 = vmatprep.subr.bf16.mxu0 %v4990
    %5800 = vmatpush1.bf16.msra.mxu0 %v4989
    %5801 = vmatprep.subr.bf16.mxu0 %v4994
    %5802 = vmatpush1.bf16.msra.mxu0 %v4993
    %5803 = vmatprep.mubr.bf16.mxu0 %v3156
    %5804 = vmatmul.mubr.bf16.gmra.mrb[0].mxu0 %v3155
    %v5805 = vpop.f32.mrb[0].mxu0
    %v5806 = vadd.f32 0.0, %v5805
    %v5807 = vpop.f32.mrb[0].mxu0
    %v5808 = vadd.f32 0.0, %v5807
    %v5809 = vpop.f32.mrb[0].mxu0
    %v5810 = vpop.f32.mrb[0].mxu0
    %5811 = vdwg.mxu0
    %5812 = vmatprep.subr.bf16.mxu0 %v4998
    %5813 = vmatpush1.bf16.msra.mxu0 %v4997
    %5814 = vmatprep.subr.bf16.mxu0 %v5002
    %5815 = vmatpush1.bf16.msra.mxu0 %v5001
    %5816 = vmatprep.subr.bf16.mxu0 %v5006
    %5817 = vmatpush1.bf16.msra.mxu0 %v5005
    %5818 = vmatprep.subr.bf16.mxu0 %v5010
    %5819 = vmatpush1.bf16.msra.mxu0 %v5009
    %5820 = vmatprep.subr.bf16.mxu0 %v5014
    %5821 = vmatpush1.bf16.msra.mxu0 %v5013
    %5822 = vmatprep.subr.bf16.mxu0 %v5018
    %5823 = vmatpush1.bf16.msra.mxu0 %v5017
    %5824 = vmatprep.subr.bf16.mxu0 %v5022
    %5825 = vmatpush1.bf16.msra.mxu0 %v5021
    %5826 = vmatprep.subr.bf16.mxu0 %v5026
    %5827 = vmatpush1.bf16.msra.mxu0 %v5025
    %5828 = vmatprep.subr.bf16.mxu0 %v5030
    %5829 = vmatpush1.bf16.msra.mxu0 %v5029
    %5830 = vmatprep.subr.bf16.mxu0 %v5034
    %5831 = vmatpush1.bf16.msra.mxu0 %v5033
    %5832 = vmatprep.subr.bf16.mxu0 %v5038
    %5833 = vmatpush1.bf16.msra.mxu0 %v5037
    %5834 = vmatprep.subr.bf16.mxu0 %v5042
    %5835 = vmatpush1.bf16.msra.mxu0 %v5041
    %5836 = vmatprep.subr.bf16.mxu0 %v5046
    %5837 = vmatpush1.bf16.msra.mxu0 %v5045
    %5838 = vmatprep.subr.bf16.mxu0 %v5050
    %5839 = vmatpush1.bf16.msra.mxu0 %v5049
    %5840 = vmatprep.subr.bf16.mxu0 %v5054
    %5841 = vmatpush1.bf16.msra.mxu0 %v5053
    %5842 = vmatprep.subr.bf16.mxu0 %v5058
    %5843 = vmatpush1.bf16.msra.mxu0 %v5057
    %5844 = vmatprep.mubr.bf16.mxu0 %v3158
    %5845 = vmatmul.mubr.bf16.gmra.mrb[0].mxu0 %v3157
    %v5846 = vpop.f32.mrb[0].mxu0
    %v5847 = vadd.f32 %v5806, %v5846
    %v5848 = vpop.f32.mrb[0].mxu0
    %v5849 = vadd.f32 %v5808, %v5848
    %v5850 = vpop.f32.mrb[0].mxu0
    %v5851 = vpop.f32.mrb[0].mxu0
    %5852 = vdwg.mxu0
    %5853 = vmatprep.subr.bf16.mxu0 %v5062
    %5854 = vmatpush1.bf16.msra.mxu0 %v5061
    %5855 = vmatprep.subr.bf16.mxu0 %v5066
    %5856 = vmatpush1.bf16.msra.mxu0 %v5065
    %5857 = vmatprep.subr.bf16.mxu0 %v5070
    %5858 = vmatpush1.bf16.msra.mxu0 %v5069
    %5859 = vmatprep.subr.bf16.mxu0 %v5074
    %5860 = vmatpush1.bf16.msra.mxu0 %v5073
    %5861 = vmatprep.subr.bf16.mxu0 %v5078
    %5862 = vmatpush1.bf16.msra.mxu0 %v5077
    %5863 = vmatprep.subr.bf16.mxu0 %v5082
    %5864 = vmatpush1.bf16.msra.mxu0 %v5081
    %5865 = vmatprep.subr.bf16.mxu0 %v5086
    %5866 = vmatpush1.bf16.msra.mxu0 %v5085
    %5867 = vmatprep.subr.bf16.mxu0 %v5090
    %5868 = vmatpush1.bf16.msra.mxu0 %v5089
    %5869 = vmatprep.subr.bf16.mxu0 %v5094
    %5870 = vmatpush1.bf16.msra.mxu0 %v5093
    %5871 = vmatprep.subr.bf16.mxu0 %v5098
    %5872 = vmatpush1.bf16.msra.mxu0 %v5097
    %5873 = vmatprep.subr.bf16.mxu0 %v5102
    %5874 = vmatpush1.bf16.msra.mxu0 %v5101
    %5875 = vmatprep.subr.bf16.mxu0 %v5106
    %5876 = vmatpush1.bf16.msra.mxu0 %v5105
    %5877 = vmatprep.subr.bf16.mxu0 %v5110
    %5878 = vmatpush1.bf16.msra.mxu0 %v5109
    %5879 = vmatprep.subr.bf16.mxu0 %v5114
    %5880 = vmatpush1.bf16.msra.mxu0 %v5113
    %5881 = vmatprep.subr.bf16.mxu0 %v5118
    %5882 = vmatpush1.bf16.msra.mxu0 %v5117
    %5883 = vmatprep.subr.bf16.mxu0 %v5122
    %5884 = vmatpush1.bf16.msra.mxu0 %v5121
    %5885 = vmatprep.mubr.bf16.mxu0 %v3160
    %5886 = vmatmul.mubr.bf16.gmra.mrb[0].mxu0 %v3159
    %v5887 = vpop.f32.mrb[0].mxu0
    %v5888 = vadd.f32 %v5847, %v5887
    %v5889 = vpop.f32.mrb[0].mxu0
    %v5890 = vadd.f32 %v5849, %v5889
    %v5891 = vpop.f32.mrb[0].mxu0
    %v5892 = vpop.f32.mrb[0].mxu0
    %5893 = vdwg.mxu0
    %5894 = vmatprep.subr.bf16.mxu0 %v5126
    %5895 = vmatpush1.bf16.msra.mxu0 %v5125
    %5896 = vmatprep.subr.bf16.mxu0 %v5130
    %5897 = vmatpush1.bf16.msra.mxu0 %v5129
    %5898 = vmatprep.subr.bf16.mxu0 %v5134
    %5899 = vmatpush1.bf16.msra.mxu0 %v5133
    %5900 = vmatprep.subr.bf16.mxu0 %v5138
    %5901 = vmatpush1.bf16.msra.mxu0 %v5137
    %5902 = vmatprep.subr.bf16.mxu0 %v5142
    %5903 = vmatpush1.bf16.msra.mxu0 %v5141
    %5904 = vmatprep.subr.bf16.mxu0 %v5146
    %5905 = vmatpush1.bf16.msra.mxu0 %v5145
    %5906 = vmatprep.subr.bf16.mxu0 %v5150
    %5907 = vmatpush1.bf16.msra.mxu0 %v5149
    %5908 = vmatprep.subr.bf16.mxu0 %v5154
    %5909 = vmatpush1.bf16.msra.mxu0 %v5153
    %5910 = vmatprep.subr.bf16.mxu0 %v5158
    %5911 = vmatpush1.bf16.msra.mxu0 %v5157
    %5912 = vmatprep.subr.bf16.mxu0 %v5162
    %5913 = vmatpush1.bf16.msra.mxu0 %v5161
    %5914 = vmatprep.subr.bf16.mxu0 %v5166
    %5915 = vmatpush1.bf16.msra.mxu0 %v5165
    %5916 = vmatprep.subr.bf16.mxu0 %v5170
    %5917 = vmatpush1.bf16.msra.mxu0 %v5169
    %5918 = vmatprep.subr.bf16.mxu0 %v5174
    %5919 = vmatpush1.bf16.msra.mxu0 %v5173
    %5920 = vmatprep.subr.bf16.mxu0 %v5178
    %5921 = vmatpush1.bf16.msra.mxu0 %v5177
    %5922 = vmatprep.subr.bf16.mxu0 %v5182
    %5923 = vmatpush1.bf16.msra.mxu0 %v5181
    %5924 = vmatprep.subr.bf16.mxu0 %v5186
    %5925 = vmatpush1.bf16.msra.mxu0 %v5185
    %5926 = vmatprep.mubr.bf16.mxu0 %v3162
    %5927 = vmatmul.mubr.bf16.gmra.mrb[0].mxu0 %v3161
    %v5928 = vpop.f32.mrb[0].mxu0
    %v5929 = vadd.f32 %v5888, %v5928
    %v5930 = vpop.f32.mrb[0].mxu0
    %v5931 = vadd.f32 %v5890, %v5930
    %v5932 = vpop.f32.mrb[0].mxu0
    %v5933 = vpop.f32.mrb[0].mxu0
    %5934 = vdwg.mxu0
    %5935 = vmatprep.subr.bf16.mxu0 %v5190
    %5936 = vmatpush1.bf16.msra.mxu0 %v5189
    %5937 = vmatprep.subr.bf16.mxu0 %v5194
    %5938 = vmatpush1.bf16.msra.mxu0 %v5193
    %5939 = vmatprep.subr.bf16.mxu0 %v5198
    %5940 = vmatpush1.bf16.msra.mxu0 %v5197
    %5941 = vmatprep.subr.bf16.mxu0 %v5202
    %5942 = vmatpush1.bf16.msra.mxu0 %v5201
    %5943 = vmatprep.subr.bf16.mxu0 %v5206
    %5944 = vmatpush1.bf16.msra.mxu0 %v5205
    %5945 = vmatprep.subr.bf16.mxu0 %v5210
    %5946 = vmatpush1.bf16.msra.mxu0 %v5209
    %5947 = vmatprep.subr.bf16.mxu0 %v5214
    %5948 = vmatpush1.bf16.msra.mxu0 %v5213
    %5949 = vmatprep.subr.bf16.mxu0 %v5218
    %5950 = vmatpush1.bf16.msra.mxu0 %v5217
    %5951 = vmatprep.subr.bf16.mxu0 %v5222
    %5952 = vmatpush1.bf16.msra.mxu0 %v5221
    %5953 = vmatprep.subr.bf16.mxu0 %v5226
    %5954 = vmatpush1.bf16.msra.mxu0 %v5225
    %5955 = vmatprep.subr.bf16.mxu0 %v5230
    %5956 = vmatpush1.bf16.msra.mxu0 %v5229
    %5957 = vmatprep.subr.bf16.mxu0 %v5234
    %5958 = vmatpush1.bf16.msra.mxu0 %v5233
    %5959 = vmatprep.subr.bf16.mxu0 %v5238
    %5960 = vmatpush1.bf16.msra.mxu0 %v5237
    %5961 = vmatprep.subr.bf16.mxu0 %v5242
    %5962 = vmatpush1.bf16.msra.mxu0 %v5241
    %5963 = vmatprep.subr.bf16.mxu0 %v5246
    %5964 = vmatpush1.bf16.msra.mxu0 %v5245
    %5965 = vmatprep.subr.bf16.mxu0 %v5250
    %5966 = vmatpush1.bf16.msra.mxu0 %v5249
    %5967 = vmatprep.mubr.bf16.mxu0 %v3164
    %5968 = vmatmul.mubr.bf16.gmra.mrb[0].mxu0 %v3163
    %v5969 = vpop.f32.mrb[0].mxu0
    %v5970 = vadd.f32 %v5929, %v5969
    %v5971 = vpop.f32.mrb[0].mxu0
    %v5972 = vadd.f32 %v5931, %v5971
    %v5973 = vpop.f32.mrb[0].mxu0
    %v5974 = vpop.f32.mrb[0].mxu0
    %5975 = vdwg.mxu0
    %5976 = vmatprep.subr.bf16.mxu0 %v5254
    %5977 = vmatpush1.bf16.msra.mxu0 %v5253
    %5978 = vmatprep.subr.bf16.mxu0 %v5258
    %5979 = vmatpush1.bf16.msra.mxu0 %v5257
    %5980 = vmatprep.subr.bf16.mxu0 %v5262
    %5981 = vmatpush1.bf16.msra.mxu0 %v5261
    %5982 = vmatprep.subr.bf16.mxu0 %v5266
    %5983 = vmatpush1.bf16.msra.mxu0 %v5265
    %5984 = vmatprep.subr.bf16.mxu0 %v5270
    %5985 = vmatpush1.bf16.msra.mxu0 %v5269
    %5986 = vmatprep.subr.bf16.mxu0 %v5274
    %5987 = vmatpush1.bf16.msra.mxu0 %v5273
    %5988 = vmatprep.subr.bf16.mxu0 %v5278
    %5989 = vmatpush1.bf16.msra.mxu0 %v5277
    %5990 = vmatprep.subr.bf16.mxu0 %v5282
    %5991 = vmatpush1.bf16.msra.mxu0 %v5281
    %5992 = vmatprep.subr.bf16.mxu0 %v5286
    %5993 = vmatpush1.bf16.msra.mxu0 %v5285
    %5994 = vmatprep.subr.bf16.mxu0 %v5290
    %5995 = vmatpush1.bf16.msra.mxu0 %v5289
    %5996 = vmatprep.subr.bf16.mxu0 %v5294
    %5997 = vmatpush1.bf16.msra.mxu0 %v5293
    %5998 = vmatprep.subr.bf16.mxu0 %v5298
    %5999 = vmatpush1.bf16.msra.mxu0 %v5297
    %6000 = vmatprep.subr.bf16.mxu0 %v5302
    %6001 = vmatpush1.bf16.msra.mxu0 %v5301
    %6002 = vmatprep.subr.bf16.mxu0 %v5306
    %6003 = vmatpush1.bf16.msra.mxu0 %v5305
    %6004 = vmatprep.subr.bf16.mxu0 %v5310
    %6005 = vmatpush1.bf16.msra.mxu0 %v5309
    %6006 = vmatprep.subr.bf16.mxu0 %v5314
    %6007 = vmatpush1.bf16.msra.mxu0 %v5313
    %6008 = vmatprep.mubr.bf16.mxu0 %v3166
    %6009 = vmatmul.mubr.bf16.gmra.mrb[0].mxu0 %v3165
    %v6010 = vpop.f32.mrb[0].mxu0
    %v6011 = vadd.f32 %v5970, %v6010
    %v6012 = vpop.f32.mrb[0].mxu0
    %v6013 = vadd.f32 %v5972, %v6012
    %v6014 = vpop.f32.mrb[0].mxu0
    %v6015 = vpop.f32.mrb[0].mxu0
    %6016 = vdwg.mxu0
    %6017 = vmatprep.subr.bf16.mxu0 %v5318
    %6018 = vmatpush1.bf16.msra.mxu0 %v5317
    %6019 = vmatprep.subr.bf16.mxu0 %v5322
    %6020 = vmatpush1.bf16.msra.mxu0 %v5321
    %6021 = vmatprep.subr.bf16.mxu0 %v5326
    %6022 = vmatpush1.bf16.msra.mxu0 %v5325
    %6023 = vmatprep.subr.bf16.mxu0 %v5330
    %6024 = vmatpush1.bf16.msra.mxu0 %v5329
    %6025 = vmatprep.subr.bf16.mxu0 %v5334
    %6026 = vmatpush1.bf16.msra.mxu0 %v5333
    %6027 = vmatprep.subr.bf16.mxu0 %v5338
    %6028 = vmatpush1.bf16.msra.mxu0 %v5337
    %6029 = vmatprep.subr.bf16.mxu0 %v5342
    %6030 = vmatpush1.bf16.msra.mxu0 %v5341
    %6031 = vmatprep.subr.bf16.mxu0 %v5346
    %6032 = vmatpush1.bf16.msra.mxu0 %v5345
    %6033 = vmatprep.subr.bf16.mxu0 %v5350
    %6034 = vmatpush1.bf16.msra.mxu0 %v5349
    %6035 = vmatprep.subr.bf16.mxu0 %v5354
    %6036 = vmatpush1.bf16.msra.mxu0 %v5353
    %6037 = vmatprep.subr.bf16.mxu0 %v5358
    %6038 = vmatpush1.bf16.msra.mxu0 %v5357
    %6039 = vmatprep.subr.bf16.mxu0 %v5362
    %6040 = vmatpush1.bf16.msra.mxu0 %v5361
    %6041 = vmatprep.subr.bf16.mxu0 %v5366
    %6042 = vmatpush1.bf16.msra.mxu0 %v5365
    %6043 = vmatprep.subr.bf16.mxu0 %v5370
    %6044 = vmatpush1.bf16.msra.mxu0 %v5369
    %6045 = vmatprep.subr.bf16.mxu0 %v5374
    %6046 = vmatpush1.bf16.msra.mxu0 %v5373
    %6047 = vmatprep.subr.bf16.mxu0 %v5378
    %6048 = vmatpush1.bf16.msra.mxu0 %v5377
    %6049 = vmatprep.mubr.bf16.mxu0 %v3168
    %6050 = vmatmul.mubr.bf16.gmra.mrb[0].mxu0 %v3167
    %v6051 = vpop.f32.mrb[0].mxu0
    %v6052 = vadd.f32 %v6011, %v6051
    %v6053 = vpop.f32.mrb[0].mxu0
    %v6054 = vadd.f32 %v6013, %v6053
    %v6055 = vpop.f32.mrb[0].mxu0
    %v6056 = vpop.f32.mrb[0].mxu0
    %6057 = vdwg.mxu0
    %6058 = vmatprep.subr.bf16.mxu0 %v5382
    %6059 = vmatpush1.bf16.msra.mxu0 %v5381
    %6060 = vmatprep.subr.bf16.mxu0 %v5386
    %6061 = vmatpush1.bf16.msra.mxu0 %v5385
    %6062 = vmatprep.subr.bf16.mxu0 %v5390
    %6063 = vmatpush1.bf16.msra.mxu0 %v5389
    %6064 = vmatprep.subr.bf16.mxu0 %v5394
    %6065 = vmatpush1.bf16.msra.mxu0 %v5393
    %6066 = vmatprep.subr.bf16.mxu0 %v5398
    %6067 = vmatpush1.bf16.msra.mxu0 %v5397
    %6068 = vmatprep.subr.bf16.mxu0 %v5402
    %6069 = vmatpush1.bf16.msra.mxu0 %v5401
    %6070 = vmatprep.subr.bf16.mxu0 %v5406
    %6071 = vmatpush1.bf16.msra.mxu0 %v5405
    %6072 = vmatprep.subr.bf16.mxu0 %v5410
    %6073 = vmatpush1.bf16.msra.mxu0 %v5409
    %6074 = vmatprep.subr.bf16.mxu0 %v5414
    %6075 = vmatpush1.bf16.msra.mxu0 %v5413
    %6076 = vmatprep.subr.bf16.mxu0 %v5418
    %6077 = vmatpush1.bf16.msra.mxu0 %v5417
    %6078 = vmatprep.subr.bf16.mxu0 %v5422
    %6079 = vmatpush1.bf16.msra.mxu0 %v5421
    %6080 = vmatprep.subr.bf16.mxu0 %v5426
    %6081 = vmatpush1.bf16.msra.mxu0 %v5425
    %6082 = vmatprep.subr.bf16.mxu0 %v5430
    %6083 = vmatpush1.bf16.msra.mxu0 %v5429
    %6084 = vmatprep.subr.bf16.mxu0 %v5434
    %6085 = vmatpush1.bf16.msra.mxu0 %v5433
    %6086 = vmatprep.subr.bf16.mxu0 %v5438
    %6087 = vmatpush1.bf16.msra.mxu0 %v5437
    %6088 = vmatprep.subr.bf16.mxu0 %v5442
    %6089 = vmatpush1.bf16.msra.mxu0 %v5441
    %6090 = vmatprep.mubr.bf16.mxu0 %v3170
    %6091 = vmatmul.mubr.bf16.gmra.mrb[0].mxu0 %v3169
    %v6092 = vpop.f32.mrb[0].mxu0
    %v6093 = vadd.f32 %v6052, %v6092
    %v6094 = vpop.f32.mrb[0].mxu0
    %v6095 = vadd.f32 %v6054, %v6094
    %v6096 = vpop.f32.mrb[0].mxu0
    %v6097 = vpop.f32.mrb[0].mxu0
    %6098 = vdwg.mxu0
    %v6099 = vld [vmem:[#allocation14 + $0x4] sm:$0xf]
    %v6101 = vlaneseq
    %v6102 = vshrl.u32 %v6101, 7
    %v6103 = vsub.s32 0, %v6102
    %v6104 = vrot.slane %v6099, %v6103
    %v6105 = vlaneseq
    %v6106 = vshrl.u32 %v6105, 7
    %v6107 = vsub.s32 1, %v6106
    %v6108 = vrot.slane %v6099, %v6107
    %v6109 = vlaneseq
    %v6110 = vshrl.u32 %v6109, 7
    %v6111 = vsub.s32 2, %v6110
    %v6112 = vrot.slane %v6099, %v6111
    %v6113 = vlaneseq
    %v6114 = vshrl.u32 %v6113, 7
    %v6115 = vsub.s32 3, %v6114
    %v6116 = vrot.slane %v6099, %v6115
    %v6121 = vmul.f32 %v5765, %v6104
    %v6122 = vmul.f32 %v5767, %v6108
    %v6123 = vmul.f32 %v6093, %v6112
    %v6124 = vmul.f32 %v6095, %v6116
    %v6125 = vld [vmem:[#allocation15 + $0x4] sm:$0xf]
    %v6127 = vlaneseq
    %v6128 = vshrl.u32 %v6127, 7
    %v6129 = vsub.s32 0, %v6128
    %v6130 = vrot.slane %v6125, %v6129
    %v6131 = vlaneseq
    %v6132 = vshrl.u32 %v6131, 7
    %v6133 = vsub.s32 1, %v6132
    %v6134 = vrot.slane %v6125, %v6133
    %v6135 = vlaneseq
    %v6136 = vshrl.u32 %v6135, 7
    %v6137 = vsub.s32 2, %v6136
    %v6138 = vrot.slane %v6125, %v6137
    %v6139 = vlaneseq
    %v6140 = vshrl.u32 %v6139, 7
    %v6141 = vsub.s32 3, %v6140
    %v6142 = vrot.slane %v6125, %v6141
    %v6147 = vadd.f32 %v6121, %v6130
    %v6148 = vadd.f32 %v6122, %v6134
    %v6149 = vadd.f32 %v6123, %v6138
    %v6150 = vadd.f32 %v6124, %v6142
    %v6151 = vmax.f32 %v6147, 0.0
    %v6152 = vmax.f32 %v6148, 0.0
    %v6153 = vmax.f32 %v6149, 0.0
    %v6154 = vmax.f32 %v6150, 0.0
    %6155 = vst [vmem:[#allocation3 + $0x20] sm:$0xff] %v6151
    %6156 = vst [vmem:[#allocation3 + $0x28] sm:$0xff] %v6152
    %6157 = vst [vmem:[#allocation3 + $0x30] sm:$0xff] %v6153
    %6158 = vst [vmem:[#allocation3 + $0x38] sm:$0xff] %v6154
    %v6159 = vld [vmem:[#allocation3] sm:$0xff]
    %v6160 = vld [vmem:[#allocation3 + $0x8] sm:$0xff]
    %v6161 = vld [vmem:[#allocation3 + $0x10] sm:$0xff]
    %v6162 = vld [vmem:[#allocation3 + $0x18] sm:$0xff]
    %v6163 = vld [vmem:[#allocation3 + $0x20] sm:$0xff]
    %v6164 = vld [vmem:[#allocation3 + $0x28] sm:$0xff]
    %v6165 = vld [vmem:[#allocation3 + $0x30] sm:$0xff]
    %v6166 = vld [vmem:[#allocation3 + $0x38] sm:$0xff]
    %v6167 = vpack.c.bf16 %v6159, %v6159
    %v6168 = vpack.c.bf16 %v6160, %v6160
    %v6169 = vpack.c.bf16 %v6161, %v6161
    %v6170 = vpack.c.bf16 %v6162, %v6162
    %v6171 = vpack.c.bf16 %v6163, %v6163
    %v6172 = vpack.c.bf16 %v6164, %v6164
    %v6173 = vpack.c.bf16 %v6165, %v6165
    %v6174 = vpack.c.bf16 %v6166, %v6166
    %s6175 = smul.u32 2, 128
    %s6176 = smul.u32 %s6175, 4
    %s6177 = sshll.u32 %s6176, 4
    %6178 = dma.done %s169, %s6177
    %s6179 = scalar_lea.hbm %s7, 16384
    %s6180 = scalar_lea.vmem [#allocation7], 1024
    %s6181 = scalar_lea.sflag [#allocation8], 5
    // Predicated region
    $region106: #{adversarial_forward.1} parent=1 // pred_check
      _
    $region107: #{adversarial_forward.1} parent=1 // pred_check_branch
      %6183 = sbr.rel target = $region109
    $region108: #{adversarial_forward.1} parent=1 // pred_region
      %6184 = sst [smem:[#allocation27]] [#allocation42]
      %6185 = sst [smem:[#allocation28]] [#allocation41]
    $region109: #{adversarial_forward.1} parent=1 // pred_fallthru
      _
    %6187 = shalt.err (0)
    %s6189 = sshll.u32 %s6180, 4
    %s6190 = int_to_ptr.vmem [resolvable:$true] %s6189
    %6192 = dma.hbm_to_vmem [thread:$0]  %s6179, 16384, %s6190, %s6181
    %v6193 = vld [vmem:[#allocation7] sm:$0xff]
    %v6194 = vld [vmem:[#allocation7 + $0x8] sm:$0xff]
    %v6195 = vld [vmem:[#allocation7 + $0x10] sm:$0xff]
    %v6196 = vld [vmem:[#allocation7 + $0x18] sm:$0xff]
    %v6197 = vld [vmem:[#allocation7 + $0x20] sm:$0xff]
    %v6198 = vld [vmem:[#allocation7 + $0x28] sm:$0xff]
    %v6199 = vld [vmem:[#allocation7 + $0x30] sm:$0xff]
    %v6200 = vld [vmem:[#allocation7 + $0x38] sm:$0xff]
    %v6201 = vld [vmem:[#allocation7 + $0x40] sm:$0xff]
    %v6202 = vld [vmem:[#allocation7 + $0x48] sm:$0xff]
    %v6203 = vld [vmem:[#allocation7 + $0x50] sm:$0xff]
    %v6204 = vld [vmem:[#allocation7 + $0x58] sm:$0xff]
    %v6205 = vld [vmem:[#allocation7 + $0x60] sm:$0xff]
    %v6206 = vld [vmem:[#allocation7 + $0x68] sm:$0xff]
    %v6207 = vld [vmem:[#allocation7 + $0x70] sm:$0xff]
    %v6208 = vld [vmem:[#allocation7 + $0x78] sm:$0xff]
    %v6209 = vld [vmem:[#allocation7 + $0x80] sm:$0xff]
    %v6210 = vld [vmem:[#allocation7 + $0x88] sm:$0xff]
    %v6211 = vld [vmem:[#allocation7 + $0x90] sm:$0xff]
    %v6212 = vld [vmem:[#allocation7 + $0x98] sm:$0xff]
    %v6213 = vld [vmem:[#allocation7 + $0xa0] sm:$0xff]
    %v6214 = vld [vmem:[#allocation7 + $0xa8] sm:$0xff]
    %v6215 = vld [vmem:[#allocation7 + $0xb0] sm:$0xff]
    %v6216 = vld [vmem:[#allocation7 + $0xb8] sm:$0xff]
    %v6217 = vld [vmem:[#allocation7 + $0xc0] sm:$0xff]
    %v6218 = vld [vmem:[#allocation7 + $0xc8] sm:$0xff]
    %v6219 = vld [vmem:[#allocation7 + $0xd0] sm:$0xff]
    %v6220 = vld [vmem:[#allocation7 + $0xd8] sm:$0xff]
    %v6221 = vld [vmem:[#allocation7 + $0xe0] sm:$0xff]
    %v6222 = vld [vmem:[#allocation7 + $0xe8] sm:$0xff]
    %v6223 = vld [vmem:[#allocation7 + $0xf0] sm:$0xff]
    %v6224 = vld [vmem:[#allocation7 + $0xf8] sm:$0xff]
    %v6225 = vld [vmem:[#allocation7 + $0x100] sm:$0xff]
    %v6226 = vld [vmem:[#allocation7 + $0x108] sm:$0xff]
    %v6227 = vld [vmem:[#allocation7 + $0x110] sm:$0xff]
    %v6228 = vld [vmem:[#allocation7 + $0x118] sm:$0xff]
    %v6229 = vld [vmem:[#allocation7 + $0x120] sm:$0xff]
    %v6230 = vld [vmem:[#allocation7 + $0x128] sm:$0xff]
    %v6231 = vld [vmem:[#allocation7 + $0x130] sm:$0xff]
    %v6232 = vld [vmem:[#allocation7 + $0x138] sm:$0xff]
    %v6233 = vld [vmem:[#allocation7 + $0x140] sm:$0xff]
    %v6234 = vld [vmem:[#allocation7 + $0x148] sm:$0xff]
    %v6235 = vld [vmem:[#allocation7 + $0x150] sm:$0xff]
    %v6236 = vld [vmem:[#allocation7 + $0x158] sm:$0xff]
    %v6237 = vld [vmem:[#allocation7 + $0x160] sm:$0xff]
    %v6238 = vld [vmem:[#allocation7 + $0x168] sm:$0xff]
    %v6239 = vld [vmem:[#allocation7 + $0x170] sm:$0xff]
    %v6240 = vld [vmem:[#allocation7 + $0x178] sm:$0xff]
    %v6241 = vld [vmem:[#allocation7 + $0x180] sm:$0xff]
    %v6242 = vld [vmem:[#allocation7 + $0x188] sm:$0xff]
    %v6243 = vld [vmem:[#allocation7 + $0x190] sm:$0xff]
    %v6244 = vld [vmem:[#allocation7 + $0x198] sm:$0xff]
    %v6245 = vld [vmem:[#allocation7 + $0x1a0] sm:$0xff]
    %v6246 = vld [vmem:[#allocation7 + $0x1a8] sm:$0xff]
    %v6247 = vld [vmem:[#allocation7 + $0x1b0] sm:$0xff]
    %v6248 = vld [vmem:[#allocation7 + $0x1b8] sm:$0xff]
    %v6249 = vld [vmem:[#allocation7 + $0x1c0] sm:$0xff]
    %v6250 = vld [vmem:[#allocation7 + $0x1c8] sm:$0xff]
    %v6251 = vld [vmem:[#allocation7 + $0x1d0] sm:$0xff]
    %v6252 = vld [vmem:[#allocation7 + $0x1d8] sm:$0xff]
    %v6253 = vld [vmem:[#allocation7 + $0x1e0] sm:$0xff]
    %v6254 = vld [vmem:[#allocation7 + $0x1e8] sm:$0xff]
    %v6255 = vld [vmem:[#allocation7 + $0x1f0] sm:$0xff]
    %v6256 = vld [vmem:[#allocation7 + $0x1f8] sm:$0xff]
    %v6257 = vld [vmem:[#allocation7 + $0x200] sm:$0xff]
    %v6258 = vld [vmem:[#allocation7 + $0x208] sm:$0xff]
    %v6259 = vld [vmem:[#allocation7 + $0x210] sm:$0xff]
    %v6260 = vld [vmem:[#allocation7 + $0x218] sm:$0xff]
    %v6261 = vld [vmem:[#allocation7 + $0x220] sm:$0xff]
    %v6262 = vld [vmem:[#allocation7 + $0x228] sm:$0xff]
    %v6263 = vld [vmem:[#allocation7 + $0x230] sm:$0xff]
    %v6264 = vld [vmem:[#allocation7 + $0x238] sm:$0xff]
    %v6265 = vld [vmem:[#allocation7 + $0x240] sm:$0xff]
    %v6266 = vld [vmem:[#allocation7 + $0x248] sm:$0xff]
    %v6267 = vld [vmem:[#allocation7 + $0x250] sm:$0xff]
    %v6268 = vld [vmem:[#allocation7 + $0x258] sm:$0xff]
    %v6269 = vld [vmem:[#allocation7 + $0x260] sm:$0xff]
    %v6270 = vld [vmem:[#allocation7 + $0x268] sm:$0xff]
    %v6271 = vld [vmem:[#allocation7 + $0x270] sm:$0xff]
    %v6272 = vld [vmem:[#allocation7 + $0x278] sm:$0xff]
    %v6273 = vld [vmem:[#allocation7 + $0x280] sm:$0xff]
    %v6274 = vld [vmem:[#allocation7 + $0x288] sm:$0xff]
    %v6275 = vld [vmem:[#allocation7 + $0x290] sm:$0xff]
    %v6276 = vld [vmem:[#allocation7 + $0x298] sm:$0xff]
    %v6277 = vld [vmem:[#allocation7 + $0x2a0] sm:$0xff]
    %v6278 = vld [vmem:[#allocation7 + $0x2a8] sm:$0xff]
    %v6279 = vld [vmem:[#allocation7 + $0x2b0] sm:$0xff]
    %v6280 = vld [vmem:[#allocation7 + $0x2b8] sm:$0xff]
    %v6281 = vld [vmem:[#allocation7 + $0x2c0] sm:$0xff]
    %v6282 = vld [vmem:[#allocation7 + $0x2c8] sm:$0xff]
    %v6283 = vld [vmem:[#allocation7 + $0x2d0] sm:$0xff]
    %v6284 = vld [vmem:[#allocation7 + $0x2d8] sm:$0xff]
    %v6285 = vld [vmem:[#allocation7 + $0x2e0] sm:$0xff]
    %v6286 = vld [vmem:[#allocation7 + $0x2e8] sm:$0xff]
    %v6287 = vld [vmem:[#allocation7 + $0x2f0] sm:$0xff]
    %v6288 = vld [vmem:[#allocation7 + $0x2f8] sm:$0xff]
    %v6289 = vld [vmem:[#allocation7 + $0x300] sm:$0xff]
    %v6290 = vld [vmem:[#allocation7 + $0x308] sm:$0xff]
    %v6291 = vld [vmem:[#allocation7 + $0x310] sm:$0xff]
    %v6292 = vld [vmem:[#allocation7 + $0x318] sm:$0xff]
    %v6293 = vld [vmem:[#allocation7 + $0x320] sm:$0xff]
    %v6294 = vld [vmem:[#allocation7 + $0x328] sm:$0xff]
    %v6295 = vld [vmem:[#allocation7 + $0x330] sm:$0xff]
    %v6296 = vld [vmem:[#allocation7 + $0x338] sm:$0xff]
    %v6297 = vld [vmem:[#allocation7 + $0x340] sm:$0xff]
    %v6298 = vld [vmem:[#allocation7 + $0x348] sm:$0xff]
    %v6299 = vld [vmem:[#allocation7 + $0x350] sm:$0xff]
    %v6300 = vld [vmem:[#allocation7 + $0x358] sm:$0xff]
    %v6301 = vld [vmem:[#allocation7 + $0x360] sm:$0xff]
    %v6302 = vld [vmem:[#allocation7 + $0x368] sm:$0xff]
    %v6303 = vld [vmem:[#allocation7 + $0x370] sm:$0xff]
    %v6304 = vld [vmem:[#allocation7 + $0x378] sm:$0xff]
    %v6305 = vld [vmem:[#allocation7 + $0x380] sm:$0xff]
    %v6306 = vld [vmem:[#allocation7 + $0x388] sm:$0xff]
    %v6307 = vld [vmem:[#allocation7 + $0x390] sm:$0xff]
    %v6308 = vld [vmem:[#allocation7 + $0x398] sm:$0xff]
    %v6309 = vld [vmem:[#allocation7 + $0x3a0] sm:$0xff]
    %v6310 = vld [vmem:[#allocation7 + $0x3a8] sm:$0xff]
    %v6311 = vld [vmem:[#allocation7 + $0x3b0] sm:$0xff]
    %v6312 = vld [vmem:[#allocation7 + $0x3b8] sm:$0xff]
    %v6313 = vld [vmem:[#allocation7 + $0x3c0] sm:$0xff]
    %v6314 = vld [vmem:[#allocation7 + $0x3c8] sm:$0xff]
    %v6315 = vld [vmem:[#allocation7 + $0x3d0] sm:$0xff]
    %v6316 = vld [vmem:[#allocation7 + $0x3d8] sm:$0xff]
    %v6317 = vld [vmem:[#allocation7 + $0x3e0] sm:$0xff]
    %v6318 = vld [vmem:[#allocation7 + $0x3e8] sm:$0xff]
    %v6319 = vld [vmem:[#allocation7 + $0x3f0] sm:$0xff]
    %v6320 = vld [vmem:[#allocation7 + $0x3f8] sm:$0xff]
    %v6321 = vunpack.c.l.s8.bf16 %v6193
    %v6322 = vunpack.c.l.s8.bf16 %v6194
    %v6323 = vunpack.c.l.s8.bf16 %v6195
    %v6324 = vunpack.c.l.s8.bf16 %v6196
    %v6325 = vunpack.c.h.s8.bf16 %v6193
    %v6326 = vunpack.c.h.s8.bf16 %v6194
    %v6327 = vunpack.c.h.s8.bf16 %v6195
    %v6328 = vunpack.c.h.s8.bf16 %v6196
    %v6329 = vunpack.c.l.s8.bf16 %v6197
    %v6330 = vunpack.c.l.s8.bf16 %v6198
    %v6331 = vunpack.c.l.s8.bf16 %v6199
    %v6332 = vunpack.c.l.s8.bf16 %v6200
    %v6333 = vunpack.c.h.s8.bf16 %v6197
    %v6334 = vunpack.c.h.s8.bf16 %v6198
    %v6335 = vunpack.c.h.s8.bf16 %v6199
    %v6336 = vunpack.c.h.s8.bf16 %v6200
    %v6337 = vunpack.c.l.s8.bf16 %v6201
    %v6338 = vunpack.c.l.s8.bf16 %v6202
    %v6339 = vunpack.c.l.s8.bf16 %v6203
    %v6340 = vunpack.c.l.s8.bf16 %v6204
    %v6341 = vunpack.c.h.s8.bf16 %v6201
    %v6342 = vunpack.c.h.s8.bf16 %v6202
    %v6343 = vunpack.c.h.s8.bf16 %v6203
    %v6344 = vunpack.c.h.s8.bf16 %v6204
    %v6345 = vunpack.c.l.s8.bf16 %v6205
    %v6346 = vunpack.c.l.s8.bf16 %v6206
    %v6347 = vunpack.c.l.s8.bf16 %v6207
    %v6348 = vunpack.c.l.s8.bf16 %v6208
    %v6349 = vunpack.c.h.s8.bf16 %v6205
    %v6350 = vunpack.c.h.s8.bf16 %v6206
    %v6351 = vunpack.c.h.s8.bf16 %v6207
    %v6352 = vunpack.c.h.s8.bf16 %v6208
    %v6353 = vunpack.c.l.s8.bf16 %v6209
    %v6354 = vunpack.c.l.s8.bf16 %v6210
    %v6355 = vunpack.c.l.s8.bf16 %v6211
    %v6356 = vunpack.c.l.s8.bf16 %v6212
    %v6357 = vunpack.c.h.s8.bf16 %v6209
    %v6358 = vunpack.c.h.s8.bf16 %v6210
    %v6359 = vunpack.c.h.s8.bf16 %v6211
    %v6360 = vunpack.c.h.s8.bf16 %v6212
    %v6361 = vunpack.c.l.s8.bf16 %v6213
    %v6362 = vunpack.c.l.s8.bf16 %v6214
    %v6363 = vunpack.c.l.s8.bf16 %v6215
    %v6364 = vunpack.c.l.s8.bf16 %v6216
    %v6365 = vunpack.c.h.s8.bf16 %v6213
    %v6366 = vunpack.c.h.s8.bf16 %v6214
    %v6367 = vunpack.c.h.s8.bf16 %v6215
    %v6368 = vunpack.c.h.s8.bf16 %v6216
    %v6369 = vunpack.c.l.s8.bf16 %v6217
    %v6370 = vunpack.c.l.s8.bf16 %v6218
    %v6371 = vunpack.c.l.s8.bf16 %v6219
    %v6372 = vunpack.c.l.s8.bf16 %v6220
    %v6373 = vunpack.c.h.s8.bf16 %v6217
    %v6374 = vunpack.c.h.s8.bf16 %v6218
    %v6375 = vunpack.c.h.s8.bf16 %v6219
    %v6376 = vunpack.c.h.s8.bf16 %v6220
    %v6377 = vunpack.c.l.s8.bf16 %v6221
    %v6378 = vunpack.c.l.s8.bf16 %v6222
    %v6379 = vunpack.c.l.s8.bf16 %v6223
    %v6380 = vunpack.c.l.s8.bf16 %v6224
    %v6381 = vunpack.c.h.s8.bf16 %v6221
    %v6382 = vunpack.c.h.s8.bf16 %v6222
    %v6383 = vunpack.c.h.s8.bf16 %v6223
    %v6384 = vunpack.c.h.s8.bf16 %v6224
    %v6385 = vunpack.c.l.s8.bf16 %v6225
    %v6386 = vunpack.c.l.s8.bf16 %v6226
    %v6387 = vunpack.c.l.s8.bf16 %v6227
    %v6388 = vunpack.c.l.s8.bf16 %v6228
    %v6389 = vunpack.c.h.s8.bf16 %v6225
    %v6390 = vunpack.c.h.s8.bf16 %v6226
    %v6391 = vunpack.c.h.s8.bf16 %v6227
    %v6392 = vunpack.c.h.s8.bf16 %v6228
    %v6393 = vunpack.c.l.s8.bf16 %v6229
    %v6394 = vunpack.c.l.s8.bf16 %v6230
    %v6395 = vunpack.c.l.s8.bf16 %v6231
    %v6396 = vunpack.c.l.s8.bf16 %v6232
    %v6397 = vunpack.c.h.s8.bf16 %v6229
    %v6398 = vunpack.c.h.s8.bf16 %v6230
    %v6399 = vunpack.c.h.s8.bf16 %v6231
    %v6400 = vunpack.c.h.s8.bf16 %v6232
    %v6401 = vunpack.c.l.s8.bf16 %v6233
    %v6402 = vunpack.c.l.s8.bf16 %v6234
    %v6403 = vunpack.c.l.s8.bf16 %v6235
    %v6404 = vunpack.c.l.s8.bf16 %v6236
    %v6405 = vunpack.c.h.s8.bf16 %v6233
    %v6406 = vunpack.c.h.s8.bf16 %v6234
    %v6407 = vunpack.c.h.s8.bf16 %v6235
    %v6408 = vunpack.c.h.s8.bf16 %v6236
    %v6409 = vunpack.c.l.s8.bf16 %v6237
    %v6410 = vunpack.c.l.s8.bf16 %v6238
    %v6411 = vunpack.c.l.s8.bf16 %v6239
    %v6412 = vunpack.c.l.s8.bf16 %v6240
    %v6413 = vunpack.c.h.s8.bf16 %v6237
    %v6414 = vunpack.c.h.s8.bf16 %v6238
    %v6415 = vunpack.c.h.s8.bf16 %v6239
    %v6416 = vunpack.c.h.s8.bf16 %v6240
    %v6417 = vunpack.c.l.s8.bf16 %v6241
    %v6418 = vunpack.c.l.s8.bf16 %v6242
    %v6419 = vunpack.c.l.s8.bf16 %v6243
    %v6420 = vunpack.c.l.s8.bf16 %v6244
    %v6421 = vunpack.c.h.s8.bf16 %v6241
    %v6422 = vunpack.c.h.s8.bf16 %v6242
    %v6423 = vunpack.c.h.s8.bf16 %v6243
    %v6424 = vunpack.c.h.s8.bf16 %v6244
    %v6425 = vunpack.c.l.s8.bf16 %v6245
    %v6426 = vunpack.c.l.s8.bf16 %v6246
    %v6427 = vunpack.c.l.s8.bf16 %v6247
    %v6428 = vunpack.c.l.s8.bf16 %v6248
    %v6429 = vunpack.c.h.s8.bf16 %v6245
    %v6430 = vunpack.c.h.s8.bf16 %v6246
    %v6431 = vunpack.c.h.s8.bf16 %v6247
    %v6432 = vunpack.c.h.s8.bf16 %v6248
    %v6433 = vunpack.c.l.s8.bf16 %v6249
    %v6434 = vunpack.c.l.s8.bf16 %v6250
    %v6435 = vunpack.c.l.s8.bf16 %v6251
    %v6436 = vunpack.c.l.s8.bf16 %v6252
    %v6437 = vunpack.c.h.s8.bf16 %v6249
    %v6438 = vunpack.c.h.s8.bf16 %v6250
    %v6439 = vunpack.c.h.s8.bf16 %v6251
    %v6440 = vunpack.c.h.s8.bf16 %v6252
    %v6441 = vunpack.c.l.s8.bf16 %v6253
    %v6442 = vunpack.c.l.s8.bf16 %v6254
    %v6443 = vunpack.c.l.s8.bf16 %v6255
    %v6444 = vunpack.c.l.s8.bf16 %v6256
    %v6445 = vunpack.c.h.s8.bf16 %v6253
    %v6446 = vunpack.c.h.s8.bf16 %v6254
    %v6447 = vunpack.c.h.s8.bf16 %v6255
    %v6448 = vunpack.c.h.s8.bf16 %v6256
    %v6449 = vunpack.c.l.s8.bf16 %v6257
    %v6450 = vunpack.c.l.s8.bf16 %v6258
    %v6451 = vunpack.c.l.s8.bf16 %v6259
    %v6452 = vunpack.c.l.s8.bf16 %v6260
    %v6453 = vunpack.c.h.s8.bf16 %v6257
    %v6454 = vunpack.c.h.s8.bf16 %v6258
    %v6455 = vunpack.c.h.s8.bf16 %v6259
    %v6456 = vunpack.c.h.s8.bf16 %v6260
    %v6457 = vunpack.c.l.s8.bf16 %v6261
    %v6458 = vunpack.c.l.s8.bf16 %v6262
    %v6459 = vunpack.c.l.s8.bf16 %v6263
    %v6460 = vunpack.c.l.s8.bf16 %v6264
    %v6461 = vunpack.c.h.s8.bf16 %v6261
    %v6462 = vunpack.c.h.s8.bf16 %v6262
    %v6463 = vunpack.c.h.s8.bf16 %v6263
    %v6464 = vunpack.c.h.s8.bf16 %v6264
    %v6465 = vunpack.c.l.s8.bf16 %v6265
    %v6466 = vunpack.c.l.s8.bf16 %v6266
    %v6467 = vunpack.c.l.s8.bf16 %v6267
    %v6468 = vunpack.c.l.s8.bf16 %v6268
    %v6469 = vunpack.c.h.s8.bf16 %v6265
    %v6470 = vunpack.c.h.s8.bf16 %v6266
    %v6471 = vunpack.c.h.s8.bf16 %v6267
    %v6472 = vunpack.c.h.s8.bf16 %v6268
    %v6473 = vunpack.c.l.s8.bf16 %v6269
    %v6474 = vunpack.c.l.s8.bf16 %v6270
    %v6475 = vunpack.c.l.s8.bf16 %v6271
    %v6476 = vunpack.c.l.s8.bf16 %v6272
    %v6477 = vunpack.c.h.s8.bf16 %v6269
    %v6478 = vunpack.c.h.s8.bf16 %v6270
    %v6479 = vunpack.c.h.s8.bf16 %v6271
    %v6480 = vunpack.c.h.s8.bf16 %v6272
    %v6481 = vunpack.c.l.s8.bf16 %v6273
    %v6482 = vunpack.c.l.s8.bf16 %v6274
    %v6483 = vunpack.c.l.s8.bf16 %v6275
    %v6484 = vunpack.c.l.s8.bf16 %v6276
    %v6485 = vunpack.c.h.s8.bf16 %v6273
    %v6486 = vunpack.c.h.s8.bf16 %v6274
    %v6487 = vunpack.c.h.s8.bf16 %v6275
    %v6488 = vunpack.c.h.s8.bf16 %v6276
    %v6489 = vunpack.c.l.s8.bf16 %v6277
    %v6490 = vunpack.c.l.s8.bf16 %v6278
    %v6491 = vunpack.c.l.s8.bf16 %v6279
    %v6492 = vunpack.c.l.s8.bf16 %v6280
    %v6493 = vunpack.c.h.s8.bf16 %v6277
    %v6494 = vunpack.c.h.s8.bf16 %v6278
    %v6495 = vunpack.c.h.s8.bf16 %v6279
    %v6496 = vunpack.c.h.s8.bf16 %v6280
    %v6497 = vunpack.c.l.s8.bf16 %v6281
    %v6498 = vunpack.c.l.s8.bf16 %v6282
    %v6499 = vunpack.c.l.s8.bf16 %v6283
    %v6500 = vunpack.c.l.s8.bf16 %v6284
    %v6501 = vunpack.c.h.s8.bf16 %v6281
    %v6502 = vunpack.c.h.s8.bf16 %v6282
    %v6503 = vunpack.c.h.s8.bf16 %v6283
    %v6504 = vunpack.c.h.s8.bf16 %v6284
    %v6505 = vunpack.c.l.s8.bf16 %v6285
    %v6506 = vunpack.c.l.s8.bf16 %v6286
    %v6507 = vunpack.c.l.s8.bf16 %v6287
    %v6508 = vunpack.c.l.s8.bf16 %v6288
    %v6509 = vunpack.c.h.s8.bf16 %v6285
    %v6510 = vunpack.c.h.s8.bf16 %v6286
    %v6511 = vunpack.c.h.s8.bf16 %v6287
    %v6512 = vunpack.c.h.s8.bf16 %v6288
    %v6513 = vunpack.c.l.s8.bf16 %v6289
    %v6514 = vunpack.c.l.s8.bf16 %v6290
    %v6515 = vunpack.c.l.s8.bf16 %v6291
    %v6516 = vunpack.c.l.s8.bf16 %v6292
    %v6517 = vunpack.c.h.s8.bf16 %v6289
    %v6518 = vunpack.c.h.s8.bf16 %v6290
    %v6519 = vunpack.c.h.s8.bf16 %v6291
    %v6520 = vunpack.c.h.s8.bf16 %v6292
    %v6521 = vunpack.c.l.s8.bf16 %v6293
    %v6522 = vunpack.c.l.s8.bf16 %v6294
    %v6523 = vunpack.c.l.s8.bf16 %v6295
    %v6524 = vunpack.c.l.s8.bf16 %v6296
    %v6525 = vunpack.c.h.s8.bf16 %v6293
    %v6526 = vunpack.c.h.s8.bf16 %v6294
    %v6527 = vunpack.c.h.s8.bf16 %v6295
    %v6528 = vunpack.c.h.s8.bf16 %v6296
    %v6529 = vunpack.c.l.s8.bf16 %v6297
    %v6530 = vunpack.c.l.s8.bf16 %v6298
    %v6531 = vunpack.c.l.s8.bf16 %v6299
    %v6532 = vunpack.c.l.s8.bf16 %v6300
    %v6533 = vunpack.c.h.s8.bf16 %v6297
    %v6534 = vunpack.c.h.s8.bf16 %v6298
    %v6535 = vunpack.c.h.s8.bf16 %v6299
    %v6536 = vunpack.c.h.s8.bf16 %v6300
    %v6537 = vunpack.c.l.s8.bf16 %v6301
    %v6538 = vunpack.c.l.s8.bf16 %v6302
    %v6539 = vunpack.c.l.s8.bf16 %v6303
    %v6540 = vunpack.c.l.s8.bf16 %v6304
    %v6541 = vunpack.c.h.s8.bf16 %v6301
    %v6542 = vunpack.c.h.s8.bf16 %v6302
    %v6543 = vunpack.c.h.s8.bf16 %v6303
    %v6544 = vunpack.c.h.s8.bf16 %v6304
    %v6545 = vunpack.c.l.s8.bf16 %v6305
    %v6546 = vunpack.c.l.s8.bf16 %v6306
    %v6547 = vunpack.c.l.s8.bf16 %v6307
    %v6548 = vunpack.c.l.s8.bf16 %v6308
    %v6549 = vunpack.c.h.s8.bf16 %v6305
    %v6550 = vunpack.c.h.s8.bf16 %v6306
    %v6551 = vunpack.c.h.s8.bf16 %v6307
    %v6552 = vunpack.c.h.s8.bf16 %v6308
    %v6553 = vunpack.c.l.s8.bf16 %v6309
    %v6554 = vunpack.c.l.s8.bf16 %v6310
    %v6555 = vunpack.c.l.s8.bf16 %v6311
    %v6556 = vunpack.c.l.s8.bf16 %v6312
    %v6557 = vunpack.c.h.s8.bf16 %v6309
    %v6558 = vunpack.c.h.s8.bf16 %v6310
    %v6559 = vunpack.c.h.s8.bf16 %v6311
    %v6560 = vunpack.c.h.s8.bf16 %v6312
    %v6561 = vunpack.c.l.s8.bf16 %v6313
    %v6562 = vunpack.c.l.s8.bf16 %v6314
    %v6563 = vunpack.c.l.s8.bf16 %v6315
    %v6564 = vunpack.c.l.s8.bf16 %v6316
    %v6565 = vunpack.c.h.s8.bf16 %v6313
    %v6566 = vunpack.c.h.s8.bf16 %v6314
    %v6567 = vunpack.c.h.s8.bf16 %v6315
    %v6568 = vunpack.c.h.s8.bf16 %v6316
    %v6569 = vunpack.c.l.s8.bf16 %v6317
    %v6570 = vunpack.c.l.s8.bf16 %v6318
    %v6571 = vunpack.c.l.s8.bf16 %v6319
    %v6572 = vunpack.c.l.s8.bf16 %v6320
    %v6573 = vunpack.c.h.s8.bf16 %v6317
    %v6574 = vunpack.c.h.s8.bf16 %v6318
    %v6575 = vunpack.c.h.s8.bf16 %v6319
    %v6576 = vunpack.c.h.s8.bf16 %v6320
    %6577 = vmatprep.subr.bf16.mxu0 %v6322
    %6578 = vmatpush1.bf16.msra.mxu0 %v6321
    %6579 = vmatprep.subr.bf16.mxu0 %v6326
    %6580 = vmatpush1.bf16.msra.mxu0 %v6325
    %6581 = vmatprep.subr.bf16.mxu0 %v6330
    %6582 = vmatpush1.bf16.msra.mxu0 %v6329
    %6583 = vmatprep.subr.bf16.mxu0 %v6334
    %6584 = vmatpush1.bf16.msra.mxu0 %v6333
    %6585 = vmatprep.subr.bf16.mxu0 %v6338
    %6586 = vmatpush1.bf16.msra.mxu0 %v6337
    %6587 = vmatprep.subr.bf16.mxu0 %v6342
    %6588 = vmatpush1.bf16.msra.mxu0 %v6341
    %6589 = vmatprep.subr.bf16.mxu0 %v6346
    %6590 = vmatpush1.bf16.msra.mxu0 %v6345
    %6591 = vmatprep.subr.bf16.mxu0 %v6350
    %6592 = vmatpush1.bf16.msra.mxu0 %v6349
    %6593 = vmatprep.subr.bf16.mxu0 %v6354
    %6594 = vmatpush1.bf16.msra.mxu0 %v6353
    %6595 = vmatprep.subr.bf16.mxu0 %v6358
    %6596 = vmatpush1.bf16.msra.mxu0 %v6357
    %6597 = vmatprep.subr.bf16.mxu0 %v6362
    %6598 = vmatpush1.bf16.msra.mxu0 %v6361
    %6599 = vmatprep.subr.bf16.mxu0 %v6366
    %6600 = vmatpush1.bf16.msra.mxu0 %v6365
    %6601 = vmatprep.subr.bf16.mxu0 %v6370
    %6602 = vmatpush1.bf16.msra.mxu0 %v6369
    %6603 = vmatprep.subr.bf16.mxu0 %v6374
    %6604 = vmatpush1.bf16.msra.mxu0 %v6373
    %6605 = vmatprep.subr.bf16.mxu0 %v6378
    %6606 = vmatpush1.bf16.msra.mxu0 %v6377
    %6607 = vmatprep.subr.bf16.mxu0 %v6382
    %6608 = vmatpush1.bf16.msra.mxu0 %v6381
    %6609 = vmatprep.mubr.bf16.mxu0 %v6168
    %6610 = vmatmul.mubr.bf16.gmra.mrb[0].mxu0 %v6167
    %v6611 = vpop.f32.mrb[0].mxu0
    %v6612 = vadd.f32 0.0, %v6611
    %v6613 = vpop.f32.mrb[0].mxu0
    %v6614 = vadd.f32 0.0, %v6613
    %v6615 = vpop.f32.mrb[0].mxu0
    %v6616 = vpop.f32.mrb[0].mxu0
    %6617 = vdwg.mxu0
    %6618 = vmatprep.subr.bf16.mxu0 %v6386
    %6619 = vmatpush1.bf16.msra.mxu0 %v6385
    %6620 = vmatprep.subr.bf16.mxu0 %v6390
    %6621 = vmatpush1.bf16.msra.mxu0 %v6389
    %6622 = vmatprep.subr.bf16.mxu0 %v6394
    %6623 = vmatpush1.bf16.msra.mxu0 %v6393
    %6624 = vmatprep.subr.bf16.mxu0 %v6398
    %6625 = vmatpush1.bf16.msra.mxu0 %v6397
    %6626 = vmatprep.subr.bf16.mxu0 %v6402
    %6627 = vmatpush1.bf16.msra.mxu0 %v6401
    %6628 = vmatprep.subr.bf16.mxu0 %v6406
    %6629 = vmatpush1.bf16.msra.mxu0 %v6405
    %6630 = vmatprep.subr.bf16.mxu0 %v6410
    %6631 = vmatpush1.bf16.msra.mxu0 %v6409
    %6632 = vmatprep.subr.bf16.mxu0 %v6414
    %6633 = vmatpush1.bf16.msra.mxu0 %v6413
    %6634 = vmatprep.subr.bf16.mxu0 %v6418
    %6635 = vmatpush1.bf16.msra.mxu0 %v6417
    %6636 = vmatprep.subr.bf16.mxu0 %v6422
    %6637 = vmatpush1.bf16.msra.mxu0 %v6421
    %6638 = vmatprep.subr.bf16.mxu0 %v6426
    %6639 = vmatpush1.bf16.msra.mxu0 %v6425
    %6640 = vmatprep.subr.bf16.mxu0 %v6430
    %6641 = vmatpush1.bf16.msra.mxu0 %v6429
    %6642 = vmatprep.subr.bf16.mxu0 %v6434
    %6643 = vmatpush1.bf16.msra.mxu0 %v6433
    %6644 = vmatprep.subr.bf16.mxu0 %v6438
    %6645 = vmatpush1.bf16.msra.mxu0 %v6437
    %6646 = vmatprep.subr.bf16.mxu0 %v6442
    %6647 = vmatpush1.bf16.msra.mxu0 %v6441
    %6648 = vmatprep.subr.bf16.mxu0 %v6446
    %6649 = vmatpush1.bf16.msra.mxu0 %v6445
    %6650 = vmatprep.mubr.bf16.mxu0 %v6170
    %6651 = vmatmul.mubr.bf16.gmra.mrb[0].mxu0 %v6169
    %v6652 = vpop.f32.mrb[0].mxu0
    %v6653 = vadd.f32 %v6612, %v6652
    %v6654 = vpop.f32.mrb[0].mxu0
    %v6655 = vadd.f32 %v6614, %v6654
    %v6656 = vpop.f32.mrb[0].mxu0
    %v6657 = vpop.f32.mrb[0].mxu0
    %6658 = vdwg.mxu0
    %6659 = vmatprep.subr.bf16.mxu0 %v6450
    %6660 = vmatpush1.bf16.msra.mxu0 %v6449
    %6661 = vmatprep.subr.bf16.mxu0 %v6454
    %6662 = vmatpush1.bf16.msra.mxu0 %v6453
    %6663 = vmatprep.subr.bf16.mxu0 %v6458
    %6664 = vmatpush1.bf16.msra.mxu0 %v6457
    %6665 = vmatprep.subr.bf16.mxu0 %v6462
    %6666 = vmatpush1.bf16.msra.mxu0 %v6461
    %6667 = vmatprep.subr.bf16.mxu0 %v6466
    %6668 = vmatpush1.bf16.msra.mxu0 %v6465
    %6669 = vmatprep.subr.bf16.mxu0 %v6470
    %6670 = vmatpush1.bf16.msra.mxu0 %v6469
    %6671 = vmatprep.subr.bf16.mxu0 %v6474
    %6672 = vmatpush1.bf16.msra.mxu0 %v6473
    %6673 = vmatprep.subr.bf16.mxu0 %v6478
    %6674 = vmatpush1.bf16.msra.mxu0 %v6477
    %6675 = vmatprep.subr.bf16.mxu0 %v6482
    %6676 = vmatpush1.bf16.msra.mxu0 %v6481
    %6677 = vmatprep.subr.bf16.mxu0 %v6486
    %6678 = vmatpush1.bf16.msra.mxu0 %v6485
    %6679 = vmatprep.subr.bf16.mxu0 %v6490
    %6680 = vmatpush1.bf16.msra.mxu0 %v6489
    %6681 = vmatprep.subr.bf16.mxu0 %v6494
    %6682 = vmatpush1.bf16.msra.mxu0 %v6493
    %6683 = vmatprep.subr.bf16.mxu0 %v6498
    %6684 = vmatpush1.bf16.msra.mxu0 %v6497
    %6685 = vmatprep.subr.bf16.mxu0 %v6502
    %6686 = vmatpush1.bf16.msra.mxu0 %v6501
    %6687 = vmatprep.subr.bf16.mxu0 %v6506
    %6688 = vmatpush1.bf16.msra.mxu0 %v6505
    %6689 = vmatprep.subr.bf16.mxu0 %v6510
    %6690 = vmatpush1.bf16.msra.mxu0 %v6509
    %6691 = vmatprep.mubr.bf16.mxu0 %v6172
    %6692 = vmatmul.mubr.bf16.gmra.mrb[0].mxu0 %v6171
    %v6693 = vpop.f32.mrb[0].mxu0
    %v6694 = vadd.f32 %v6653, %v6693
    %v6695 = vpop.f32.mrb[0].mxu0
    %v6696 = vadd.f32 %v6655, %v6695
    %v6697 = vpop.f32.mrb[0].mxu0
    %v6698 = vpop.f32.mrb[0].mxu0
    %6699 = vdwg.mxu0
    %6700 = vmatprep.subr.bf16.mxu0 %v6514
    %6701 = vmatpush1.bf16.msra.mxu0 %v6513
    %6702 = vmatprep.subr.bf16.mxu0 %v6518
    %6703 = vmatpush1.bf16.msra.mxu0 %v6517
    %6704 = vmatprep.subr.bf16.mxu0 %v6522
    %6705 = vmatpush1.bf16.msra.mxu0 %v6521
    %6706 = vmatprep.subr.bf16.mxu0 %v6526
    %6707 = vmatpush1.bf16.msra.mxu0 %v6525
    %6708 = vmatprep.subr.bf16.mxu0 %v6530
    %6709 = vmatpush1.bf16.msra.mxu0 %v6529
    %6710 = vmatprep.subr.bf16.mxu0 %v6534
    %6711 = vmatpush1.bf16.msra.mxu0 %v6533
    %6712 = vmatprep.subr.bf16.mxu0 %v6538
    %6713 = vmatpush1.bf16.msra.mxu0 %v6537
    %6714 = vmatprep.subr.bf16.mxu0 %v6542
    %6715 = vmatpush1.bf16.msra.mxu0 %v6541
    %6716 = vmatprep.subr.bf16.mxu0 %v6546
    %6717 = vmatpush1.bf16.msra.mxu0 %v6545
    %6718 = vmatprep.subr.bf16.mxu0 %v6550
    %6719 = vmatpush1.bf16.msra.mxu0 %v6549
    %6720 = vmatprep.subr.bf16.mxu0 %v6554
    %6721 = vmatpush1.bf16.msra.mxu0 %v6553
    %6722 = vmatprep.subr.bf16.mxu0 %v6558
    %6723 = vmatpush1.bf16.msra.mxu0 %v6557
    %6724 = vmatprep.subr.bf16.mxu0 %v6562
    %6725 = vmatpush1.bf16.msra.mxu0 %v6561
    %6726 = vmatprep.subr.bf16.mxu0 %v6566
    %6727 = vmatpush1.bf16.msra.mxu0 %v6565
    %6728 = vmatprep.subr.bf16.mxu0 %v6570
    %6729 = vmatpush1.bf16.msra.mxu0 %v6569
    %6730 = vmatprep.subr.bf16.mxu0 %v6574
    %6731 = vmatpush1.bf16.msra.mxu0 %v6573
    %6732 = vmatprep.mubr.bf16.mxu0 %v6174
    %6733 = vmatmul.mubr.bf16.gmra.mrb[0].mxu0 %v6173
    %v6734 = vpop.f32.mrb[0].mxu0
    %v6735 = vadd.f32 %v6694, %v6734
    %v6736 = vpop.f32.mrb[0].mxu0
    %v6737 = vadd.f32 %v6696, %v6736
    %v6738 = vpop.f32.mrb[0].mxu0
    %v6739 = vpop.f32.mrb[0].mxu0
    %6740 = vdwg.mxu0
    %6741 = vmatprep.subr.bf16.mxu0 %v6324
    %6742 = vmatpush1.bf16.msra.mxu0 %v6323
    %6743 = vmatprep.subr.bf16.mxu0 %v6328
    %6744 = vmatpush1.bf16.msra.mxu0 %v6327
    %6745 = vmatprep.subr.bf16.mxu0 %v6332
    %6746 = vmatpush1.bf16.msra.mxu0 %v6331
    %6747 = vmatprep.subr.bf16.mxu0 %v6336
    %6748 = vmatpush1.bf16.msra.mxu0 %v6335
    %6749 = vmatprep.subr.bf16.mxu0 %v6340
    %6750 = vmatpush1.bf16.msra.mxu0 %v6339
    %6751 = vmatprep.subr.bf16.mxu0 %v6344
    %6752 = vmatpush1.bf16.msra.mxu0 %v6343
    %6753 = vmatprep.subr.bf16.mxu0 %v6348
    %6754 = vmatpush1.bf16.msra.mxu0 %v6347
    %6755 = vmatprep.subr.bf16.mxu0 %v6352
    %6756 = vmatpush1.bf16.msra.mxu0 %v6351
    %6757 = vmatprep.subr.bf16.mxu0 %v6356
    %6758 = vmatpush1.bf16.msra.mxu0 %v6355
    %6759 = vmatprep.subr.bf16.mxu0 %v6360
    %6760 = vmatpush1.bf16.msra.mxu0 %v6359
    %6761 = vmatprep.subr.bf16.mxu0 %v6364
    %6762 = vmatpush1.bf16.msra.mxu0 %v6363
    %6763 = vmatprep.subr.bf16.mxu0 %v6368
    %6764 = vmatpush1.bf16.msra.mxu0 %v6367
    %6765 = vmatprep.subr.bf16.mxu0 %v6372
    %6766 = vmatpush1.bf16.msra.mxu0 %v6371
    %6767 = vmatprep.subr.bf16.mxu0 %v6376
    %6768 = vmatpush1.bf16.msra.mxu0 %v6375
    %6769 = vmatprep.subr.bf16.mxu0 %v6380
    %6770 = vmatpush1.bf16.msra.mxu0 %v6379
    %6771 = vmatprep.subr.bf16.mxu0 %v6384
    %6772 = vmatpush1.bf16.msra.mxu0 %v6383
    %6773 = vmatprep.mubr.bf16.mxu0 %v6168
    %6774 = vmatmul.mubr.bf16.gmra.mrb[0].mxu0 %v6167
    %v6775 = vpop.f32.mrb[0].mxu0
    %v6776 = vadd.f32 0.0, %v6775
    %v6777 = vpop.f32.mrb[0].mxu0
    %v6778 = vadd.f32 0.0, %v6777
    %v6779 = vpop.f32.mrb[0].mxu0
    %v6780 = vpop.f32.mrb[0].mxu0
    %6781 = vdwg.mxu0
    %6782 = vmatprep.subr.bf16.mxu0 %v6388
    %6783 = vmatpush1.bf16.msra.mxu0 %v6387
    %6784 = vmatprep.subr.bf16.mxu0 %v6392
    %6785 = vmatpush1.bf16.msra.mxu0 %v6391
    %6786 = vmatprep.subr.bf16.mxu0 %v6396
    %6787 = vmatpush1.bf16.msra.mxu0 %v6395
    %6788 = vmatprep.subr.bf16.mxu0 %v6400
    %6789 = vmatpush1.bf16.msra.mxu0 %v6399
    %6790 = vmatprep.subr.bf16.mxu0 %v6404
    %6791 = vmatpush1.bf16.msra.mxu0 %v6403
    %6792 = vmatprep.subr.bf16.mxu0 %v6408
    %6793 = vmatpush1.bf16.msra.mxu0 %v6407
    %6794 = vmatprep.subr.bf16.mxu0 %v6412
    %6795 = vmatpush1.bf16.msra.mxu0 %v6411
    %6796 = vmatprep.subr.bf16.mxu0 %v6416
    %6797 = vmatpush1.bf16.msra.mxu0 %v6415
    %6798 = vmatprep.subr.bf16.mxu0 %v6420
    %6799 = vmatpush1.bf16.msra.mxu0 %v6419
    %6800 = vmatprep.subr.bf16.mxu0 %v6424
    %6801 = vmatpush1.bf16.msra.mxu0 %v6423
    %6802 = vmatprep.subr.bf16.mxu0 %v6428
    %6803 = vmatpush1.bf16.msra.mxu0 %v6427
    %6804 = vmatprep.subr.bf16.mxu0 %v6432
    %6805 = vmatpush1.bf16.msra.mxu0 %v6431
    %6806 = vmatprep.subr.bf16.mxu0 %v6436
    %6807 = vmatpush1.bf16.msra.mxu0 %v6435
    %6808 = vmatprep.subr.bf16.mxu0 %v6440
    %6809 = vmatpush1.bf16.msra.mxu0 %v6439
    %6810 = vmatprep.subr.bf16.mxu0 %v6444
    %6811 = vmatpush1.bf16.msra.mxu0 %v6443
    %6812 = vmatprep.subr.bf16.mxu0 %v6448
    %6813 = vmatpush1.bf16.msra.mxu0 %v6447
    %6814 = vmatprep.mubr.bf16.mxu0 %v6170
    %6815 = vmatmul.mubr.bf16.gmra.mrb[0].mxu0 %v6169
    %v6816 = vpop.f32.mrb[0].mxu0
    %v6817 = vadd.f32 %v6776, %v6816
    %v6818 = vpop.f32.mrb[0].mxu0
    %v6819 = vadd.f32 %v6778, %v6818
    %v6820 = vpop.f32.mrb[0].mxu0
    %v6821 = vpop.f32.mrb[0].mxu0
    %6822 = vdwg.mxu0
    %6823 = vmatprep.subr.bf16.mxu0 %v6452
    %6824 = vmatpush1.bf16.msra.mxu0 %v6451
    %6825 = vmatprep.subr.bf16.mxu0 %v6456
    %6826 = vmatpush1.bf16.msra.mxu0 %v6455
    %6827 = vmatprep.subr.bf16.mxu0 %v6460
    %6828 = vmatpush1.bf16.msra.mxu0 %v6459
    %6829 = vmatprep.subr.bf16.mxu0 %v6464
    %6830 = vmatpush1.bf16.msra.mxu0 %v6463
    %6831 = vmatprep.subr.bf16.mxu0 %v6468
    %6832 = vmatpush1.bf16.msra.mxu0 %v6467
    %6833 = vmatprep.subr.bf16.mxu0 %v6472
    %6834 = vmatpush1.bf16.msra.mxu0 %v6471
    %6835 = vmatprep.subr.bf16.mxu0 %v6476
    %6836 = vmatpush1.bf16.msra.mxu0 %v6475
    %6837 = vmatprep.subr.bf16.mxu0 %v6480
    %6838 = vmatpush1.bf16.msra.mxu0 %v6479
    %6839 = vmatprep.subr.bf16.mxu0 %v6484
    %6840 = vmatpush1.bf16.msra.mxu0 %v6483
    %6841 = vmatprep.subr.bf16.mxu0 %v6488
    %6842 = vmatpush1.bf16.msra.mxu0 %v6487
    %6843 = vmatprep.subr.bf16.mxu0 %v6492
    %6844 = vmatpush1.bf16.msra.mxu0 %v6491
    %6845 = vmatprep.subr.bf16.mxu0 %v6496
    %6846 = vmatpush1.bf16.msra.mxu0 %v6495
    %6847 = vmatprep.subr.bf16.mxu0 %v6500
    %6848 = vmatpush1.bf16.msra.mxu0 %v6499
    %6849 = vmatprep.subr.bf16.mxu0 %v6504
    %6850 = vmatpush1.bf16.msra.mxu0 %v6503
    %6851 = vmatprep.subr.bf16.mxu0 %v6508
    %6852 = vmatpush1.bf16.msra.mxu0 %v6507
    %6853 = vmatprep.subr.bf16.mxu0 %v6512
    %6854 = vmatpush1.bf16.msra.mxu0 %v6511
    %6855 = vmatprep.mubr.bf16.mxu0 %v6172
    %6856 = vmatmul.mubr.bf16.gmra.mrb[0].mxu0 %v6171
    %v6857 = vpop.f32.mrb[0].mxu0
    %v6858 = vadd.f32 %v6817, %v6857
    %v6859 = vpop.f32.mrb[0].mxu0
    %v6860 = vadd.f32 %v6819, %v6859
    %v6861 = vpop.f32.mrb[0].mxu0
    %v6862 = vpop.f32.mrb[0].mxu0
    %6863 = vdwg.mxu0
    %6864 = vmatprep.subr.bf16.mxu0 %v6516
    %6865 = vmatpush1.bf16.msra.mxu0 %v6515
    %6866 = vmatprep.subr.bf16.mxu0 %v6520
    %6867 = vmatpush1.bf16.msra.mxu0 %v6519
    %6868 = vmatprep.subr.bf16.mxu0 %v6524
    %6869 = vmatpush1.bf16.msra.mxu0 %v6523
    %6870 = vmatprep.subr.bf16.mxu0 %v6528
    %6871 = vmatpush1.bf16.msra.mxu0 %v6527
    %6872 = vmatprep.subr.bf16.mxu0 %v6532
    %6873 = vmatpush1.bf16.msra.mxu0 %v6531
    %6874 = vmatprep.subr.bf16.mxu0 %v6536
    %6875 = vmatpush1.bf16.msra.mxu0 %v6535
    %6876 = vmatprep.subr.bf16.mxu0 %v6540
    %6877 = vmatpush1.bf16.msra.mxu0 %v6539
    %6878 = vmatprep.subr.bf16.mxu0 %v6544
    %6879 = vmatpush1.bf16.msra.mxu0 %v6543
    %6880 = vmatprep.subr.bf16.mxu0 %v6548
    %6881 = vmatpush1.bf16.msra.mxu0 %v6547
    %6882 = vmatprep.subr.bf16.mxu0 %v6552
    %6883 = vmatpush1.bf16.msra.mxu0 %v6551
    %6884 = vmatprep.subr.bf16.mxu0 %v6556
    %6885 = vmatpush1.bf16.msra.mxu0 %v6555
    %6886 = vmatprep.subr.bf16.mxu0 %v6560
    %6887 = vmatpush1.bf16.msra.mxu0 %v6559
    %6888 = vmatprep.subr.bf16.mxu0 %v6564
    %6889 = vmatpush1.bf16.msra.mxu0 %v6563
    %6890 = vmatprep.subr.bf16.mxu0 %v6568
    %6891 = vmatpush1.bf16.msra.mxu0 %v6567
    %6892 = vmatprep.subr.bf16.mxu0 %v6572
    %6893 = vmatpush1.bf16.msra.mxu0 %v6571
    %6894 = vmatprep.subr.bf16.mxu0 %v6576
    %6895 = vmatpush1.bf16.msra.mxu0 %v6575
    %6896 = vmatprep.mubr.bf16.mxu0 %v6174
    %6897 = vmatmul.mubr.bf16.gmra.mrb[0].mxu0 %v6173
    %v6898 = vpop.f32.mrb[0].mxu0
    %v6899 = vadd.f32 %v6858, %v6898
    %v6900 = vpop.f32.mrb[0].mxu0
    %v6901 = vadd.f32 %v6860, %v6900
    %v6902 = vpop.f32.mrb[0].mxu0
    %v6903 = vpop.f32.mrb[0].mxu0
    %6904 = vdwg.mxu0
    %v6905 = vld [vmem:[#allocation17] sm:$0xf]
    %v6907 = vlaneseq
    %v6908 = vshrl.u32 %v6907, 7
    %v6909 = vsub.s32 0, %v6908
    %v6910 = vrot.slane %v6905, %v6909
    %v6911 = vlaneseq
    %v6912 = vshrl.u32 %v6911, 7
    %v6913 = vsub.s32 1, %v6912
    %v6914 = vrot.slane %v6905, %v6913
    %v6915 = vlaneseq
    %v6916 = vshrl.u32 %v6915, 7
    %v6917 = vsub.s32 2, %v6916
    %v6918 = vrot.slane %v6905, %v6917
    %v6919 = vlaneseq
    %v6920 = vshrl.u32 %v6919, 7
    %v6921 = vsub.s32 3, %v6920
    %v6922 = vrot.slane %v6905, %v6921
    %v6927 = vmul.f32 %v6735, %v6910
    %v6928 = vmul.f32 %v6737, %v6914
    %v6929 = vmul.f32 %v6899, %v6918
    %v6930 = vmul.f32 %v6901, %v6922
    %v6931 = vld [vmem:[#allocation18] sm:$0xf]
    %v6933 = vlaneseq
    %v6934 = vshrl.u32 %v6933, 7
    %v6935 = vsub.s32 0, %v6934
    %v6936 = vrot.slane %v6931, %v6935
    %v6937 = vlaneseq
    %v6938 = vshrl.u32 %v6937, 7
    %v6939 = vsub.s32 1, %v6938
    %v6940 = vrot.slane %v6931, %v6939
    %v6941 = vlaneseq
    %v6942 = vshrl.u32 %v6941, 7
    %v6943 = vsub.s32 2, %v6942
    %v6944 = vrot.slane %v6931, %v6943
    %v6945 = vlaneseq
    %v6946 = vshrl.u32 %v6945, 7
    %v6947 = vsub.s32 3, %v6946
    %v6948 = vrot.slane %v6931, %v6947
    %v6953 = vadd.f32 %v6927, %v6936
    %v6954 = vadd.f32 %v6928, %v6940
    %v6955 = vadd.f32 %v6929, %v6944
    %v6956 = vadd.f32 %v6930, %v6948
    %v6957 = vmax.f32 %v6953, 0.0
    %v6958 = vmax.f32 %v6954, 0.0
    %v6959 = vmax.f32 %v6955, 0.0
    %v6960 = vmax.f32 %v6956, 0.0
    %6961 = vst [vmem:[#allocation4] sm:$0xff] %v6957
    %6962 = vst [vmem:[#allocation4 + $0x8] sm:$0xff] %v6958
    %6963 = vst [vmem:[#allocation4 + $0x10] sm:$0xff] %v6959
    %6964 = vst [vmem:[#allocation4 + $0x18] sm:$0xff] %v6960
    %s6965 = sshll.u32 %s6176, 4
    %6966 = dma.done %s6181, %s6965
    %v6967 = vld [vmem:[%s6180] sm:$0xff]
    %v6968 = vld [vmem:[%s6180 + $0x8] sm:$0xff]
    %v6969 = vld [vmem:[%s6180 + $0x10] sm:$0xff]
    %v6970 = vld [vmem:[%s6180 + $0x18] sm:$0xff]
    %v6971 = vld [vmem:[%s6180 + $0x20] sm:$0xff]
    %v6972 = vld [vmem:[%s6180 + $0x28] sm:$0xff]
    %v6973 = vld [vmem:[%s6180 + $0x30] sm:$0xff]
    %v6974 = vld [vmem:[%s6180 + $0x38] sm:$0xff]
    %v6975 = vld [vmem:[%s6180 + $0x40] sm:$0xff]
    %v6976 = vld [vmem:[%s6180 + $0x48] sm:$0xff]
    %v6977 = vld [vmem:[%s6180 + $0x50] sm:$0xff]
    %v6978 = vld [vmem:[%s6180 + $0x58] sm:$0xff]
    %v6979 = vld [vmem:[%s6180 + $0x60] sm:$0xff]
    %v6980 = vld [vmem:[%s6180 + $0x68] sm:$0xff]
    %v6981 = vld [vmem:[%s6180 + $0x70] sm:$0xff]
    %v6982 = vld [vmem:[%s6180 + $0x78] sm:$0xff]
    %v6983 = vld [vmem:[%s6180 + $0x80] sm:$0xff]
    %v6984 = vld [vmem:[%s6180 + $0x88] sm:$0xff]
    %v6985 = vld [vmem:[%s6180 + $0x90] sm:$0xff]
    %v6986 = vld [vmem:[%s6180 + $0x98] sm:$0xff]
    %v6987 = vld [vmem:[%s6180 + $0xa0] sm:$0xff]
    %v6988 = vld [vmem:[%s6180 + $0xa8] sm:$0xff]
    %v6989 = vld [vmem:[%s6180 + $0xb0] sm:$0xff]
    %v6990 = vld [vmem:[%s6180 + $0xb8] sm:$0xff]
    %v6991 = vld [vmem:[%s6180 + $0xc0] sm:$0xff]
    %v6992 = vld [vmem:[%s6180 + $0xc8] sm:$0xff]
    %v6993 = vld [vmem:[%s6180 + $0xd0] sm:$0xff]
    %v6994 = vld [vmem:[%s6180 + $0xd8] sm:$0xff]
    %v6995 = vld [vmem:[%s6180 + $0xe0] sm:$0xff]
    %v6996 = vld [vmem:[%s6180 + $0xe8] sm:$0xff]
    %v6997 = vld [vmem:[%s6180 + $0xf0] sm:$0xff]
    %v6998 = vld [vmem:[%s6180 + $0xf8] sm:$0xff]
    %v6999 = vld [vmem:[%s6180 + $0x100] sm:$0xff]
    %v7000 = vld [vmem:[%s6180 + $0x108] sm:$0xff]
    %v7001 = vld [vmem:[%s6180 + $0x110] sm:$0xff]
    %v7002 = vld [vmem:[%s6180 + $0x118] sm:$0xff]
    %v7003 = vld [vmem:[%s6180 + $0x120] sm:$0xff]
    %v7004 = vld [vmem:[%s6180 + $0x128] sm:$0xff]
    %v7005 = vld [vmem:[%s6180 + $0x130] sm:$0xff]
    %v7006 = vld [vmem:[%s6180 + $0x138] sm:$0xff]
    %v7007 = vld [vmem:[%s6180 + $0x140] sm:$0xff]
    %v7008 = vld [vmem:[%s6180 + $0x148] sm:$0xff]
    %v7009 = vld [vmem:[%s6180 + $0x150] sm:$0xff]
    %v7010 = vld [vmem:[%s6180 + $0x158] sm:$0xff]
    %v7011 = vld [vmem:[%s6180 + $0x160] sm:$0xff]
    %v7012 = vld [vmem:[%s6180 + $0x168] sm:$0xff]
    %v7013 = vld [vmem:[%s6180 + $0x170] sm:$0xff]
    %v7014 = vld [vmem:[%s6180 + $0x178] sm:$0xff]
    %v7015 = vld [vmem:[%s6180 + $0x180] sm:$0xff]
    %v7016 = vld [vmem:[%s6180 + $0x188] sm:$0xff]
    %v7017 = vld [vmem:[%s6180 + $0x190] sm:$0xff]
    %v7018 = vld [vmem:[%s6180 + $0x198] sm:$0xff]
    %v7019 = vld [vmem:[%s6180 + $0x1a0] sm:$0xff]
    %v7020 = vld [vmem:[%s6180 + $0x1a8] sm:$0xff]
    %v7021 = vld [vmem:[%s6180 + $0x1b0] sm:$0xff]
    %v7022 = vld [vmem:[%s6180 + $0x1b8] sm:$0xff]
    %v7023 = vld [vmem:[%s6180 + $0x1c0] sm:$0xff]
    %v7024 = vld [vmem:[%s6180 + $0x1c8] sm:$0xff]
    %v7025 = vld [vmem:[%s6180 + $0x1d0] sm:$0xff]
    %v7026 = vld [vmem:[%s6180 + $0x1d8] sm:$0xff]
    %v7027 = vld [vmem:[%s6180 + $0x1e0] sm:$0xff]
    %v7028 = vld [vmem:[%s6180 + $0x1e8] sm:$0xff]
    %v7029 = vld [vmem:[%s6180 + $0x1f0] sm:$0xff]
    %v7030 = vld [vmem:[%s6180 + $0x1f8] sm:$0xff]
    %v7031 = vld [vmem:[%s6180 + $0x200] sm:$0xff]
    %v7032 = vld [vmem:[%s6180 + $0x208] sm:$0xff]
    %v7033 = vld [vmem:[%s6180 + $0x210] sm:$0xff]
    %v7034 = vld [vmem:[%s6180 + $0x218] sm:$0xff]
    %v7035 = vld [vmem:[%s6180 + $0x220] sm:$0xff]
    %v7036 = vld [vmem:[%s6180 + $0x228] sm:$0xff]
    %v7037 = vld [vmem:[%s6180 + $0x230] sm:$0xff]
    %v7038 = vld [vmem:[%s6180 + $0x238] sm:$0xff]
    %v7039 = vld [vmem:[%s6180 + $0x240] sm:$0xff]
    %v7040 = vld [vmem:[%s6180 + $0x248] sm:$0xff]
    %v7041 = vld [vmem:[%s6180 + $0x250] sm:$0xff]
    %v7042 = vld [vmem:[%s6180 + $0x258] sm:$0xff]
    %v7043 = vld [vmem:[%s6180 + $0x260] sm:$0xff]
    %v7044 = vld [vmem:[%s6180 + $0x268] sm:$0xff]
    %v7045 = vld [vmem:[%s6180 + $0x270] sm:$0xff]
    %v7046 = vld [vmem:[%s6180 + $0x278] sm:$0xff]
    %v7047 = vld [vmem:[%s6180 + $0x280] sm:$0xff]
    %v7048 = vld [vmem:[%s6180 + $0x288] sm:$0xff]
    %v7049 = vld [vmem:[%s6180 + $0x290] sm:$0xff]
    %v7050 = vld [vmem:[%s6180 + $0x298] sm:$0xff]
    %v7051 = vld [vmem:[%s6180 + $0x2a0] sm:$0xff]
    %v7052 = vld [vmem:[%s6180 + $0x2a8] sm:$0xff]
    %v7053 = vld [vmem:[%s6180 + $0x2b0] sm:$0xff]
    %v7054 = vld [vmem:[%s6180 + $0x2b8] sm:$0xff]
    %v7055 = vld [vmem:[%s6180 + $0x2c0] sm:$0xff]
    %v7056 = vld [vmem:[%s6180 + $0x2c8] sm:$0xff]
    %v7057 = vld [vmem:[%s6180 + $0x2d0] sm:$0xff]
    %v7058 = vld [vmem:[%s6180 + $0x2d8] sm:$0xff]
    %v7059 = vld [vmem:[%s6180 + $0x2e0] sm:$0xff]
    %v7060 = vld [vmem:[%s6180 + $0x2e8] sm:$0xff]
    %v7061 = vld [vmem:[%s6180 + $0x2f0] sm:$0xff]
    %v7062 = vld [vmem:[%s6180 + $0x2f8] sm:$0xff]
    %v7063 = vld [vmem:[%s6180 + $0x300] sm:$0xff]
    %v7064 = vld [vmem:[%s6180 + $0x308] sm:$0xff]
    %v7065 = vld [vmem:[%s6180 + $0x310] sm:$0xff]
    %v7066 = vld [vmem:[%s6180 + $0x318] sm:$0xff]
    %v7067 = vld [vmem:[%s6180 + $0x320] sm:$0xff]
    %v7068 = vld [vmem:[%s6180 + $0x328] sm:$0xff]
    %v7069 = vld [vmem:[%s6180 + $0x330] sm:$0xff]
    %v7070 = vld [vmem:[%s6180 + $0x338] sm:$0xff]
    %v7071 = vld [vmem:[%s6180 + $0x340] sm:$0xff]
    %v7072 = vld [vmem:[%s6180 + $0x348] sm:$0xff]
    %v7073 = vld [vmem:[%s6180 + $0x350] sm:$0xff]
    %v7074 = vld [vmem:[%s6180 + $0x358] sm:$0xff]
    %v7075 = vld [vmem:[%s6180 + $0x360] sm:$0xff]
    %v7076 = vld [vmem:[%s6180 + $0x368] sm:$0xff]
    %v7077 = vld [vmem:[%s6180 + $0x370] sm:$0xff]
    %v7078 = vld [vmem:[%s6180 + $0x378] sm:$0xff]
    %v7079 = vld [vmem:[%s6180 + $0x380] sm:$0xff]
    %v7080 = vld [vmem:[%s6180 + $0x388] sm:$0xff]
    %v7081 = vld [vmem:[%s6180 + $0x390] sm:$0xff]
    %v7082 = vld [vmem:[%s6180 + $0x398] sm:$0xff]
    %v7083 = vld [vmem:[%s6180 + $0x3a0] sm:$0xff]
    %v7084 = vld [vmem:[%s6180 + $0x3a8] sm:$0xff]
    %v7085 = vld [vmem:[%s6180 + $0x3b0] sm:$0xff]
    %v7086 = vld [vmem:[%s6180 + $0x3b8] sm:$0xff]
    %v7087 = vld [vmem:[%s6180 + $0x3c0] sm:$0xff]
    %v7088 = vld [vmem:[%s6180 + $0x3c8] sm:$0xff]
    %v7089 = vld [vmem:[%s6180 + $0x3d0] sm:$0xff]
    %v7090 = vld [vmem:[%s6180 + $0x3d8] sm:$0xff]
    %v7091 = vld [vmem:[%s6180 + $0x3e0] sm:$0xff]
    %v7092 = vld [vmem:[%s6180 + $0x3e8] sm:$0xff]
    %v7093 = vld [vmem:[%s6180 + $0x3f0] sm:$0xff]
    %v7094 = vld [vmem:[%s6180 + $0x3f8] sm:$0xff]
    %v7095 = vunpack.c.l.s8.bf16 %v6967
    %v7096 = vunpack.c.l.s8.bf16 %v6968
    %v7097 = vunpack.c.l.s8.bf16 %v6969
    %v7098 = vunpack.c.l.s8.bf16 %v6970
    %v7099 = vunpack.c.h.s8.bf16 %v6967
    %v7100 = vunpack.c.h.s8.bf16 %v6968
    %v7101 = vunpack.c.h.s8.bf16 %v6969
    %v7102 = vunpack.c.h.s8.bf16 %v6970
    %v7103 = vunpack.c.l.s8.bf16 %v6971
    %v7104 = vunpack.c.l.s8.bf16 %v6972
    %v7105 = vunpack.c.l.s8.bf16 %v6973
    %v7106 = vunpack.c.l.s8.bf16 %v6974
    %v7107 = vunpack.c.h.s8.bf16 %v6971
    %v7108 = vunpack.c.h.s8.bf16 %v6972
    %v7109 = vunpack.c.h.s8.bf16 %v6973
    %v7110 = vunpack.c.h.s8.bf16 %v6974
    %v7111 = vunpack.c.l.s8.bf16 %v6975
    %v7112 = vunpack.c.l.s8.bf16 %v6976
    %v7113 = vunpack.c.l.s8.bf16 %v6977
    %v7114 = vunpack.c.l.s8.bf16 %v6978
    %v7115 = vunpack.c.h.s8.bf16 %v6975
    %v7116 = vunpack.c.h.s8.bf16 %v6976
    %v7117 = vunpack.c.h.s8.bf16 %v6977
    %v7118 = vunpack.c.h.s8.bf16 %v6978
    %v7119 = vunpack.c.l.s8.bf16 %v6979
    %v7120 = vunpack.c.l.s8.bf16 %v6980
    %v7121 = vunpack.c.l.s8.bf16 %v6981
    %v7122 = vunpack.c.l.s8.bf16 %v6982
    %v7123 = vunpack.c.h.s8.bf16 %v6979
    %v7124 = vunpack.c.h.s8.bf16 %v6980
    %v7125 = vunpack.c.h.s8.bf16 %v6981
    %v7126 = vunpack.c.h.s8.bf16 %v6982
    %v7127 = vunpack.c.l.s8.bf16 %v6983
    %v7128 = vunpack.c.l.s8.bf16 %v6984
    %v7129 = vunpack.c.l.s8.bf16 %v6985
    %v7130 = vunpack.c.l.s8.bf16 %v6986
    %v7131 = vunpack.c.h.s8.bf16 %v6983
    %v7132 = vunpack.c.h.s8.bf16 %v6984
    %v7133 = vunpack.c.h.s8.bf16 %v6985
    %v7134 = vunpack.c.h.s8.bf16 %v6986
    %v7135 = vunpack.c.l.s8.bf16 %v6987
    %v7136 = vunpack.c.l.s8.bf16 %v6988
    %v7137 = vunpack.c.l.s8.bf16 %v6989
    %v7138 = vunpack.c.l.s8.bf16 %v6990
    %v7139 = vunpack.c.h.s8.bf16 %v6987
    %v7140 = vunpack.c.h.s8.bf16 %v6988
    %v7141 = vunpack.c.h.s8.bf16 %v6989
    %v7142 = vunpack.c.h.s8.bf16 %v6990
    %v7143 = vunpack.c.l.s8.bf16 %v6991
    %v7144 = vunpack.c.l.s8.bf16 %v6992
    %v7145 = vunpack.c.l.s8.bf16 %v6993
    %v7146 = vunpack.c.l.s8.bf16 %v6994
    %v7147 = vunpack.c.h.s8.bf16 %v6991
    %v7148 = vunpack.c.h.s8.bf16 %v6992
    %v7149 = vunpack.c.h.s8.bf16 %v6993
    %v7150 = vunpack.c.h.s8.bf16 %v6994
    %v7151 = vunpack.c.l.s8.bf16 %v6995
    %v7152 = vunpack.c.l.s8.bf16 %v6996
    %v7153 = vunpack.c.l.s8.bf16 %v6997
    %v7154 = vunpack.c.l.s8.bf16 %v6998
    %v7155 = vunpack.c.h.s8.bf16 %v6995
    %v7156 = vunpack.c.h.s8.bf16 %v6996
    %v7157 = vunpack.c.h.s8.bf16 %v6997
    %v7158 = vunpack.c.h.s8.bf16 %v6998
    %v7159 = vunpack.c.l.s8.bf16 %v6999
    %v7160 = vunpack.c.l.s8.bf16 %v7000
    %v7161 = vunpack.c.l.s8.bf16 %v7001
    %v7162 = vunpack.c.l.s8.bf16 %v7002
    %v7163 = vunpack.c.h.s8.bf16 %v6999
    %v7164 = vunpack.c.h.s8.bf16 %v7000
    %v7165 = vunpack.c.h.s8.bf16 %v7001
    %v7166 = vunpack.c.h.s8.bf16 %v7002
    %v7167 = vunpack.c.l.s8.bf16 %v7003
    %v7168 = vunpack.c.l.s8.bf16 %v7004
    %v7169 = vunpack.c.l.s8.bf16 %v7005
    %v7170 = vunpack.c.l.s8.bf16 %v7006
    %v7171 = vunpack.c.h.s8.bf16 %v7003
    %v7172 = vunpack.c.h.s8.bf16 %v7004
    %v7173 = vunpack.c.h.s8.bf16 %v7005
    %v7174 = vunpack.c.h.s8.bf16 %v7006
    %v7175 = vunpack.c.l.s8.bf16 %v7007
    %v7176 = vunpack.c.l.s8.bf16 %v7008
    %v7177 = vunpack.c.l.s8.bf16 %v7009
    %v7178 = vunpack.c.l.s8.bf16 %v7010
    %v7179 = vunpack.c.h.s8.bf16 %v7007
    %v7180 = vunpack.c.h.s8.bf16 %v7008
    %v7181 = vunpack.c.h.s8.bf16 %v7009
    %v7182 = vunpack.c.h.s8.bf16 %v7010
    %v7183 = vunpack.c.l.s8.bf16 %v7011
    %v7184 = vunpack.c.l.s8.bf16 %v7012
    %v7185 = vunpack.c.l.s8.bf16 %v7013
    %v7186 = vunpack.c.l.s8.bf16 %v7014
    %v7187 = vunpack.c.h.s8.bf16 %v7011
    %v7188 = vunpack.c.h.s8.bf16 %v7012
    %v7189 = vunpack.c.h.s8.bf16 %v7013
    %v7190 = vunpack.c.h.s8.bf16 %v7014
    %v7191 = vunpack.c.l.s8.bf16 %v7015
    %v7192 = vunpack.c.l.s8.bf16 %v7016
    %v7193 = vunpack.c.l.s8.bf16 %v7017
    %v7194 = vunpack.c.l.s8.bf16 %v7018
    %v7195 = vunpack.c.h.s8.bf16 %v7015
    %v7196 = vunpack.c.h.s8.bf16 %v7016
    %v7197 = vunpack.c.h.s8.bf16 %v7017
    %v7198 = vunpack.c.h.s8.bf16 %v7018
    %v7199 = vunpack.c.l.s8.bf16 %v7019
    %v7200 = vunpack.c.l.s8.bf16 %v7020
    %v7201 = vunpack.c.l.s8.bf16 %v7021
    %v7202 = vunpack.c.l.s8.bf16 %v7022
    %v7203 = vunpack.c.h.s8.bf16 %v7019
    %v7204 = vunpack.c.h.s8.bf16 %v7020
    %v7205 = vunpack.c.h.s8.bf16 %v7021
    %v7206 = vunpack.c.h.s8.bf16 %v7022
    %v7207 = vunpack.c.l.s8.bf16 %v7023
    %v7208 = vunpack.c.l.s8.bf16 %v7024
    %v7209 = vunpack.c.l.s8.bf16 %v7025
    %v7210 = vunpack.c.l.s8.bf16 %v7026
    %v7211 = vunpack.c.h.s8.bf16 %v7023
    %v7212 = vunpack.c.h.s8.bf16 %v7024
    %v7213 = vunpack.c.h.s8.bf16 %v7025
    %v7214 = vunpack.c.h.s8.bf16 %v7026
    %v7215 = vunpack.c.l.s8.bf16 %v7027
    %v7216 = vunpack.c.l.s8.bf16 %v7028
    %v7217 = vunpack.c.l.s8.bf16 %v7029
    %v7218 = vunpack.c.l.s8.bf16 %v7030
    %v7219 = vunpack.c.h.s8.bf16 %v7027
    %v7220 = vunpack.c.h.s8.bf16 %v7028
    %v7221 = vunpack.c.h.s8.bf16 %v7029
    %v7222 = vunpack.c.h.s8.bf16 %v7030
    %v7223 = vunpack.c.l.s8.bf16 %v7031
    %v7224 = vunpack.c.l.s8.bf16 %v7032
    %v7225 = vunpack.c.l.s8.bf16 %v7033
    %v7226 = vunpack.c.l.s8.bf16 %v7034
    %v7227 = vunpack.c.h.s8.bf16 %v7031
    %v7228 = vunpack.c.h.s8.bf16 %v7032
    %v7229 = vunpack.c.h.s8.bf16 %v7033
    %v7230 = vunpack.c.h.s8.bf16 %v7034
    %v7231 = vunpack.c.l.s8.bf16 %v7035
    %v7232 = vunpack.c.l.s8.bf16 %v7036
    %v7233 = vunpack.c.l.s8.bf16 %v7037
    %v7234 = vunpack.c.l.s8.bf16 %v7038
    %v7235 = vunpack.c.h.s8.bf16 %v7035
    %v7236 = vunpack.c.h.s8.bf16 %v7036
    %v7237 = vunpack.c.h.s8.bf16 %v7037
    %v7238 = vunpack.c.h.s8.bf16 %v7038
    %v7239 = vunpack.c.l.s8.bf16 %v7039
    %v7240 = vunpack.c.l.s8.bf16 %v7040
    %v7241 = vunpack.c.l.s8.bf16 %v7041
    %v7242 = vunpack.c.l.s8.bf16 %v7042
    %v7243 = vunpack.c.h.s8.bf16 %v7039
    %v7244 = vunpack.c.h.s8.bf16 %v7040
    %v7245 = vunpack.c.h.s8.bf16 %v7041
    %v7246 = vunpack.c.h.s8.bf16 %v7042
    %v7247 = vunpack.c.l.s8.bf16 %v7043
    %v7248 = vunpack.c.l.s8.bf16 %v7044
    %v7249 = vunpack.c.l.s8.bf16 %v7045
    %v7250 = vunpack.c.l.s8.bf16 %v7046
    %v7251 = vunpack.c.h.s8.bf16 %v7043
    %v7252 = vunpack.c.h.s8.bf16 %v7044
    %v7253 = vunpack.c.h.s8.bf16 %v7045
    %v7254 = vunpack.c.h.s8.bf16 %v7046
    %v7255 = vunpack.c.l.s8.bf16 %v7047
    %v7256 = vunpack.c.l.s8.bf16 %v7048
    %v7257 = vunpack.c.l.s8.bf16 %v7049
    %v7258 = vunpack.c.l.s8.bf16 %v7050
    %v7259 = vunpack.c.h.s8.bf16 %v7047
    %v7260 = vunpack.c.h.s8.bf16 %v7048
    %v7261 = vunpack.c.h.s8.bf16 %v7049
    %v7262 = vunpack.c.h.s8.bf16 %v7050
    %v7263 = vunpack.c.l.s8.bf16 %v7051
    %v7264 = vunpack.c.l.s8.bf16 %v7052
    %v7265 = vunpack.c.l.s8.bf16 %v7053
    %v7266 = vunpack.c.l.s8.bf16 %v7054
    %v7267 = vunpack.c.h.s8.bf16 %v7051
    %v7268 = vunpack.c.h.s8.bf16 %v7052
    %v7269 = vunpack.c.h.s8.bf16 %v7053
    %v7270 = vunpack.c.h.s8.bf16 %v7054
    %v7271 = vunpack.c.l.s8.bf16 %v7055
    %v7272 = vunpack.c.l.s8.bf16 %v7056
    %v7273 = vunpack.c.l.s8.bf16 %v7057
    %v7274 = vunpack.c.l.s8.bf16 %v7058
    %v7275 = vunpack.c.h.s8.bf16 %v7055
    %v7276 = vunpack.c.h.s8.bf16 %v7056
    %v7277 = vunpack.c.h.s8.bf16 %v7057
    %v7278 = vunpack.c.h.s8.bf16 %v7058
    %v7279 = vunpack.c.l.s8.bf16 %v7059
    %v7280 = vunpack.c.l.s8.bf16 %v7060
    %v7281 = vunpack.c.l.s8.bf16 %v7061
    %v7282 = vunpack.c.l.s8.bf16 %v7062
    %v7283 = vunpack.c.h.s8.bf16 %v7059
    %v7284 = vunpack.c.h.s8.bf16 %v7060
    %v7285 = vunpack.c.h.s8.bf16 %v7061
    %v7286 = vunpack.c.h.s8.bf16 %v7062
    %v7287 = vunpack.c.l.s8.bf16 %v7063
    %v7288 = vunpack.c.l.s8.bf16 %v7064
    %v7289 = vunpack.c.l.s8.bf16 %v7065
    %v7290 = vunpack.c.l.s8.bf16 %v7066
    %v7291 = vunpack.c.h.s8.bf16 %v7063
    %v7292 = vunpack.c.h.s8.bf16 %v7064
    %v7293 = vunpack.c.h.s8.bf16 %v7065
    %v7294 = vunpack.c.h.s8.bf16 %v7066
    %v7295 = vunpack.c.l.s8.bf16 %v7067
    %v7296 = vunpack.c.l.s8.bf16 %v7068
    %v7297 = vunpack.c.l.s8.bf16 %v7069
    %v7298 = vunpack.c.l.s8.bf16 %v7070
    %v7299 = vunpack.c.h.s8.bf16 %v7067
    %v7300 = vunpack.c.h.s8.bf16 %v7068
    %v7301 = vunpack.c.h.s8.bf16 %v7069
    %v7302 = vunpack.c.h.s8.bf16 %v7070
    %v7303 = vunpack.c.l.s8.bf16 %v7071
    %v7304 = vunpack.c.l.s8.bf16 %v7072
    %v7305 = vunpack.c.l.s8.bf16 %v7073
    %v7306 = vunpack.c.l.s8.bf16 %v7074
    %v7307 = vunpack.c.h.s8.bf16 %v7071
    %v7308 = vunpack.c.h.s8.bf16 %v7072
    %v7309 = vunpack.c.h.s8.bf16 %v7073
    %v7310 = vunpack.c.h.s8.bf16 %v7074
    %v7311 = vunpack.c.l.s8.bf16 %v7075
    %v7312 = vunpack.c.l.s8.bf16 %v7076
    %v7313 = vunpack.c.l.s8.bf16 %v7077
    %v7314 = vunpack.c.l.s8.bf16 %v7078
    %v7315 = vunpack.c.h.s8.bf16 %v7075
    %v7316 = vunpack.c.h.s8.bf16 %v7076
    %v7317 = vunpack.c.h.s8.bf16 %v7077
    %v7318 = vunpack.c.h.s8.bf16 %v7078
    %v7319 = vunpack.c.l.s8.bf16 %v7079
    %v7320 = vunpack.c.l.s8.bf16 %v7080
    %v7321 = vunpack.c.l.s8.bf16 %v7081
    %v7322 = vunpack.c.l.s8.bf16 %v7082
    %v7323 = vunpack.c.h.s8.bf16 %v7079
    %v7324 = vunpack.c.h.s8.bf16 %v7080
    %v7325 = vunpack.c.h.s8.bf16 %v7081
    %v7326 = vunpack.c.h.s8.bf16 %v7082
    %v7327 = vunpack.c.l.s8.bf16 %v7083
    %v7328 = vunpack.c.l.s8.bf16 %v7084
    %v7329 = vunpack.c.l.s8.bf16 %v7085
    %v7330 = vunpack.c.l.s8.bf16 %v7086
    %v7331 = vunpack.c.h.s8.bf16 %v7083
    %v7332 = vunpack.c.h.s8.bf16 %v7084
    %v7333 = vunpack.c.h.s8.bf16 %v7085
    %v7334 = vunpack.c.h.s8.bf16 %v7086
    %v7335 = vunpack.c.l.s8.bf16 %v7087
    %v7336 = vunpack.c.l.s8.bf16 %v7088
    %v7337 = vunpack.c.l.s8.bf16 %v7089
    %v7338 = vunpack.c.l.s8.bf16 %v7090
    %v7339 = vunpack.c.h.s8.bf16 %v7087
    %v7340 = vunpack.c.h.s8.bf16 %v7088
    %v7341 = vunpack.c.h.s8.bf16 %v7089
    %v7342 = vunpack.c.h.s8.bf16 %v7090
    %v7343 = vunpack.c.l.s8.bf16 %v7091
    %v7344 = vunpack.c.l.s8.bf16 %v7092
    %v7345 = vunpack.c.l.s8.bf16 %v7093
    %v7346 = vunpack.c.l.s8.bf16 %v7094
    %v7347 = vunpack.c.h.s8.bf16 %v7091
    %v7348 = vunpack.c.h.s8.bf16 %v7092
    %v7349 = vunpack.c.h.s8.bf16 %v7093
    %v7350 = vunpack.c.h.s8.bf16 %v7094
    %7351 = vmatprep.subr.bf16.mxu0 %v7096
    %7352 = vmatpush1.bf16.msra.mxu0 %v7095
    %7353 = vmatprep.subr.bf16.mxu0 %v7100
    %7354 = vmatpush1.bf16.msra.mxu0 %v7099
    %7355 = vmatprep.subr.bf16.mxu0 %v7104
    %7356 = vmatpush1.bf16.msra.mxu0 %v7103
    %7357 = vmatprep.subr.bf16.mxu0 %v7108
    %7358 = vmatpush1.bf16.msra.mxu0 %v7107
    %7359 = vmatprep.subr.bf16.mxu0 %v7112
    %7360 = vmatpush1.bf16.msra.mxu0 %v7111
    %7361 = vmatprep.subr.bf16.mxu0 %v7116
    %7362 = vmatpush1.bf16.msra.mxu0 %v7115
    %7363 = vmatprep.subr.bf16.mxu0 %v7120
    %7364 = vmatpush1.bf16.msra.mxu0 %v7119
    %7365 = vmatprep.subr.bf16.mxu0 %v7124
    %7366 = vmatpush1.bf16.msra.mxu0 %v7123
    %7367 = vmatprep.subr.bf16.mxu0 %v7128
    %7368 = vmatpush1.bf16.msra.mxu0 %v7127
    %7369 = vmatprep.subr.bf16.mxu0 %v7132
    %7370 = vmatpush1.bf16.msra.mxu0 %v7131
    %7371 = vmatprep.subr.bf16.mxu0 %v7136
    %7372 = vmatpush1.bf16.msra.mxu0 %v7135
    %7373 = vmatprep.subr.bf16.mxu0 %v7140
    %7374 = vmatpush1.bf16.msra.mxu0 %v7139
    %7375 = vmatprep.subr.bf16.mxu0 %v7144
    %7376 = vmatpush1.bf16.msra.mxu0 %v7143
    %7377 = vmatprep.subr.bf16.mxu0 %v7148
    %7378 = vmatpush1.bf16.msra.mxu0 %v7147
    %7379 = vmatprep.subr.bf16.mxu0 %v7152
    %7380 = vmatpush1.bf16.msra.mxu0 %v7151
    %7381 = vmatprep.subr.bf16.mxu0 %v7156
    %7382 = vmatpush1.bf16.msra.mxu0 %v7155
    %7383 = vmatprep.mubr.bf16.mxu0 %v6168
    %7384 = vmatmul.mubr.bf16.gmra.mrb[0].mxu0 %v6167
    %v7385 = vpop.f32.mrb[0].mxu0
    %v7386 = vadd.f32 0.0, %v7385
    %v7387 = vpop.f32.mrb[0].mxu0
    %v7388 = vadd.f32 0.0, %v7387
    %v7389 = vpop.f32.mrb[0].mxu0
    %v7390 = vpop.f32.mrb[0].mxu0
    %7391 = vdwg.mxu0
    %7392 = vmatprep.subr.bf16.mxu0 %v7160
    %7393 = vmatpush1.bf16.msra.mxu0 %v7159
    %7394 = vmatprep.subr.bf16.mxu0 %v7164
    %7395 = vmatpush1.bf16.msra.mxu0 %v7163
    %7396 = vmatprep.subr.bf16.mxu0 %v7168
    %7397 = vmatpush1.bf16.msra.mxu0 %v7167
    %7398 = vmatprep.subr.bf16.mxu0 %v7172
    %7399 = vmatpush1.bf16.msra.mxu0 %v7171
    %7400 = vmatprep.subr.bf16.mxu0 %v7176
    %7401 = vmatpush1.bf16.msra.mxu0 %v7175
    %7402 = vmatprep.subr.bf16.mxu0 %v7180
    %7403 = vmatpush1.bf16.msra.mxu0 %v7179
    %7404 = vmatprep.subr.bf16.mxu0 %v7184
    %7405 = vmatpush1.bf16.msra.mxu0 %v7183
    %7406 = vmatprep.subr.bf16.mxu0 %v7188
    %7407 = vmatpush1.bf16.msra.mxu0 %v7187
    %7408 = vmatprep.subr.bf16.mxu0 %v7192
    %7409 = vmatpush1.bf16.msra.mxu0 %v7191
    %7410 = vmatprep.subr.bf16.mxu0 %v7196
    %7411 = vmatpush1.bf16.msra.mxu0 %v7195
    %7412 = vmatprep.subr.bf16.mxu0 %v7200
    %7413 = vmatpush1.bf16.msra.mxu0 %v7199
    %7414 = vmatprep.subr.bf16.mxu0 %v7204
    %7415 = vmatpush1.bf16.msra.mxu0 %v7203
    %7416 = vmatprep.subr.bf16.mxu0 %v7208
    %7417 = vmatpush1.bf16.msra.mxu0 %v7207
    %7418 = vmatprep.subr.bf16.mxu0 %v7212
    %7419 = vmatpush1.bf16.msra.mxu0 %v7211
    %7420 = vmatprep.subr.bf16.mxu0 %v7216
    %7421 = vmatpush1.bf16.msra.mxu0 %v7215
    %7422 = vmatprep.subr.bf16.mxu0 %v7220
    %7423 = vmatpush1.bf16.msra.mxu0 %v7219
    %7424 = vmatprep.mubr.bf16.mxu0 %v6170
    %7425 = vmatmul.mubr.bf16.gmra.mrb[0].mxu0 %v6169
    %v7426 = vpop.f32.mrb[0].mxu0
    %v7427 = vadd.f32 %v7386, %v7426
    %v7428 = vpop.f32.mrb[0].mxu0
    %v7429 = vadd.f32 %v7388, %v7428
    %v7430 = vpop.f32.mrb[0].mxu0
    %v7431 = vpop.f32.mrb[0].mxu0
    %7432 = vdwg.mxu0
    %7433 = vmatprep.subr.bf16.mxu0 %v7224
    %7434 = vmatpush1.bf16.msra.mxu0 %v7223
    %7435 = vmatprep.subr.bf16.mxu0 %v7228
    %7436 = vmatpush1.bf16.msra.mxu0 %v7227
    %7437 = vmatprep.subr.bf16.mxu0 %v7232
    %7438 = vmatpush1.bf16.msra.mxu0 %v7231
    %7439 = vmatprep.subr.bf16.mxu0 %v7236
    %7440 = vmatpush1.bf16.msra.mxu0 %v7235
    %7441 = vmatprep.subr.bf16.mxu0 %v7240
    %7442 = vmatpush1.bf16.msra.mxu0 %v7239
    %7443 = vmatprep.subr.bf16.mxu0 %v7244
    %7444 = vmatpush1.bf16.msra.mxu0 %v7243
    %7445 = vmatprep.subr.bf16.mxu0 %v7248
    %7446 = vmatpush1.bf16.msra.mxu0 %v7247
    %7447 = vmatprep.subr.bf16.mxu0 %v7252
    %7448 = vmatpush1.bf16.msra.mxu0 %v7251
    %7449 = vmatprep.subr.bf16.mxu0 %v7256
    %7450 = vmatpush1.bf16.msra.mxu0 %v7255
    %7451 = vmatprep.subr.bf16.mxu0 %v7260
    %7452 = vmatpush1.bf16.msra.mxu0 %v7259
    %7453 = vmatprep.subr.bf16.mxu0 %v7264
    %7454 = vmatpush1.bf16.msra.mxu0 %v7263
    %7455 = vmatprep.subr.bf16.mxu0 %v7268
    %7456 = vmatpush1.bf16.msra.mxu0 %v7267
    %7457 = vmatprep.subr.bf16.mxu0 %v7272
    %7458 = vmatpush1.bf16.msra.mxu0 %v7271
    %7459 = vmatprep.subr.bf16.mxu0 %v7276
    %7460 = vmatpush1.bf16.msra.mxu0 %v7275
    %7461 = vmatprep.subr.bf16.mxu0 %v7280
    %7462 = vmatpush1.bf16.msra.mxu0 %v7279
    %7463 = vmatprep.subr.bf16.mxu0 %v7284
    %7464 = vmatpush1.bf16.msra.mxu0 %v7283
    %7465 = vmatprep.mubr.bf16.mxu0 %v6172
    %7466 = vmatmul.mubr.bf16.gmra.mrb[0].mxu0 %v6171
    %v7467 = vpop.f32.mrb[0].mxu0
    %v7468 = vadd.f32 %v7427, %v7467
    %v7469 = vpop.f32.mrb[0].mxu0
    %v7470 = vadd.f32 %v7429, %v7469
    %v7471 = vpop.f32.mrb[0].mxu0
    %v7472 = vpop.f32.mrb[0].mxu0
    %7473 = vdwg.mxu0
    %7474 = vmatprep.subr.bf16.mxu0 %v7288
    %7475 = vmatpush1.bf16.msra.mxu0 %v7287
    %7476 = vmatprep.subr.bf16.mxu0 %v7292
    %7477 = vmatpush1.bf16.msra.mxu0 %v7291
    %7478 = vmatprep.subr.bf16.mxu0 %v7296
    %7479 = vmatpush1.bf16.msra.mxu0 %v7295
    %7480 = vmatprep.subr.bf16.mxu0 %v7300
    %7481 = vmatpush1.bf16.msra.mxu0 %v7299
    %7482 = vmatprep.subr.bf16.mxu0 %v7304
    %7483 = vmatpush1.bf16.msra.mxu0 %v7303
    %7484 = vmatprep.subr.bf16.mxu0 %v7308
    %7485 = vmatpush1.bf16.msra.mxu0 %v7307
    %7486 = vmatprep.subr.bf16.mxu0 %v7312
    %7487 = vmatpush1.bf16.msra.mxu0 %v7311
    %7488 = vmatprep.subr.bf16.mxu0 %v7316
    %7489 = vmatpush1.bf16.msra.mxu0 %v7315
    %7490 = vmatprep.subr.bf16.mxu0 %v7320
    %7491 = vmatpush1.bf16.msra.mxu0 %v7319
    %7492 = vmatprep.subr.bf16.mxu0 %v7324
    %7493 = vmatpush1.bf16.msra.mxu0 %v7323
    %7494 = vmatprep.subr.bf16.mxu0 %v7328
    %7495 = vmatpush1.bf16.msra.mxu0 %v7327
    %7496 = vmatprep.subr.bf16.mxu0 %v7332
    %7497 = vmatpush1.bf16.msra.mxu0 %v7331
    %7498 = vmatprep.subr.bf16.mxu0 %v7336
    %7499 = vmatpush1.bf16.msra.mxu0 %v7335
    %7500 = vmatprep.subr.bf16.mxu0 %v7340
    %7501 = vmatpush1.bf16.msra.mxu0 %v7339
    %7502 = vmatprep.subr.bf16.mxu0 %v7344
    %7503 = vmatpush1.bf16.msra.mxu0 %v7343
    %7504 = vmatprep.subr.bf16.mxu0 %v7348
    %7505 = vmatpush1.bf16.msra.mxu0 %v7347
    %7506 = vmatprep.mubr.bf16.mxu0 %v6174
    %7507 = vmatmul.mubr.bf16.gmra.mrb[0].mxu0 %v6173
    %v7508 = vpop.f32.mrb[0].mxu0
    %v7509 = vadd.f32 %v7468, %v7508
    %v7510 = vpop.f32.mrb[0].mxu0
    %v7511 = vadd.f32 %v7470, %v7510
    %v7512 = vpop.f32.mrb[0].mxu0
    %v7513 = vpop.f32.mrb[0].mxu0
    %7514 = vdwg.mxu0
    %7515 = vmatprep.subr.bf16.mxu0 %v7098
    %7516 = vmatpush1.bf16.msra.mxu0 %v7097
    %7517 = vmatprep.subr.bf16.mxu0 %v7102
    %7518 = vmatpush1.bf16.msra.mxu0 %v7101
    %7519 = vmatprep.subr.bf16.mxu0 %v7106
    %7520 = vmatpush1.bf16.msra.mxu0 %v7105
    %7521 = vmatprep.subr.bf16.mxu0 %v7110
    %7522 = vmatpush1.bf16.msra.mxu0 %v7109
    %7523 = vmatprep.subr.bf16.mxu0 %v7114
    %7524 = vmatpush1.bf16.msra.mxu0 %v7113
    %7525 = vmatprep.subr.bf16.mxu0 %v7118
    %7526 = vmatpush1.bf16.msra.mxu0 %v7117
    %7527 = vmatprep.subr.bf16.mxu0 %v7122
    %7528 = vmatpush1.bf16.msra.mxu0 %v7121
    %7529 = vmatprep.subr.bf16.mxu0 %v7126
    %7530 = vmatpush1.bf16.msra.mxu0 %v7125
    %7531 = vmatprep.subr.bf16.mxu0 %v7130
    %7532 = vmatpush1.bf16.msra.mxu0 %v7129
    %7533 = vmatprep.subr.bf16.mxu0 %v7134
    %7534 = vmatpush1.bf16.msra.mxu0 %v7133
    %7535 = vmatprep.subr.bf16.mxu0 %v7138
    %7536 = vmatpush1.bf16.msra.mxu0 %v7137
    %7537 = vmatprep.subr.bf16.mxu0 %v7142
    %7538 = vmatpush1.bf16.msra.mxu0 %v7141
    %7539 = vmatprep.subr.bf16.mxu0 %v7146
    %7540 = vmatpush1.bf16.msra.mxu0 %v7145
    %7541 = vmatprep.subr.bf16.mxu0 %v7150
    %7542 = vmatpush1.bf16.msra.mxu0 %v7149
    %7543 = vmatprep.subr.bf16.mxu0 %v7154
    %7544 = vmatpush1.bf16.msra.mxu0 %v7153
    %7545 = vmatprep.subr.bf16.mxu0 %v7158
    %7546 = vmatpush1.bf16.msra.mxu0 %v7157
    %7547 = vmatprep.mubr.bf16.mxu0 %v6168
    %7548 = vmatmul.mubr.bf16.gmra.mrb[0].mxu0 %v6167
    %v7549 = vpop.f32.mrb[0].mxu0
    %v7550 = vadd.f32 0.0, %v7549
    %v7551 = vpop.f32.mrb[0].mxu0
    %v7552 = vadd.f32 0.0, %v7551
    %v7553 = vpop.f32.mrb[0].mxu0
    %v7554 = vpop.f32.mrb[0].mxu0
    %7555 = vdwg.mxu0
    %7556 = vmatprep.subr.bf16.mxu0 %v7162
    %7557 = vmatpush1.bf16.msra.mxu0 %v7161
    %7558 = vmatprep.subr.bf16.mxu0 %v7166
    %7559 = vmatpush1.bf16.msra.mxu0 %v7165
    %7560 = vmatprep.subr.bf16.mxu0 %v7170
    %7561 = vmatpush1.bf16.msra.mxu0 %v7169
    %7562 = vmatprep.subr.bf16.mxu0 %v7174
    %7563 = vmatpush1.bf16.msra.mxu0 %v7173
    %7564 = vmatprep.subr.bf16.mxu0 %v7178
    %7565 = vmatpush1.bf16.msra.mxu0 %v7177
    %7566 = vmatprep.subr.bf16.mxu0 %v7182
    %7567 = vmatpush1.bf16.msra.mxu0 %v7181
    %7568 = vmatprep.subr.bf16.mxu0 %v7186
    %7569 = vmatpush1.bf16.msra.mxu0 %v7185
    %7570 = vmatprep.subr.bf16.mxu0 %v7190
    %7571 = vmatpush1.bf16.msra.mxu0 %v7189
    %7572 = vmatprep.subr.bf16.mxu0 %v7194
    %7573 = vmatpush1.bf16.msra.mxu0 %v7193
    %7574 = vmatprep.subr.bf16.mxu0 %v7198
    %7575 = vmatpush1.bf16.msra.mxu0 %v7197
    %7576 = vmatprep.subr.bf16.mxu0 %v7202
    %7577 = vmatpush1.bf16.msra.mxu0 %v7201
    %7578 = vmatprep.subr.bf16.mxu0 %v7206
    %7579 = vmatpush1.bf16.msra.mxu0 %v7205
    %7580 = vmatprep.subr.bf16.mxu0 %v7210
    %7581 = vmatpush1.bf16.msra.mxu0 %v7209
    %7582 = vmatprep.subr.bf16.mxu0 %v7214
    %7583 = vmatpush1.bf16.msra.mxu0 %v7213
    %7584 = vmatprep.subr.bf16.mxu0 %v7218
    %7585 = vmatpush1.bf16.msra.mxu0 %v7217
    %7586 = vmatprep.subr.bf16.mxu0 %v7222
    %7587 = vmatpush1.bf16.msra.mxu0 %v7221
    %7588 = vmatprep.mubr.bf16.mxu0 %v6170
    %7589 = vmatmul.mubr.bf16.gmra.mrb[0].mxu0 %v6169
    %v7590 = vpop.f32.mrb[0].mxu0
    %v7591 = vadd.f32 %v7550, %v7590
    %v7592 = vpop.f32.mrb[0].mxu0
    %v7593 = vadd.f32 %v7552, %v7592
    %v7594 = vpop.f32.mrb[0].mxu0
    %v7595 = vpop.f32.mrb[0].mxu0
    %7596 = vdwg.mxu0
    %7597 = vmatprep.subr.bf16.mxu0 %v7226
    %7598 = vmatpush1.bf16.msra.mxu0 %v7225
    %7599 = vmatprep.subr.bf16.mxu0 %v7230
    %7600 = vmatpush1.bf16.msra.mxu0 %v7229
    %7601 = vmatprep.subr.bf16.mxu0 %v7234
    %7602 = vmatpush1.bf16.msra.mxu0 %v7233
    %7603 = vmatprep.subr.bf16.mxu0 %v7238
    %7604 = vmatpush1.bf16.msra.mxu0 %v7237
    %7605 = vmatprep.subr.bf16.mxu0 %v7242
    %7606 = vmatpush1.bf16.msra.mxu0 %v7241
    %7607 = vmatprep.subr.bf16.mxu0 %v7246
    %7608 = vmatpush1.bf16.msra.mxu0 %v7245
    %7609 = vmatprep.subr.bf16.mxu0 %v7250
    %7610 = vmatpush1.bf16.msra.mxu0 %v7249
    %7611 = vmatprep.subr.bf16.mxu0 %v7254
    %7612 = vmatpush1.bf16.msra.mxu0 %v7253
    %7613 = vmatprep.subr.bf16.mxu0 %v7258
    %7614 = vmatpush1.bf16.msra.mxu0 %v7257
    %7615 = vmatprep.subr.bf16.mxu0 %v7262
    %7616 = vmatpush1.bf16.msra.mxu0 %v7261
    %7617 = vmatprep.subr.bf16.mxu0 %v7266
    %7618 = vmatpush1.bf16.msra.mxu0 %v7265
    %7619 = vmatprep.subr.bf16.mxu0 %v7270
    %7620 = vmatpush1.bf16.msra.mxu0 %v7269
    %7621 = vmatprep.subr.bf16.mxu0 %v7274
    %7622 = vmatpush1.bf16.msra.mxu0 %v7273
    %7623 = vmatprep.subr.bf16.mxu0 %v7278
    %7624 = vmatpush1.bf16.msra.mxu0 %v7277
    %7625 = vmatprep.subr.bf16.mxu0 %v7282
    %7626 = vmatpush1.bf16.msra.mxu0 %v7281
    %7627 = vmatprep.subr.bf16.mxu0 %v7286
    %7628 = vmatpush1.bf16.msra.mxu0 %v7285
    %7629 = vmatprep.mubr.bf16.mxu0 %v6172
    %7630 = vmatmul.mubr.bf16.gmra.mrb[0].mxu0 %v6171
    %v7631 = vpop.f32.mrb[0].mxu0
    %v7632 = vadd.f32 %v7591, %v7631
    %v7633 = vpop.f32.mrb[0].mxu0
    %v7634 = vadd.f32 %v7593, %v7633
    %v7635 = vpop.f32.mrb[0].mxu0
    %v7636 = vpop.f32.mrb[0].mxu0
    %7637 = vdwg.mxu0
    %7638 = vmatprep.subr.bf16.mxu0 %v7290
    %7639 = vmatpush1.bf16.msra.mxu0 %v7289
    %7640 = vmatprep.subr.bf16.mxu0 %v7294
    %7641 = vmatpush1.bf16.msra.mxu0 %v7293
    %7642 = vmatprep.subr.bf16.mxu0 %v7298
    %7643 = vmatpush1.bf16.msra.mxu0 %v7297
    %7644 = vmatprep.subr.bf16.mxu0 %v7302
    %7645 = vmatpush1.bf16.msra.mxu0 %v7301
    %7646 = vmatprep.subr.bf16.mxu0 %v7306
    %7647 = vmatpush1.bf16.msra.mxu0 %v7305
    %7648 = vmatprep.subr.bf16.mxu0 %v7310
    %7649 = vmatpush1.bf16.msra.mxu0 %v7309
    %7650 = vmatprep.subr.bf16.mxu0 %v7314
    %7651 = vmatpush1.bf16.msra.mxu0 %v7313
    %7652 = vmatprep.subr.bf16.mxu0 %v7318
    %7653 = vmatpush1.bf16.msra.mxu0 %v7317
    %7654 = vmatprep.subr.bf16.mxu0 %v7322
    %7655 = vmatpush1.bf16.msra.mxu0 %v7321
    %7656 = vmatprep.subr.bf16.mxu0 %v7326
    %7657 = vmatpush1.bf16.msra.mxu0 %v7325
    %7658 = vmatprep.subr.bf16.mxu0 %v7330
    %7659 = vmatpush1.bf16.msra.mxu0 %v7329
    %7660 = vmatprep.subr.bf16.mxu0 %v7334
    %7661 = vmatpush1.bf16.msra.mxu0 %v7333
    %7662 = vmatprep.subr.bf16.mxu0 %v7338
    %7663 = vmatpush1.bf16.msra.mxu0 %v7337
    %7664 = vmatprep.subr.bf16.mxu0 %v7342
    %7665 = vmatpush1.bf16.msra.mxu0 %v7341
    %7666 = vmatprep.subr.bf16.mxu0 %v7346
    %7667 = vmatpush1.bf16.msra.mxu0 %v7345
    %7668 = vmatprep.subr.bf16.mxu0 %v7350
    %7669 = vmatpush1.bf16.msra.mxu0 %v7349
    %7670 = vmatprep.mubr.bf16.mxu0 %v6174
    %7671 = vmatmul.mubr.bf16.gmra.mrb[0].mxu0 %v6173
    %v7672 = vpop.f32.mrb[0].mxu0
    %v7673 = vadd.f32 %v7632, %v7672
    %v7674 = vpop.f32.mrb[0].mxu0
    %v7675 = vadd.f32 %v7634, %v7674
    %v7676 = vpop.f32.mrb[0].mxu0
    %v7677 = vpop.f32.mrb[0].mxu0
    %7678 = vdwg.mxu0
    %v7679 = vld [vmem:[#allocation17 + $0x4] sm:$0xf]
    %v7681 = vlaneseq
    %v7682 = vshrl.u32 %v7681, 7
    %v7683 = vsub.s32 0, %v7682
    %v7684 = vrot.slane %v7679, %v7683
    %v7685 = vlaneseq
    %v7686 = vshrl.u32 %v7685, 7
    %v7687 = vsub.s32 1, %v7686
    %v7688 = vrot.slane %v7679, %v7687
    %v7689 = vlaneseq
    %v7690 = vshrl.u32 %v7689, 7
    %v7691 = vsub.s32 2, %v7690
    %v7692 = vrot.slane %v7679, %v7691
    %v7693 = vlaneseq
    %v7694 = vshrl.u32 %v7693, 7
    %v7695 = vsub.s32 3, %v7694
    %v7696 = vrot.slane %v7679, %v7695
    %v7701 = vmul.f32 %v7509, %v7684
    %v7702 = vmul.f32 %v7511, %v7688
    %v7703 = vmul.f32 %v7673, %v7692
    %v7704 = vmul.f32 %v7675, %v7696
    %v7705 = vld [vmem:[#allocation18 + $0x4] sm:$0xf]
    %v7707 = vlaneseq
    %v7708 = vshrl.u32 %v7707, 7
    %v7709 = vsub.s32 0, %v7708
    %v7710 = vrot.slane %v7705, %v7709
    %v7711 = vlaneseq
    %v7712 = vshrl.u32 %v7711, 7
    %v7713 = vsub.s32 1, %v7712
    %v7714 = vrot.slane %v7705, %v7713
    %v7715 = vlaneseq
    %v7716 = vshrl.u32 %v7715, 7
    %v7717 = vsub.s32 2, %v7716
    %v7718 = vrot.slane %v7705, %v7717
    %v7719 = vlaneseq
    %v7720 = vshrl.u32 %v7719, 7
    %v7721 = vsub.s32 3, %v7720
    %v7722 = vrot.slane %v7705, %v7721
    %v7727 = vadd.f32 %v7701, %v7710
    %v7728 = vadd.f32 %v7702, %v7714
    %v7729 = vadd.f32 %v7703, %v7718
    %v7730 = vadd.f32 %v7704, %v7722
    %v7731 = vmax.f32 %v7727, 0.0
    %v7732 = vmax.f32 %v7728, 0.0
    %v7733 = vmax.f32 %v7729, 0.0
    %v7734 = vmax.f32 %v7730, 0.0
    %7735 = vst [vmem:[#allocation4 + $0x20] sm:$0xff] %v7731
    %7736 = vst [vmem:[#allocation4 + $0x28] sm:$0xff] %v7732
    %7737 = vst [vmem:[#allocation4 + $0x30] sm:$0xff] %v7733
    %7738 = vst [vmem:[#allocation4 + $0x38] sm:$0xff] %v7734
    %v7739 = vld [vmem:[#allocation4] sm:$0xff]
    %v7740 = vld [vmem:[#allocation4 + $0x8] sm:$0xff]
    %v7741 = vld [vmem:[#allocation4 + $0x10] sm:$0xff]
    %v7742 = vld [vmem:[#allocation4 + $0x18] sm:$0xff]
    %v7743 = vld [vmem:[#allocation4 + $0x20] sm:$0xff]
    %v7744 = vld [vmem:[#allocation4 + $0x28] sm:$0xff]
    %v7745 = vld [vmem:[#allocation4 + $0x30] sm:$0xff]
    %v7746 = vld [vmem:[#allocation4 + $0x38] sm:$0xff]
    %v7747 = vpack.c.bf16 %v7739, %v7739
    %v7748 = vpack.c.bf16 %v7740, %v7740
    %v7749 = vpack.c.bf16 %v7741, %v7741
    %v7750 = vpack.c.bf16 %v7742, %v7742
    %v7751 = vpack.c.bf16 %v7743, %v7743
    %v7752 = vpack.c.bf16 %v7744, %v7744
    %v7753 = vpack.c.bf16 %v7745, %v7745
    %v7754 = vpack.c.bf16 %v7746, %v7746
    %v7755 = vld [vmem:[#allocation20] sm:$0xff]
    %v7756 = vld [vmem:[#allocation20 + $0x8] sm:$0xff]
    %v7757 = vld [vmem:[#allocation20 + $0x10] sm:$0xff]
    %v7758 = vld [vmem:[#allocation20 + $0x18] sm:$0xff]
    %v7759 = vld [vmem:[#allocation20 + $0x20] sm:$0xff]
    %v7760 = vld [vmem:[#allocation20 + $0x28] sm:$0xff]
    %v7761 = vld [vmem:[#allocation20 + $0x30] sm:$0xff]
    %v7762 = vld [vmem:[#allocation20 + $0x38] sm:$0xff]
    %v7763 = vld [vmem:[#allocation20 + $0x40] sm:$0xff]
    %v7764 = vld [vmem:[#allocation20 + $0x48] sm:$0xff]
    %v7765 = vld [vmem:[#allocation20 + $0x50] sm:$0xff]
    %v7766 = vld [vmem:[#allocation20 + $0x58] sm:$0xff]
    %v7767 = vld [vmem:[#allocation20 + $0x60] sm:$0xff]
    %v7768 = vld [vmem:[#allocation20 + $0x68] sm:$0xff]
    %v7769 = vld [vmem:[#allocation20 + $0x70] sm:$0xff]
    %v7770 = vld [vmem:[#allocation20 + $0x78] sm:$0xff]
    %v7771 = vld [vmem:[#allocation20 + $0x80] sm:$0xff]
    %v7772 = vld [vmem:[#allocation20 + $0x88] sm:$0xff]
    %v7773 = vld [vmem:[#allocation20 + $0x90] sm:$0xff]
    %v7774 = vld [vmem:[#allocation20 + $0x98] sm:$0xff]
    %v7775 = vld [vmem:[#allocation20 + $0xa0] sm:$0xff]
    %v7776 = vld [vmem:[#allocation20 + $0xa8] sm:$0xff]
    %v7777 = vld [vmem:[#allocation20 + $0xb0] sm:$0xff]
    %v7778 = vld [vmem:[#allocation20 + $0xb8] sm:$0xff]
    %v7779 = vld [vmem:[#allocation20 + $0xc0] sm:$0xff]
    %v7780 = vld [vmem:[#allocation20 + $0xc8] sm:$0xff]
    %v7781 = vld [vmem:[#allocation20 + $0xd0] sm:$0xff]
    %v7782 = vld [vmem:[#allocation20 + $0xd8] sm:$0xff]
    %v7783 = vld [vmem:[#allocation20 + $0xe0] sm:$0xff]
    %v7784 = vld [vmem:[#allocation20 + $0xe8] sm:$0xff]
    %v7785 = vld [vmem:[#allocation20 + $0xf0] sm:$0xff]
    %v7786 = vld [vmem:[#allocation20 + $0xf8] sm:$0xff]
    %v7787 = vunpack.c.l.s8.bf16 %v7755
    %v7788 = vunpack.c.h.s8.bf16 %v7755
    %v7789 = vunpack.c.l.s8.bf16 %v7756
    %v7790 = vunpack.c.h.s8.bf16 %v7756
    %v7791 = vunpack.c.l.s8.bf16 %v7757
    %v7792 = vunpack.c.h.s8.bf16 %v7757
    %v7793 = vunpack.c.l.s8.bf16 %v7758
    %v7794 = vunpack.c.h.s8.bf16 %v7758
    %v7795 = vunpack.c.l.s8.bf16 %v7759
    %v7796 = vunpack.c.h.s8.bf16 %v7759
    %v7797 = vunpack.c.l.s8.bf16 %v7760
    %v7798 = vunpack.c.h.s8.bf16 %v7760
    %v7799 = vunpack.c.l.s8.bf16 %v7761
    %v7800 = vunpack.c.h.s8.bf16 %v7761
    %v7801 = vunpack.c.l.s8.bf16 %v7762
    %v7802 = vunpack.c.h.s8.bf16 %v7762
    %v7803 = vunpack.c.l.s8.bf16 %v7763
    %v7804 = vunpack.c.h.s8.bf16 %v7763
    %v7805 = vunpack.c.l.s8.bf16 %v7764
    %v7806 = vunpack.c.h.s8.bf16 %v7764
    %v7807 = vunpack.c.l.s8.bf16 %v7765
    %v7808 = vunpack.c.h.s8.bf16 %v7765
    %v7809 = vunpack.c.l.s8.bf16 %v7766
    %v7810 = vunpack.c.h.s8.bf16 %v7766
    %v7811 = vunpack.c.l.s8.bf16 %v7767
    %v7812 = vunpack.c.h.s8.bf16 %v7767
    %v7813 = vunpack.c.l.s8.bf16 %v7768
    %v7814 = vunpack.c.h.s8.bf16 %v7768
    %v7815 = vunpack.c.l.s8.bf16 %v7769
    %v7816 = vunpack.c.h.s8.bf16 %v7769
    %v7817 = vunpack.c.l.s8.bf16 %v7770
    %v7818 = vunpack.c.h.s8.bf16 %v7770
    %v7819 = vunpack.c.l.s8.bf16 %v7771
    %v7820 = vunpack.c.h.s8.bf16 %v7771
    %v7821 = vunpack.c.l.s8.bf16 %v7772
    %v7822 = vunpack.c.h.s8.bf16 %v7772
    %v7823 = vunpack.c.l.s8.bf16 %v7773
    %v7824 = vunpack.c.h.s8.bf16 %v7773
    %v7825 = vunpack.c.l.s8.bf16 %v7774
    %v7826 = vunpack.c.h.s8.bf16 %v7774
    %v7827 = vunpack.c.l.s8.bf16 %v7775
    %v7828 = vunpack.c.h.s8.bf16 %v7775
    %v7829 = vunpack.c.l.s8.bf16 %v7776
    %v7830 = vunpack.c.h.s8.bf16 %v7776
    %v7831 = vunpack.c.l.s8.bf16 %v7777
    %v7832 = vunpack.c.h.s8.bf16 %v7777
    %v7833 = vunpack.c.l.s8.bf16 %v7778
    %v7834 = vunpack.c.h.s8.bf16 %v7778
    %v7835 = vunpack.c.l.s8.bf16 %v7779
    %v7836 = vunpack.c.h.s8.bf16 %v7779
    %v7837 = vunpack.c.l.s8.bf16 %v7780
    %v7838 = vunpack.c.h.s8.bf16 %v7780
    %v7839 = vunpack.c.l.s8.bf16 %v7781
    %v7840 = vunpack.c.h.s8.bf16 %v7781
    %v7841 = vunpack.c.l.s8.bf16 %v7782
    %v7842 = vunpack.c.h.s8.bf16 %v7782
    %v7843 = vunpack.c.l.s8.bf16 %v7783
    %v7844 = vunpack.c.h.s8.bf16 %v7783
    %v7845 = vunpack.c.l.s8.bf16 %v7784
    %v7846 = vunpack.c.h.s8.bf16 %v7784
    %v7847 = vunpack.c.l.s8.bf16 %v7785
    %v7848 = vunpack.c.h.s8.bf16 %v7785
    %v7849 = vunpack.c.l.s8.bf16 %v7786
    %v7850 = vunpack.c.h.s8.bf16 %v7786
    %7851 = vmatprep.subr.bf16.mxu0 0
    %7852 = vmatpush1.bf16.msra.mxu0 %v7787
    %7853 = vmatprep.subr.bf16.mxu0 0
    %7854 = vmatpush1.bf16.msra.mxu0 %v7788
    %7855 = vmatprep.subr.bf16.mxu0 0
    %7856 = vmatpush1.bf16.msra.mxu0 %v7789
    %7857 = vmatprep.subr.bf16.mxu0 0
    %7858 = vmatpush1.bf16.msra.mxu0 %v7790
    %7859 = vmatprep.subr.bf16.mxu0 0
    %7860 = vmatpush1.bf16.msra.mxu0 %v7791
    %7861 = vmatprep.subr.bf16.mxu0 0
    %7862 = vmatpush1.bf16.msra.mxu0 %v7792
    %7863 = vmatprep.subr.bf16.mxu0 0
    %7864 = vmatpush1.bf16.msra.mxu0 %v7793
    %7865 = vmatprep.subr.bf16.mxu0 0
    %7866 = vmatpush1.bf16.msra.mxu0 %v7794
    %7867 = vmatprep.subr.bf16.mxu0 0
    %7868 = vmatpush1.bf16.msra.mxu0 %v7795
    %7869 = vmatprep.subr.bf16.mxu0 0
    %7870 = vmatpush1.bf16.msra.mxu0 %v7796
    %7871 = vmatprep.subr.bf16.mxu0 0
    %7872 = vmatpush1.bf16.msra.mxu0 %v7797
    %7873 = vmatprep.subr.bf16.mxu0 0
    %7874 = vmatpush1.bf16.msra.mxu0 %v7798
    %7875 = vmatprep.subr.bf16.mxu0 0
    %7876 = vmatpush1.bf16.msra.mxu0 %v7799
    %7877 = vmatprep.subr.bf16.mxu0 0
    %7878 = vmatpush1.bf16.msra.mxu0 %v7800
    %7879 = vmatprep.subr.bf16.mxu0 0
    %7880 = vmatpush1.bf16.msra.mxu0 %v7801
    %7881 = vmatprep.subr.bf16.mxu0 0
    %7882 = vmatpush1.bf16.msra.mxu0 %v7802
    %7883 = vmatprep.mubr.bf16.mxu0 %v7748
    %7884 = vmatmul.mubr.bf16.gmra.mrb[0].mxu0 %v7747
    %v7885 = vpop.f32.mrb[0].mxu0
    %v7886 = vadd.f32 0.0, %v7885
    %v7887 = vpop.f32.mrb[0].mxu0
    %v7888 = vpop.f32.mrb[0].mxu0
    %v7889 = vpop.f32.mrb[0].mxu0
    %7890 = vdwg.mxu0
    %7891 = vmatprep.subr.bf16.mxu0 0
    %7892 = vmatpush1.bf16.msra.mxu0 %v7803
    %7893 = vmatprep.subr.bf16.mxu0 0
    %7894 = vmatpush1.bf16.msra.mxu0 %v7804
    %7895 = vmatprep.subr.bf16.mxu0 0
    %7896 = vmatpush1.bf16.msra.mxu0 %v7805
    %7897 = vmatprep.subr.bf16.mxu0 0
    %7898 = vmatpush1.bf16.msra.mxu0 %v7806
    %7899 = vmatprep.subr.bf16.mxu0 0
    %7900 = vmatpush1.bf16.msra.mxu0 %v7807
    %7901 = vmatprep.subr.bf16.mxu0 0
    %7902 = vmatpush1.bf16.msra.mxu0 %v7808
    %7903 = vmatprep.subr.bf16.mxu0 0
    %7904 = vmatpush1.bf16.msra.mxu0 %v7809
    %7905 = vmatprep.subr.bf16.mxu0 0
    %7906 = vmatpush1.bf16.msra.mxu0 %v7810
    %7907 = vmatprep.subr.bf16.mxu0 0
    %7908 = vmatpush1.bf16.msra.mxu0 %v7811
    %7909 = vmatprep.subr.bf16.mxu0 0
    %7910 = vmatpush1.bf16.msra.mxu0 %v7812
    %7911 = vmatprep.subr.bf16.mxu0 0
    %7912 = vmatpush1.bf16.msra.mxu0 %v7813
    %7913 = vmatprep.subr.bf16.mxu0 0
    %7914 = vmatpush1.bf16.msra.mxu0 %v7814
    %7915 = vmatprep.subr.bf16.mxu0 0
    %7916 = vmatpush1.bf16.msra.mxu0 %v7815
    %7917 = vmatprep.subr.bf16.mxu0 0
    %7918 = vmatpush1.bf16.msra.mxu0 %v7816
    %7919 = vmatprep.subr.bf16.mxu0 0
    %7920 = vmatpush1.bf16.msra.mxu0 %v7817
    %7921 = vmatprep.subr.bf16.mxu0 0
    %7922 = vmatpush1.bf16.msra.mxu0 %v7818
    %7923 = vmatprep.mubr.bf16.mxu0 %v7750
    %7924 = vmatmul.mubr.bf16.gmra.mrb[0].mxu0 %v7749
    %v7925 = vpop.f32.mrb[0].mxu0
    %v7926 = vadd.f32 %v7886, %v7925
    %v7927 = vpop.f32.mrb[0].mxu0
    %v7928 = vpop.f32.mrb[0].mxu0
    %v7929 = vpop.f32.mrb[0].mxu0
    %7930 = vdwg.mxu0
    %7931 = vmatprep.subr.bf16.mxu0 0
    %7932 = vmatpush1.bf16.msra.mxu0 %v7819
    %7933 = vmatprep.subr.bf16.mxu0 0
    %7934 = vmatpush1.bf16.msra.mxu0 %v7820
    %7935 = vmatprep.subr.bf16.mxu0 0
    %7936 = vmatpush1.bf16.msra.mxu0 %v7821
    %7937 = vmatprep.subr.bf16.mxu0 0
    %7938 = vmatpush1.bf16.msra.mxu0 %v7822
    %7939 = vmatprep.subr.bf16.mxu0 0
    %7940 = vmatpush1.bf16.msra.mxu0 %v7823
    %7941 = vmatprep.subr.bf16.mxu0 0
    %7942 = vmatpush1.bf16.msra.mxu0 %v7824
    %7943 = vmatprep.subr.bf16.mxu0 0
    %7944 = vmatpush1.bf16.msra.mxu0 %v7825
    %7945 = vmatprep.subr.bf16.mxu0 0
    %7946 = vmatpush1.bf16.msra.mxu0 %v7826
    %7947 = vmatprep.subr.bf16.mxu0 0
    %7948 = vmatpush1.bf16.msra.mxu0 %v7827
    %7949 = vmatprep.subr.bf16.mxu0 0
    %7950 = vmatpush1.bf16.msra.mxu0 %v7828
    %7951 = vmatprep.subr.bf16.mxu0 0
    %7952 = vmatpush1.bf16.msra.mxu0 %v7829
    %7953 = vmatprep.subr.bf16.mxu0 0
    %7954 = vmatpush1.bf16.msra.mxu0 %v7830
    %7955 = vmatprep.subr.bf16.mxu0 0
    %7956 = vmatpush1.bf16.msra.mxu0 %v7831
    %7957 = vmatprep.subr.bf16.mxu0 0
    %7958 = vmatpush1.bf16.msra.mxu0 %v7832
    %7959 = vmatprep.subr.bf16.mxu0 0
    %7960 = vmatpush1.bf16.msra.mxu0 %v7833
    %7961 = vmatprep.subr.bf16.mxu0 0
    %7962 = vmatpush1.bf16.msra.mxu0 %v7834
    %7963 = vmatprep.mubr.bf16.mxu0 %v7752
    %7964 = vmatmul.mubr.bf16.gmra.mrb[0].mxu0 %v7751
    %v7965 = vpop.f32.mrb[0].mxu0
    %v7966 = vadd.f32 %v7926, %v7965
    %v7967 = vpop.f32.mrb[0].mxu0
    %v7968 = vpop.f32.mrb[0].mxu0
    %v7969 = vpop.f32.mrb[0].mxu0
    %7970 = vdwg.mxu0
    %7971 = vmatprep.subr.bf16.mxu0 0
    %7972 = vmatpush1.bf16.msra.mxu0 %v7835
    %7973 = vmatprep.subr.bf16.mxu0 0
    %7974 = vmatpush1.bf16.msra.mxu0 %v7836
    %7975 = vmatprep.subr.bf16.mxu0 0
    %7976 = vmatpush1.bf16.msra.mxu0 %v7837
    %7977 = vmatprep.subr.bf16.mxu0 0
    %7978 = vmatpush1.bf16.msra.mxu0 %v7838
    %7979 = vmatprep.subr.bf16.mxu0 0
    %7980 = vmatpush1.bf16.msra.mxu0 %v7839
    %7981 = vmatprep.subr.bf16.mxu0 0
    %7982 = vmatpush1.bf16.msra.mxu0 %v7840
    %7983 = vmatprep.subr.bf16.mxu0 0
    %7984 = vmatpush1.bf16.msra.mxu0 %v7841
    %7985 = vmatprep.subr.bf16.mxu0 0
    %7986 = vmatpush1.bf16.msra.mxu0 %v7842
    %7987 = vmatprep.subr.bf16.mxu0 0
    %7988 = vmatpush1.bf16.msra.mxu0 %v7843
    %7989 = vmatprep.subr.bf16.mxu0 0
    %7990 = vmatpush1.bf16.msra.mxu0 %v7844
    %7991 = vmatprep.subr.bf16.mxu0 0
    %7992 = vmatpush1.bf16.msra.mxu0 %v7845
    %7993 = vmatprep.subr.bf16.mxu0 0
    %7994 = vmatpush1.bf16.msra.mxu0 %v7846
    %7995 = vmatprep.subr.bf16.mxu0 0
    %7996 = vmatpush1.bf16.msra.mxu0 %v7847
    %7997 = vmatprep.subr.bf16.mxu0 0
    %7998 = vmatpush1.bf16.msra.mxu0 %v7848
    %7999 = vmatprep.subr.bf16.mxu0 0
    %8000 = vmatpush1.bf16.msra.mxu0 %v7849
    %8001 = vmatprep.subr.bf16.mxu0 0
    %8002 = vmatpush1.bf16.msra.mxu0 %v7850
    %8003 = vmatprep.mubr.bf16.mxu0 %v7754
    %8004 = vmatmul.mubr.bf16.gmra.mrb[0].mxu0 %v7753
    %v8005 = vpop.f32.mrb[0].mxu0
    %v8006 = vadd.f32 %v7966, %v8005
    %v8007 = vpop.f32.mrb[0].mxu0
    %v8008 = vpop.f32.mrb[0].mxu0
    %v8009 = vpop.f32.mrb[0].mxu0
    %8010 = vdwg.mxu0
    %v8011 = vld [vmem:[#allocation21] sm:$0x1]
    %v8013 = vlaneseq
    %v8014 = vshrl.u32 %v8013, 7
    %v8015 = vsub.s32 0, %v8014
    %v8016 = vrot.slane %v8011, %v8015
    %v8018 = vmul.f32 %v8006, %v8016
    %v8019 = vld [vmem:[#allocation23] sm:$0x1]
    %v8021 = vlaneseq
    %v8022 = vshrl.u32 %v8021, 7
    %v8023 = vsub.s32 0, %v8022
    %v8024 = vrot.slane %v8019, %v8023
    %v8026 = vadd.f32 %v8018, %v8024
    %8027 = vmax.xlane.f32.xlu0 %v8026
    %v8028 = vpop.xlane.xlu0 %8027
    %v8029 = vsub.f32 %v8026, %v8028
    %v8030 = vmul.f32 %v8029, 1.442695
    %v8031 = vpow.pop %v8030
    %8032 = vadd.xlane.f32.xlu0 %v8031
    %v8033 = vpop.xlane.xlu0 %8032
    %v8034 = vrcp.pop %v8033
    %v8035 = vmul.f32 %v8031, %v8034
    %8036 = vst [vmem:[#allocation24] sm:$0xff] %v8035
    // Predicated region
    $region110: #{adversarial_forward.1} parent=1 // pred_check
      _
    $region111: #{adversarial_forward.1} parent=1 // pred_check_branch
      %8038 = sbr.rel (0) target = $region113
    $region112: #{adversarial_forward.1} parent=1 // pred_region
      %s8040 = ssub.s32 128, 128
      %8041 = vsyncadd [#allocation11], %s8040
      %s8043 = sshll.u32 [#allocation24], 4
      %s8044 = int_to_ptr.vmem [resolvable:$true] %s8043
      %8046 = dma.vmem_to_hbm [thread:$0]  %s8044, 128, %s13, [#allocation11]
    $region113: #{adversarial_forward.1} parent=1 // pred_fallthru
      _
    // Predicated region
    $region114: #{adversarial_forward.1} parent=1 // pred_check
      _
    $region115: #{adversarial_forward.1} parent=1 // pred_check_branch
      %8048 = sbr.rel (0) target = $region117
    $region116: #{adversarial_forward.1} parent=1 // pred_region
      %8049 = dma.done [#allocation11], 128
    $region117: #{adversarial_forward.1} parent=1 // pred_fallthru
      _
    %8050 = vsyncpa [#allocation10], 1
    %8051 = vsyncpa [#allocation13], 1
    %8052 = vsyncpa [#allocation16], 1
    %8053 = vsyncpa [#allocation19], 1
    %8054 = vsyncpa [#allocation22], 1
    %8055 = vsyncpa [#allocation11], 1
  %8056 = vsyncmov [#allocation8]
  %s8057 = vpop.sfrf %8056
  %p8058 = scmp.eq.s32.totalorder %s8057, 0
  %p8059 = pneg %p8058
  %8061 = shalt.err (%p8059)
  %s8062 = scalar_lea.sflag [#allocation8], 1
  %8063 = vsyncmov %s8062
  %s8064 = vpop.sfrf %8063
  %p8065 = scmp.eq.s32.totalorder %s8064, 0
  %p8066 = pneg %p8065
  %8068 = shalt.err (%p8066)
  %s8069 = scalar_lea.sflag [#allocation8], 2
  %8070 = vsyncmov %s8069
  %s8071 = vpop.sfrf %8070
  %p8072 = scmp.eq.s32.totalorder %s8071, 0
  %p8073 = pneg %p8072
  %8075 = shalt.err (%p8073)
  %s8076 = scalar_lea.sflag [#allocation8], 3
  %8077 = vsyncmov %s8076
  %s8078 = vpop.sfrf %8077
  %p8079 = scmp.eq.s32.totalorder %s8078, 0
  %p8080 = pneg %p8079
  %8082 = shalt.err (%p8080)
  %s8083 = scalar_lea.sflag [#allocation8], 4
  %8084 = vsyncmov %s8083
  %s8085 = vpop.sfrf %8084
  %p8086 = scmp.eq.s32.totalorder %s8085, 0
  %p8087 = pneg %p8086
  %8089 = shalt.err (%p8087)
  %s8090 = scalar_lea.sflag [#allocation8], 5
  %8091 = vsyncmov %s8090
  %s8092 = vpop.sfrf %8091
  %p8093 = scmp.eq.s32.totalorder %s8092, 0
  %p8094 = pneg %p8093
  %8096 = shalt.err (%p8094)

</llo_original>
